<compile_context>
chip_gen: v6e
topology: v6e:2x2x1
jax: 0.10.0
libtpu: 0.0.40
codegen_flags: <defaults>
</compile_context>

<pallas_src>
import functools

import jax
import jax.numpy as jnp
from jax.experimental import pallas as pl
from jax.experimental.pallas import tpu as pltpu


VMEM_LIMIT = 48 * 1024 * 1024   # <= v7x physical 64 MiB; raise to 64-96 MiB on v5e/v6e


def _const_spec(shape):
    """BlockSpec for an input whose block never changes: fetch once, single buffer."""
    return pl.BlockSpec(shape, lambda i: (0, 0), pipeline_mode=pl.Buffered(1))


# ----------------------------------------------------------------------------
# Shared GIN convolution body for one node tile.
#   agg_n = sum_{e: dst_e == n} msg_e        (bf16 0/1 scatter matmul, f32 acc)
#   c_n   = MLP((1 + eps) * h_plus_n + agg_n)  (BatchNorms folded into the linears)
# ----------------------------------------------------------------------------
def _gin_conv_tile(hp_f32, msg_ref, sdst_ref, w1_ref, b1_ref, w2_ref, b2_ref, eps):
    agg = jnp.dot(sdst_ref[...], msg_ref[...],                                # [TN, D]
                  preferred_element_type=jnp.float32)
    z = (1.0 + eps) * hp_f32 + agg
    t = jnp.maximum(
        jnp.dot(z.astype(jnp.bfloat16), w1_ref[...],
                preferred_element_type=jnp.float32) + b1_ref[...], 0.0)       # Lin+BN(2D)+ReLU
    c = jnp.dot(t.astype(jnp.bfloat16), w2_ref[...],
                preferred_element_type=jnp.float32) + b2_ref[...]             # Lin+BN(D)
    return c


# ----------------------------------------------------------------------------
# Kernel A (layers 0 .. L-2): fused GIN conv + ReLU + virtual-node update.
# Grid: node tiles (reduction axis for the virtual-node add-pool accumulator).
# ----------------------------------------------------------------------------
def gin_vnode_layer_kernel(hp_ref, msg_ref, sdst_ref, padd_ref, vn_ref,
                           w1_ref, b1_ref, w2_ref, b2_ref,
                           v1_ref, c1_ref, v2_ref, c2_ref,
                           hout_ref, vnout_ref, pool_acc, *, eps):
    i = pl.program_id(0)

    @pl.when(i == 0)
    def _():
        pool_acc[...] = jnp.zeros_like(pool_acc)
        vnout_ref[...] = jnp.zeros_like(vnout_ref)

    hp_bf = hp_ref[...]                                                      # bf16 [TN, D]
    c = _gin_conv_tile(hp_bf.astype(jnp.float32), msg_ref, sdst_ref,
                       w1_ref, b1_ref, w2_ref, b2_ref, eps)
    hout_ref[...] = jnp.maximum(c, 0.0).astype(hout_ref.dtype)   # ReLU; dropout = id (eval)

    # accumulate global_add_pool(h_plus) for the virtual-node update
    pool_acc[...] += jnp.dot(padd_ref[...], hp_bf, preferred_element_type=jnp.float32)

    @pl.when(i == pl.num_programs(0) - 1)
    def _():
        tmp = pool_acc[...] + vn_ref[...]
        a = jnp.maximum(
            jnp.dot(tmp.astype(jnp.bfloat16), v1_ref[...],
                    preferred_element_type=jnp.float32) + c1_ref[...], 0.0)  # Lin+BN+ReLU
        vnout_ref[...] = jnp.maximum(
            jnp.dot(a.astype(jnp.bfloat16), v2_ref[...],
                    preferred_element_type=jnp.float32) + c2_ref[...], 0.0)  # Lin+BN+ReLU


def gin_vnode_layer(h_plus, msg, sdst, padd, vn, conv_p, vn_p, *, eps, tile_n):
    N, D = h_plus.shape
    E = msg.shape[0]
    G = vn.shape[0]
    H = 2 * D
    w1, b1, w2, b2 = conv_p
    v1, c1, v2, c2 = vn_p

    flops = 2 * (N * E * D + 2 * N * D * H + G * N * D + 2 * G * D * H)
    bytes_acc = (2 * (2 * N * D + E * D + N * E + G * N + 4 * D * H)
                 + 4 * (2 * G * D + 2 * (H + D)))

    grid_spec = pltpu.PrefetchScalarGridSpec(
        num_scalar_prefetch=0,
        grid=(N // tile_n,),
        in_specs=[
            pl.BlockSpec((tile_n, D), lambda i: (i, 0)),   # h_plus node tile (bf16)
            _const_spec((E, D)),                           # precomputed edge messages (bf16)
            pl.BlockSpec((tile_n, E), lambda i: (i, 0)),   # scatter-add rows (bf16 0/1)
            pl.BlockSpec((G, tile_n), lambda i: (0, i)),   # add-pool cols (bf16 0/1)
            _const_spec((G, D)),                           # virtual-node embedding (f32)
            _const_spec((D, H)),                           # w1 (BN folded, bf16)
            _const_spec((1, H)),                           # b1
            _const_spec((H, D)),                           # w2 (BN folded, bf16)
            _const_spec((1, D)),                           # b2
            _const_spec((D, H)),                           # vnode MLP w1 (bf16)
            _const_spec((1, H)),                           # vnode MLP b1
            _const_spec((H, D)),                           # vnode MLP w2 (bf16)
            _const_spec((1, D)),                           # vnode MLP b2
        ],
        out_specs=(
            pl.BlockSpec((tile_n, D), lambda i: (i, 0)),   # new node embedding (bf16)
            pl.BlockSpec((G, D), lambda i: (0, 0)),        # new virtual-node embedding (f32)
        ),
        scratch_shapes=[pltpu.VMEM((G, D), jnp.float32)],  # add-pool accumulator
    )
    return pl.pallas_call(
        functools.partial(gin_vnode_layer_kernel, eps=eps),
        out_shape=(jax.ShapeDtypeStruct((N, D), jnp.bfloat16),
                   jax.ShapeDtypeStruct((G, D), jnp.float32)),
        grid_spec=grid_spec,
        compiler_params=pltpu.CompilerParams(
            dimension_semantics=("arbitrary",),            # pool accumulation -> reduction axis
            vmem_limit_bytes=VMEM_LIMIT),
        cost_estimate=pl.CostEstimate(flops=flops, transcendentals=0,
                                      bytes_accessed=bytes_acc),
    )(h_plus, msg, sdst, padd, vn, w1, b1, w2, b2, v1, c1, v2, c2)


# ----------------------------------------------------------------------------
# Kernel B (last layer): fused GIN conv (no ReLU) + global mean pool + task head.
# Only the padded prediction [G, T_pad] leaves the kernel.
# ----------------------------------------------------------------------------
def gin_pool_predict_kernel(hp_ref, msg_ref, sdst_ref, padd_ref, invc_ref,
                            w1_ref, b1_ref, w2_ref, b2_ref, wp_ref, bp_ref,
                            pred_ref, pool_acc, *, eps):
    i = pl.program_id(0)

    @pl.when(i == 0)
    def _():
        pool_acc[...] = jnp.zeros_like(pool_acc)
        pred_ref[...] = jnp.zeros_like(pred_ref)

    hp_bf = hp_ref[...]
    c = _gin_conv_tile(hp_bf.astype(jnp.float32), msg_ref, sdst_ref,
                       w1_ref, b1_ref, w2_ref, b2_ref, eps)
    # last layer: no ReLU; dropout identity in eval.  JK='last' -> pool c directly.
    pool_acc[...] += jnp.dot(padd_ref[...], c.astype(jnp.bfloat16),
                             preferred_element_type=jnp.float32)

    @pl.when(i == pl.num_programs(0) - 1)
    def _():
        hg = pool_acc[...] * invc_ref[...]                 # global_mean_pool
        pred_ref[...] = jnp.dot(hg.astype(jnp.bfloat16), wp_ref[...],
                                preferred_element_type=jnp.float32) + bp_ref[...]


def gin_pool_predict_layer(h_plus, msg, sdst, padd, inv_counts,
                           conv_p, pred_w, pred_b, *, eps, tile_n):
    N, D = h_plus.shape
    E = msg.shape[0]
    G = inv_counts.shape[0]
    H = 2 * D
    T = pred_w.shape[1]
    w1, b1, w2, b2 = conv_p

    flops = 2 * (N * E * D + 2 * N * D * H + G * N * D + G * D * T)
    bytes_acc = (2 * (N * D + E * D + N * E + G * N + 2 * D * H + D * T)
                 + 4 * (G * T + G + (H + D + T)))

    grid_spec = pltpu.PrefetchScalarGridSpec(
        num_scalar_prefetch=0,
        grid=(N // tile_n,),
        in_specs=[
            pl.BlockSpec((tile_n, D), lambda i: (i, 0)),   # h_plus node tile (bf16)
            _const_spec((E, D)),                           # precomputed edge messages (bf16)
            pl.BlockSpec((tile_n, E), lambda i: (i, 0)),   # scatter-add rows
            pl.BlockSpec((G, tile_n), lambda i: (0, i)),   # add-pool cols
            _const_spec((G, 1)),                           # 1 / nodes-per-graph
            _const_spec((D, H)),                           # w1
            _const_spec((1, H)),                           # b1
            _const_spec((H, D)),                           # w2
            _const_spec((1, D)),                           # b2
            _const_spec((D, T)),                           # graph_pred_linear W (lane-padded)
            _const_spec((1, T)),                           # graph_pred_linear b
        ],
        out_specs=pl.BlockSpec((G, T), lambda i: (0, 0)),
        scratch_shapes=[pltpu.VMEM((G, D), jnp.float32)],
    )
    return pl.pallas_call(
        functools.partial(gin_pool_predict_kernel, eps=eps),
        out_shape=jax.ShapeDtypeStruct((G, T), jnp.float32),
        grid_spec=grid_spec,
        compiler_params=pltpu.CompilerParams(
            dimension_semantics=("arbitrary",),
            vmem_limit_bytes=VMEM_LIMIT),
        cost_estimate=pl.CostEstimate(flops=flops, transcendentals=0,
                                      bytes_accessed=bytes_acc),
    )(h_plus, msg, sdst, padd, inv_counts, w1, b1, w2, b2, pred_w, pred_b)


# ----------------------------------------------------------------------------
# Parameters (deterministic, in-script), with eval-mode BatchNorm folded into the
# linears and MXU weights stored in bf16 (biases stay f32).
# ----------------------------------------------------------------------------
def _rand(key, shape, scale=0.1):
    return (scale * jax.random.normal(key, shape)).astype(jnp.float32)


def make_params(key, emb_dim, num_layer, num_tasks, num_tasks_pad,
                atom_vocabs, bond_vocabs):
    D, H = emb_dim, 2 * emb_dim
    keys = iter(jax.random.split(key, 1024))

    def lin(din, dout):
        return _rand(next(keys), (din, dout)), _rand(next(keys), (1, dout))

    def bn_default(width):
        # Untrained PyTorch BatchNorm1d (eval): gamma=1, beta=0, mean=0, var=1.
        # TODO(synk): with a trained checkpoint, feed the real running stats here.
        return (jnp.ones((width,), jnp.float32), jnp.zeros((width,), jnp.float32),
                jnp.zeros((width,), jnp.float32), jnp.ones((width,), jnp.float32))

    def fold(w, b, bn):                      # y = (x@w + b) -> BN_eval(y)
        gamma, beta, mean, var = bn
        s = gamma / jnp.sqrt(var + 1e-5)
        w_f = (w * s[None, :]).astype(jnp.bfloat16)
        b_f = (b * s[None, :] + (beta - mean * s)[None, :]).astype(jnp.float32)
        return w_f, b_f

    params = {}
    params['atom_emb'] = [_rand(next(keys), (v, D)) for v in atom_vocabs]
    params['bond_emb'] = [[_rand(next(keys), (v, D)) for v in bond_vocabs]
                          for _ in range(num_layer)]

    convs = []
    for _ in range(num_layer):
        w1, b1 = lin(D, H)
        w2, b2 = lin(H, D)
        w1f, b1f = fold(w1, b1, bn_default(H))   # GIN MLP internal BN(2D)
        w2f, b2f = fold(w2, b2, bn_default(D))   # per-layer external BN(D)
        convs.append((w1f, b1f, w2f, b2f))
    params['conv'] = convs

    vns = []
    for _ in range(num_layer - 1):
        v1, c1 = lin(D, H)
        v2, c2 = lin(H, D)
        vns.append(fold(v1, c1, bn_default(H)) + fold(v2, c2, bn_default(D)))
    params['vn_mlp'] = vns

    wp, bp = lin(D, num_tasks)                   # graph_pred_linear, lane-padded to 128
    params['pred_w'] = (jnp.zeros((D, num_tasks_pad), jnp.float32)
                        .at[:, :num_tasks].set(wp).astype(jnp.bfloat16))
    params['pred_b'] = jnp.zeros((1, num_tasks_pad), jnp.float32).at[:, :num_tasks].set(bp)
    return params


# ----------------------------------------------------------------------------
# Full forward pass.
# ----------------------------------------------------------------------------
def gnn_forward(params, x_atom, edge_attr, src, dst, batch, *,
                num_layer, num_graphs, num_tasks, tile_n):
    N = x_atom.shape[0]
    G = num_graphs
    D = params['atom_emb'][0].shape[1]

    # AtomEncoder: embedding-table lookups (plain-JAX glue).
    h = params['atom_emb'][0][x_atom[:, 0]]
    for i in range(1, len(params['atom_emb'])):
        h = h + params['atom_emb'][i][x_atom[:, i]]

    # Static graph operators, built directly in bf16 (0/1 values -> exact), no
    # one_hot + transpose intermediates.
    node_ids = jnp.arange(N, dtype=jnp.int32)
    graph_ids = jnp.arange(G, dtype=jnp.int32)
    sdst = (node_ids[:, None] == dst[None, :]).astype(jnp.bfloat16)    # [N, E] scatter-add
    padd = (graph_ids[:, None] == batch[None, :]).astype(jnp.bfloat16)  # [G, N] add-pool
    counts = jnp.zeros((G,), jnp.float32).at[batch].add(1.0).reshape(G, 1)
    inv_counts = 1.0 / jnp.maximum(counts, 1.0)                        # [G, 1] mean-pool scale

    vn = jnp.zeros((G, D), jnp.float32)   # virtualnode embedding init constant_(0)
    eps = 0.0                             # GINConv.eps Parameter init 0
                                          # TODO(synk): thread a learned eps per layer here.

    h_cur, pred = h, None
    for layer in range(num_layer):
        # BondEncoder (one per GINConv) -- plain-JAX lookup glue.
        tbls = params['bond_emb'][layer]
        eemb = tbls[0][edge_attr[:, 0]]
        for i in range(1, len(tbls)):
            eemb = eemb + tbls[i][edge_attr[:, i]]

        # Virtual-node broadcast + per-edge source gather + edge message, all as
        # cheap O(N*D)/O(E*D) XLA row gathers / VPU ops.  Only a single bf16 [E,D]
        # message slab enters the kernel.
        h_plus = h_cur.astype(jnp.float32) + vn[batch]
        msg = jnp.maximum(h_plus[src] + eemb, 0.0).astype(jnp.bfloat16)
        hp_bf = h_plus.astype(jnp.bfloat16)

        if layer < num_layer - 1:
            h_cur, vn = gin_vnode_layer(hp_bf, msg, sdst, padd, vn,
                                        params['conv'][layer], params['vn_mlp'][layer],
                                        eps=eps, tile_n=tile_n)
        else:   # last layer: fuse mean pool + graph_pred_linear (JK='last')
            pred = gin_pool_predict_layer(hp_bf, msg, sdst, padd, inv_counts,
                                          params['conv'][layer],
                                          params['pred_w'], params['pred_b'],
                                          eps=eps, tile_n=tile_n)
    return pred[:, :num_tasks]


if __name__ == "__main__":
    key = jax.random.PRNGKey(0)
    G = 4                      # graphs in the batch
    NODES_PER_G = 128
    EDGES_PER_G = 256
    N = G * NODES_PER_G        # 512 nodes
    E = G * EDGES_PER_G        # 1024 directed edges
    EMB_DIM = 128              # lane-aligned small emb_dim (prod 300 would pad to 384)
    NUM_TASKS = 4
    NUM_TASKS_PAD = 128        # lane-dense prediction head, sliced afterwards
    NUM_LAYER = 5
    TILE_N = 256               # node tile (multiple of 8 sublanes / 128 lanes)
    ATOM_VOCABS = (8, 4, 6)
    BOND_VOCABS = (4, 3, 2)

    assert N % TILE_N == 0

    k_x, k_e, k_s, k_d, k_p = jax.random.split(key, 5)
    x_atom = jax.random.randint(k_x, (N, len(ATOM_VOCABS)), 0,
                                jnp.array(ATOM_VOCABS, jnp.int32), dtype=jnp.int32)
    edge_attr = jax.random.randint(k_e, (E, len(BOND_VOCABS)), 0,
                                   jnp.array(BOND_VOCABS, jnp.int32), dtype=jnp.int32)
    # edges stay inside their own graph
    offs = jnp.repeat(jnp.arange(G, dtype=jnp.int32) * NODES_PER_G, EDGES_PER_G)
    src = jax.random.randint(k_s, (E,), 0, NODES_PER_G, dtype=jnp.int32) + offs
    dst = jax.random.randint(k_d, (E,), 0, NODES_PER_G, dtype=jnp.int32) + offs
    batch = jnp.repeat(jnp.arange(G, dtype=jnp.int32), NODES_PER_G)

    params = make_params(k_p, EMB_DIM, NUM_LAYER, NUM_TASKS, NUM_TASKS_PAD,
                         ATOM_VOCABS, BOND_VOCABS)

    fwd = jax.jit(functools.partial(gnn_forward, num_layer=NUM_LAYER,
                                    num_graphs=G, num_tasks=NUM_TASKS, tile_n=TILE_N))
    out = jax.block_until_ready(fwd(params, x_atom, edge_attr, src, dst, batch))

    assert out.shape == (G, NUM_TASKS) and out.dtype == jnp.float32
    assert bool(jnp.all(jnp.isfinite(out)))
    print("KERNEL_OK")
</pallas_src>

<mosaic_0001>
module attributes {stable_mosaic.version = 11 : i64} {
  func.func private @main(%arg0: i32) attributes {dimension_semantics = [#tpu.dimension_semantics<core_parallel>], iteration_bounds = array<i64: 2>, tpu.core_type = #tpu.core_type<sc_scalar_subcore>, window_params = []} {
    return
  }
}

module attributes {stable_mosaic.version = 11 : i64} {
  func.func private @main(%arg0: i32) attributes {dimension_semantics = [#tpu.dimension_semantics<core_parallel>], iteration_bounds = array<i64: 2>, tpu.core_type = #tpu.core_type<sc_scalar_subcore>, window_params = []} {
    return
  }
}

module attributes {stable_mosaic.version = 11 : i64} {
  func.func @gin_vnode_layer_kernel(%arg0: i32, %arg1: memref<256x128xbf16, #tpu.memory_space<vmem>>, %arg2: memref<1024x128xbf16, #tpu.memory_space<vmem>>, %arg3: memref<256x1024xbf16, #tpu.memory_space<vmem>>, %arg4: memref<4x256xbf16, #tpu.memory_space<vmem>>, %arg5: memref<4x128xf32, #tpu.memory_space<vmem>>, %arg6: memref<128x256xbf16, #tpu.memory_space<vmem>>, %arg7: memref<1x256xf32, #tpu.memory_space<vmem>>, %arg8: memref<256x128xbf16, #tpu.memory_space<vmem>>, %arg9: memref<1x128xf32, #tpu.memory_space<vmem>>, %arg10: memref<128x256xbf16, #tpu.memory_space<vmem>>, %arg11: memref<1x256xf32, #tpu.memory_space<vmem>>, %arg12: memref<256x128xbf16, #tpu.memory_space<vmem>>, %arg13: memref<1x128xf32, #tpu.memory_space<vmem>>, %arg14: memref<256x128xbf16, #tpu.memory_space<vmem>>, %arg15: memref<4x128xf32, #tpu.memory_space<vmem>>, %arg16: memref<4x128xf32, #tpu.memory_space<vmem>>) attributes {dimension_semantics = [#tpu.dimension_semantics<arbitrary>], iteration_bounds = array<i64: 2>, scalar_prefetch = 0 : i64, scratch_operands = 1 : i64, tpu.core_type = #tpu.core_type<tc>, window_params = [{transform_indices = @transform_0, window_bounds = array<i64: 256, 128>}, {pipeline_mode = #tpu.pipeline_mode<synchronous>, transform_indices = @transform_1, window_bounds = array<i64: 1024, 128>}, {transform_indices = @transform_2, window_bounds = array<i64: 256, 1024>}, {transform_indices = @transform_3, window_bounds = array<i64: 4, 256>}, {pipeline_mode = #tpu.pipeline_mode<synchronous>, transform_indices = @transform_4, window_bounds = array<i64: 4, 128>}, {pipeline_mode = #tpu.pipeline_mode<synchronous>, transform_indices = @transform_5, window_bounds = array<i64: 128, 256>}, {pipeline_mode = #tpu.pipeline_mode<synchronous>, transform_indices = @transform_6, window_bounds = array<i64: 1, 256>}, {pipeline_mode = #tpu.pipeline_mode<synchronous>, transform_indices = @transform_7, window_bounds = array<i64: 256, 128>}, {pipeline_mode = #tpu.pipeline_mode<synchronous>, transform_indices = @transform_8, window_bounds = array<i64: 1, 128>}, {pipeline_mode = #tpu.pipeline_mode<synchronous>, transform_indices = @transform_9, window_bounds = array<i64: 128, 256>}, {pipeline_mode = #tpu.pipeline_mode<synchronous>, transform_indices = @transform_10, window_bounds = array<i64: 1, 256>}, {pipeline_mode = #tpu.pipeline_mode<synchronous>, transform_indices = @transform_11, window_bounds = array<i64: 256, 128>}, {pipeline_mode = #tpu.pipeline_mode<synchronous>, transform_indices = @transform_12, window_bounds = array<i64: 1, 128>}, {transform_indices = @transform_13, window_bounds = array<i64: 256, 128>}, {pipeline_mode = #tpu.pipeline_mode<synchronous>, transform_indices = @transform_14, window_bounds = array<i64: 4, 128>}]} {
    %c0_i32 = arith.constant 0 : i32
    %0 = arith.cmpi eq, %arg0, %c0_i32 : i32
    %1 = arith.extui %0 : i1 to i32
    %c0_i32_0 = arith.constant 0 : i32
    %2 = arith.cmpi ne, %1, %c0_i32_0 : i32
    scf.if %2 {
      %cst_29 = arith.constant 0.000000e+00 : f32
      %37 = vector.broadcast %cst_29 : f32 to vector<4x128xf32>
      %c0_30 = arith.constant 0 : index
      %c0_31 = arith.constant 0 : index
      %38 = vector.load %arg16[%c0_30, %c0_31] : memref<4x128xf32, #tpu.memory_space<vmem>>, vector<4x128xf32>
      tpu.vector_store %arg16[%c0_30, %c0_31], %37 {strides = array<i32>} : memref<4x128xf32, #tpu.memory_space<vmem>>, vector<4x128xf32>,
      %cst_32 = arith.constant 0.000000e+00 : f32
      %39 = vector.broadcast %cst_32 : f32 to vector<4x128xf32>
      %c0_33 = arith.constant 0 : index
      %c0_34 = arith.constant 0 : index
      %40 = vector.load %arg15[%c0_33, %c0_34] : memref<4x128xf32, #tpu.memory_space<vmem>>, vector<4x128xf32>
      tpu.vector_store %arg15[%c0_33, %c0_34], %39 {strides = array<i32>} : memref<4x128xf32, #tpu.memory_space<vmem>>, vector<4x128xf32>,
    } else {
    }
    %c0 = arith.constant 0 : index
    %c0_1 = arith.constant 0 : index
    %3 = vector.load %arg1[%c0, %c0_1] : memref<256x128xbf16, #tpu.memory_space<vmem>>, vector<256x128xbf16>
    %4 = arith.extf %3 : vector<256x128xbf16> to vector<256x128xf32>
    %c0_2 = arith.constant 0 : index
    %c0_3 = arith.constant 0 : index
    %5 = vector.load %arg3[%c0_2, %c0_3] : memref<256x1024xbf16, #tpu.memory_space<vmem>>, vector<256x1024xbf16>
    %c0_4 = arith.constant 0 : index
    %c0_5 = arith.constant 0 : index
    %6 = vector.load %arg2[%c0_4, %c0_5] : memref<1024x128xbf16, #tpu.memory_space<vmem>>, vector<1024x128xbf16>
    %cst = arith.constant dense<0.000000e+00> : vector<256x128xf32>
    %7 = tpu.matmul %5, %6, %cst {dimension_numbers = #tpu.dot_dimension_numbers<[1], [0], [0], [1], [0, 0, 1, 1], [], []>} : vector<256x1024xbf16>, vector<1024x128xbf16>, vector<256x128xf32> -> vector<256x128xf32>
    %cst_6 = arith.constant 1.000000e+00 : f32
    %8 = vector.broadcast %cst_6 : f32 to vector<256x128xf32>
    %9 = arith.mulf %8, %4 : vector<256x128xf32>
    %10 = arith.addf %9, %7 : vector<256x128xf32>
    %11 = arith.truncf %10 : vector<256x128xf32> to vector<256x128xbf16>
    %c0_7 = arith.constant 0 : index
    %c0_8 = arith.constant 0 : index
    %12 = vector.load %arg6[%c0_7, %c0_8] : memref<128x256xbf16, #tpu.memory_space<vmem>>, vector<128x256xbf16>
    %cst_9 = arith.constant dense<0.000000e+00> : vector<256x256xf32>
    %13 = tpu.matmul %11, %12, %cst_9 {dimension_numbers = #tpu.dot_dimension_numbers<[1], [0], [0], [1], [0, 0, 1, 1], [], []>} : vector<256x128xbf16>, vector<128x256xbf16>, vector<256x256xf32> -> vector<256x256xf32>
    %c0_10 = arith.constant 0 : index
    %c0_11 = arith.constant 0 : index
    %14 = vector.load %arg7[%c0_10, %c0_11] : memref<1x256xf32, #tpu.memory_space<vmem>>, vector<1x256xf32>
    %15 = vector.broadcast %14 : vector<1x256xf32> to vector<256x256xf32>
    %16 = arith.addf %13, %15 : vector<256x256xf32>
    %cst_12 = arith.constant 0.000000e+00 : f32
    %17 = vector.broadcast %cst_12 : f32 to vector<256x256xf32>
    %18 = arith.maximumf %16, %17 : vector<256x256xf32>
    %19 = arith.truncf %18 : vector<256x256xf32> to vector<256x256xbf16>
    %c0_13 = arith.constant 0 : index
    %c0_14 = arith.constant 0 : index
    %20 = vector.load %arg8[%c0_13, %c0_14] : memref<256x128xbf16, #tpu.memory_space<vmem>>, vector<256x128xbf16>
    %cst_15 = arith.constant dense<0.000000e+00> : vector<256x128xf32>
    %21 = tpu.matmul %19, %20, %cst_15 {dimension_numbers = #tpu.dot_dimension_numbers<[1], [0], [0], [1], [0, 0, 1, 1], [], []>} : vector<256x256xbf16>, vector<256x128xbf16>, vector<256x128xf32> -> vector<256x128xf32>
    %c0_16 = arith.constant 0 : index
    %c0_17 = arith.constant 0 : index
    %22 = vector.load %arg9[%c0_16, %c0_17] : memref<1x128xf32, #tpu.memory_space<vmem>>, vector<1x128xf32>
    %23 = vector.broadcast %22 : vector<1x128xf32> to vector<256x128xf32>
    %24 = arith.addf %21, %23 : vector<256x128xf32>
    %cst_18 = arith.constant 0.000000e+00 : f32
    %25 = vector.broadcast %cst_18 : f32 to vector<256x128xf32>
    %26 = arith.maximumf %24, %25 : vector<256x128xf32>
    %27 = arith.truncf %26 : vector<256x128xf32> to vector<256x128xbf16>
    %c0_19 = arith.constant 0 : index
    %c0_20 = arith.constant 0 : index
    %28 = vector.load %arg14[%c0_19, %c0_20] : memref<256x128xbf16, #tpu.memory_space<vmem>>, vector<256x128xbf16>
    tpu.vector_store %arg14[%c0_19, %c0_20], %27 {strides = array<i32>} : memref<256x128xbf16, #tpu.memory_space<vmem>>, vector<256x128xbf16>,
    %c0_21 = arith.constant 0 : index
    %c0_22 = arith.constant 0 : index
    %29 = vector.load %arg16[%c0_21, %c0_22] : memref<4x128xf32, #tpu.memory_space<vmem>>, vector<4x128xf32>
    %c0_23 = arith.constant 0 : index
    %c0_24 = arith.constant 0 : index
    %30 = vector.load %arg4[%c0_23, %c0_24] : memref<4x256xbf16, #tpu.memory_space<vmem>>, vector<4x256xbf16>
    %cst_25 = arith.constant dense<0.000000e+00> : vector<4x128xf32>
    %31 = tpu.matmul %30, %3, %cst_25 {dimension_numbers = #tpu.dot_dimension_numbers<[1], [0], [0], [1], [0, 0, 1, 1], [], []>} : vector<4x256xbf16>, vector<256x128xbf16>, vector<4x128xf32> -> vector<4x128xf32>
    %32 = arith.addf %29, %31 : vector<4x128xf32>
    %c0_26 = arith.constant 0 : index
    %c0_27 = arith.constant 0 : index
    %33 = vector.load %arg16[%c0_26, %c0_27] : memref<4x128xf32, #tpu.memory_space<vmem>>, vector<4x128xf32>
    tpu.vector_store %arg16[%c0_26, %c0_27], %32 {strides = array<i32>} : memref<4x128xf32, #tpu.memory_space<vmem>>, vector<4x128xf32>,
    %c1_i32 = arith.constant 1 : i32
    %34 = arith.cmpi eq, %arg0, %c1_i32 : i32
    %35 = arith.extui %34 : i1 to i32
    %c0_i32_28 = arith.constant 0 : i32
    %36 = arith.cmpi ne, %35, %c0_i32_28 : i32
    scf.if %36 {
      %c0_29 = arith.constant 0 : index
      %c0_30 = arith.constant 0 : index
      %37 = vector.load %arg16[%c0_29, %c0_30] : memref<4x128xf32, #tpu.memory_space<vmem>>, vector<4x128xf32>
      %c0_31 = arith.constant 0 : index
      %c0_32 = arith.constant 0 : index
      %38 = vector.load %arg5[%c0_31, %c0_32] : memref<4x128xf32, #tpu.memory_space<vmem>>, vector<4x128xf32>
      %39 = arith.addf %37, %38 : vector<4x128xf32>
      %40 = arith.truncf %39 : vector<4x128xf32> to vector<4x128xbf16>
      %c0_33 = arith.constant 0 : index
      %c0_34 = arith.constant 0 : index
      %41 = vector.load %arg10[%c0_33, %c0_34] : memref<128x256xbf16, #tpu.memory_space<vmem>>, vector<128x256xbf16>
      %cst_35 = arith.constant dense<0.000000e+00> : vector<4x256xf32>
      %42 = tpu.matmul %40, %41, %cst_35 {dimension_numbers = #tpu.dot_dimension_numbers<[1], [0], [0], [1], [0, 0, 1, 1], [], []>} : vector<4x128xbf16>, vector<128x256xbf16>, vector<4x256xf32> -> vector<4x256xf32>
      %c0_36 = arith.constant 0 : index
      %c0_37 = arith.constant 0 : index
      %43 = vector.load %arg11[%c0_36, %c0_37] : memref<1x256xf32, #tpu.memory_space<vmem>>, vector<1x256xf32>
      %44 = vector.broadcast %43 : vector<1x256xf32> to vector<4x256xf32>
      %45 = arith.addf %42, %44 : vector<4x256xf32>
      %cst_38 = arith.constant 0.000000e+00 : f32
      %46 = vector.broadcast %cst_38 : f32 to vector<4x256xf32>
      %47 = arith.maximumf %45, %46 : vector<4x256xf32>
      %48 = arith.truncf %47 : vector<4x256xf32> to vector<4x256xbf16>
      %c0_39 = arith.constant 0 : index
      %c0_40 = arith.constant 0 : index
      %49 = vector.load %arg12[%c0_39, %c0_40] : memref<256x128xbf16, #tpu.memory_space<vmem>>, vector<256x128xbf16>
      %cst_41 = arith.constant dense<0.000000e+00> : vector<4x128xf32>
      %50 = tpu.matmul %48, %49, %cst_41 {dimension_numbers = #tpu.dot_dimension_numbers<[1], [0], [0], [1], [0, 0, 1, 1], [], []>} : vector<4x256xbf16>, vector<256x128xbf16>, vector<4x128xf32> -> vector<4x128xf32>
      %c0_42 = arith.constant 0 : index
      %c0_43 = arith.constant 0 : index
      %51 = vector.load %arg13[%c0_42, %c0_43] : memref<1x128xf32, #tpu.memory_space<vmem>>, vector<1x128xf32>
      %52 = vector.broadcast %51 : vector<1x128xf32> to vector<4x128xf32>
      %53 = arith.addf %50, %52 : vector<4x128xf32>
      %cst_44 = arith.constant 0.000000e+00 : f32
      %54 = vector.broadcast %cst_44 : f32 to vector<4x128xf32>
      %55 = arith.maximumf %53, %54 : vector<4x128xf32>
      %c0_45 = arith.constant 0 : index
      %c0_46 = arith.constant 0 : index
      %56 = vector.load %arg15[%c0_45, %c0_46] : memref<4x128xf32, #tpu.memory_space<vmem>>, vector<4x128xf32>
      tpu.vector_store %arg15[%c0_45, %c0_46], %55 {strides = array<i32>} : memref<4x128xf32, #tpu.memory_space<vmem>>, vector<4x128xf32>,
    } else {
    }
    return
  }
  func.func @transform_0(%arg0: i32) -> (i32, i32) {
    %c0_i32 = arith.constant 0 : i32
    %c0_i32_0 = arith.constant 0 : i32
    return %arg0, %c0_i32 : i32, i32
  }
  func.func @transform_1(%arg0: i32) -> (i32, i32) {
    %c0_i32 = arith.constant 0 : i32
    %c0_i32_0 = arith.constant 0 : i32
    %c0_i32_1 = arith.constant 0 : i32
    return %c0_i32, %c0_i32_0 : i32, i32
  }
  func.func @transform_2(%arg0: i32) -> (i32, i32) {
    %c0_i32 = arith.constant 0 : i32
    %c0_i32_0 = arith.constant 0 : i32
    return %arg0, %c0_i32 : i32, i32
  }
  func.func @transform_3(%arg0: i32) -> (i32, i32) {
    %c0_i32 = arith.constant 0 : i32
    %c0_i32_0 = arith.constant 0 : i32
    return %c0_i32, %arg0 : i32, i32
  }
  func.func @transform_4(%arg0: i32) -> (i32, i32) {
    %c0_i32 = arith.constant 0 : i32
    %c0_i32_0 = arith.constant 0 : i32
    %c0_i32_1 = arith.constant 0 : i32
    return %c0_i32, %c0_i32_0 : i32, i32
  }
  func.func @transform_5(%arg0: i32) -> (i32, i32) {
    %c0_i32 = arith.constant 0 : i32
    %c0_i32_0 = arith.constant 0 : i32
    %c0_i32_1 = arith.constant 0 : i32
    return %c0_i32, %c0_i32_0 : i32, i32
  }
  func.func @transform_6(%arg0: i32) -> (i32, i32) {
    %c0_i32 = arith.constant 0 : i32
    %c0_i32_0 = arith.constant 0 : i32
    %c0_i32_1 = arith.constant 0 : i32
    return %c0_i32, %c0_i32_0 : i32, i32
  }
  func.func @transform_7(%arg0: i32) -> (i32, i32) {
    %c0_i32 = arith.constant 0 : i32
    %c0_i32_0 = arith.constant 0 : i32
    %c0_i32_1 = arith.constant 0 : i32
    return %c0_i32, %c0_i32_0 : i32, i32
  }
  func.func @transform_8(%arg0: i32) -> (i32, i32) {
    %c0_i32 = arith.constant 0 : i32
    %c0_i32_0 = arith.constant 0 : i32
    %c0_i32_1 = arith.constant 0 : i32
    return %c0_i32, %c0_i32_0 : i32, i32
  }
  func.func @transform_9(%arg0: i32) -> (i32, i32) {
    %c0_i32 = arith.constant 0 : i32
    %c0_i32_0 = arith.constant 0 : i32
    %c0_i32_1 = arith.constant 0 : i32
    return %c0_i32, %c0_i32_0 : i32, i32
  }
  func.func @transform_10(%arg0: i32) -> (i32, i32) {
    %c0_i32 = arith.constant 0 : i32
    %c0_i32_0 = arith.constant 0 : i32
    %c0_i32_1 = arith.constant 0 : i32
    return %c0_i32, %c0_i32_0 : i32, i32
  }
  func.func @transform_11(%arg0: i32) -> (i32, i32) {
    %c0_i32 = arith.constant 0 : i32
    %c0_i32_0 = arith.constant 0 : i32
    %c0_i32_1 = arith.constant 0 : i32
    return %c0_i32, %c0_i32_0 : i32, i32
  }
  func.func @transform_12(%arg0: i32) -> (i32, i32) {
    %c0_i32 = arith.constant 0 : i32
    %c0_i32_0 = arith.constant 0 : i32
    %c0_i32_1 = arith.constant 0 : i32
    return %c0_i32, %c0_i32_0 : i32, i32
  }
  func.func @transform_13(%arg0: i32) -> (i32, i32) {
    %c0_i32 = arith.constant 0 : i32
    %c0_i32_0 = arith.constant 0 : i32
    return %arg0, %c0_i32 : i32, i32
  }
  func.func @transform_14(%arg0: i32) -> (i32, i32) {
    %c0_i32 = arith.constant 0 : i32
    %c0_i32_0 = arith.constant 0 : i32
    %c0_i32_1 = arith.constant 0 : i32
    return %c0_i32, %c0_i32_0 : i32, i32
  }
}

module attributes {stable_mosaic.version = 11 : i64} {
  func.func @gin_pool_predict_kernel(%arg0: i32, %arg1: memref<256x128xbf16, #tpu.memory_space<vmem>>, %arg2: memref<1024x128xbf16, #tpu.memory_space<vmem>>, %arg3: memref<256x1024xbf16, #tpu.memory_space<vmem>>, %arg4: memref<4x256xbf16, #tpu.memory_space<vmem>>, %arg5: memref<4x1xf32, #tpu.memory_space<vmem>>, %arg6: memref<128x256xbf16, #tpu.memory_space<vmem>>, %arg7: memref<1x256xf32, #tpu.memory_space<vmem>>, %arg8: memref<256x128xbf16, #tpu.memory_space<vmem>>, %arg9: memref<1x128xf32, #tpu.memory_space<vmem>>, %arg10: memref<128x128xbf16, #tpu.memory_space<vmem>>, %arg11: memref<1x128xf32, #tpu.memory_space<vmem>>, %arg12: memref<4x128xf32, #tpu.memory_space<vmem>>, %arg13: memref<4x128xf32, #tpu.memory_space<vmem>>) attributes {dimension_semantics = [#tpu.dimension_semantics<arbitrary>], iteration_bounds = array<i64: 2>, scalar_prefetch = 0 : i64, scratch_operands = 1 : i64, tpu.core_type = #tpu.core_type<tc>, window_params = [{transform_indices = @transform_0, window_bounds = array<i64: 256, 128>}, {pipeline_mode = #tpu.pipeline_mode<synchronous>, transform_indices = @transform_1, window_bounds = array<i64: 1024, 128>}, {transform_indices = @transform_2, window_bounds = array<i64: 256, 1024>}, {transform_indices = @transform_3, window_bounds = array<i64: 4, 256>}, {pipeline_mode = #tpu.pipeline_mode<synchronous>, transform_indices = @transform_4, window_bounds = array<i64: 4, 1>}, {pipeline_mode = #tpu.pipeline_mode<synchronous>, transform_indices = @transform_5, window_bounds = array<i64: 128, 256>}, {pipeline_mode = #tpu.pipeline_mode<synchronous>, transform_indices = @transform_6, window_bounds = array<i64: 1, 256>}, {pipeline_mode = #tpu.pipeline_mode<synchronous>, transform_indices = @transform_7, window_bounds = array<i64: 256, 128>}, {pipeline_mode = #tpu.pipeline_mode<synchronous>, transform_indices = @transform_8, window_bounds = array<i64: 1, 128>}, {pipeline_mode = #tpu.pipeline_mode<synchronous>, transform_indices = @transform_9, window_bounds = array<i64: 128, 128>}, {pipeline_mode = #tpu.pipeline_mode<synchronous>, transform_indices = @transform_10, window_bounds = array<i64: 1, 128>}, {pipeline_mode = #tpu.pipeline_mode<synchronous>, transform_indices = @transform_11, window_bounds = array<i64: 4, 128>}]} {
    %c0_i32 = arith.constant 0 : i32
    %0 = arith.cmpi eq, %arg0, %c0_i32 : i32
    %1 = arith.extui %0 : i1 to i32
    %c0_i32_0 = arith.constant 0 : i32
    %2 = arith.cmpi ne, %1, %c0_i32_0 : i32
    scf.if %2 {
      %cst_26 = arith.constant 0.000000e+00 : f32
      %34 = vector.broadcast %cst_26 : f32 to vector<4x128xf32>
      %c0_27 = arith.constant 0 : index
      %c0_28 = arith.constant 0 : index
      %35 = vector.load %arg13[%c0_27, %c0_28] : memref<4x128xf32, #tpu.memory_space<vmem>>, vector<4x128xf32>
      tpu.vector_store %arg13[%c0_27, %c0_28], %34 {strides = array<i32>} : memref<4x128xf32, #tpu.memory_space<vmem>>, vector<4x128xf32>,
      %cst_29 = arith.constant 0.000000e+00 : f32
      %36 = vector.broadcast %cst_29 : f32 to vector<4x128xf32>
      %c0_30 = arith.constant 0 : index
      %c0_31 = arith.constant 0 : index
      %37 = vector.load %arg12[%c0_30, %c0_31] : memref<4x128xf32, #tpu.memory_space<vmem>>, vector<4x128xf32>
      tpu.vector_store %arg12[%c0_30, %c0_31], %36 {strides = array<i32>} : memref<4x128xf32, #tpu.memory_space<vmem>>, vector<4x128xf32>,
    } else {
    }
    %c0 = arith.constant 0 : index
    %c0_1 = arith.constant 0 : index
    %3 = vector.load %arg1[%c0, %c0_1] : memref<256x128xbf16, #tpu.memory_space<vmem>>, vector<256x128xbf16>
    %4 = arith.extf %3 : vector<256x128xbf16> to vector<256x128xf32>
    %c0_2 = arith.constant 0 : index
    %c0_3 = arith.constant 0 : index
    %5 = vector.load %arg3[%c0_2, %c0_3] : memref<256x1024xbf16, #tpu.memory_space<vmem>>, vector<256x1024xbf16>
    %c0_4 = arith.constant 0 : index
    %c0_5 = arith.constant 0 : index
    %6 = vector.load %arg2[%c0_4, %c0_5] : memref<1024x128xbf16, #tpu.memory_space<vmem>>, vector<1024x128xbf16>
    %cst = arith.constant dense<0.000000e+00> : vector<256x128xf32>
    %7 = tpu.matmul %5, %6, %cst {dimension_numbers = #tpu.dot_dimension_numbers<[1], [0], [0], [1], [0, 0, 1, 1], [], []>} : vector<256x1024xbf16>, vector<1024x128xbf16>, vector<256x128xf32> -> vector<256x128xf32>
    %cst_6 = arith.constant 1.000000e+00 : f32
    %8 = vector.broadcast %cst_6 : f32 to vector<256x128xf32>
    %9 = arith.mulf %8, %4 : vector<256x128xf32>
    %10 = arith.addf %9, %7 : vector<256x128xf32>
    %11 = arith.truncf %10 : vector<256x128xf32> to vector<256x128xbf16>
    %c0_7 = arith.constant 0 : index
    %c0_8 = arith.constant 0 : index
    %12 = vector.load %arg6[%c0_7, %c0_8] : memref<128x256xbf16, #tpu.memory_space<vmem>>, vector<128x256xbf16>
    %cst_9 = arith.constant dense<0.000000e+00> : vector<256x256xf32>
    %13 = tpu.matmul %11, %12, %cst_9 {dimension_numbers = #tpu.dot_dimension_numbers<[1], [0], [0], [1], [0, 0, 1, 1], [], []>} : vector<256x128xbf16>, vector<128x256xbf16>, vector<256x256xf32> -> vector<256x256xf32>
    %c0_10 = arith.constant 0 : index
    %c0_11 = arith.constant 0 : index
    %14 = vector.load %arg7[%c0_10, %c0_11] : memref<1x256xf32, #tpu.memory_space<vmem>>, vector<1x256xf32>
    %15 = vector.broadcast %14 : vector<1x256xf32> to vector<256x256xf32>
    %16 = arith.addf %13, %15 : vector<256x256xf32>
    %cst_12 = arith.constant 0.000000e+00 : f32
    %17 = vector.broadcast %cst_12 : f32 to vector<256x256xf32>
    %18 = arith.maximumf %16, %17 : vector<256x256xf32>
    %19 = arith.truncf %18 : vector<256x256xf32> to vector<256x256xbf16>
    %c0_13 = arith.constant 0 : index
    %c0_14 = arith.constant 0 : index
    %20 = vector.load %arg8[%c0_13, %c0_14] : memref<256x128xbf16, #tpu.memory_space<vmem>>, vector<256x128xbf16>
    %cst_15 = arith.constant dense<0.000000e+00> : vector<256x128xf32>
    %21 = tpu.matmul %19, %20, %cst_15 {dimension_numbers = #tpu.dot_dimension_numbers<[1], [0], [0], [1], [0, 0, 1, 1], [], []>} : vector<256x256xbf16>, vector<256x128xbf16>, vector<256x128xf32> -> vector<256x128xf32>
    %c0_16 = arith.constant 0 : index
    %c0_17 = arith.constant 0 : index
    %22 = vector.load %arg9[%c0_16, %c0_17] : memref<1x128xf32, #tpu.memory_space<vmem>>, vector<1x128xf32>
    %23 = vector.broadcast %22 : vector<1x128xf32> to vector<256x128xf32>
    %24 = arith.addf %21, %23 : vector<256x128xf32>
    %c0_18 = arith.constant 0 : index
    %c0_19 = arith.constant 0 : index
    %25 = vector.load %arg13[%c0_18, %c0_19] : memref<4x128xf32, #tpu.memory_space<vmem>>, vector<4x128xf32>
    %c0_20 = arith.constant 0 : index
    %c0_21 = arith.constant 0 : index
    %26 = vector.load %arg4[%c0_20, %c0_21] : memref<4x256xbf16, #tpu.memory_space<vmem>>, vector<4x256xbf16>
    %27 = arith.truncf %24 : vector<256x128xf32> to vector<256x128xbf16>
    %cst_22 = arith.constant dense<0.000000e+00> : vector<4x128xf32>
    %28 = tpu.matmul %26, %27, %cst_22 {dimension_numbers = #tpu.dot_dimension_numbers<[1], [0], [0], [1], [0, 0, 1, 1], [], []>} : vector<4x256xbf16>, vector<256x128xbf16>, vector<4x128xf32> -> vector<4x128xf32>
    %29 = arith.addf %25, %28 : vector<4x128xf32>
    %c0_23 = arith.constant 0 : index
    %c0_24 = arith.constant 0 : index
    %30 = vector.load %arg13[%c0_23, %c0_24] : memref<4x128xf32, #tpu.memory_space<vmem>>, vector<4x128xf32>
    tpu.vector_store %arg13[%c0_23, %c0_24], %29 {strides = array<i32>} : memref<4x128xf32, #tpu.memory_space<vmem>>, vector<4x128xf32>,
    %c1_i32 = arith.constant 1 : i32
    %31 = arith.cmpi eq, %arg0, %c1_i32 : i32
    %32 = arith.extui %31 : i1 to i32
    %c0_i32_25 = arith.constant 0 : i32
    %33 = arith.cmpi ne, %32, %c0_i32_25 : i32
    scf.if %33 {
      %c0_26 = arith.constant 0 : index
      %c0_27 = arith.constant 0 : index
      %34 = vector.load %arg13[%c0_26, %c0_27] : memref<4x128xf32, #tpu.memory_space<vmem>>, vector<4x128xf32>
      %c0_28 = arith.constant 0 : index
      %c0_29 = arith.constant 0 : index
      %35 = vector.load %arg5[%c0_28, %c0_29] : memref<4x1xf32, #tpu.memory_space<vmem>>, vector<4x1xf32>
      %36 = vector.broadcast %35 : vector<4x1xf32> to vector<4x128xf32>
      %37 = arith.mulf %34, %36 : vector<4x128xf32>
      %38 = arith.truncf %37 : vector<4x128xf32> to vector<4x128xbf16>
      %c0_30 = arith.constant 0 : index
      %c0_31 = arith.constant 0 : index
      %39 = vector.load %arg10[%c0_30, %c0_31] : memref<128x128xbf16, #tpu.memory_space<vmem>>, vector<128x128xbf16>
      %cst_32 = arith.constant dense<0.000000e+00> : vector<4x128xf32>
      %40 = tpu.matmul %38, %39, %cst_32 {dimension_numbers = #tpu.dot_dimension_numbers<[1], [0], [0], [1], [0, 0, 1, 1], [], []>} : vector<4x128xbf16>, vector<128x128xbf16>, vector<4x128xf32> -> vector<4x128xf32>
      %c0_33 = arith.constant 0 : index
      %c0_34 = arith.constant 0 : index
      %41 = vector.load %arg11[%c0_33, %c0_34] : memref<1x128xf32, #tpu.memory_space<vmem>>, vector<1x128xf32>
      %42 = vector.broadcast %41 : vector<1x128xf32> to vector<4x128xf32>
      %43 = arith.addf %40, %42 : vector<4x128xf32>
      %c0_35 = arith.constant 0 : index
      %c0_36 = arith.constant 0 : index
      %44 = vector.load %arg12[%c0_35, %c0_36] : memref<4x128xf32, #tpu.memory_space<vmem>>, vector<4x128xf32>
      tpu.vector_store %arg12[%c0_35, %c0_36], %43 {strides = array<i32>} : memref<4x128xf32, #tpu.memory_space<vmem>>, vector<4x128xf32>,
    } else {
    }
    return
  }
  func.func @transform_0(%arg0: i32) -> (i32, i32) {
    %c0_i32 = arith.constant 0 : i32
    %c0_i32_0 = arith.constant 0 : i32
    return %arg0, %c0_i32 : i32, i32
  }
  func.func @transform_1(%arg0: i32) -> (i32, i32) {
    %c0_i32 = arith.constant 0 : i32
    %c0_i32_0 = arith.constant 0 : i32
    %c0_i32_1 = arith.constant 0 : i32
    return %c0_i32, %c0_i32_0 : i32, i32
  }
  func.func @transform_2(%arg0: i32) -> (i32, i32) {
    %c0_i32 = arith.constant 0 : i32
    %c0_i32_0 = arith.constant 0 : i32
    return %arg0, %c0_i32 : i32, i32
  }
  func.func @transform_3(%arg0: i32) -> (i32, i32) {
    %c0_i32 = arith.constant 0 : i32
    %c0_i32_0 = arith.constant 0 : i32
    return %c0_i32, %arg0 : i32, i32
  }
  func.func @transform_4(%arg0: i32) -> (i32, i32) {
    %c0_i32 = arith.constant 0 : i32
    %c0_i32_0 = arith.constant 0 : i32
    %c0_i32_1 = arith.constant 0 : i32
    return %c0_i32, %c0_i32_0 : i32, i32
  }
  func.func @transform_5(%arg0: i32) -> (i32, i32) {
    %c0_i32 = arith.constant 0 : i32
    %c0_i32_0 = arith.constant 0 : i32
    %c0_i32_1 = arith.constant 0 : i32
    return %c0_i32, %c0_i32_0 : i32, i32
  }
  func.func @transform_6(%arg0: i32) -> (i32, i32) {
    %c0_i32 = arith.constant 0 : i32
    %c0_i32_0 = arith.constant 0 : i32
    %c0_i32_1 = arith.constant 0 : i32
    return %c0_i32, %c0_i32_0 : i32, i32
  }
  func.func @transform_7(%arg0: i32) -> (i32, i32) {
    %c0_i32 = arith.constant 0 : i32
    %c0_i32_0 = arith.constant 0 : i32
    %c0_i32_1 = arith.constant 0 : i32
    return %c0_i32, %c0_i32_0 : i32, i32
  }
  func.func @transform_8(%arg0: i32) -> (i32, i32) {
    %c0_i32 = arith.constant 0 : i32
    %c0_i32_0 = arith.constant 0 : i32
    %c0_i32_1 = arith.constant 0 : i32
    return %c0_i32, %c0_i32_0 : i32, i32
  }
  func.func @transform_9(%arg0: i32) -> (i32, i32) {
    %c0_i32 = arith.constant 0 : i32
    %c0_i32_0 = arith.constant 0 : i32
    %c0_i32_1 = arith.constant 0 : i32
    return %c0_i32, %c0_i32_0 : i32, i32
  }
  func.func @transform_10(%arg0: i32) -> (i32, i32) {
    %c0_i32 = arith.constant 0 : i32
    %c0_i32_0 = arith.constant 0 : i32
    %c0_i32_1 = arith.constant 0 : i32
    return %c0_i32, %c0_i32_0 : i32, i32
  }
  func.func @transform_11(%arg0: i32) -> (i32, i32) {
    %c0_i32 = arith.constant 0 : i32
    %c0_i32_0 = arith.constant 0 : i32
    %c0_i32_1 = arith.constant 0 : i32
    return %c0_i32, %c0_i32_0 : i32, i32
  }
}

</mosaic_0001>

<llo_original>
// kernel: gnn_forward.5
$region0: #{gnn_forward.5}
  #allocation0 [shape = 'u32[]', space=smem, size = 0x4, offset = 0x4, fixed_abs, tag = 'smem constant byte address 0x4 - core index']
  #allocation1 [shape = 'u32[144,128]{1,0:T(1,128)}', space=vmem, size = 0x12000, scoped, tag = 'internal scratch']
  #allocation2 [shape = 'f32[4,128]{1,0:T(4,128)}', space=vmem, size = 0x800, scoped, tag = 'scratch operand']
  %s0 = inlined_call_operand.vmem [shape: bf16[512,128], index: 0, kind: input, shape index: {}]
  %s1 = inlined_call_operand.vmem [shape: bf16[1024,128], index: 1, kind: input, shape index: {}]
  %s2 = inlined_call_operand.vmem [shape: bf16[512,1024], index: 2, kind: input, shape index: {}]
  %s3 = inlined_call_operand.vmem [shape: bf16[4,512], index: 3, kind: input, shape index: {}]
  %s4 = inlined_call_operand.vmem [shape: f32[4,128], index: 4, kind: input, shape index: {}]
  %s5 = inlined_call_operand.vmem [shape: bf16[128,256], index: 5, kind: input, shape index: {}]
  %s6 = inlined_call_operand.vmem [shape: f32[1,256], index: 6, kind: input, shape index: {}]
  %s7 = inlined_call_operand.vmem [shape: bf16[256,128], index: 7, kind: input, shape index: {}]
  %s8 = inlined_call_operand.vmem [shape: f32[1,128], index: 8, kind: input, shape index: {}]
  %s9 = inlined_call_operand.vmem [shape: bf16[128,256], index: 9, kind: input, shape index: {}]
  %s10 = inlined_call_operand.vmem [shape: f32[1,256], index: 10, kind: input, shape index: {}]
  %s11 = inlined_call_operand.vmem [shape: bf16[256,128], index: 11, kind: input, shape index: {}]
  %s12 = inlined_call_operand.vmem [shape: f32[1,128], index: 12, kind: input, shape index: {}]
  %s13 = inlined_call_operand.vmem [shape: bf16[512,128], index: 13, kind: output, shape index: {0}]
  %s14 = inlined_call_operand.vmem [shape: f32[4,128], index: 14, kind: output, shape index: {1}]
  %15 = xla_tuple %s13, %s14
  %s16 = sld [smem:[#allocation0]]
  $region101: #{gnn_forward.5} parent=0
    _
  %s18 = ssub.s32 1, %s16
  %s19 = scalar_select 0, %s18, %s16
  loop: start=0, step=1, limit=4
  $region2: #{gnn_forward.5} parent=0 // loop_pre_header
    _
  $region3: #{gnn_forward.5} parent=0 // loop_header
    %s21 = sphi 0, %s25
    %p22 = scmp.ge.s32.totalorder %s21, 4
    %s31 = sphi 0, %s33
    %s34 = sphi 0, %s31
    %s35 = sphi 0, %s34
    %s51 = sphi 0, %s35
    %s55 = sphi 0, %s55
    %s57 = sphi 0, %s55
    %s58 = sphi 0, %s57
    %s72 = sphi 0, %s58
    %s78 = sphi 0, %s80
    %s81 = sphi 0, %s78
    %s82 = sphi 0, %s81
    %s98 = sphi 0, %s82
    %s104 = sphi 0, %s106
    %s107 = sphi 0, %s104
    %s108 = sphi 0, %s107
    %s124 = sphi 0, %s108
    %s128 = sphi 0, %s128
    %s130 = sphi 0, %s128
    %s131 = sphi 0, %s130
    %s145 = sphi 0, %s131
    %s149 = sphi 0, %s149
    %s151 = sphi 0, %s149
    %s152 = sphi 0, %s151
    %s166 = sphi 0, %s152
    %s170 = sphi 0, %s170
    %s172 = sphi 0, %s170
    %s173 = sphi 0, %s172
    %s187 = sphi 0, %s173
    %s191 = sphi 0, %s191
    %s193 = sphi 0, %s191
    %s194 = sphi 0, %s193
    %s208 = sphi 0, %s194
    %s212 = sphi 0, %s212
    %s214 = sphi 0, %s212
    %s215 = sphi 0, %s214
    %s229 = sphi 0, %s215
    %s233 = sphi 0, %s233
    %s235 = sphi 0, %s233
    %s236 = sphi 0, %s235
    %s250 = sphi 0, %s236
    %s254 = sphi 0, %s254
    %s256 = sphi 0, %s254
    %s257 = sphi 0, %s256
    %s271 = sphi 0, %s257
    %s275 = sphi 0, %s275
    %s277 = sphi 0, %s275
    %s278 = sphi 0, %s277
    %s292 = sphi 0, %s278
    %s296 = sphi 0, %s296
    %s298 = sphi 0, %s296
    %s299 = sphi 0, %s298
    %s313 = sphi 0, %s299
    %s319 = sphi 0, %s321
    %s322 = sphi 0, %s319
    %s323 = sphi 0, %s322
    %s339 = sphi 0, %s323
    %s343 = sphi 0, %s343
    %s345 = sphi 0, %s343
    %s346 = sphi 0, %s345
    %s360 = sphi 0, %s346
  $region4: #{gnn_forward.5} parent=0 // loop_header_branch
    %24 = sbr.rel (%p22) target = $region8
  $region5: #{gnn_forward.5} parent=0 // loop_body
    %s26 = ssub.s32 %s21, 1
    %s27 = ssub.s32 %s21, 2
    %s28 = sadd.s32 %s21, 1
    %s29 = ssub.s32 %s21, %s28
    %p30 = scmp.eq.s32.totalorder %s29, 0
    %s32 = sadd.s32 %s31, 1
    %s33 = scalar_select %p30, %s31, %s32
    %p36 = pneg %p30
    %p37 = scmp.eq.s32.totalorder %s21, 1
    %p38 = por %p36, %p37
    %p39 = scmp.ne.s32.totalorder %s31, %s34
    %p40 = scmp.eq.s32.totalorder %s21, 0
    %p41 = por %p39, %p40
    %p42 = scmp.ne.s32.totalorder %s31, %s34
    %p43 = scmp.eq.s32.totalorder %s26, 1
    %p44 = por %p42, %p43
    %p45 = scmp.ne.s32.totalorder %s34, %s35
    %p46 = scmp.eq.s32.totalorder %s26, 0
    %p47 = por %p45, %p46
    %p48 = scmp.ne.s32.totalorder %s34, %s35
    %p49 = scmp.eq.s32.totalorder %s27, 1
    %p50 = por %p48, %p49
    %p52 = scmp.ne.s32.totalorder %s35, %s51
    %p53 = scmp.eq.s32.totalorder %s27, 0
    %p54 = por %p52, %p53
    %s56 = sadd.s32 %s55, 1
    %p59 = scmp.eq.s32.totalorder %s21, 1
    %p60 = scmp.ne.s32.totalorder %s55, %s57
    %p61 = scmp.eq.s32.totalorder %s21, 0
    %p62 = por %p60, %p61
    %p63 = scmp.ne.s32.totalorder %s55, %s57
    %p64 = scmp.eq.s32.totalorder %s26, 1
    %p65 = por %p63, %p64
    %p66 = scmp.ne.s32.totalorder %s57, %s58
    %p67 = scmp.eq.s32.totalorder %s26, 0
    %p68 = por %p66, %p67
    %p69 = scmp.ne.s32.totalorder %s57, %s58
    %p70 = scmp.eq.s32.totalorder %s27, 1
    %p71 = por %p69, %p70
    %p73 = scmp.ne.s32.totalorder %s58, %s72
    %p74 = scmp.eq.s32.totalorder %s27, 0
    %p75 = por %p73, %p74
    %s76 = ssub.s32 %s21, %s28
    %p77 = scmp.eq.s32.totalorder %s76, 0
    %s79 = sadd.s32 %s78, 1
    %s80 = scalar_select %p77, %s78, %s79
    %p83 = pneg %p77
    %p84 = scmp.eq.s32.totalorder %s21, 1
    %p85 = por %p83, %p84
    %p86 = scmp.ne.s32.totalorder %s78, %s81
    %p87 = scmp.eq.s32.totalorder %s21, 0
    %p88 = por %p86, %p87
    %p89 = scmp.ne.s32.totalorder %s78, %s81
    %p90 = scmp.eq.s32.totalorder %s26, 1
    %p91 = por %p89, %p90
    %p92 = scmp.ne.s32.totalorder %s81, %s82
    %p93 = scmp.eq.s32.totalorder %s26, 0
    %p94 = por %p92, %p93
    %p95 = scmp.ne.s32.totalorder %s81, %s82
    %p96 = scmp.eq.s32.totalorder %s27, 1
    %p97 = por %p95, %p96
    %p99 = scmp.ne.s32.totalorder %s82, %s98
    %p100 = scmp.eq.s32.totalorder %s27, 0
    %p101 = por %p99, %p100
    %s102 = ssub.s32 %s21, %s28
    %p103 = scmp.eq.s32.totalorder %s102, 0
    %s105 = sadd.s32 %s104, 1
    %s106 = scalar_select %p103, %s104, %s105
    %p109 = pneg %p103
    %p110 = scmp.eq.s32.totalorder %s21, 1
    %p111 = por %p109, %p110
    %p112 = scmp.ne.s32.totalorder %s104, %s107
    %p113 = scmp.eq.s32.totalorder %s21, 0
    %p114 = por %p112, %p113
    %p115 = scmp.ne.s32.totalorder %s104, %s107
    %p116 = scmp.eq.s32.totalorder %s26, 1
    %p117 = por %p115, %p116
    %p118 = scmp.ne.s32.totalorder %s107, %s108
    %p119 = scmp.eq.s32.totalorder %s26, 0
    %p120 = por %p118, %p119
    %p121 = scmp.ne.s32.totalorder %s107, %s108
    %p122 = scmp.eq.s32.totalorder %s27, 1
    %p123 = por %p121, %p122
    %p125 = scmp.ne.s32.totalorder %s108, %s124
    %p126 = scmp.eq.s32.totalorder %s27, 0
    %p127 = por %p125, %p126
    %s129 = sadd.s32 %s128, 1
    %p132 = scmp.eq.s32.totalorder %s21, 1
    %p133 = scmp.ne.s32.totalorder %s128, %s130
    %p134 = scmp.eq.s32.totalorder %s21, 0
    %p135 = por %p133, %p134
    %p136 = scmp.ne.s32.totalorder %s128, %s130
    %p137 = scmp.eq.s32.totalorder %s26, 1
    %p138 = por %p136, %p137
    %p139 = scmp.ne.s32.totalorder %s130, %s131
    %p140 = scmp.eq.s32.totalorder %s26, 0
    %p141 = por %p139, %p140
    %p142 = scmp.ne.s32.totalorder %s130, %s131
    %p143 = scmp.eq.s32.totalorder %s27, 1
    %p144 = por %p142, %p143
    %p146 = scmp.ne.s32.totalorder %s131, %s145
    %p147 = scmp.eq.s32.totalorder %s27, 0
    %p148 = por %p146, %p147
    %s150 = sadd.s32 %s149, 1
    %p153 = scmp.eq.s32.totalorder %s21, 1
    %p154 = scmp.ne.s32.totalorder %s149, %s151
    %p155 = scmp.eq.s32.totalorder %s21, 0
    %p156 = por %p154, %p155
    %p157 = scmp.ne.s32.totalorder %s149, %s151
    %p158 = scmp.eq.s32.totalorder %s26, 1
    %p159 = por %p157, %p158
    %p160 = scmp.ne.s32.totalorder %s151, %s152
    %p161 = scmp.eq.s32.totalorder %s26, 0
    %p162 = por %p160, %p161
    %p163 = scmp.ne.s32.totalorder %s151, %s152
    %p164 = scmp.eq.s32.totalorder %s27, 1
    %p165 = por %p163, %p164
    %p167 = scmp.ne.s32.totalorder %s152, %s166
    %p168 = scmp.eq.s32.totalorder %s27, 0
    %p169 = por %p167, %p168
    %s171 = sadd.s32 %s170, 1
    %p174 = scmp.eq.s32.totalorder %s21, 1
    %p175 = scmp.ne.s32.totalorder %s170, %s172
    %p176 = scmp.eq.s32.totalorder %s21, 0
    %p177 = por %p175, %p176
    %p178 = scmp.ne.s32.totalorder %s170, %s172
    %p179 = scmp.eq.s32.totalorder %s26, 1
    %p180 = por %p178, %p179
    %p181 = scmp.ne.s32.totalorder %s172, %s173
    %p182 = scmp.eq.s32.totalorder %s26, 0
    %p183 = por %p181, %p182
    %p184 = scmp.ne.s32.totalorder %s172, %s173
    %p185 = scmp.eq.s32.totalorder %s27, 1
    %p186 = por %p184, %p185
    %p188 = scmp.ne.s32.totalorder %s173, %s187
    %p189 = scmp.eq.s32.totalorder %s27, 0
    %p190 = por %p188, %p189
    %s192 = sadd.s32 %s191, 1
    %p195 = scmp.eq.s32.totalorder %s21, 1
    %p196 = scmp.ne.s32.totalorder %s191, %s193
    %p197 = scmp.eq.s32.totalorder %s21, 0
    %p198 = por %p196, %p197
    %p199 = scmp.ne.s32.totalorder %s191, %s193
    %p200 = scmp.eq.s32.totalorder %s26, 1
    %p201 = por %p199, %p200
    %p202 = scmp.ne.s32.totalorder %s193, %s194
    %p203 = scmp.eq.s32.totalorder %s26, 0
    %p204 = por %p202, %p203
    %p205 = scmp.ne.s32.totalorder %s193, %s194
    %p206 = scmp.eq.s32.totalorder %s27, 1
    %p207 = por %p205, %p206
    %p209 = scmp.ne.s32.totalorder %s194, %s208
    %p210 = scmp.eq.s32.totalorder %s27, 0
    %p211 = por %p209, %p210
    %s213 = sadd.s32 %s212, 1
    %p216 = scmp.eq.s32.totalorder %s21, 1
    %p217 = scmp.ne.s32.totalorder %s212, %s214
    %p218 = scmp.eq.s32.totalorder %s21, 0
    %p219 = por %p217, %p218
    %p220 = scmp.ne.s32.totalorder %s212, %s214
    %p221 = scmp.eq.s32.totalorder %s26, 1
    %p222 = por %p220, %p221
    %p223 = scmp.ne.s32.totalorder %s214, %s215
    %p224 = scmp.eq.s32.totalorder %s26, 0
    %p225 = por %p223, %p224
    %p226 = scmp.ne.s32.totalorder %s214, %s215
    %p227 = scmp.eq.s32.totalorder %s27, 1
    %p228 = por %p226, %p227
    %p230 = scmp.ne.s32.totalorder %s215, %s229
    %p231 = scmp.eq.s32.totalorder %s27, 0
    %p232 = por %p230, %p231
    %s234 = sadd.s32 %s233, 1
    %p237 = scmp.eq.s32.totalorder %s21, 1
    %p238 = scmp.ne.s32.totalorder %s233, %s235
    %p239 = scmp.eq.s32.totalorder %s21, 0
    %p240 = por %p238, %p239
    %p241 = scmp.ne.s32.totalorder %s233, %s235
    %p242 = scmp.eq.s32.totalorder %s26, 1
    %p243 = por %p241, %p242
    %p244 = scmp.ne.s32.totalorder %s235, %s236
    %p245 = scmp.eq.s32.totalorder %s26, 0
    %p246 = por %p244, %p245
    %p247 = scmp.ne.s32.totalorder %s235, %s236
    %p248 = scmp.eq.s32.totalorder %s27, 1
    %p249 = por %p247, %p248
    %p251 = scmp.ne.s32.totalorder %s236, %s250
    %p252 = scmp.eq.s32.totalorder %s27, 0
    %p253 = por %p251, %p252
    %s255 = sadd.s32 %s254, 1
    %p258 = scmp.eq.s32.totalorder %s21, 1
    %p259 = scmp.ne.s32.totalorder %s254, %s256
    %p260 = scmp.eq.s32.totalorder %s21, 0
    %p261 = por %p259, %p260
    %p262 = scmp.ne.s32.totalorder %s254, %s256
    %p263 = scmp.eq.s32.totalorder %s26, 1
    %p264 = por %p262, %p263
    %p265 = scmp.ne.s32.totalorder %s256, %s257
    %p266 = scmp.eq.s32.totalorder %s26, 0
    %p267 = por %p265, %p266
    %p268 = scmp.ne.s32.totalorder %s256, %s257
    %p269 = scmp.eq.s32.totalorder %s27, 1
    %p270 = por %p268, %p269
    %p272 = scmp.ne.s32.totalorder %s257, %s271
    %p273 = scmp.eq.s32.totalorder %s27, 0
    %p274 = por %p272, %p273
    %s276 = sadd.s32 %s275, 1
    %p279 = scmp.eq.s32.totalorder %s21, 1
    %p280 = scmp.ne.s32.totalorder %s275, %s277
    %p281 = scmp.eq.s32.totalorder %s21, 0
    %p282 = por %p280, %p281
    %p283 = scmp.ne.s32.totalorder %s275, %s277
    %p284 = scmp.eq.s32.totalorder %s26, 1
    %p285 = por %p283, %p284
    %p286 = scmp.ne.s32.totalorder %s277, %s278
    %p287 = scmp.eq.s32.totalorder %s26, 0
    %p288 = por %p286, %p287
    %p289 = scmp.ne.s32.totalorder %s277, %s278
    %p290 = scmp.eq.s32.totalorder %s27, 1
    %p291 = por %p289, %p290
    %p293 = scmp.ne.s32.totalorder %s278, %s292
    %p294 = scmp.eq.s32.totalorder %s27, 0
    %p295 = por %p293, %p294
    %s297 = sadd.s32 %s296, 1
    %p300 = scmp.eq.s32.totalorder %s21, 1
    %p301 = scmp.ne.s32.totalorder %s296, %s298
    %p302 = scmp.eq.s32.totalorder %s21, 0
    %p303 = por %p301, %p302
    %p304 = scmp.ne.s32.totalorder %s296, %s298
    %p305 = scmp.eq.s32.totalorder %s26, 1
    %p306 = por %p304, %p305
    %p307 = scmp.ne.s32.totalorder %s298, %s299
    %p308 = scmp.eq.s32.totalorder %s26, 0
    %p309 = por %p307, %p308
    %p310 = scmp.ne.s32.totalorder %s298, %s299
    %p311 = scmp.eq.s32.totalorder %s27, 1
    %p312 = por %p310, %p311
    %p314 = scmp.ne.s32.totalorder %s299, %s313
    %p315 = scmp.eq.s32.totalorder %s27, 0
    %p316 = por %p314, %p315
    %s317 = ssub.s32 %s21, %s28
    %p318 = scmp.eq.s32.totalorder %s317, 0
    %s320 = sadd.s32 %s319, 1
    %s321 = scalar_select %p318, %s319, %s320
    %p324 = pneg %p318
    %p325 = scmp.eq.s32.totalorder %s21, 1
    %p326 = por %p324, %p325
    %p327 = scmp.ne.s32.totalorder %s319, %s322
    %p328 = scmp.eq.s32.totalorder %s21, 0
    %p329 = por %p327, %p328
    %p330 = scmp.ne.s32.totalorder %s319, %s322
    %p331 = scmp.eq.s32.totalorder %s26, 1
    %p332 = por %p330, %p331
    %p333 = scmp.ne.s32.totalorder %s322, %s323
    %p334 = scmp.eq.s32.totalorder %s26, 0
    %p335 = por %p333, %p334
    %p336 = scmp.ne.s32.totalorder %s322, %s323
    %p337 = scmp.eq.s32.totalorder %s27, 1
    %p338 = por %p336, %p337
    %p340 = scmp.ne.s32.totalorder %s323, %s339
    %p341 = scmp.eq.s32.totalorder %s27, 0
    %p342 = por %p340, %p341
    %s344 = sadd.s32 %s343, 1
    %p347 = scmp.eq.s32.totalorder %s21, 1
    %p348 = scmp.ne.s32.totalorder %s343, %s345
    %p349 = scmp.eq.s32.totalorder %s21, 0
    %p350 = por %p348, %p349
    %p351 = scmp.ne.s32.totalorder %s343, %s345
    %p352 = scmp.eq.s32.totalorder %s26, 1
    %p353 = por %p351, %p352
    %p354 = scmp.ne.s32.totalorder %s345, %s346
    %p355 = scmp.eq.s32.totalorder %s26, 0
    %p356 = por %p354, %p355
    %p357 = scmp.ne.s32.totalorder %s345, %s346
    %p358 = scmp.eq.s32.totalorder %s27, 1
    %p359 = por %p357, %p358
    %p361 = scmp.ne.s32.totalorder %s346, %s360
    %p362 = scmp.eq.s32.totalorder %s27, 0
    %p363 = por %p361, %p362
    %p364 = scmp.le.s32.totalorder 1, %s21
    %p365 = scmp.lt.s32.totalorder %s21, 3
    %p366 = pnand %p364, %p365
    %p367 = pneg %p366
    // Predicated region
    $region9: #{gnn_forward.5} parent=5 // pred_check
      _
    $region10: #{gnn_forward.5} parent=5 // pred_check_branch
      %369 = sbr.rel (%p366) target = $region12
    $region11: #{gnn_forward.5} parent=5 // pred_region
      %s370 = ssub.s32 %s21, 1
      // Predicated region
      $region13: #{gnn_forward.5} parent=11 // pred_check
        %p371 = pneg %p68
      $region14: #{gnn_forward.5} parent=11 // pred_check_branch
        %373 = sbr.rel (%p371) target = $region16
      $region15: #{gnn_forward.5} parent=11 // pred_region
        _
      $region16: #{gnn_forward.5} parent=11 // pred_fallthru
        _
      // Predicated region
      $region17: #{gnn_forward.5} parent=11 // pred_check
        %p374 = pneg %p141
      $region18: #{gnn_forward.5} parent=11 // pred_check_branch
        %376 = sbr.rel (%p374) target = $region20
      $region19: #{gnn_forward.5} parent=11 // pred_region
        _
      $region20: #{gnn_forward.5} parent=11 // pred_fallthru
        _
      // Predicated region
      $region21: #{gnn_forward.5} parent=11 // pred_check
        %p377 = pneg %p162
      $region22: #{gnn_forward.5} parent=11 // pred_check_branch
        %379 = sbr.rel (%p377) target = $region24
      $region23: #{gnn_forward.5} parent=11 // pred_region
        _
      $region24: #{gnn_forward.5} parent=11 // pred_fallthru
        _
      // Predicated region
      $region25: #{gnn_forward.5} parent=11 // pred_check
        %p380 = pneg %p183
      $region26: #{gnn_forward.5} parent=11 // pred_check_branch
        %382 = sbr.rel (%p380) target = $region28
      $region27: #{gnn_forward.5} parent=11 // pred_region
        _
      $region28: #{gnn_forward.5} parent=11 // pred_fallthru
        _
      // Predicated region
      $region29: #{gnn_forward.5} parent=11 // pred_check
        %p383 = pneg %p204
      $region30: #{gnn_forward.5} parent=11 // pred_check_branch
        %385 = sbr.rel (%p383) target = $region32
      $region31: #{gnn_forward.5} parent=11 // pred_region
        _
      $region32: #{gnn_forward.5} parent=11 // pred_fallthru
        _
      // Predicated region
      $region33: #{gnn_forward.5} parent=11 // pred_check
        %p386 = pneg %p225
      $region34: #{gnn_forward.5} parent=11 // pred_check_branch
        %388 = sbr.rel (%p386) target = $region36
      $region35: #{gnn_forward.5} parent=11 // pred_region
        _
      $region36: #{gnn_forward.5} parent=11 // pred_fallthru
        _
      // Predicated region
      $region37: #{gnn_forward.5} parent=11 // pred_check
        %p389 = pneg %p246
      $region38: #{gnn_forward.5} parent=11 // pred_check_branch
        %391 = sbr.rel (%p389) target = $region40
      $region39: #{gnn_forward.5} parent=11 // pred_region
        _
      $region40: #{gnn_forward.5} parent=11 // pred_fallthru
        _
      // Predicated region
      $region41: #{gnn_forward.5} parent=11 // pred_check
        %p392 = pneg %p267
      $region42: #{gnn_forward.5} parent=11 // pred_check_branch
        %394 = sbr.rel (%p392) target = $region44
      $region43: #{gnn_forward.5} parent=11 // pred_region
        _
      $region44: #{gnn_forward.5} parent=11 // pred_fallthru
        _
      // Predicated region
      $region45: #{gnn_forward.5} parent=11 // pred_check
        %p395 = pneg %p288
      $region46: #{gnn_forward.5} parent=11 // pred_check_branch
        %397 = sbr.rel (%p395) target = $region48
      $region47: #{gnn_forward.5} parent=11 // pred_region
        _
      $region48: #{gnn_forward.5} parent=11 // pred_fallthru
        _
      // Predicated region
      $region49: #{gnn_forward.5} parent=11 // pred_check
        %p398 = pneg %p309
      $region50: #{gnn_forward.5} parent=11 // pred_check_branch
        %400 = sbr.rel (%p398) target = $region52
      $region51: #{gnn_forward.5} parent=11 // pred_region
        _
      $region52: #{gnn_forward.5} parent=11 // pred_fallthru
        _
    $region12: #{gnn_forward.5} parent=5 // pred_fallthru
      _
    %p401 = scmp.lt.s32.totalorder %s21, 2
    // Predicated region
    $region53: #{gnn_forward.5} parent=5 // pred_check
      %p402 = pneg %p401
    $region54: #{gnn_forward.5} parent=5 // pred_check_branch
      %404 = sbr.rel (%p402) target = $region56
    $region55: #{gnn_forward.5} parent=5 // pred_region
      // Predicated region
      $region57: #{gnn_forward.5} parent=55 // pred_check
        %p405 = pneg %p41
      $region58: #{gnn_forward.5} parent=55 // pred_check_branch
        %407 = sbr.rel (%p405) target = $region60
      $region59: #{gnn_forward.5} parent=55 // pred_region
        %s408 = smul.u32 32, %s21
        %p409 = scmp.lt.s32.totalorder %s408, 63
        %s410 = scalar_select %p409, %s408, 63
        %s411 = smul.addr %s410, 4
        %s412 = scalar_lea.vmem %s0, %s411
        %s413 = smul.u32 32, %s21
      $region60: #{gnn_forward.5} parent=55 // pred_fallthru
        _
      // Predicated region
      $region61: #{gnn_forward.5} parent=55 // pred_check
        %p414 = pneg %p88
      $region62: #{gnn_forward.5} parent=55 // pred_check_branch
        %416 = sbr.rel (%p414) target = $region64
      $region63: #{gnn_forward.5} parent=55 // pred_region
        %s417 = smul.u32 32, %s21
        %p418 = scmp.lt.s32.totalorder %s417, 63
        %s419 = scalar_select %p418, %s417, 63
        %s420 = smul.addr %s419, 8
        %s421 = smul.addr %s420, 4
        %s422 = scalar_lea.vmem %s2, %s421
        %s423 = smul.u32 32, %s21
      $region64: #{gnn_forward.5} parent=55 // pred_fallthru
        _
      // Predicated region
      $region65: #{gnn_forward.5} parent=55 // pred_check
        %p424 = pneg %p114
      $region66: #{gnn_forward.5} parent=55 // pred_check_branch
        %426 = sbr.rel (%p424) target = $region68
      $region67: #{gnn_forward.5} parent=55 // pred_region
        %s427 = smul.u32 2, %s21
        %p428 = scmp.lt.s32.totalorder %s427, 3
        %s429 = scalar_select %p428, %s427, 3
        %s430 = smul.addr %s429, 2
        %s431 = scalar_lea.vmem %s3, %s430
        %s432 = smul.u32 2, %s21
      $region68: #{gnn_forward.5} parent=55 // pred_fallthru
        _
    $region56: #{gnn_forward.5} parent=5 // pred_fallthru
      _
    %p433 = scmp.le.s32.totalorder 1, %s21
    %p434 = scmp.lt.s32.totalorder %s21, 3
    %p435 = pnand %p433, %p434
    %p436 = pneg %p435
    // Predicated region
    $region69: #{gnn_forward.5} parent=5 // pred_check
      _
    $region70: #{gnn_forward.5} parent=5 // pred_check_branch
      %438 = sbr.rel (%p435) target = $region72
    $region71: #{gnn_forward.5} parent=5 // pred_region
      %s439 = ssub.s32 %s21, 1
      %s440 = smul.u32 32, %s26
      %p441 = scmp.lt.s32.totalorder %s440, 63
      %s442 = scalar_select %p441, %s440, 63
      %s443 = smul.addr %s442, 4
      %s444 = scalar_lea.vmem %s0, %s443
      %p445 = pneg %p47
      %p446 = pneg %p44
      %p447 = pneg %p68
      %p448 = pneg %p65
      %s449 = smul.u32 32, %s26
      %p450 = scmp.lt.s32.totalorder %s449, 63
      %s451 = scalar_select %p450, %s449, 63
      %s452 = smul.addr %s451, 8
      %s453 = smul.addr %s452, 4
      %s454 = scalar_lea.vmem %s2, %s453
      %p455 = pneg %p94
      %p456 = pneg %p91
      %s457 = smul.u32 2, %s26
      %p458 = scmp.lt.s32.totalorder %s457, 3
      %s459 = scalar_select %p458, %s457, 3
      %s460 = smul.addr %s459, 2
      %s461 = scalar_lea.vmem %s3, %s460
      %p462 = pneg %p120
      %p463 = pneg %p117
      %p464 = pneg %p141
      %p465 = pneg %p138
      %p466 = pneg %p162
      %p467 = pneg %p159
      %p468 = pneg %p183
      %p469 = pneg %p180
      %p470 = pneg %p204
      %p471 = pneg %p201
      %p472 = pneg %p225
      %p473 = pneg %p222
      %p474 = pneg %p246
      %p475 = pneg %p243
      %p476 = pneg %p267
      %p477 = pneg %p264
      %p478 = pneg %p288
      %p479 = pneg %p285
      %p480 = pneg %p309
      %p481 = pneg %p306
      %p482 = pneg %p335
      %p483 = pneg %p332
      %s484 = smul.u32 32, %s26
      %p485 = scmp.lt.s32.totalorder %s484, 63
      %s486 = scalar_select %p485, %s484, 63
      %s487 = smul.addr %s486, 4
      %s488 = scalar_lea.vmem %s13, %s487
      %p489 = pneg %p356
      %p490 = pneg %p353
      %s491 = smul.u32 32, %s26
      %p492 = scmp.lt.s32.totalorder %s491, 63
      %s493 = scalar_select %p492, %s491, 63
      %s494 = smul.addr %s493, 4
      %s495 = scalar_lea.vmem %s0, %s494
      %s496 = smul.u32 32, %s26
      %s497 = smul.u32 32, %s26
      %p498 = scmp.lt.s32.totalorder %s497, 63
      %s499 = scalar_select %p498, %s497, 63
      %s500 = smul.addr %s499, 8
      %s501 = smul.addr %s500, 4
      %s502 = scalar_lea.vmem %s2, %s501
      %s503 = smul.u32 32, %s26
      %s504 = smul.u32 2, %s26
      %p505 = scmp.lt.s32.totalorder %s504, 3
      %s506 = scalar_select %p505, %s504, 3
      %s507 = smul.addr %s506, 2
      %s508 = scalar_lea.vmem %s3, %s507
      %s509 = smul.u32 2, %s26
      %s510 = smul.u32 32, %s26
      %p511 = scmp.lt.s32.totalorder %s510, 63
      %s512 = scalar_select %p511, %s510, 63
      %s513 = smul.addr %s512, 4
      %s514 = scalar_lea.vmem %s13, %s513
      %s515 = smul.u32 32, %s26
      %p517 = scmp.eq.s32.totalorder %s26, 0
      // Predicated region
      $region73: #{gnn_forward.5} parent=71 // pred_check
        %p518 = pneg %p517
      $region74: #{gnn_forward.5} parent=71 // pred_check_branch
        %520 = sbr.rel (%p518) target = $region76
      $region75: #{gnn_forward.5} parent=71 // pred_region
        %521 = vst [vmem:[#allocation2] sm:$0xf] 0.0
        %522 = vst [vmem:[%s14] sm:$0xf] 0.0
      $region76: #{gnn_forward.5} parent=71 // pred_fallthru
        _
      %v523 = vld [vmem:[%s495] sm:$0xf]
      %v524 = vld [vmem:[%s495 + $0x4] sm:$0xf]
      %v525 = vld [vmem:[%s495 + $0x8] sm:$0xf]
      %v526 = vld [vmem:[%s495 + $0xc] sm:$0xf]
      %v527 = vld [vmem:[%s495 + $0x10] sm:$0xf]
      %v528 = vld [vmem:[%s495 + $0x14] sm:$0xf]
      %v529 = vld [vmem:[%s495 + $0x18] sm:$0xf]
      %v530 = vld [vmem:[%s495 + $0x1c] sm:$0xf]
      %v531 = vld [vmem:[%s495 + $0x20] sm:$0xf]
      %v532 = vld [vmem:[%s495 + $0x24] sm:$0xf]
      %v533 = vld [vmem:[%s495 + $0x28] sm:$0xf]
      %v534 = vld [vmem:[%s495 + $0x2c] sm:$0xf]
      %v535 = vld [vmem:[%s495 + $0x30] sm:$0xf]
      %v536 = vld [vmem:[%s495 + $0x34] sm:$0xf]
      %v537 = vld [vmem:[%s495 + $0x38] sm:$0xf]
      %v538 = vld [vmem:[%s495 + $0x3c] sm:$0xf]
      %v539 = vld [vmem:[%s495 + $0x40] sm:$0xf]
      %v540 = vld [vmem:[%s495 + $0x44] sm:$0xf]
      %v541 = vld [vmem:[%s495 + $0x48] sm:$0xf]
      %v542 = vld [vmem:[%s495 + $0x4c] sm:$0xf]
      %v543 = vld [vmem:[%s495 + $0x50] sm:$0xf]
      %v544 = vld [vmem:[%s495 + $0x54] sm:$0xf]
      %v545 = vld [vmem:[%s495 + $0x58] sm:$0xf]
      %v546 = vld [vmem:[%s495 + $0x5c] sm:$0xf]
      %v547 = vld [vmem:[%s495 + $0x60] sm:$0xf]
      %v548 = vld [vmem:[%s495 + $0x64] sm:$0xf]
      %v549 = vld [vmem:[%s495 + $0x68] sm:$0xf]
      %v550 = vld [vmem:[%s495 + $0x6c] sm:$0xf]
      %v551 = vld [vmem:[%s495 + $0x70] sm:$0xf]
      %v552 = vld [vmem:[%s495 + $0x74] sm:$0xf]
      %v553 = vld [vmem:[%s495 + $0x78] sm:$0xf]
      %v554 = vld [vmem:[%s495 + $0x7c] sm:$0xf]
      %v555 = vunpack.c.l.bf16 %v523
      %v556 = vunpack.c.l.bf16 %v524
      %v557 = vunpack.c.l.bf16 %v525
      %v558 = vunpack.c.l.bf16 %v526
      %v559 = vunpack.c.l.bf16 %v527
      %v560 = vunpack.c.l.bf16 %v528
      %v561 = vunpack.c.l.bf16 %v529
      %v562 = vunpack.c.l.bf16 %v530
      %v563 = vunpack.c.l.bf16 %v531
      %v564 = vunpack.c.l.bf16 %v532
      %v565 = vunpack.c.l.bf16 %v533
      %v566 = vunpack.c.l.bf16 %v534
      %v567 = vunpack.c.l.bf16 %v535
      %v568 = vunpack.c.l.bf16 %v536
      %v569 = vunpack.c.l.bf16 %v537
      %v570 = vunpack.c.l.bf16 %v538
      %v571 = vunpack.c.l.bf16 %v539
      %v572 = vunpack.c.l.bf16 %v540
      %v573 = vunpack.c.l.bf16 %v541
      %v574 = vunpack.c.l.bf16 %v542
      %v575 = vunpack.c.l.bf16 %v543
      %v576 = vunpack.c.l.bf16 %v544
      %v577 = vunpack.c.l.bf16 %v545
      %v578 = vunpack.c.l.bf16 %v546
      %v579 = vunpack.c.l.bf16 %v547
      %v580 = vunpack.c.l.bf16 %v548
      %v581 = vunpack.c.l.bf16 %v549
      %v582 = vunpack.c.l.bf16 %v550
      %v583 = vunpack.c.l.bf16 %v551
      %v584 = vunpack.c.l.bf16 %v552
      %v585 = vunpack.c.l.bf16 %v553
      %v586 = vunpack.c.l.bf16 %v554
      %v587 = vld [vmem:[%s502] sm:$0xff]
      %v588 = vld [vmem:[%s502 + $0x8] sm:$0xff]
      %v589 = vld [vmem:[%s502 + $0x10] sm:$0xff]
      %v590 = vld [vmem:[%s502 + $0x18] sm:$0xff]
      %v591 = vld [vmem:[%s502 + $0x20] sm:$0xff]
      %v592 = vld [vmem:[%s502 + $0x28] sm:$0xff]
      %v593 = vld [vmem:[%s502 + $0x30] sm:$0xff]
      %v594 = vld [vmem:[%s502 + $0x38] sm:$0xff]
      %v595 = vld [vmem:[%s502 + $0x40] sm:$0xff]
      %v596 = vld [vmem:[%s502 + $0x48] sm:$0xff]
      %v597 = vld [vmem:[%s502 + $0x50] sm:$0xff]
      %v598 = vld [vmem:[%s502 + $0x58] sm:$0xff]
      %v599 = vld [vmem:[%s502 + $0x60] sm:$0xff]
      %v600 = vld [vmem:[%s502 + $0x68] sm:$0xff]
      %v601 = vld [vmem:[%s502 + $0x70] sm:$0xff]
      %v602 = vld [vmem:[%s502 + $0x78] sm:$0xff]
      %v603 = vld [vmem:[%s502 + $0x80] sm:$0xff]
      %v604 = vld [vmem:[%s502 + $0x88] sm:$0xff]
      %v605 = vld [vmem:[%s502 + $0x90] sm:$0xff]
      %v606 = vld [vmem:[%s502 + $0x98] sm:$0xff]
      %v607 = vld [vmem:[%s502 + $0xa0] sm:$0xff]
      %v608 = vld [vmem:[%s502 + $0xa8] sm:$0xff]
      %v609 = vld [vmem:[%s502 + $0xb0] sm:$0xff]
      %v610 = vld [vmem:[%s502 + $0xb8] sm:$0xff]
      %v611 = vld [vmem:[%s502 + $0xc0] sm:$0xff]
      %v612 = vld [vmem:[%s502 + $0xc8] sm:$0xff]
      %v613 = vld [vmem:[%s502 + $0xd0] sm:$0xff]
      %v614 = vld [vmem:[%s502 + $0xd8] sm:$0xff]
      %v615 = vld [vmem:[%s502 + $0xe0] sm:$0xff]
      %v616 = vld [vmem:[%s502 + $0xe8] sm:$0xff]
      %v617 = vld [vmem:[%s502 + $0xf0] sm:$0xff]
      %v618 = vld [vmem:[%s502 + $0xf8] sm:$0xff]
      %v619 = vld [vmem:[%s502 + $0x100] sm:$0xff]
      %v620 = vld [vmem:[%s502 + $0x108] sm:$0xff]
      %v621 = vld [vmem:[%s502 + $0x110] sm:$0xff]
      %v622 = vld [vmem:[%s502 + $0x118] sm:$0xff]
      %v623 = vld [vmem:[%s502 + $0x120] sm:$0xff]
      %v624 = vld [vmem:[%s502 + $0x128] sm:$0xff]
      %v625 = vld [vmem:[%s502 + $0x130] sm:$0xff]
      %v626 = vld [vmem:[%s502 + $0x138] sm:$0xff]
      %v627 = vld [vmem:[%s502 + $0x140] sm:$0xff]
      %v628 = vld [vmem:[%s502 + $0x148] sm:$0xff]
      %v629 = vld [vmem:[%s502 + $0x150] sm:$0xff]
      %v630 = vld [vmem:[%s502 + $0x158] sm:$0xff]
      %v631 = vld [vmem:[%s502 + $0x160] sm:$0xff]
      %v632 = vld [vmem:[%s502 + $0x168] sm:$0xff]
      %v633 = vld [vmem:[%s502 + $0x170] sm:$0xff]
      %v634 = vld [vmem:[%s502 + $0x178] sm:$0xff]
      %v635 = vld [vmem:[%s502 + $0x180] sm:$0xff]
      %v636 = vld [vmem:[%s502 + $0x188] sm:$0xff]
      %v637 = vld [vmem:[%s502 + $0x190] sm:$0xff]
      %v638 = vld [vmem:[%s502 + $0x198] sm:$0xff]
      %v639 = vld [vmem:[%s502 + $0x1a0] sm:$0xff]
      %v640 = vld [vmem:[%s502 + $0x1a8] sm:$0xff]
      %v641 = vld [vmem:[%s502 + $0x1b0] sm:$0xff]
      %v642 = vld [vmem:[%s502 + $0x1b8] sm:$0xff]
      %v643 = vld [vmem:[%s502 + $0x1c0] sm:$0xff]
      %v644 = vld [vmem:[%s502 + $0x1c8] sm:$0xff]
      %v645 = vld [vmem:[%s502 + $0x1d0] sm:$0xff]
      %v646 = vld [vmem:[%s502 + $0x1d8] sm:$0xff]
      %v647 = vld [vmem:[%s502 + $0x1e0] sm:$0xff]
      %v648 = vld [vmem:[%s502 + $0x1e8] sm:$0xff]
      %v649 = vld [vmem:[%s502 + $0x1f0] sm:$0xff]
      %v650 = vld [vmem:[%s502 + $0x1f8] sm:$0xff]
      %v651 = vld [vmem:[%s502 + $0x200] sm:$0xff]
      %v652 = vld [vmem:[%s502 + $0x208] sm:$0xff]
      %v653 = vld [vmem:[%s502 + $0x210] sm:$0xff]
      %v654 = vld [vmem:[%s502 + $0x218] sm:$0xff]
      %v655 = vld [vmem:[%s502 + $0x220] sm:$0xff]
      %v656 = vld [vmem:[%s502 + $0x228] sm:$0xff]
      %v657 = vld [vmem:[%s502 + $0x230] sm:$0xff]
      %v658 = vld [vmem:[%s502 + $0x238] sm:$0xff]
      %v659 = vld [vmem:[%s502 + $0x240] sm:$0xff]
      %v660 = vld [vmem:[%s502 + $0x248] sm:$0xff]
      %v661 = vld [vmem:[%s502 + $0x250] sm:$0xff]
      %v662 = vld [vmem:[%s502 + $0x258] sm:$0xff]
      %v663 = vld [vmem:[%s502 + $0x260] sm:$0xff]
      %v664 = vld [vmem:[%s502 + $0x268] sm:$0xff]
      %v665 = vld [vmem:[%s502 + $0x270] sm:$0xff]
      %v666 = vld [vmem:[%s502 + $0x278] sm:$0xff]
      %v667 = vld [vmem:[%s502 + $0x280] sm:$0xff]
      %v668 = vld [vmem:[%s502 + $0x288] sm:$0xff]
      %v669 = vld [vmem:[%s502 + $0x290] sm:$0xff]
      %v670 = vld [vmem:[%s502 + $0x298] sm:$0xff]
      %v671 = vld [vmem:[%s502 + $0x2a0] sm:$0xff]
      %v672 = vld [vmem:[%s502 + $0x2a8] sm:$0xff]
      %v673 = vld [vmem:[%s502 + $0x2b0] sm:$0xff]
      %v674 = vld [vmem:[%s502 + $0x2b8] sm:$0xff]
      %v675 = vld [vmem:[%s502 + $0x2c0] sm:$0xff]
      %v676 = vld [vmem:[%s502 + $0x2c8] sm:$0xff]
      %v677 = vld [vmem:[%s502 + $0x2d0] sm:$0xff]
      %v678 = vld [vmem:[%s502 + $0x2d8] sm:$0xff]
      %v679 = vld [vmem:[%s502 + $0x2e0] sm:$0xff]
      %v680 = vld [vmem:[%s502 + $0x2e8] sm:$0xff]
      %v681 = vld [vmem:[%s502 + $0x2f0] sm:$0xff]
      %v682 = vld [vmem:[%s502 + $0x2f8] sm:$0xff]
      %v683 = vld [vmem:[%s502 + $0x300] sm:$0xff]
      %v684 = vld [vmem:[%s502 + $0x308] sm:$0xff]
      %v685 = vld [vmem:[%s502 + $0x310] sm:$0xff]
      %v686 = vld [vmem:[%s502 + $0x318] sm:$0xff]
      %v687 = vld [vmem:[%s502 + $0x320] sm:$0xff]
      %v688 = vld [vmem:[%s502 + $0x328] sm:$0xff]
      %v689 = vld [vmem:[%s502 + $0x330] sm:$0xff]
      %v690 = vld [vmem:[%s502 + $0x338] sm:$0xff]
      %v691 = vld [vmem:[%s502 + $0x340] sm:$0xff]
      %v692 = vld [vmem:[%s502 + $0x348] sm:$0xff]
      %v693 = vld [vmem:[%s502 + $0x350] sm:$0xff]
      %v694 = vld [vmem:[%s502 + $0x358] sm:$0xff]
      %v695 = vld [vmem:[%s502 + $0x360] sm:$0xff]
      %v696 = vld [vmem:[%s502 + $0x368] sm:$0xff]
      %v697 = vld [vmem:[%s502 + $0x370] sm:$0xff]
      %v698 = vld [vmem:[%s502 + $0x378] sm:$0xff]
      %v699 = vld [vmem:[%s502 + $0x380] sm:$0xff]
      %v700 = vld [vmem:[%s502 + $0x388] sm:$0xff]
      %v701 = vld [vmem:[%s502 + $0x390] sm:$0xff]
      %v702 = vld [vmem:[%s502 + $0x398] sm:$0xff]
      %v703 = vld [vmem:[%s502 + $0x3a0] sm:$0xff]
      %v704 = vld [vmem:[%s502 + $0x3a8] sm:$0xff]
      %v705 = vld [vmem:[%s502 + $0x3b0] sm:$0xff]
      %v706 = vld [vmem:[%s502 + $0x3b8] sm:$0xff]
      %v707 = vld [vmem:[%s502 + $0x3c0] sm:$0xff]
      %v708 = vld [vmem:[%s502 + $0x3c8] sm:$0xff]
      %v709 = vld [vmem:[%s502 + $0x3d0] sm:$0xff]
      %v710 = vld [vmem:[%s502 + $0x3d8] sm:$0xff]
      %v711 = vld [vmem:[%s502 + $0x3e0] sm:$0xff]
      %v712 = vld [vmem:[%s502 + $0x3e8] sm:$0xff]
      %v713 = vld [vmem:[%s502 + $0x3f0] sm:$0xff]
      %v714 = vld [vmem:[%s502 + $0x3f8] sm:$0xff]
      %v715 = vld [vmem:[%s1] sm:$0xf]
      %v716 = vld [vmem:[%s1 + $0x4] sm:$0xf]
      %v717 = vld [vmem:[%s1 + $0x8] sm:$0xf]
      %v718 = vld [vmem:[%s1 + $0xc] sm:$0xf]
      %v719 = vld [vmem:[%s1 + $0x10] sm:$0xf]
      %v720 = vld [vmem:[%s1 + $0x14] sm:$0xf]
      %v721 = vld [vmem:[%s1 + $0x18] sm:$0xf]
      %v722 = vld [vmem:[%s1 + $0x1c] sm:$0xf]
      %v723 = vld [vmem:[%s1 + $0x20] sm:$0xf]
      %v724 = vld [vmem:[%s1 + $0x24] sm:$0xf]
      %v725 = vld [vmem:[%s1 + $0x28] sm:$0xf]
      %v726 = vld [vmem:[%s1 + $0x2c] sm:$0xf]
      %v727 = vld [vmem:[%s1 + $0x30] sm:$0xf]
      %v728 = vld [vmem:[%s1 + $0x34] sm:$0xf]
      %v729 = vld [vmem:[%s1 + $0x38] sm:$0xf]
      %v730 = vld [vmem:[%s1 + $0x3c] sm:$0xf]
      %v731 = vld [vmem:[%s1 + $0x40] sm:$0xf]
      %v732 = vld [vmem:[%s1 + $0x44] sm:$0xf]
      %v733 = vld [vmem:[%s1 + $0x48] sm:$0xf]
      %v734 = vld [vmem:[%s1 + $0x4c] sm:$0xf]
      %v735 = vld [vmem:[%s1 + $0x50] sm:$0xf]
      %v736 = vld [vmem:[%s1 + $0x54] sm:$0xf]
      %v737 = vld [vmem:[%s1 + $0x58] sm:$0xf]
      %v738 = vld [vmem:[%s1 + $0x5c] sm:$0xf]
      %v739 = vld [vmem:[%s1 + $0x60] sm:$0xf]
      %v740 = vld [vmem:[%s1 + $0x64] sm:$0xf]
      %v741 = vld [vmem:[%s1 + $0x68] sm:$0xf]
      %v742 = vld [vmem:[%s1 + $0x6c] sm:$0xf]
      %v743 = vld [vmem:[%s1 + $0x70] sm:$0xf]
      %v744 = vld [vmem:[%s1 + $0x74] sm:$0xf]
      %v745 = vld [vmem:[%s1 + $0x78] sm:$0xf]
      %v746 = vld [vmem:[%s1 + $0x7c] sm:$0xf]
      %v747 = vld [vmem:[%s1 + $0x80] sm:$0xf]
      %v748 = vld [vmem:[%s1 + $0x84] sm:$0xf]
      %v749 = vld [vmem:[%s1 + $0x88] sm:$0xf]
      %v750 = vld [vmem:[%s1 + $0x8c] sm:$0xf]
      %v751 = vld [vmem:[%s1 + $0x90] sm:$0xf]
      %v752 = vld [vmem:[%s1 + $0x94] sm:$0xf]
      %v753 = vld [vmem:[%s1 + $0x98] sm:$0xf]
      %v754 = vld [vmem:[%s1 + $0x9c] sm:$0xf]
      %v755 = vld [vmem:[%s1 + $0xa0] sm:$0xf]
      %v756 = vld [vmem:[%s1 + $0xa4] sm:$0xf]
      %v757 = vld [vmem:[%s1 + $0xa8] sm:$0xf]
      %v758 = vld [vmem:[%s1 + $0xac] sm:$0xf]
      %v759 = vld [vmem:[%s1 + $0xb0] sm:$0xf]
      %v760 = vld [vmem:[%s1 + $0xb4] sm:$0xf]
      %v761 = vld [vmem:[%s1 + $0xb8] sm:$0xf]
      %v762 = vld [vmem:[%s1 + $0xbc] sm:$0xf]
      %v763 = vld [vmem:[%s1 + $0xc0] sm:$0xf]
      %v764 = vld [vmem:[%s1 + $0xc4] sm:$0xf]
      %v765 = vld [vmem:[%s1 + $0xc8] sm:$0xf]
      %v766 = vld [vmem:[%s1 + $0xcc] sm:$0xf]
      %v767 = vld [vmem:[%s1 + $0xd0] sm:$0xf]
      %v768 = vld [vmem:[%s1 + $0xd4] sm:$0xf]
      %v769 = vld [vmem:[%s1 + $0xd8] sm:$0xf]
      %v770 = vld [vmem:[%s1 + $0xdc] sm:$0xf]
      %v771 = vld [vmem:[%s1 + $0xe0] sm:$0xf]
      %v772 = vld [vmem:[%s1 + $0xe4] sm:$0xf]
      %v773 = vld [vmem:[%s1 + $0xe8] sm:$0xf]
      %v774 = vld [vmem:[%s1 + $0xec] sm:$0xf]
      %v775 = vld [vmem:[%s1 + $0xf0] sm:$0xf]
      %v776 = vld [vmem:[%s1 + $0xf4] sm:$0xf]
      %v777 = vld [vmem:[%s1 + $0xf8] sm:$0xf]
      %v778 = vld [vmem:[%s1 + $0xfc] sm:$0xf]
      %v779 = vld [vmem:[%s1 + $0x100] sm:$0xf]
      %v780 = vld [vmem:[%s1 + $0x104] sm:$0xf]
      %v781 = vld [vmem:[%s1 + $0x108] sm:$0xf]
      %v782 = vld [vmem:[%s1 + $0x10c] sm:$0xf]
      %v783 = vld [vmem:[%s1 + $0x110] sm:$0xf]
      %v784 = vld [vmem:[%s1 + $0x114] sm:$0xf]
      %v785 = vld [vmem:[%s1 + $0x118] sm:$0xf]
      %v786 = vld [vmem:[%s1 + $0x11c] sm:$0xf]
      %v787 = vld [vmem:[%s1 + $0x120] sm:$0xf]
      %v788 = vld [vmem:[%s1 + $0x124] sm:$0xf]
      %v789 = vld [vmem:[%s1 + $0x128] sm:$0xf]
      %v790 = vld [vmem:[%s1 + $0x12c] sm:$0xf]
      %v791 = vld [vmem:[%s1 + $0x130] sm:$0xf]
      %v792 = vld [vmem:[%s1 + $0x134] sm:$0xf]
      %v793 = vld [vmem:[%s1 + $0x138] sm:$0xf]
      %v794 = vld [vmem:[%s1 + $0x13c] sm:$0xf]
      %v795 = vld [vmem:[%s1 + $0x140] sm:$0xf]
      %v796 = vld [vmem:[%s1 + $0x144] sm:$0xf]
      %v797 = vld [vmem:[%s1 + $0x148] sm:$0xf]
      %v798 = vld [vmem:[%s1 + $0x14c] sm:$0xf]
      %v799 = vld [vmem:[%s1 + $0x150] sm:$0xf]
      %v800 = vld [vmem:[%s1 + $0x154] sm:$0xf]
      %v801 = vld [vmem:[%s1 + $0x158] sm:$0xf]
      %v802 = vld [vmem:[%s1 + $0x15c] sm:$0xf]
      %v803 = vld [vmem:[%s1 + $0x160] sm:$0xf]
      %v804 = vld [vmem:[%s1 + $0x164] sm:$0xf]
      %v805 = vld [vmem:[%s1 + $0x168] sm:$0xf]
      %v806 = vld [vmem:[%s1 + $0x16c] sm:$0xf]
      %v807 = vld [vmem:[%s1 + $0x170] sm:$0xf]
      %v808 = vld [vmem:[%s1 + $0x174] sm:$0xf]
      %v809 = vld [vmem:[%s1 + $0x178] sm:$0xf]
      %v810 = vld [vmem:[%s1 + $0x17c] sm:$0xf]
      %v811 = vld [vmem:[%s1 + $0x180] sm:$0xf]
      %v812 = vld [vmem:[%s1 + $0x184] sm:$0xf]
      %v813 = vld [vmem:[%s1 + $0x188] sm:$0xf]
      %v814 = vld [vmem:[%s1 + $0x18c] sm:$0xf]
      %v815 = vld [vmem:[%s1 + $0x190] sm:$0xf]
      %v816 = vld [vmem:[%s1 + $0x194] sm:$0xf]
      %v817 = vld [vmem:[%s1 + $0x198] sm:$0xf]
      %v818 = vld [vmem:[%s1 + $0x19c] sm:$0xf]
      %v819 = vld [vmem:[%s1 + $0x1a0] sm:$0xf]
      %v820 = vld [vmem:[%s1 + $0x1a4] sm:$0xf]
      %v821 = vld [vmem:[%s1 + $0x1a8] sm:$0xf]
      %v822 = vld [vmem:[%s1 + $0x1ac] sm:$0xf]
      %v823 = vld [vmem:[%s1 + $0x1b0] sm:$0xf]
      %v824 = vld [vmem:[%s1 + $0x1b4] sm:$0xf]
      %v825 = vld [vmem:[%s1 + $0x1b8] sm:$0xf]
      %v826 = vld [vmem:[%s1 + $0x1bc] sm:$0xf]
      %v827 = vld [vmem:[%s1 + $0x1c0] sm:$0xf]
      %v828 = vld [vmem:[%s1 + $0x1c4] sm:$0xf]
      %v829 = vld [vmem:[%s1 + $0x1c8] sm:$0xf]
      %v830 = vld [vmem:[%s1 + $0x1cc] sm:$0xf]
      %v831 = vld [vmem:[%s1 + $0x1d0] sm:$0xf]
      %v832 = vld [vmem:[%s1 + $0x1d4] sm:$0xf]
      %v833 = vld [vmem:[%s1 + $0x1d8] sm:$0xf]
      %v834 = vld [vmem:[%s1 + $0x1dc] sm:$0xf]
      %v835 = vld [vmem:[%s1 + $0x1e0] sm:$0xf]
      %v836 = vld [vmem:[%s1 + $0x1e4] sm:$0xf]
      %v837 = vld [vmem:[%s1 + $0x1e8] sm:$0xf]
      %v838 = vld [vmem:[%s1 + $0x1ec] sm:$0xf]
      %v839 = vld [vmem:[%s1 + $0x1f0] sm:$0xf]
      %v840 = vld [vmem:[%s1 + $0x1f4] sm:$0xf]
      %v841 = vld [vmem:[%s1 + $0x1f8] sm:$0xf]
      %v842 = vld [vmem:[%s1 + $0x1fc] sm:$0xf]
      %v971 = vunpack.c.l.b16 %v587
      %v972 = vunpack.c.h.b16 %v587
      %v973 = vunpack.c.l.b16 %v588
      %v974 = vunpack.c.h.b16 %v588
      %v975 = vunpack.c.l.b16 %v589
      %v976 = vunpack.c.h.b16 %v589
      %v977 = vunpack.c.l.b16 %v590
      %v978 = vunpack.c.h.b16 %v590
      %v979 = vunpack.c.l.b16 %v591
      %v980 = vunpack.c.h.b16 %v591
      %v981 = vunpack.c.l.b16 %v592
      %v982 = vunpack.c.h.b16 %v592
      %v983 = vunpack.c.l.b16 %v593
      %v984 = vunpack.c.h.b16 %v593
      %v985 = vunpack.c.l.b16 %v594
      %v986 = vunpack.c.h.b16 %v594
      %v987 = vunpack.c.l.b16 %v595
      %v988 = vunpack.c.h.b16 %v595
      %v989 = vunpack.c.l.b16 %v596
      %v990 = vunpack.c.h.b16 %v596
      %v991 = vunpack.c.l.b16 %v597
      %v992 = vunpack.c.h.b16 %v597
      %v993 = vunpack.c.l.b16 %v598
      %v994 = vunpack.c.h.b16 %v598
      %v995 = vunpack.c.l.b16 %v599
      %v996 = vunpack.c.h.b16 %v599
      %v997 = vunpack.c.l.b16 %v600
      %v998 = vunpack.c.h.b16 %v600
      %v999 = vunpack.c.l.b16 %v601
      %v1000 = vunpack.c.h.b16 %v601
      %v1001 = vunpack.c.l.b16 %v602
      %v1002 = vunpack.c.h.b16 %v602
      %v1003 = vunpack.c.l.b16 %v603
      %v1004 = vunpack.c.h.b16 %v603
      %v1005 = vunpack.c.l.b16 %v604
      %v1006 = vunpack.c.h.b16 %v604
      %v1007 = vunpack.c.l.b16 %v605
      %v1008 = vunpack.c.h.b16 %v605
      %v1009 = vunpack.c.l.b16 %v606
      %v1010 = vunpack.c.h.b16 %v606
      %v1011 = vunpack.c.l.b16 %v607
      %v1012 = vunpack.c.h.b16 %v607
      %v1013 = vunpack.c.l.b16 %v608
      %v1014 = vunpack.c.h.b16 %v608
      %v1015 = vunpack.c.l.b16 %v609
      %v1016 = vunpack.c.h.b16 %v609
      %v1017 = vunpack.c.l.b16 %v610
      %v1018 = vunpack.c.h.b16 %v610
      %v1019 = vunpack.c.l.b16 %v611
      %v1020 = vunpack.c.h.b16 %v611
      %v1021 = vunpack.c.l.b16 %v612
      %v1022 = vunpack.c.h.b16 %v612
      %v1023 = vunpack.c.l.b16 %v613
      %v1024 = vunpack.c.h.b16 %v613
      %v1025 = vunpack.c.l.b16 %v614
      %v1026 = vunpack.c.h.b16 %v614
      %v1027 = vunpack.c.l.b16 %v615
      %v1028 = vunpack.c.h.b16 %v615
      %v1029 = vunpack.c.l.b16 %v616
      %v1030 = vunpack.c.h.b16 %v616
      %v1031 = vunpack.c.l.b16 %v617
      %v1032 = vunpack.c.h.b16 %v617
      %v1033 = vunpack.c.l.b16 %v618
      %v1034 = vunpack.c.h.b16 %v618
      %v1035 = vunpack.c.l.b16 %v619
      %v1036 = vunpack.c.h.b16 %v619
      %v1037 = vunpack.c.l.b16 %v620
      %v1038 = vunpack.c.h.b16 %v620
      %v1039 = vunpack.c.l.b16 %v621
      %v1040 = vunpack.c.h.b16 %v621
      %v1041 = vunpack.c.l.b16 %v622
      %v1042 = vunpack.c.h.b16 %v622
      %v1043 = vunpack.c.l.b16 %v623
      %v1044 = vunpack.c.h.b16 %v623
      %v1045 = vunpack.c.l.b16 %v624
      %v1046 = vunpack.c.h.b16 %v624
      %v1047 = vunpack.c.l.b16 %v625
      %v1048 = vunpack.c.h.b16 %v625
      %v1049 = vunpack.c.l.b16 %v626
      %v1050 = vunpack.c.h.b16 %v626
      %v1051 = vunpack.c.l.b16 %v627
      %v1052 = vunpack.c.h.b16 %v627
      %v1053 = vunpack.c.l.b16 %v628
      %v1054 = vunpack.c.h.b16 %v628
      %v1055 = vunpack.c.l.b16 %v629
      %v1056 = vunpack.c.h.b16 %v629
      %v1057 = vunpack.c.l.b16 %v630
      %v1058 = vunpack.c.h.b16 %v630
      %v1059 = vunpack.c.l.b16 %v631
      %v1060 = vunpack.c.h.b16 %v631
      %v1061 = vunpack.c.l.b16 %v632
      %v1062 = vunpack.c.h.b16 %v632
      %v1063 = vunpack.c.l.b16 %v633
      %v1064 = vunpack.c.h.b16 %v633
      %v1065 = vunpack.c.l.b16 %v634
      %v1066 = vunpack.c.h.b16 %v634
      %v1067 = vunpack.c.l.b16 %v635
      %v1068 = vunpack.c.h.b16 %v635
      %v1069 = vunpack.c.l.b16 %v636
      %v1070 = vunpack.c.h.b16 %v636
      %v1071 = vunpack.c.l.b16 %v637
      %v1072 = vunpack.c.h.b16 %v637
      %v1073 = vunpack.c.l.b16 %v638
      %v1074 = vunpack.c.h.b16 %v638
      %v1075 = vunpack.c.l.b16 %v639
      %v1076 = vunpack.c.h.b16 %v639
      %v1077 = vunpack.c.l.b16 %v640
      %v1078 = vunpack.c.h.b16 %v640
      %v1079 = vunpack.c.l.b16 %v641
      %v1080 = vunpack.c.h.b16 %v641
      %v1081 = vunpack.c.l.b16 %v642
      %v1082 = vunpack.c.h.b16 %v642
      %v1083 = vunpack.c.l.b16 %v643
      %v1084 = vunpack.c.h.b16 %v643
      %v1085 = vunpack.c.l.b16 %v644
      %v1086 = vunpack.c.h.b16 %v644
      %v1087 = vunpack.c.l.b16 %v645
      %v1088 = vunpack.c.h.b16 %v645
      %v1089 = vunpack.c.l.b16 %v646
      %v1090 = vunpack.c.h.b16 %v646
      %v1091 = vunpack.c.l.b16 %v647
      %v1092 = vunpack.c.h.b16 %v647
      %v1093 = vunpack.c.l.b16 %v648
      %v1094 = vunpack.c.h.b16 %v648
      %v1095 = vunpack.c.l.b16 %v649
      %v1096 = vunpack.c.h.b16 %v649
      %v1097 = vunpack.c.l.b16 %v650
      %v1098 = vunpack.c.h.b16 %v650
      %v1099 = vunpack.c.l.b16 %v651
      %v1100 = vunpack.c.h.b16 %v651
      %v1101 = vunpack.c.l.b16 %v652
      %v1102 = vunpack.c.h.b16 %v652
      %v1103 = vunpack.c.l.b16 %v653
      %v1104 = vunpack.c.h.b16 %v653
      %v1105 = vunpack.c.l.b16 %v654
      %v1106 = vunpack.c.h.b16 %v654
      %v1107 = vunpack.c.l.b16 %v655
      %v1108 = vunpack.c.h.b16 %v655
      %v1109 = vunpack.c.l.b16 %v656
      %v1110 = vunpack.c.h.b16 %v656
      %v1111 = vunpack.c.l.b16 %v657
      %v1112 = vunpack.c.h.b16 %v657
      %v1113 = vunpack.c.l.b16 %v658
      %v1114 = vunpack.c.h.b16 %v658
      %v1115 = vunpack.c.l.b16 %v659
      %v1116 = vunpack.c.h.b16 %v659
      %v1117 = vunpack.c.l.b16 %v660
      %v1118 = vunpack.c.h.b16 %v660
      %v1119 = vunpack.c.l.b16 %v661
      %v1120 = vunpack.c.h.b16 %v661
      %v1121 = vunpack.c.l.b16 %v662
      %v1122 = vunpack.c.h.b16 %v662
      %v1123 = vunpack.c.l.b16 %v663
      %v1124 = vunpack.c.h.b16 %v663
      %v1125 = vunpack.c.l.b16 %v664
      %v1126 = vunpack.c.h.b16 %v664
      %v1127 = vunpack.c.l.b16 %v665
      %v1128 = vunpack.c.h.b16 %v665
      %v1129 = vunpack.c.l.b16 %v666
      %v1130 = vunpack.c.h.b16 %v666
      %v1131 = vunpack.c.l.b16 %v667
      %v1132 = vunpack.c.h.b16 %v667
      %v1133 = vunpack.c.l.b16 %v668
      %v1134 = vunpack.c.h.b16 %v668
      %v1135 = vunpack.c.l.b16 %v669
      %v1136 = vunpack.c.h.b16 %v669
      %v1137 = vunpack.c.l.b16 %v670
      %v1138 = vunpack.c.h.b16 %v670
      %v1139 = vunpack.c.l.b16 %v671
      %v1140 = vunpack.c.h.b16 %v671
      %v1141 = vunpack.c.l.b16 %v672
      %v1142 = vunpack.c.h.b16 %v672
      %v1143 = vunpack.c.l.b16 %v673
      %v1144 = vunpack.c.h.b16 %v673
      %v1145 = vunpack.c.l.b16 %v674
      %v1146 = vunpack.c.h.b16 %v674
      %v1147 = vunpack.c.l.b16 %v675
      %v1148 = vunpack.c.h.b16 %v675
      %v1149 = vunpack.c.l.b16 %v676
      %v1150 = vunpack.c.h.b16 %v676
      %v1151 = vunpack.c.l.b16 %v677
      %v1152 = vunpack.c.h.b16 %v677
      %v1153 = vunpack.c.l.b16 %v678
      %v1154 = vunpack.c.h.b16 %v678
      %v1155 = vunpack.c.l.b16 %v679
      %v1156 = vunpack.c.h.b16 %v679
      %v1157 = vunpack.c.l.b16 %v680
      %v1158 = vunpack.c.h.b16 %v680
      %v1159 = vunpack.c.l.b16 %v681
      %v1160 = vunpack.c.h.b16 %v681
      %v1161 = vunpack.c.l.b16 %v682
      %v1162 = vunpack.c.h.b16 %v682
      %v1163 = vunpack.c.l.b16 %v683
      %v1164 = vunpack.c.h.b16 %v683
      %v1165 = vunpack.c.l.b16 %v684
      %v1166 = vunpack.c.h.b16 %v684
      %v1167 = vunpack.c.l.b16 %v685
      %v1168 = vunpack.c.h.b16 %v685
      %v1169 = vunpack.c.l.b16 %v686
      %v1170 = vunpack.c.h.b16 %v686
      %v1171 = vunpack.c.l.b16 %v687
      %v1172 = vunpack.c.h.b16 %v687
      %v1173 = vunpack.c.l.b16 %v688
      %v1174 = vunpack.c.h.b16 %v688
      %v1175 = vunpack.c.l.b16 %v689
      %v1176 = vunpack.c.h.b16 %v689
      %v1177 = vunpack.c.l.b16 %v690
      %v1178 = vunpack.c.h.b16 %v690
      %v1179 = vunpack.c.l.b16 %v691
      %v1180 = vunpack.c.h.b16 %v691
      %v1181 = vunpack.c.l.b16 %v692
      %v1182 = vunpack.c.h.b16 %v692
      %v1183 = vunpack.c.l.b16 %v693
      %v1184 = vunpack.c.h.b16 %v693
      %v1185 = vunpack.c.l.b16 %v694
      %v1186 = vunpack.c.h.b16 %v694
      %v1187 = vunpack.c.l.b16 %v695
      %v1188 = vunpack.c.h.b16 %v695
      %v1189 = vunpack.c.l.b16 %v696
      %v1190 = vunpack.c.h.b16 %v696
      %v1191 = vunpack.c.l.b16 %v697
      %v1192 = vunpack.c.h.b16 %v697
      %v1193 = vunpack.c.l.b16 %v698
      %v1194 = vunpack.c.h.b16 %v698
      %v1195 = vunpack.c.l.b16 %v699
      %v1196 = vunpack.c.h.b16 %v699
      %v1197 = vunpack.c.l.b16 %v700
      %v1198 = vunpack.c.h.b16 %v700
      %v1199 = vunpack.c.l.b16 %v701
      %v1200 = vunpack.c.h.b16 %v701
      %v1201 = vunpack.c.l.b16 %v702
      %v1202 = vunpack.c.h.b16 %v702
      %v1203 = vunpack.c.l.b16 %v703
      %v1204 = vunpack.c.h.b16 %v703
      %v1205 = vunpack.c.l.b16 %v704
      %v1206 = vunpack.c.h.b16 %v704
      %v1207 = vunpack.c.l.b16 %v705
      %v1208 = vunpack.c.h.b16 %v705
      %v1209 = vunpack.c.l.b16 %v706
      %v1210 = vunpack.c.h.b16 %v706
      %v1211 = vunpack.c.l.b16 %v707
      %v1212 = vunpack.c.h.b16 %v707
      %v1213 = vunpack.c.l.b16 %v708
      %v1214 = vunpack.c.h.b16 %v708
      %v1215 = vunpack.c.l.b16 %v709
      %v1216 = vunpack.c.h.b16 %v709
      %v1217 = vunpack.c.l.b16 %v710
      %v1218 = vunpack.c.h.b16 %v710
      %v1219 = vunpack.c.l.b16 %v711
      %v1220 = vunpack.c.h.b16 %v711
      %v1221 = vunpack.c.l.b16 %v712
      %v1222 = vunpack.c.h.b16 %v712
      %v1223 = vunpack.c.l.b16 %v713
      %v1224 = vunpack.c.h.b16 %v713
      %v1225 = vunpack.c.l.b16 %v714
      %v1226 = vunpack.c.h.b16 %v714
      %v1227 = vpack.c.b16 %v979, %v971
      %v1228 = vpack.c.b16 %v980, %v972
      %v1229 = vpack.c.b16 %v981, %v973
      %v1230 = vpack.c.b16 %v982, %v974
      %v1231 = vpack.c.b16 %v983, %v975
      %v1232 = vpack.c.b16 %v984, %v976
      %v1233 = vpack.c.b16 %v985, %v977
      %v1234 = vpack.c.b16 %v986, %v978
      %v1235 = vpack.c.b16 %v995, %v987
      %v1236 = vpack.c.b16 %v996, %v988
      %v1237 = vpack.c.b16 %v997, %v989
      %v1238 = vpack.c.b16 %v998, %v990
      %v1239 = vpack.c.b16 %v999, %v991
      %v1240 = vpack.c.b16 %v1000, %v992
      %v1241 = vpack.c.b16 %v1001, %v993
      %v1242 = vpack.c.b16 %v1002, %v994
      %v1243 = vpack.c.b16 %v1011, %v1003
      %v1244 = vpack.c.b16 %v1012, %v1004
      %v1245 = vpack.c.b16 %v1013, %v1005
      %v1246 = vpack.c.b16 %v1014, %v1006
      %v1247 = vpack.c.b16 %v1015, %v1007
      %v1248 = vpack.c.b16 %v1016, %v1008
      %v1249 = vpack.c.b16 %v1017, %v1009
      %v1250 = vpack.c.b16 %v1018, %v1010
      %v1251 = vpack.c.b16 %v1027, %v1019
      %v1252 = vpack.c.b16 %v1028, %v1020
      %v1253 = vpack.c.b16 %v1029, %v1021
      %v1254 = vpack.c.b16 %v1030, %v1022
      %v1255 = vpack.c.b16 %v1031, %v1023
      %v1256 = vpack.c.b16 %v1032, %v1024
      %v1257 = vpack.c.b16 %v1033, %v1025
      %v1258 = vpack.c.b16 %v1034, %v1026
      %v1259 = vpack.c.b16 %v1043, %v1035
      %v1260 = vpack.c.b16 %v1044, %v1036
      %v1261 = vpack.c.b16 %v1045, %v1037
      %v1262 = vpack.c.b16 %v1046, %v1038
      %v1263 = vpack.c.b16 %v1047, %v1039
      %v1264 = vpack.c.b16 %v1048, %v1040
      %v1265 = vpack.c.b16 %v1049, %v1041
      %v1266 = vpack.c.b16 %v1050, %v1042
      %v1267 = vpack.c.b16 %v1059, %v1051
      %v1268 = vpack.c.b16 %v1060, %v1052
      %v1269 = vpack.c.b16 %v1061, %v1053
      %v1270 = vpack.c.b16 %v1062, %v1054
      %v1271 = vpack.c.b16 %v1063, %v1055
      %v1272 = vpack.c.b16 %v1064, %v1056
      %v1273 = vpack.c.b16 %v1065, %v1057
      %v1274 = vpack.c.b16 %v1066, %v1058
      %v1275 = vpack.c.b16 %v1075, %v1067
      %v1276 = vpack.c.b16 %v1076, %v1068
      %v1277 = vpack.c.b16 %v1077, %v1069
      %v1278 = vpack.c.b16 %v1078, %v1070
      %v1279 = vpack.c.b16 %v1079, %v1071
      %v1280 = vpack.c.b16 %v1080, %v1072
      %v1281 = vpack.c.b16 %v1081, %v1073
      %v1282 = vpack.c.b16 %v1082, %v1074
      %v1283 = vpack.c.b16 %v1091, %v1083
      %v1284 = vpack.c.b16 %v1092, %v1084
      %v1285 = vpack.c.b16 %v1093, %v1085
      %v1286 = vpack.c.b16 %v1094, %v1086
      %v1287 = vpack.c.b16 %v1095, %v1087
      %v1288 = vpack.c.b16 %v1096, %v1088
      %v1289 = vpack.c.b16 %v1097, %v1089
      %v1290 = vpack.c.b16 %v1098, %v1090
      %v1291 = vpack.c.b16 %v1107, %v1099
      %v1292 = vpack.c.b16 %v1108, %v1100
      %v1293 = vpack.c.b16 %v1109, %v1101
      %v1294 = vpack.c.b16 %v1110, %v1102
      %v1295 = vpack.c.b16 %v1111, %v1103
      %v1296 = vpack.c.b16 %v1112, %v1104
      %v1297 = vpack.c.b16 %v1113, %v1105
      %v1298 = vpack.c.b16 %v1114, %v1106
      %v1299 = vpack.c.b16 %v1123, %v1115
      %v1300 = vpack.c.b16 %v1124, %v1116
      %v1301 = vpack.c.b16 %v1125, %v1117
      %v1302 = vpack.c.b16 %v1126, %v1118
      %v1303 = vpack.c.b16 %v1127, %v1119
      %v1304 = vpack.c.b16 %v1128, %v1120
      %v1305 = vpack.c.b16 %v1129, %v1121
      %v1306 = vpack.c.b16 %v1130, %v1122
      %v1307 = vpack.c.b16 %v1139, %v1131
      %v1308 = vpack.c.b16 %v1140, %v1132
      %v1309 = vpack.c.b16 %v1141, %v1133
      %v1310 = vpack.c.b16 %v1142, %v1134
      %v1311 = vpack.c.b16 %v1143, %v1135
      %v1312 = vpack.c.b16 %v1144, %v1136
      %v1313 = vpack.c.b16 %v1145, %v1137
      %v1314 = vpack.c.b16 %v1146, %v1138
      %v1315 = vpack.c.b16 %v1155, %v1147
      %v1316 = vpack.c.b16 %v1156, %v1148
      %v1317 = vpack.c.b16 %v1157, %v1149
      %v1318 = vpack.c.b16 %v1158, %v1150
      %v1319 = vpack.c.b16 %v1159, %v1151
      %v1320 = vpack.c.b16 %v1160, %v1152
      %v1321 = vpack.c.b16 %v1161, %v1153
      %v1322 = vpack.c.b16 %v1162, %v1154
      %v1323 = vpack.c.b16 %v1171, %v1163
      %v1324 = vpack.c.b16 %v1172, %v1164
      %v1325 = vpack.c.b16 %v1173, %v1165
      %v1326 = vpack.c.b16 %v1174, %v1166
      %v1327 = vpack.c.b16 %v1175, %v1167
      %v1328 = vpack.c.b16 %v1176, %v1168
      %v1329 = vpack.c.b16 %v1177, %v1169
      %v1330 = vpack.c.b16 %v1178, %v1170
      %v1331 = vpack.c.b16 %v1187, %v1179
      %v1332 = vpack.c.b16 %v1188, %v1180
      %v1333 = vpack.c.b16 %v1189, %v1181
      %v1334 = vpack.c.b16 %v1190, %v1182
      %v1335 = vpack.c.b16 %v1191, %v1183
      %v1336 = vpack.c.b16 %v1192, %v1184
      %v1337 = vpack.c.b16 %v1193, %v1185
      %v1338 = vpack.c.b16 %v1194, %v1186
      %v1339 = vpack.c.b16 %v1203, %v1195
      %v1340 = vpack.c.b16 %v1204, %v1196
      %v1341 = vpack.c.b16 %v1205, %v1197
      %v1342 = vpack.c.b16 %v1206, %v1198
      %v1343 = vpack.c.b16 %v1207, %v1199
      %v1344 = vpack.c.b16 %v1208, %v1200
      %v1345 = vpack.c.b16 %v1209, %v1201
      %v1346 = vpack.c.b16 %v1210, %v1202
      %v1347 = vpack.c.b16 %v1219, %v1211
      %v1348 = vpack.c.b16 %v1220, %v1212
      %v1349 = vpack.c.b16 %v1221, %v1213
      %v1350 = vpack.c.b16 %v1222, %v1214
      %v1351 = vpack.c.b16 %v1223, %v1215
      %v1352 = vpack.c.b16 %v1224, %v1216
      %v1353 = vpack.c.b16 %v1225, %v1217
      %v1354 = vpack.c.b16 %v1226, %v1218
      %v1611 = vunpack.c.l.b16 %v715
      %v1612 = vunpack.c.l.b16 %v716
      %v1613 = vunpack.c.l.b16 %v717
      %v1614 = vunpack.c.l.b16 %v718
      %v1615 = vunpack.c.l.b16 %v719
      %v1616 = vunpack.c.l.b16 %v720
      %v1617 = vunpack.c.l.b16 %v721
      %v1618 = vunpack.c.l.b16 %v722
      %v1619 = vunpack.c.l.b16 %v723
      %v1620 = vunpack.c.l.b16 %v724
      %v1621 = vunpack.c.l.b16 %v725
      %v1622 = vunpack.c.l.b16 %v726
      %v1623 = vunpack.c.l.b16 %v727
      %v1624 = vunpack.c.l.b16 %v728
      %v1625 = vunpack.c.l.b16 %v729
      %v1626 = vunpack.c.l.b16 %v730
      %v1627 = vunpack.c.l.b16 %v731
      %v1628 = vunpack.c.l.b16 %v732
      %v1629 = vunpack.c.l.b16 %v733
      %v1630 = vunpack.c.l.b16 %v734
      %v1631 = vunpack.c.l.b16 %v735
      %v1632 = vunpack.c.l.b16 %v736
      %v1633 = vunpack.c.l.b16 %v737
      %v1634 = vunpack.c.l.b16 %v738
      %v1635 = vunpack.c.l.b16 %v739
      %v1636 = vunpack.c.l.b16 %v740
      %v1637 = vunpack.c.l.b16 %v741
      %v1638 = vunpack.c.l.b16 %v742
      %v1639 = vunpack.c.l.b16 %v743
      %v1640 = vunpack.c.l.b16 %v744
      %v1641 = vunpack.c.l.b16 %v745
      %v1642 = vunpack.c.l.b16 %v746
      %v1643 = vunpack.c.l.b16 %v747
      %v1644 = vunpack.c.l.b16 %v748
      %v1645 = vunpack.c.l.b16 %v749
      %v1646 = vunpack.c.l.b16 %v750
      %v1647 = vunpack.c.l.b16 %v751
      %v1648 = vunpack.c.l.b16 %v752
      %v1649 = vunpack.c.l.b16 %v753
      %v1650 = vunpack.c.l.b16 %v754
      %v1651 = vunpack.c.l.b16 %v755
      %v1652 = vunpack.c.l.b16 %v756
      %v1653 = vunpack.c.l.b16 %v757
      %v1654 = vunpack.c.l.b16 %v758
      %v1655 = vunpack.c.l.b16 %v759
      %v1656 = vunpack.c.l.b16 %v760
      %v1657 = vunpack.c.l.b16 %v761
      %v1658 = vunpack.c.l.b16 %v762
      %v1659 = vunpack.c.l.b16 %v763
      %v1660 = vunpack.c.l.b16 %v764
      %v1661 = vunpack.c.l.b16 %v765
      %v1662 = vunpack.c.l.b16 %v766
      %v1663 = vunpack.c.l.b16 %v767
      %v1664 = vunpack.c.l.b16 %v768
      %v1665 = vunpack.c.l.b16 %v769
      %v1666 = vunpack.c.l.b16 %v770
      %v1667 = vunpack.c.l.b16 %v771
      %v1668 = vunpack.c.l.b16 %v772
      %v1669 = vunpack.c.l.b16 %v773
      %v1670 = vunpack.c.l.b16 %v774
      %v1671 = vunpack.c.l.b16 %v775
      %v1672 = vunpack.c.l.b16 %v776
      %v1673 = vunpack.c.l.b16 %v777
      %v1674 = vunpack.c.l.b16 %v778
      %v1675 = vunpack.c.l.b16 %v779
      %v1676 = vunpack.c.l.b16 %v780
      %v1677 = vunpack.c.l.b16 %v781
      %v1678 = vunpack.c.l.b16 %v782
      %v1679 = vunpack.c.l.b16 %v783
      %v1680 = vunpack.c.l.b16 %v784
      %v1681 = vunpack.c.l.b16 %v785
      %v1682 = vunpack.c.l.b16 %v786
      %v1683 = vunpack.c.l.b16 %v787
      %v1684 = vunpack.c.l.b16 %v788
      %v1685 = vunpack.c.l.b16 %v789
      %v1686 = vunpack.c.l.b16 %v790
      %v1687 = vunpack.c.l.b16 %v791
      %v1688 = vunpack.c.l.b16 %v792
      %v1689 = vunpack.c.l.b16 %v793
      %v1690 = vunpack.c.l.b16 %v794
      %v1691 = vunpack.c.l.b16 %v795
      %v1692 = vunpack.c.l.b16 %v796
      %v1693 = vunpack.c.l.b16 %v797
      %v1694 = vunpack.c.l.b16 %v798
      %v1695 = vunpack.c.l.b16 %v799
      %v1696 = vunpack.c.l.b16 %v800
      %v1697 = vunpack.c.l.b16 %v801
      %v1698 = vunpack.c.l.b16 %v802
      %v1699 = vunpack.c.l.b16 %v803
      %v1700 = vunpack.c.l.b16 %v804
      %v1701 = vunpack.c.l.b16 %v805
      %v1702 = vunpack.c.l.b16 %v806
      %v1703 = vunpack.c.l.b16 %v807
      %v1704 = vunpack.c.l.b16 %v808
      %v1705 = vunpack.c.l.b16 %v809
      %v1706 = vunpack.c.l.b16 %v810
      %v1707 = vunpack.c.l.b16 %v811
      %v1708 = vunpack.c.l.b16 %v812
      %v1709 = vunpack.c.l.b16 %v813
      %v1710 = vunpack.c.l.b16 %v814
      %v1711 = vunpack.c.l.b16 %v815
      %v1712 = vunpack.c.l.b16 %v816
      %v1713 = vunpack.c.l.b16 %v817
      %v1714 = vunpack.c.l.b16 %v818
      %v1715 = vunpack.c.l.b16 %v819
      %v1716 = vunpack.c.l.b16 %v820
      %v1717 = vunpack.c.l.b16 %v821
      %v1718 = vunpack.c.l.b16 %v822
      %v1719 = vunpack.c.l.b16 %v823
      %v1720 = vunpack.c.l.b16 %v824
      %v1721 = vunpack.c.l.b16 %v825
      %v1722 = vunpack.c.l.b16 %v826
      %v1723 = vunpack.c.l.b16 %v827
      %v1724 = vunpack.c.l.b16 %v828
      %v1725 = vunpack.c.l.b16 %v829
      %v1726 = vunpack.c.l.b16 %v830
      %v1727 = vunpack.c.l.b16 %v831
      %v1728 = vunpack.c.l.b16 %v832
      %v1729 = vunpack.c.l.b16 %v833
      %v1730 = vunpack.c.l.b16 %v834
      %v1731 = vunpack.c.l.b16 %v835
      %v1732 = vunpack.c.l.b16 %v836
      %v1733 = vunpack.c.l.b16 %v837
      %v1734 = vunpack.c.l.b16 %v838
      %v1735 = vunpack.c.l.b16 %v839
      %v1736 = vunpack.c.l.b16 %v840
      %v1737 = vunpack.c.l.b16 %v841
      %v1738 = vunpack.c.l.b16 %v842
      %v1739 = vpack.c.b16 %v1612, %v1611
      %v1740 = vpack.c.b16 %v1614, %v1613
      %v1741 = vpack.c.b16 %v1616, %v1615
      %v1742 = vpack.c.b16 %v1618, %v1617
      %v1743 = vpack.c.b16 %v1620, %v1619
      %v1744 = vpack.c.b16 %v1622, %v1621
      %v1745 = vpack.c.b16 %v1624, %v1623
      %v1746 = vpack.c.b16 %v1626, %v1625
      %v1747 = vpack.c.b16 %v1628, %v1627
      %v1748 = vpack.c.b16 %v1630, %v1629
      %v1749 = vpack.c.b16 %v1632, %v1631
      %v1750 = vpack.c.b16 %v1634, %v1633
      %v1751 = vpack.c.b16 %v1636, %v1635
      %v1752 = vpack.c.b16 %v1638, %v1637
      %v1753 = vpack.c.b16 %v1640, %v1639
      %v1754 = vpack.c.b16 %v1642, %v1641
      %v1755 = vpack.c.b16 %v1644, %v1643
      %v1756 = vpack.c.b16 %v1646, %v1645
      %v1757 = vpack.c.b16 %v1648, %v1647
      %v1758 = vpack.c.b16 %v1650, %v1649
      %v1759 = vpack.c.b16 %v1652, %v1651
      %v1760 = vpack.c.b16 %v1654, %v1653
      %v1761 = vpack.c.b16 %v1656, %v1655
      %v1762 = vpack.c.b16 %v1658, %v1657
      %v1763 = vpack.c.b16 %v1660, %v1659
      %v1764 = vpack.c.b16 %v1662, %v1661
      %v1765 = vpack.c.b16 %v1664, %v1663
      %v1766 = vpack.c.b16 %v1666, %v1665
      %v1767 = vpack.c.b16 %v1668, %v1667
      %v1768 = vpack.c.b16 %v1670, %v1669
      %v1769 = vpack.c.b16 %v1672, %v1671
      %v1770 = vpack.c.b16 %v1674, %v1673
      %v1771 = vpack.c.b16 %v1676, %v1675
      %v1772 = vpack.c.b16 %v1678, %v1677
      %v1773 = vpack.c.b16 %v1680, %v1679
      %v1774 = vpack.c.b16 %v1682, %v1681
      %v1775 = vpack.c.b16 %v1684, %v1683
      %v1776 = vpack.c.b16 %v1686, %v1685
      %v1777 = vpack.c.b16 %v1688, %v1687
      %v1778 = vpack.c.b16 %v1690, %v1689
      %v1779 = vpack.c.b16 %v1692, %v1691
      %v1780 = vpack.c.b16 %v1694, %v1693
      %v1781 = vpack.c.b16 %v1696, %v1695
      %v1782 = vpack.c.b16 %v1698, %v1697
      %v1783 = vpack.c.b16 %v1700, %v1699
      %v1784 = vpack.c.b16 %v1702, %v1701
      %v1785 = vpack.c.b16 %v1704, %v1703
      %v1786 = vpack.c.b16 %v1706, %v1705
      %v1787 = vpack.c.b16 %v1708, %v1707
      %v1788 = vpack.c.b16 %v1710, %v1709
      %v1789 = vpack.c.b16 %v1712, %v1711
      %v1790 = vpack.c.b16 %v1714, %v1713
      %v1791 = vpack.c.b16 %v1716, %v1715
      %v1792 = vpack.c.b16 %v1718, %v1717
      %v1793 = vpack.c.b16 %v1720, %v1719
      %v1794 = vpack.c.b16 %v1722, %v1721
      %v1795 = vpack.c.b16 %v1724, %v1723
      %v1796 = vpack.c.b16 %v1726, %v1725
      %v1797 = vpack.c.b16 %v1728, %v1727
      %v1798 = vpack.c.b16 %v1730, %v1729
      %v1799 = vpack.c.b16 %v1732, %v1731
      %v1800 = vpack.c.b16 %v1734, %v1733
      %v1801 = vpack.c.b16 %v1736, %v1735
      %v1802 = vpack.c.b16 %v1738, %v1737
      %1867 = vmatprep.subr.bf16.mxu0 0
      %1868 = vmatpush1.bf16.msra.mxu0 %v1746
      %1869 = vmatprep.subr.bf16.mxu0 0
      %1870 = vmatpush1.bf16.msra.mxu0 %v1745
      %1871 = vmatprep.subr.bf16.mxu0 0
      %1872 = vmatpush1.bf16.msra.mxu0 %v1744
      %1873 = vmatprep.subr.bf16.mxu0 0
      %1874 = vmatpush1.bf16.msra.mxu0 %v1743
      %1875 = vmatprep.subr.bf16.mxu0 0
      %1876 = vmatpush1.bf16.msra.mxu0 %v1742
      %1877 = vmatprep.subr.bf16.mxu0 0
      %1878 = vmatpush1.bf16.msra.mxu0 %v1741
      %1879 = vmatprep.subr.bf16.mxu0 0
      %1880 = vmatpush1.bf16.msra.mxu0 %v1740
      %1881 = vmatprep.subr.bf16.mxu0 0
      %1882 = vmatpush1.bf16.msra.mxu0 %v1739
      %1883 = vmatprep.subr.bf16.mxu0 0
      %1884 = vmatpush2.bf16.msra.mxu0 %v1754
      %1885 = vmatprep.subr.bf16.mxu0 0
      %1886 = vmatpush2.bf16.msra.mxu0 %v1753
      %1887 = vmatprep.subr.bf16.mxu0 0
      %1888 = vmatpush2.bf16.msra.mxu0 %v1752
      %1889 = vmatprep.subr.bf16.mxu0 0
      %1890 = vmatpush2.bf16.msra.mxu0 %v1751
      %1891 = vmatprep.subr.bf16.mxu0 0
      %1892 = vmatpush2.bf16.msra.mxu0 %v1750
      %1893 = vmatprep.subr.bf16.mxu0 0
      %1894 = vmatpush2.bf16.msra.mxu0 %v1749
      %1895 = vmatprep.subr.bf16.mxu0 0
      %1896 = vmatpush2.bf16.msra.mxu0 %v1748
      %1897 = vmatprep.subr.bf16.mxu0 0
      %1898 = vmatpush2.bf16.msra.mxu0 %v1747
      %1899 = vmatprep.mubr.bf16.mxu0 %v1228
      %1900 = vmatmul.mubr.bf16.gmra.mxu0 %v1227
      %v1901 = vpop.f32.mrf.mxu0
      %v1902 = vadd.f32 0.0, %v1901
      %v1903 = vpop.f32.mrf.mxu0
      %v1904 = vpop.f32.mrf.mxu0
      %v1905 = vadd.f32 0.0, %v1904
      %v1906 = vpop.f32.mrf.mxu0
      %1907 = vmatprep.mubr.bf16.mxu0 %v1236
      %1908 = vmatmul.mubr.bf16.gmra.mxu0 %v1235
      %v1909 = vpop.f32.mrf.mxu0
      %v1910 = vadd.f32 0.0, %v1909
      %v1911 = vpop.f32.mrf.mxu0
      %v1912 = vpop.f32.mrf.mxu0
      %v1913 = vadd.f32 0.0, %v1912
      %v1914 = vpop.f32.mrf.mxu0
      %1915 = vmatprep.mubr.bf16.mxu0 %v1244
      %1916 = vmatmul.mubr.bf16.gmra.mxu0 %v1243
      %v1917 = vpop.f32.mrf.mxu0
      %v1918 = vadd.f32 0.0, %v1917
      %v1919 = vpop.f32.mrf.mxu0
      %v1920 = vpop.f32.mrf.mxu0
      %v1921 = vadd.f32 0.0, %v1920
      %v1922 = vpop.f32.mrf.mxu0
      %1923 = vmatprep.mubr.bf16.mxu0 %v1252
      %1924 = vmatmul.mubr.bf16.gmra.mxu0 %v1251
      %v1925 = vpop.f32.mrf.mxu0
      %v1926 = vadd.f32 0.0, %v1925
      %v1927 = vpop.f32.mrf.mxu0
      %v1928 = vpop.f32.mrf.mxu0
      %v1929 = vadd.f32 0.0, %v1928
      %v1930 = vpop.f32.mrf.mxu0
      %1931 = vmatprep.mubr.bf16.mxu0 %v1260
      %1932 = vmatmul.mubr.bf16.gmra.mxu0 %v1259
      %v1933 = vpop.f32.mrf.mxu0
      %v1934 = vadd.f32 0.0, %v1933
      %v1935 = vpop.f32.mrf.mxu0
      %v1936 = vpop.f32.mrf.mxu0
      %v1937 = vadd.f32 0.0, %v1936
      %v1938 = vpop.f32.mrf.mxu0
      %1939 = vmatprep.mubr.bf16.mxu0 %v1268
      %1940 = vmatmul.mubr.bf16.gmra.mxu0 %v1267
      %v1941 = vpop.f32.mrf.mxu0
      %v1942 = vadd.f32 0.0, %v1941
      %v1943 = vpop.f32.mrf.mxu0
      %v1944 = vpop.f32.mrf.mxu0
      %v1945 = vadd.f32 0.0, %v1944
      %v1946 = vpop.f32.mrf.mxu0
      %1947 = vmatprep.mubr.bf16.mxu0 %v1276
      %1948 = vmatmul.mubr.bf16.gmra.mxu0 %v1275
      %v1949 = vpop.f32.mrf.mxu0
      %v1950 = vadd.f32 0.0, %v1949
      %v1951 = vpop.f32.mrf.mxu0
      %v1952 = vpop.f32.mrf.mxu0
      %v1953 = vadd.f32 0.0, %v1952
      %v1954 = vpop.f32.mrf.mxu0
      %1955 = vmatprep.mubr.bf16.mxu0 %v1284
      %1956 = vmatmul.mubr.bf16.gmra.mxu0 %v1283
      %v1957 = vpop.f32.mrf.mxu0
      %v1958 = vadd.f32 0.0, %v1957
      %v1959 = vpop.f32.mrf.mxu0
      %v1960 = vpop.f32.mrf.mxu0
      %v1961 = vadd.f32 0.0, %v1960
      %v1962 = vpop.f32.mrf.mxu0
      %1963 = vmatprep.mubr.bf16.mxu0 %v1292
      %1964 = vmatmul.mubr.bf16.gmra.mxu0 %v1291
      %v1965 = vpop.f32.mrf.mxu0
      %v1966 = vadd.f32 0.0, %v1965
      %v1967 = vpop.f32.mrf.mxu0
      %v1968 = vpop.f32.mrf.mxu0
      %v1969 = vadd.f32 0.0, %v1968
      %v1970 = vpop.f32.mrf.mxu0
      %1971 = vmatprep.mubr.bf16.mxu0 %v1300
      %1972 = vmatmul.mubr.bf16.gmra.mxu0 %v1299
      %v1973 = vpop.f32.mrf.mxu0
      %v1974 = vadd.f32 0.0, %v1973
      %v1975 = vpop.f32.mrf.mxu0
      %v1976 = vpop.f32.mrf.mxu0
      %v1977 = vadd.f32 0.0, %v1976
      %v1978 = vpop.f32.mrf.mxu0
      %1979 = vmatprep.mubr.bf16.mxu0 %v1308
      %1980 = vmatmul.mubr.bf16.gmra.mxu0 %v1307
      %v1981 = vpop.f32.mrf.mxu0
      %v1982 = vadd.f32 0.0, %v1981
      %v1983 = vpop.f32.mrf.mxu0
      %v1984 = vpop.f32.mrf.mxu0
      %v1985 = vadd.f32 0.0, %v1984
      %v1986 = vpop.f32.mrf.mxu0
      %1987 = vmatprep.mubr.bf16.mxu0 %v1316
      %1988 = vmatmul.mubr.bf16.gmra.mxu0 %v1315
      %v1989 = vpop.f32.mrf.mxu0
      %v1990 = vadd.f32 0.0, %v1989
      %v1991 = vpop.f32.mrf.mxu0
      %v1992 = vpop.f32.mrf.mxu0
      %v1993 = vadd.f32 0.0, %v1992
      %v1994 = vpop.f32.mrf.mxu0
      %1995 = vmatprep.mubr.bf16.mxu0 %v1324
      %1996 = vmatmul.mubr.bf16.gmra.mxu0 %v1323
      %v1997 = vpop.f32.mrf.mxu0
      %v1998 = vadd.f32 0.0, %v1997
      %v1999 = vpop.f32.mrf.mxu0
      %v2000 = vpop.f32.mrf.mxu0
      %v2001 = vadd.f32 0.0, %v2000
      %v2002 = vpop.f32.mrf.mxu0
      %2003 = vmatprep.mubr.bf16.mxu0 %v1332
      %2004 = vmatmul.mubr.bf16.gmra.mxu0 %v1331
      %v2005 = vpop.f32.mrf.mxu0
      %v2006 = vadd.f32 0.0, %v2005
      %v2007 = vpop.f32.mrf.mxu0
      %v2008 = vpop.f32.mrf.mxu0
      %v2009 = vadd.f32 0.0, %v2008
      %v2010 = vpop.f32.mrf.mxu0
      %2011 = vmatprep.mubr.bf16.mxu0 %v1340
      %2012 = vmatmul.mubr.bf16.gmra.mxu0 %v1339
      %v2013 = vpop.f32.mrf.mxu0
      %v2014 = vadd.f32 0.0, %v2013
      %v2015 = vpop.f32.mrf.mxu0
      %v2016 = vpop.f32.mrf.mxu0
      %v2017 = vadd.f32 0.0, %v2016
      %v2018 = vpop.f32.mrf.mxu0
      %2019 = vmatprep.mubr.bf16.mxu0 %v1348
      %2020 = vmatmul.mubr.bf16.gmra.mxu0 %v1347
      %v2021 = vpop.f32.mrf.mxu0
      %v2022 = vadd.f32 0.0, %v2021
      %v2023 = vpop.f32.mrf.mxu0
      %v2024 = vpop.f32.mrf.mxu0
      %v2025 = vadd.f32 0.0, %v2024
      %v2026 = vpop.f32.mrf.mxu0
      %2027 = vdwg.mxu0
      %2028 = vmatprep.subr.bf16.mxu0 0
      %2029 = vmatpush1.bf16.msra.mxu0 %v1762
      %2030 = vmatprep.subr.bf16.mxu0 0
      %2031 = vmatpush1.bf16.msra.mxu0 %v1761
      %2032 = vmatprep.subr.bf16.mxu0 0
      %2033 = vmatpush1.bf16.msra.mxu0 %v1760
      %2034 = vmatprep.subr.bf16.mxu0 0
      %2035 = vmatpush1.bf16.msra.mxu0 %v1759
      %2036 = vmatprep.subr.bf16.mxu0 0
      %2037 = vmatpush1.bf16.msra.mxu0 %v1758
      %2038 = vmatprep.subr.bf16.mxu0 0
      %2039 = vmatpush1.bf16.msra.mxu0 %v1757
      %2040 = vmatprep.subr.bf16.mxu0 0
      %2041 = vmatpush1.bf16.msra.mxu0 %v1756
      %2042 = vmatprep.subr.bf16.mxu0 0
      %2043 = vmatpush1.bf16.msra.mxu0 %v1755
      %2044 = vmatprep.subr.bf16.mxu0 0
      %2045 = vmatpush2.bf16.msra.mxu0 %v1770
      %2046 = vmatprep.subr.bf16.mxu0 0
      %2047 = vmatpush2.bf16.msra.mxu0 %v1769
      %2048 = vmatprep.subr.bf16.mxu0 0
      %2049 = vmatpush2.bf16.msra.mxu0 %v1768
      %2050 = vmatprep.subr.bf16.mxu0 0
      %2051 = vmatpush2.bf16.msra.mxu0 %v1767
      %2052 = vmatprep.subr.bf16.mxu0 0
      %2053 = vmatpush2.bf16.msra.mxu0 %v1766
      %2054 = vmatprep.subr.bf16.mxu0 0
      %2055 = vmatpush2.bf16.msra.mxu0 %v1765
      %2056 = vmatprep.subr.bf16.mxu0 0
      %2057 = vmatpush2.bf16.msra.mxu0 %v1764
      %2058 = vmatprep.subr.bf16.mxu0 0
      %2059 = vmatpush2.bf16.msra.mxu0 %v1763
      %2060 = vmatprep.mubr.bf16.mxu0 %v1230
      %2061 = vmatmul.mubr.bf16.gmra.mxu0 %v1229
      %v2062 = vpop.f32.mrf.mxu0
      %v2063 = vadd.f32 %v1902, %v2062
      %v2064 = vpop.f32.mrf.mxu0
      %v2065 = vpop.f32.mrf.mxu0
      %v2066 = vadd.f32 %v1905, %v2065
      %v2067 = vpop.f32.mrf.mxu0
      %2068 = vmatprep.mubr.bf16.mxu0 %v1238
      %2069 = vmatmul.mubr.bf16.gmra.mxu0 %v1237
      %v2070 = vpop.f32.mrf.mxu0
      %v2071 = vadd.f32 %v1910, %v2070
      %v2072 = vpop.f32.mrf.mxu0
      %v2073 = vpop.f32.mrf.mxu0
      %v2074 = vadd.f32 %v1913, %v2073
      %v2075 = vpop.f32.mrf.mxu0
      %2076 = vmatprep.mubr.bf16.mxu0 %v1246
      %2077 = vmatmul.mubr.bf16.gmra.mxu0 %v1245
      %v2078 = vpop.f32.mrf.mxu0
      %v2079 = vadd.f32 %v1918, %v2078
      %v2080 = vpop.f32.mrf.mxu0
      %v2081 = vpop.f32.mrf.mxu0
      %v2082 = vadd.f32 %v1921, %v2081
      %v2083 = vpop.f32.mrf.mxu0
      %2084 = vmatprep.mubr.bf16.mxu0 %v1254
      %2085 = vmatmul.mubr.bf16.gmra.mxu0 %v1253
      %v2086 = vpop.f32.mrf.mxu0
      %v2087 = vadd.f32 %v1926, %v2086
      %v2088 = vpop.f32.mrf.mxu0
      %v2089 = vpop.f32.mrf.mxu0
      %v2090 = vadd.f32 %v1929, %v2089
      %v2091 = vpop.f32.mrf.mxu0
      %2092 = vmatprep.mubr.bf16.mxu0 %v1262
      %2093 = vmatmul.mubr.bf16.gmra.mxu0 %v1261
      %v2094 = vpop.f32.mrf.mxu0
      %v2095 = vadd.f32 %v1934, %v2094
      %v2096 = vpop.f32.mrf.mxu0
      %v2097 = vpop.f32.mrf.mxu0
      %v2098 = vadd.f32 %v1937, %v2097
      %v2099 = vpop.f32.mrf.mxu0
      %2100 = vmatprep.mubr.bf16.mxu0 %v1270
      %2101 = vmatmul.mubr.bf16.gmra.mxu0 %v1269
      %v2102 = vpop.f32.mrf.mxu0
      %v2103 = vadd.f32 %v1942, %v2102
      %v2104 = vpop.f32.mrf.mxu0
      %v2105 = vpop.f32.mrf.mxu0
      %v2106 = vadd.f32 %v1945, %v2105
      %v2107 = vpop.f32.mrf.mxu0
      %2108 = vmatprep.mubr.bf16.mxu0 %v1278
      %2109 = vmatmul.mubr.bf16.gmra.mxu0 %v1277
      %v2110 = vpop.f32.mrf.mxu0
      %v2111 = vadd.f32 %v1950, %v2110
      %v2112 = vpop.f32.mrf.mxu0
      %v2113 = vpop.f32.mrf.mxu0
      %v2114 = vadd.f32 %v1953, %v2113
      %v2115 = vpop.f32.mrf.mxu0
      %2116 = vmatprep.mubr.bf16.mxu0 %v1286
      %2117 = vmatmul.mubr.bf16.gmra.mxu0 %v1285
      %v2118 = vpop.f32.mrf.mxu0
      %v2119 = vadd.f32 %v1958, %v2118
      %v2120 = vpop.f32.mrf.mxu0
      %v2121 = vpop.f32.mrf.mxu0
      %v2122 = vadd.f32 %v1961, %v2121
      %v2123 = vpop.f32.mrf.mxu0
      %2124 = vmatprep.mubr.bf16.mxu0 %v1294
      %2125 = vmatmul.mubr.bf16.gmra.mxu0 %v1293
      %v2126 = vpop.f32.mrf.mxu0
      %v2127 = vadd.f32 %v1966, %v2126
      %v2128 = vpop.f32.mrf.mxu0
      %v2129 = vpop.f32.mrf.mxu0
      %v2130 = vadd.f32 %v1969, %v2129
      %v2131 = vpop.f32.mrf.mxu0
      %2132 = vmatprep.mubr.bf16.mxu0 %v1302
      %2133 = vmatmul.mubr.bf16.gmra.mxu0 %v1301
      %v2134 = vpop.f32.mrf.mxu0
      %v2135 = vadd.f32 %v1974, %v2134
      %v2136 = vpop.f32.mrf.mxu0
      %v2137 = vpop.f32.mrf.mxu0
      %v2138 = vadd.f32 %v1977, %v2137
      %v2139 = vpop.f32.mrf.mxu0
      %2140 = vmatprep.mubr.bf16.mxu0 %v1310
      %2141 = vmatmul.mubr.bf16.gmra.mxu0 %v1309
      %v2142 = vpop.f32.mrf.mxu0
      %v2143 = vadd.f32 %v1982, %v2142
      %v2144 = vpop.f32.mrf.mxu0
      %v2145 = vpop.f32.mrf.mxu0
      %v2146 = vadd.f32 %v1985, %v2145
      %v2147 = vpop.f32.mrf.mxu0
      %2148 = vmatprep.mubr.bf16.mxu0 %v1318
      %2149 = vmatmul.mubr.bf16.gmra.mxu0 %v1317
      %v2150 = vpop.f32.mrf.mxu0
      %v2151 = vadd.f32 %v1990, %v2150
      %v2152 = vpop.f32.mrf.mxu0
      %v2153 = vpop.f32.mrf.mxu0
      %v2154 = vadd.f32 %v1993, %v2153
      %v2155 = vpop.f32.mrf.mxu0
      %2156 = vmatprep.mubr.bf16.mxu0 %v1326
      %2157 = vmatmul.mubr.bf16.gmra.mxu0 %v1325
      %v2158 = vpop.f32.mrf.mxu0
      %v2159 = vadd.f32 %v1998, %v2158
      %v2160 = vpop.f32.mrf.mxu0
      %v2161 = vpop.f32.mrf.mxu0
      %v2162 = vadd.f32 %v2001, %v2161
      %v2163 = vpop.f32.mrf.mxu0
      %2164 = vmatprep.mubr.bf16.mxu0 %v1334
      %2165 = vmatmul.mubr.bf16.gmra.mxu0 %v1333
      %v2166 = vpop.f32.mrf.mxu0
      %v2167 = vadd.f32 %v2006, %v2166
      %v2168 = vpop.f32.mrf.mxu0
      %v2169 = vpop.f32.mrf.mxu0
      %v2170 = vadd.f32 %v2009, %v2169
      %v2171 = vpop.f32.mrf.mxu0
      %2172 = vmatprep.mubr.bf16.mxu0 %v1342
      %2173 = vmatmul.mubr.bf16.gmra.mxu0 %v1341
      %v2174 = vpop.f32.mrf.mxu0
      %v2175 = vadd.f32 %v2014, %v2174
      %v2176 = vpop.f32.mrf.mxu0
      %v2177 = vpop.f32.mrf.mxu0
      %v2178 = vadd.f32 %v2017, %v2177
      %v2179 = vpop.f32.mrf.mxu0
      %2180 = vmatprep.mubr.bf16.mxu0 %v1350
      %2181 = vmatmul.mubr.bf16.gmra.mxu0 %v1349
      %v2182 = vpop.f32.mrf.mxu0
      %v2183 = vadd.f32 %v2022, %v2182
      %v2184 = vpop.f32.mrf.mxu0
      %v2185 = vpop.f32.mrf.mxu0
      %v2186 = vadd.f32 %v2025, %v2185
      %v2187 = vpop.f32.mrf.mxu0
      %2188 = vdwg.mxu0
      %2189 = vmatprep.subr.bf16.mxu0 0
      %2190 = vmatpush1.bf16.msra.mxu0 %v1778
      %2191 = vmatprep.subr.bf16.mxu0 0
      %2192 = vmatpush1.bf16.msra.mxu0 %v1777
      %2193 = vmatprep.subr.bf16.mxu0 0
      %2194 = vmatpush1.bf16.msra.mxu0 %v1776
      %2195 = vmatprep.subr.bf16.mxu0 0
      %2196 = vmatpush1.bf16.msra.mxu0 %v1775
      %2197 = vmatprep.subr.bf16.mxu0 0
      %2198 = vmatpush1.bf16.msra.mxu0 %v1774
      %2199 = vmatprep.subr.bf16.mxu0 0
      %2200 = vmatpush1.bf16.msra.mxu0 %v1773
      %2201 = vmatprep.subr.bf16.mxu0 0
      %2202 = vmatpush1.bf16.msra.mxu0 %v1772
      %2203 = vmatprep.subr.bf16.mxu0 0
      %2204 = vmatpush1.bf16.msra.mxu0 %v1771
      %2205 = vmatprep.subr.bf16.mxu0 0
      %2206 = vmatpush2.bf16.msra.mxu0 %v1786
      %2207 = vmatprep.subr.bf16.mxu0 0
      %2208 = vmatpush2.bf16.msra.mxu0 %v1785
      %2209 = vmatprep.subr.bf16.mxu0 0
      %2210 = vmatpush2.bf16.msra.mxu0 %v1784
      %2211 = vmatprep.subr.bf16.mxu0 0
      %2212 = vmatpush2.bf16.msra.mxu0 %v1783
      %2213 = vmatprep.subr.bf16.mxu0 0
      %2214 = vmatpush2.bf16.msra.mxu0 %v1782
      %2215 = vmatprep.subr.bf16.mxu0 0
      %2216 = vmatpush2.bf16.msra.mxu0 %v1781
      %2217 = vmatprep.subr.bf16.mxu0 0
      %2218 = vmatpush2.bf16.msra.mxu0 %v1780
      %2219 = vmatprep.subr.bf16.mxu0 0
      %2220 = vmatpush2.bf16.msra.mxu0 %v1779
      %2221 = vmatprep.mubr.bf16.mxu0 %v1232
      %2222 = vmatmul.mubr.bf16.gmra.mxu0 %v1231
      %v2223 = vpop.f32.mrf.mxu0
      %v2224 = vadd.f32 %v2063, %v2223
      %v2225 = vpop.f32.mrf.mxu0
      %v2226 = vpop.f32.mrf.mxu0
      %v2227 = vadd.f32 %v2066, %v2226
      %v2228 = vpop.f32.mrf.mxu0
      %2229 = vmatprep.mubr.bf16.mxu0 %v1240
      %2230 = vmatmul.mubr.bf16.gmra.mxu0 %v1239
      %v2231 = vpop.f32.mrf.mxu0
      %v2232 = vadd.f32 %v2071, %v2231
      %v2233 = vpop.f32.mrf.mxu0
      %v2234 = vpop.f32.mrf.mxu0
      %v2235 = vadd.f32 %v2074, %v2234
      %v2236 = vpop.f32.mrf.mxu0
      %2237 = vmatprep.mubr.bf16.mxu0 %v1248
      %2238 = vmatmul.mubr.bf16.gmra.mxu0 %v1247
      %v2239 = vpop.f32.mrf.mxu0
      %v2240 = vadd.f32 %v2079, %v2239
      %v2241 = vpop.f32.mrf.mxu0
      %v2242 = vpop.f32.mrf.mxu0
      %v2243 = vadd.f32 %v2082, %v2242
      %v2244 = vpop.f32.mrf.mxu0
      %2245 = vmatprep.mubr.bf16.mxu0 %v1256
      %2246 = vmatmul.mubr.bf16.gmra.mxu0 %v1255
      %v2247 = vpop.f32.mrf.mxu0
      %v2248 = vadd.f32 %v2087, %v2247
      %v2249 = vpop.f32.mrf.mxu0
      %v2250 = vpop.f32.mrf.mxu0
      %v2251 = vadd.f32 %v2090, %v2250
      %v2252 = vpop.f32.mrf.mxu0
      %2253 = vmatprep.mubr.bf16.mxu0 %v1264
      %2254 = vmatmul.mubr.bf16.gmra.mxu0 %v1263
      %v2255 = vpop.f32.mrf.mxu0
      %v2256 = vadd.f32 %v2095, %v2255
      %v2257 = vpop.f32.mrf.mxu0
      %v2258 = vpop.f32.mrf.mxu0
      %v2259 = vadd.f32 %v2098, %v2258
      %v2260 = vpop.f32.mrf.mxu0
      %2261 = vmatprep.mubr.bf16.mxu0 %v1272
      %2262 = vmatmul.mubr.bf16.gmra.mxu0 %v1271
      %v2263 = vpop.f32.mrf.mxu0
      %v2264 = vadd.f32 %v2103, %v2263
      %v2265 = vpop.f32.mrf.mxu0
      %v2266 = vpop.f32.mrf.mxu0
      %v2267 = vadd.f32 %v2106, %v2266
      %v2268 = vpop.f32.mrf.mxu0
      %2269 = vmatprep.mubr.bf16.mxu0 %v1280
      %2270 = vmatmul.mubr.bf16.gmra.mxu0 %v1279
      %v2271 = vpop.f32.mrf.mxu0
      %v2272 = vadd.f32 %v2111, %v2271
      %v2273 = vpop.f32.mrf.mxu0
      %v2274 = vpop.f32.mrf.mxu0
      %v2275 = vadd.f32 %v2114, %v2274
      %v2276 = vpop.f32.mrf.mxu0
      %2277 = vmatprep.mubr.bf16.mxu0 %v1288
      %2278 = vmatmul.mubr.bf16.gmra.mxu0 %v1287
      %v2279 = vpop.f32.mrf.mxu0
      %v2280 = vadd.f32 %v2119, %v2279
      %v2281 = vpop.f32.mrf.mxu0
      %v2282 = vpop.f32.mrf.mxu0
      %v2283 = vadd.f32 %v2122, %v2282
      %v2284 = vpop.f32.mrf.mxu0
      %2285 = vmatprep.mubr.bf16.mxu0 %v1296
      %2286 = vmatmul.mubr.bf16.gmra.mxu0 %v1295
      %v2287 = vpop.f32.mrf.mxu0
      %v2288 = vadd.f32 %v2127, %v2287
      %v2289 = vpop.f32.mrf.mxu0
      %v2290 = vpop.f32.mrf.mxu0
      %v2291 = vadd.f32 %v2130, %v2290
      %v2292 = vpop.f32.mrf.mxu0
      %2293 = vmatprep.mubr.bf16.mxu0 %v1304
      %2294 = vmatmul.mubr.bf16.gmra.mxu0 %v1303
      %v2295 = vpop.f32.mrf.mxu0
      %v2296 = vadd.f32 %v2135, %v2295
      %v2297 = vpop.f32.mrf.mxu0
      %v2298 = vpop.f32.mrf.mxu0
      %v2299 = vadd.f32 %v2138, %v2298
      %v2300 = vpop.f32.mrf.mxu0
      %2301 = vmatprep.mubr.bf16.mxu0 %v1312
      %2302 = vmatmul.mubr.bf16.gmra.mxu0 %v1311
      %v2303 = vpop.f32.mrf.mxu0
      %v2304 = vadd.f32 %v2143, %v2303
      %v2305 = vpop.f32.mrf.mxu0
      %v2306 = vpop.f32.mrf.mxu0
      %v2307 = vadd.f32 %v2146, %v2306
      %v2308 = vpop.f32.mrf.mxu0
      %2309 = vmatprep.mubr.bf16.mxu0 %v1320
      %2310 = vmatmul.mubr.bf16.gmra.mxu0 %v1319
      %v2311 = vpop.f32.mrf.mxu0
      %v2312 = vadd.f32 %v2151, %v2311
      %v2313 = vpop.f32.mrf.mxu0
      %v2314 = vpop.f32.mrf.mxu0
      %v2315 = vadd.f32 %v2154, %v2314
      %v2316 = vpop.f32.mrf.mxu0
      %2317 = vmatprep.mubr.bf16.mxu0 %v1328
      %2318 = vmatmul.mubr.bf16.gmra.mxu0 %v1327
      %v2319 = vpop.f32.mrf.mxu0
      %v2320 = vadd.f32 %v2159, %v2319
      %v2321 = vpop.f32.mrf.mxu0
      %v2322 = vpop.f32.mrf.mxu0
      %v2323 = vadd.f32 %v2162, %v2322
      %v2324 = vpop.f32.mrf.mxu0
      %2325 = vmatprep.mubr.bf16.mxu0 %v1336
      %2326 = vmatmul.mubr.bf16.gmra.mxu0 %v1335
      %v2327 = vpop.f32.mrf.mxu0
      %v2328 = vadd.f32 %v2167, %v2327
      %v2329 = vpop.f32.mrf.mxu0
      %v2330 = vpop.f32.mrf.mxu0
      %v2331 = vadd.f32 %v2170, %v2330
      %v2332 = vpop.f32.mrf.mxu0
      %2333 = vmatprep.mubr.bf16.mxu0 %v1344
      %2334 = vmatmul.mubr.bf16.gmra.mxu0 %v1343
      %v2335 = vpop.f32.mrf.mxu0
      %v2336 = vadd.f32 %v2175, %v2335
      %v2337 = vpop.f32.mrf.mxu0
      %v2338 = vpop.f32.mrf.mxu0
      %v2339 = vadd.f32 %v2178, %v2338
      %v2340 = vpop.f32.mrf.mxu0
      %2341 = vmatprep.mubr.bf16.mxu0 %v1352
      %2342 = vmatmul.mubr.bf16.gmra.mxu0 %v1351
      %v2343 = vpop.f32.mrf.mxu0
      %v2344 = vadd.f32 %v2183, %v2343
      %v2345 = vpop.f32.mrf.mxu0
      %v2346 = vpop.f32.mrf.mxu0
      %v2347 = vadd.f32 %v2186, %v2346
      %v2348 = vpop.f32.mrf.mxu0
      %2349 = vdwg.mxu0
      %2350 = vmatprep.subr.bf16.mxu0 0
      %2351 = vmatpush1.bf16.msra.mxu0 %v1794
      %2352 = vmatprep.subr.bf16.mxu0 0
      %2353 = vmatpush1.bf16.msra.mxu0 %v1793
      %2354 = vmatprep.subr.bf16.mxu0 0
      %2355 = vmatpush1.bf16.msra.mxu0 %v1792
      %2356 = vmatprep.subr.bf16.mxu0 0
      %2357 = vmatpush1.bf16.msra.mxu0 %v1791
      %2358 = vmatprep.subr.bf16.mxu0 0
      %2359 = vmatpush1.bf16.msra.mxu0 %v1790
      %2360 = vmatprep.subr.bf16.mxu0 0
      %2361 = vmatpush1.bf16.msra.mxu0 %v1789
      %2362 = vmatprep.subr.bf16.mxu0 0
      %2363 = vmatpush1.bf16.msra.mxu0 %v1788
      %2364 = vmatprep.subr.bf16.mxu0 0
      %2365 = vmatpush1.bf16.msra.mxu0 %v1787
      %2366 = vmatprep.subr.bf16.mxu0 0
      %2367 = vmatpush2.bf16.msra.mxu0 %v1802
      %2368 = vmatprep.subr.bf16.mxu0 0
      %2369 = vmatpush2.bf16.msra.mxu0 %v1801
      %2370 = vmatprep.subr.bf16.mxu0 0
      %2371 = vmatpush2.bf16.msra.mxu0 %v1800
      %2372 = vmatprep.subr.bf16.mxu0 0
      %2373 = vmatpush2.bf16.msra.mxu0 %v1799
      %2374 = vmatprep.subr.bf16.mxu0 0
      %2375 = vmatpush2.bf16.msra.mxu0 %v1798
      %2376 = vmatprep.subr.bf16.mxu0 0
      %2377 = vmatpush2.bf16.msra.mxu0 %v1797
      %2378 = vmatprep.subr.bf16.mxu0 0
      %2379 = vmatpush2.bf16.msra.mxu0 %v1796
      %2380 = vmatprep.subr.bf16.mxu0 0
      %2381 = vmatpush2.bf16.msra.mxu0 %v1795
      %2382 = vmatprep.mubr.bf16.mxu0 %v1234
      %2383 = vmatmul.mubr.bf16.gmra.mxu0 %v1233
      %v2384 = vpop.f32.mrf.mxu0
      %v2385 = vadd.f32 %v2224, %v2384
      %v2386 = vpop.f32.mrf.mxu0
      %v2387 = vpop.f32.mrf.mxu0
      %v2388 = vadd.f32 %v2227, %v2387
      %v2389 = vpop.f32.mrf.mxu0
      %2390 = vmatprep.mubr.bf16.mxu0 %v1242
      %2391 = vmatmul.mubr.bf16.gmra.mxu0 %v1241
      %v2392 = vpop.f32.mrf.mxu0
      %v2393 = vadd.f32 %v2232, %v2392
      %v2394 = vpop.f32.mrf.mxu0
      %v2395 = vpop.f32.mrf.mxu0
      %v2396 = vadd.f32 %v2235, %v2395
      %v2397 = vpop.f32.mrf.mxu0
      %2398 = vmatprep.mubr.bf16.mxu0 %v1250
      %2399 = vmatmul.mubr.bf16.gmra.mxu0 %v1249
      %v2400 = vpop.f32.mrf.mxu0
      %v2401 = vadd.f32 %v2240, %v2400
      %v2402 = vpop.f32.mrf.mxu0
      %v2403 = vpop.f32.mrf.mxu0
      %v2404 = vadd.f32 %v2243, %v2403
      %v2405 = vpop.f32.mrf.mxu0
      %2406 = vmatprep.mubr.bf16.mxu0 %v1258
      %2407 = vmatmul.mubr.bf16.gmra.mxu0 %v1257
      %v2408 = vpop.f32.mrf.mxu0
      %v2409 = vadd.f32 %v2248, %v2408
      %v2410 = vpop.f32.mrf.mxu0
      %v2411 = vpop.f32.mrf.mxu0
      %v2412 = vadd.f32 %v2251, %v2411
      %v2413 = vpop.f32.mrf.mxu0
      %2414 = vmatprep.mubr.bf16.mxu0 %v1266
      %2415 = vmatmul.mubr.bf16.gmra.mxu0 %v1265
      %v2416 = vpop.f32.mrf.mxu0
      %v2417 = vadd.f32 %v2256, %v2416
      %v2418 = vpop.f32.mrf.mxu0
      %v2419 = vpop.f32.mrf.mxu0
      %v2420 = vadd.f32 %v2259, %v2419
      %v2421 = vpop.f32.mrf.mxu0
      %2422 = vmatprep.mubr.bf16.mxu0 %v1274
      %2423 = vmatmul.mubr.bf16.gmra.mxu0 %v1273
      %v2424 = vpop.f32.mrf.mxu0
      %v2425 = vadd.f32 %v2264, %v2424
      %v2426 = vpop.f32.mrf.mxu0
      %v2427 = vpop.f32.mrf.mxu0
      %v2428 = vadd.f32 %v2267, %v2427
      %v2429 = vpop.f32.mrf.mxu0
      %2430 = vmatprep.mubr.bf16.mxu0 %v1282
      %2431 = vmatmul.mubr.bf16.gmra.mxu0 %v1281
      %v2432 = vpop.f32.mrf.mxu0
      %v2433 = vadd.f32 %v2272, %v2432
      %v2434 = vpop.f32.mrf.mxu0
      %v2435 = vpop.f32.mrf.mxu0
      %v2436 = vadd.f32 %v2275, %v2435
      %v2437 = vpop.f32.mrf.mxu0
      %2438 = vmatprep.mubr.bf16.mxu0 %v1290
      %2439 = vmatmul.mubr.bf16.gmra.mxu0 %v1289
      %v2440 = vpop.f32.mrf.mxu0
      %v2441 = vadd.f32 %v2280, %v2440
      %v2442 = vpop.f32.mrf.mxu0
      %v2443 = vpop.f32.mrf.mxu0
      %v2444 = vadd.f32 %v2283, %v2443
      %v2445 = vpop.f32.mrf.mxu0
      %2446 = vmatprep.mubr.bf16.mxu0 %v1298
      %2447 = vmatmul.mubr.bf16.gmra.mxu0 %v1297
      %v2448 = vpop.f32.mrf.mxu0
      %v2449 = vadd.f32 %v2288, %v2448
      %v2450 = vpop.f32.mrf.mxu0
      %v2451 = vpop.f32.mrf.mxu0
      %v2452 = vadd.f32 %v2291, %v2451
      %v2453 = vpop.f32.mrf.mxu0
      %2454 = vmatprep.mubr.bf16.mxu0 %v1306
      %2455 = vmatmul.mubr.bf16.gmra.mxu0 %v1305
      %v2456 = vpop.f32.mrf.mxu0
      %v2457 = vadd.f32 %v2296, %v2456
      %v2458 = vpop.f32.mrf.mxu0
      %v2459 = vpop.f32.mrf.mxu0
      %v2460 = vadd.f32 %v2299, %v2459
      %v2461 = vpop.f32.mrf.mxu0
      %2462 = vmatprep.mubr.bf16.mxu0 %v1314
      %2463 = vmatmul.mubr.bf16.gmra.mxu0 %v1313
      %v2464 = vpop.f32.mrf.mxu0
      %v2465 = vadd.f32 %v2304, %v2464
      %v2466 = vpop.f32.mrf.mxu0
      %v2467 = vpop.f32.mrf.mxu0
      %v2468 = vadd.f32 %v2307, %v2467
      %v2469 = vpop.f32.mrf.mxu0
      %2470 = vmatprep.mubr.bf16.mxu0 %v1322
      %2471 = vmatmul.mubr.bf16.gmra.mxu0 %v1321
      %v2472 = vpop.f32.mrf.mxu0
      %v2473 = vadd.f32 %v2312, %v2472
      %v2474 = vpop.f32.mrf.mxu0
      %v2475 = vpop.f32.mrf.mxu0
      %v2476 = vadd.f32 %v2315, %v2475
      %v2477 = vpop.f32.mrf.mxu0
      %2478 = vmatprep.mubr.bf16.mxu0 %v1330
      %2479 = vmatmul.mubr.bf16.gmra.mxu0 %v1329
      %v2480 = vpop.f32.mrf.mxu0
      %v2481 = vadd.f32 %v2320, %v2480
      %v2482 = vpop.f32.mrf.mxu0
      %v2483 = vpop.f32.mrf.mxu0
      %v2484 = vadd.f32 %v2323, %v2483
      %v2485 = vpop.f32.mrf.mxu0
      %2486 = vmatprep.mubr.bf16.mxu0 %v1338
      %2487 = vmatmul.mubr.bf16.gmra.mxu0 %v1337
      %v2488 = vpop.f32.mrf.mxu0
      %v2489 = vadd.f32 %v2328, %v2488
      %v2490 = vpop.f32.mrf.mxu0
      %v2491 = vpop.f32.mrf.mxu0
      %v2492 = vadd.f32 %v2331, %v2491
      %v2493 = vpop.f32.mrf.mxu0
      %2494 = vmatprep.mubr.bf16.mxu0 %v1346
      %2495 = vmatmul.mubr.bf16.gmra.mxu0 %v1345
      %v2496 = vpop.f32.mrf.mxu0
      %v2497 = vadd.f32 %v2336, %v2496
      %v2498 = vpop.f32.mrf.mxu0
      %v2499 = vpop.f32.mrf.mxu0
      %v2500 = vadd.f32 %v2339, %v2499
      %v2501 = vpop.f32.mrf.mxu0
      %2502 = vmatprep.mubr.bf16.mxu0 %v1354
      %2503 = vmatmul.mubr.bf16.gmra.mxu0 %v1353
      %v2504 = vpop.f32.mrf.mxu0
      %v2505 = vadd.f32 %v2344, %v2504
      %v2506 = vpop.f32.mrf.mxu0
      %v2507 = vpop.f32.mrf.mxu0
      %v2508 = vadd.f32 %v2347, %v2507
      %v2509 = vpop.f32.mrf.mxu0
      %2510 = vdwg.mxu0
      %v2511 = vadd.f32 %v555, %v2385
      %v2512 = vadd.f32 %v556, %v2388
      %v2513 = vadd.f32 %v557, %v2393
      %v2514 = vadd.f32 %v558, %v2396
      %v2515 = vadd.f32 %v559, %v2401
      %v2516 = vadd.f32 %v560, %v2404
      %v2517 = vadd.f32 %v561, %v2409
      %v2518 = vadd.f32 %v562, %v2412
      %v2519 = vadd.f32 %v563, %v2417
      %v2520 = vadd.f32 %v564, %v2420
      %v2521 = vadd.f32 %v565, %v2425
      %v2522 = vadd.f32 %v566, %v2428
      %v2523 = vadd.f32 %v567, %v2433
      %v2524 = vadd.f32 %v568, %v2436
      %v2525 = vadd.f32 %v569, %v2441
      %v2526 = vadd.f32 %v570, %v2444
      %v2527 = vadd.f32 %v571, %v2449
      %v2528 = vadd.f32 %v572, %v2452
      %v2529 = vadd.f32 %v573, %v2457
      %v2530 = vadd.f32 %v574, %v2460
      %v2531 = vadd.f32 %v575, %v2465
      %v2532 = vadd.f32 %v576, %v2468
      %v2533 = vadd.f32 %v577, %v2473
      %v2534 = vadd.f32 %v578, %v2476
      %v2535 = vadd.f32 %v579, %v2481
      %v2536 = vadd.f32 %v580, %v2484
      %v2537 = vadd.f32 %v581, %v2489
      %v2538 = vadd.f32 %v582, %v2492
      %v2539 = vadd.f32 %v583, %v2497
      %v2540 = vadd.f32 %v584, %v2500
      %v2541 = vadd.f32 %v585, %v2505
      %v2542 = vadd.f32 %v586, %v2508
      %v2543 = vpack.c.bf16 %v2512, %v2511
      %v2544 = vpack.c.bf16 %v2514, %v2513
      %v2545 = vpack.c.bf16 %v2516, %v2515
      %v2546 = vpack.c.bf16 %v2518, %v2517
      %v2547 = vpack.c.bf16 %v2520, %v2519
      %v2548 = vpack.c.bf16 %v2522, %v2521
      %v2549 = vpack.c.bf16 %v2524, %v2523
      %v2550 = vpack.c.bf16 %v2526, %v2525
      %v2551 = vpack.c.bf16 %v2528, %v2527
      %v2552 = vpack.c.bf16 %v2530, %v2529
      %v2553 = vpack.c.bf16 %v2532, %v2531
      %v2554 = vpack.c.bf16 %v2534, %v2533
      %v2555 = vpack.c.bf16 %v2536, %v2535
      %v2556 = vpack.c.bf16 %v2538, %v2537
      %v2557 = vpack.c.bf16 %v2540, %v2539
      %v2558 = vpack.c.bf16 %v2542, %v2541
      %v2559 = vld [vmem:[%s5] sm:$0xff]
      %v2560 = vld [vmem:[%s5 + $0x8] sm:$0xff]
      %v2561 = vld [vmem:[%s5 + $0x10] sm:$0xff]
      %v2562 = vld [vmem:[%s5 + $0x18] sm:$0xff]
      %v2563 = vld [vmem:[%s5 + $0x20] sm:$0xff]
      %v2564 = vld [vmem:[%s5 + $0x28] sm:$0xff]
      %v2565 = vld [vmem:[%s5 + $0x30] sm:$0xff]
      %v2566 = vld [vmem:[%s5 + $0x38] sm:$0xff]
      %v2567 = vld [vmem:[%s5 + $0x40] sm:$0xff]
      %v2568 = vld [vmem:[%s5 + $0x48] sm:$0xff]
      %v2569 = vld [vmem:[%s5 + $0x50] sm:$0xff]
      %v2570 = vld [vmem:[%s5 + $0x58] sm:$0xff]
      %v2571 = vld [vmem:[%s5 + $0x60] sm:$0xff]
      %v2572 = vld [vmem:[%s5 + $0x68] sm:$0xff]
      %v2573 = vld [vmem:[%s5 + $0x70] sm:$0xff]
      %v2574 = vld [vmem:[%s5 + $0x78] sm:$0xff]
      %v2575 = vld [vmem:[%s6] sm:$0x3]
      %v2577 = vlaneseq
      %v2578 = vshrl.u32 %v2577, 7
      %v2579 = vsub.s32 0, %v2578
      %v2580 = vrot.slane %v2575, %v2579
      %v2581 = vlaneseq
      %v2582 = vshrl.u32 %v2581, 7
      %v2583 = vsub.s32 1, %v2582
      %v2584 = vrot.slane %v2575, %v2583
      %v2603 = vunpack.c.l.b16 %v2559
      %v2604 = vunpack.c.h.b16 %v2559
      %v2605 = vunpack.c.l.b16 %v2560
      %v2606 = vunpack.c.h.b16 %v2560
      %v2607 = vunpack.c.l.b16 %v2561
      %v2608 = vunpack.c.h.b16 %v2561
      %v2609 = vunpack.c.l.b16 %v2562
      %v2610 = vunpack.c.h.b16 %v2562
      %v2611 = vunpack.c.l.b16 %v2563
      %v2612 = vunpack.c.h.b16 %v2563
      %v2613 = vunpack.c.l.b16 %v2564
      %v2614 = vunpack.c.h.b16 %v2564
      %v2615 = vunpack.c.l.b16 %v2565
      %v2616 = vunpack.c.h.b16 %v2565
      %v2617 = vunpack.c.l.b16 %v2566
      %v2618 = vunpack.c.h.b16 %v2566
      %v2619 = vunpack.c.l.b16 %v2567
      %v2620 = vunpack.c.h.b16 %v2567
      %v2621 = vunpack.c.l.b16 %v2568
      %v2622 = vunpack.c.h.b16 %v2568
      %v2623 = vunpack.c.l.b16 %v2569
      %v2624 = vunpack.c.h.b16 %v2569
      %v2625 = vunpack.c.l.b16 %v2570
      %v2626 = vunpack.c.h.b16 %v2570
      %v2627 = vunpack.c.l.b16 %v2571
      %v2628 = vunpack.c.h.b16 %v2571
      %v2629 = vunpack.c.l.b16 %v2572
      %v2630 = vunpack.c.h.b16 %v2572
      %v2631 = vunpack.c.l.b16 %v2573
      %v2632 = vunpack.c.h.b16 %v2573
      %v2633 = vunpack.c.l.b16 %v2574
      %v2634 = vunpack.c.h.b16 %v2574
      %v2635 = vpack.c.b16 %v2605, %v2603
      %v2636 = vpack.c.b16 %v2606, %v2604
      %v2637 = vpack.c.b16 %v2609, %v2607
      %v2638 = vpack.c.b16 %v2610, %v2608
      %v2639 = vpack.c.b16 %v2613, %v2611
      %v2640 = vpack.c.b16 %v2614, %v2612
      %v2641 = vpack.c.b16 %v2617, %v2615
      %v2642 = vpack.c.b16 %v2618, %v2616
      %v2643 = vpack.c.b16 %v2621, %v2619
      %v2644 = vpack.c.b16 %v2622, %v2620
      %v2645 = vpack.c.b16 %v2625, %v2623
      %v2646 = vpack.c.b16 %v2626, %v2624
      %v2647 = vpack.c.b16 %v2629, %v2627
      %v2648 = vpack.c.b16 %v2630, %v2628
      %v2649 = vpack.c.b16 %v2633, %v2631
      %v2650 = vpack.c.b16 %v2634, %v2632
      %2667 = vmatprep.subr.bf16.mxu0 %v2650
      %2668 = vmatpush1.bf16.msra.mxu0 %v2649
      %2669 = vmatprep.subr.bf16.mxu0 %v2648
      %2670 = vmatpush1.bf16.msra.mxu0 %v2647
      %2671 = vmatprep.subr.bf16.mxu0 %v2646
      %2672 = vmatpush1.bf16.msra.mxu0 %v2645
      %2673 = vmatprep.subr.bf16.mxu0 %v2644
      %2674 = vmatpush1.bf16.msra.mxu0 %v2643
      %2675 = vmatprep.subr.bf16.mxu0 %v2642
      %2676 = vmatpush1.bf16.msra.mxu0 %v2641
      %2677 = vmatprep.subr.bf16.mxu0 %v2640
      %2678 = vmatpush1.bf16.msra.mxu0 %v2639
      %2679 = vmatprep.subr.bf16.mxu0 %v2638
      %2680 = vmatpush1.bf16.msra.mxu0 %v2637
      %2681 = vmatprep.subr.bf16.mxu0 %v2636
      %2682 = vmatpush1.bf16.msra.mxu0 %v2635
      %2683 = vmatprep.subr.bf16.mxu0 0
      %2684 = vmatpush2.bf16.msra.mxu0 0
      %2685 = vmatprep.subr.bf16.mxu0 0
      %2686 = vmatpush2.bf16.msra.mxu0 0
      %2687 = vmatprep.subr.bf16.mxu0 0
      %2688 = vmatpush2.bf16.msra.mxu0 0
      %2689 = vmatprep.subr.bf16.mxu0 0
      %2690 = vmatpush2.bf16.msra.mxu0 0
      %2691 = vmatprep.subr.bf16.mxu0 0
      %2692 = vmatpush2.bf16.msra.mxu0 0
      %2693 = vmatprep.subr.bf16.mxu0 0
      %2694 = vmatpush2.bf16.msra.mxu0 0
      %2695 = vmatprep.subr.bf16.mxu0 0
      %2696 = vmatpush2.bf16.msra.mxu0 0
      %2697 = vmatprep.subr.bf16.mxu0 0
      %2698 = vmatpush2.bf16.msra.mxu0 0
      %2699 = vmatprep.mubr.bf16.mxu0 0
      %2700 = vmatmul.mubr.bf16.gmra.mxu0 %v2543
      %v2701 = vpop.f32.mrf.mxu0
      %v2702 = vadd.f32 %v2580, %v2701
      %v2703 = vpop.f32.mrf.mxu0
      %v2704 = vadd.f32 %v2584, %v2703
      %v2705 = vpop.f32.mrf.mxu0
      %v2706 = vadd.f32 %v2580, %v2705
      %v2707 = vpop.f32.mrf.mxu0
      %v2708 = vadd.f32 %v2584, %v2707
      %2709 = vmatprep.mubr.bf16.mxu0 0
      %2710 = vmatmul.mubr.bf16.gmra.mxu0 %v2544
      %v2711 = vpop.f32.mrf.mxu0
      %v2712 = vadd.f32 %v2580, %v2711
      %v2713 = vpop.f32.mrf.mxu0
      %v2714 = vadd.f32 %v2584, %v2713
      %v2715 = vpop.f32.mrf.mxu0
      %v2716 = vadd.f32 %v2580, %v2715
      %v2717 = vpop.f32.mrf.mxu0
      %v2718 = vadd.f32 %v2584, %v2717
      %2719 = vmatprep.mubr.bf16.mxu0 0
      %2720 = vmatmul.mubr.bf16.gmra.mxu0 %v2545
      %v2721 = vpop.f32.mrf.mxu0
      %v2722 = vadd.f32 %v2580, %v2721
      %v2723 = vpop.f32.mrf.mxu0
      %v2724 = vadd.f32 %v2584, %v2723
      %v2725 = vpop.f32.mrf.mxu0
      %v2726 = vadd.f32 %v2580, %v2725
      %v2727 = vpop.f32.mrf.mxu0
      %v2728 = vadd.f32 %v2584, %v2727
      %2729 = vmatprep.mubr.bf16.mxu0 0
      %2730 = vmatmul.mubr.bf16.gmra.mxu0 %v2546
      %v2731 = vpop.f32.mrf.mxu0
      %v2732 = vadd.f32 %v2580, %v2731
      %v2733 = vpop.f32.mrf.mxu0
      %v2734 = vadd.f32 %v2584, %v2733
      %v2735 = vpop.f32.mrf.mxu0
      %v2736 = vadd.f32 %v2580, %v2735
      %v2737 = vpop.f32.mrf.mxu0
      %v2738 = vadd.f32 %v2584, %v2737
      %2739 = vmatprep.mubr.bf16.mxu0 0
      %2740 = vmatmul.mubr.bf16.gmra.mxu0 %v2547
      %v2741 = vpop.f32.mrf.mxu0
      %v2742 = vadd.f32 %v2580, %v2741
      %v2743 = vpop.f32.mrf.mxu0
      %v2744 = vadd.f32 %v2584, %v2743
      %v2745 = vpop.f32.mrf.mxu0
      %v2746 = vadd.f32 %v2580, %v2745
      %v2747 = vpop.f32.mrf.mxu0
      %v2748 = vadd.f32 %v2584, %v2747
      %2749 = vmatprep.mubr.bf16.mxu0 0
      %2750 = vmatmul.mubr.bf16.gmra.mxu0 %v2548
      %v2751 = vpop.f32.mrf.mxu0
      %v2752 = vadd.f32 %v2580, %v2751
      %v2753 = vpop.f32.mrf.mxu0
      %v2754 = vadd.f32 %v2584, %v2753
      %v2755 = vpop.f32.mrf.mxu0
      %v2756 = vadd.f32 %v2580, %v2755
      %v2757 = vpop.f32.mrf.mxu0
      %v2758 = vadd.f32 %v2584, %v2757
      %2759 = vmatprep.mubr.bf16.mxu0 0
      %2760 = vmatmul.mubr.bf16.gmra.mxu0 %v2549
      %v2761 = vpop.f32.mrf.mxu0
      %v2762 = vadd.f32 %v2580, %v2761
      %v2763 = vpop.f32.mrf.mxu0
      %v2764 = vadd.f32 %v2584, %v2763
      %v2765 = vpop.f32.mrf.mxu0
      %v2766 = vadd.f32 %v2580, %v2765
      %v2767 = vpop.f32.mrf.mxu0
      %v2768 = vadd.f32 %v2584, %v2767
      %2769 = vmatprep.mubr.bf16.mxu0 0
      %2770 = vmatmul.mubr.bf16.gmra.mxu0 %v2550
      %v2771 = vpop.f32.mrf.mxu0
      %v2772 = vadd.f32 %v2580, %v2771
      %v2773 = vpop.f32.mrf.mxu0
      %v2774 = vadd.f32 %v2584, %v2773
      %v2775 = vpop.f32.mrf.mxu0
      %v2776 = vadd.f32 %v2580, %v2775
      %v2777 = vpop.f32.mrf.mxu0
      %v2778 = vadd.f32 %v2584, %v2777
      %2779 = vmatprep.mubr.bf16.mxu0 0
      %2780 = vmatmul.mubr.bf16.gmra.mxu0 %v2551
      %v2781 = vpop.f32.mrf.mxu0
      %v2782 = vadd.f32 %v2580, %v2781
      %v2783 = vpop.f32.mrf.mxu0
      %v2784 = vadd.f32 %v2584, %v2783
      %v2785 = vpop.f32.mrf.mxu0
      %v2786 = vadd.f32 %v2580, %v2785
      %v2787 = vpop.f32.mrf.mxu0
      %v2788 = vadd.f32 %v2584, %v2787
      %2789 = vmatprep.mubr.bf16.mxu0 0
      %2790 = vmatmul.mubr.bf16.gmra.mxu0 %v2552
      %v2791 = vpop.f32.mrf.mxu0
      %v2792 = vadd.f32 %v2580, %v2791
      %v2793 = vpop.f32.mrf.mxu0
      %v2794 = vadd.f32 %v2584, %v2793
      %v2795 = vpop.f32.mrf.mxu0
      %v2796 = vadd.f32 %v2580, %v2795
      %v2797 = vpop.f32.mrf.mxu0
      %v2798 = vadd.f32 %v2584, %v2797
      %2799 = vmatprep.mubr.bf16.mxu0 0
      %2800 = vmatmul.mubr.bf16.gmra.mxu0 %v2553
      %v2801 = vpop.f32.mrf.mxu0
      %v2802 = vadd.f32 %v2580, %v2801
      %v2803 = vpop.f32.mrf.mxu0
      %v2804 = vadd.f32 %v2584, %v2803
      %v2805 = vpop.f32.mrf.mxu0
      %v2806 = vadd.f32 %v2580, %v2805
      %v2807 = vpop.f32.mrf.mxu0
      %v2808 = vadd.f32 %v2584, %v2807
      %2809 = vmatprep.mubr.bf16.mxu0 0
      %2810 = vmatmul.mubr.bf16.gmra.mxu0 %v2554
      %v2811 = vpop.f32.mrf.mxu0
      %v2812 = vadd.f32 %v2580, %v2811
      %v2813 = vpop.f32.mrf.mxu0
      %v2814 = vadd.f32 %v2584, %v2813
      %v2815 = vpop.f32.mrf.mxu0
      %v2816 = vadd.f32 %v2580, %v2815
      %v2817 = vpop.f32.mrf.mxu0
      %v2818 = vadd.f32 %v2584, %v2817
      %2819 = vmatprep.mubr.bf16.mxu0 0
      %2820 = vmatmul.mubr.bf16.gmra.mxu0 %v2555
      %v2821 = vpop.f32.mrf.mxu0
      %v2822 = vadd.f32 %v2580, %v2821
      %v2823 = vpop.f32.mrf.mxu0
      %v2824 = vadd.f32 %v2584, %v2823
      %v2825 = vpop.f32.mrf.mxu0
      %v2826 = vadd.f32 %v2580, %v2825
      %v2827 = vpop.f32.mrf.mxu0
      %v2828 = vadd.f32 %v2584, %v2827
      %2829 = vmatprep.mubr.bf16.mxu0 0
      %2830 = vmatmul.mubr.bf16.gmra.mxu0 %v2556
      %v2831 = vpop.f32.mrf.mxu0
      %v2832 = vadd.f32 %v2580, %v2831
      %v2833 = vpop.f32.mrf.mxu0
      %v2834 = vadd.f32 %v2584, %v2833
      %v2835 = vpop.f32.mrf.mxu0
      %v2836 = vadd.f32 %v2580, %v2835
      %v2837 = vpop.f32.mrf.mxu0
      %v2838 = vadd.f32 %v2584, %v2837
      %2839 = vmatprep.mubr.bf16.mxu0 0
      %2840 = vmatmul.mubr.bf16.gmra.mxu0 %v2557
      %v2841 = vpop.f32.mrf.mxu0
      %v2842 = vadd.f32 %v2580, %v2841
      %v2843 = vpop.f32.mrf.mxu0
      %v2844 = vadd.f32 %v2584, %v2843
      %v2845 = vpop.f32.mrf.mxu0
      %v2846 = vadd.f32 %v2580, %v2845
      %v2847 = vpop.f32.mrf.mxu0
      %v2848 = vadd.f32 %v2584, %v2847
      %2849 = vmatprep.mubr.bf16.mxu0 0
      %2850 = vmatmul.mubr.bf16.gmra.mxu0 %v2558
      %v2851 = vpop.f32.mrf.mxu0
      %v2852 = vadd.f32 %v2580, %v2851
      %v2853 = vpop.f32.mrf.mxu0
      %v2854 = vadd.f32 %v2584, %v2853
      %v2855 = vpop.f32.mrf.mxu0
      %v2856 = vadd.f32 %v2580, %v2855
      %v2857 = vpop.f32.mrf.mxu0
      %v2858 = vadd.f32 %v2584, %v2857
      %2859 = vdwg.mxu0
      %v2860 = vmax.f32 %v2702, 0.0
      %v2861 = vmax.f32 %v2704, 0.0
      %v2862 = vmax.f32 %v2706, 0.0
      %v2863 = vmax.f32 %v2708, 0.0
      %v2864 = vmax.f32 %v2712, 0.0
      %v2865 = vmax.f32 %v2714, 0.0
      %v2866 = vmax.f32 %v2716, 0.0
      %v2867 = vmax.f32 %v2718, 0.0
      %v2868 = vmax.f32 %v2722, 0.0
      %v2869 = vmax.f32 %v2724, 0.0
      %v2870 = vmax.f32 %v2726, 0.0
      %v2871 = vmax.f32 %v2728, 0.0
      %v2872 = vmax.f32 %v2732, 0.0
      %v2873 = vmax.f32 %v2734, 0.0
      %v2874 = vmax.f32 %v2736, 0.0
      %v2875 = vmax.f32 %v2738, 0.0
      %v2876 = vmax.f32 %v2742, 0.0
      %v2877 = vmax.f32 %v2744, 0.0
      %v2878 = vmax.f32 %v2746, 0.0
      %v2879 = vmax.f32 %v2748, 0.0
      %v2880 = vmax.f32 %v2752, 0.0
      %v2881 = vmax.f32 %v2754, 0.0
      %v2882 = vmax.f32 %v2756, 0.0
      %v2883 = vmax.f32 %v2758, 0.0
      %v2884 = vmax.f32 %v2762, 0.0
      %v2885 = vmax.f32 %v2764, 0.0
      %v2886 = vmax.f32 %v2766, 0.0
      %v2887 = vmax.f32 %v2768, 0.0
      %v2888 = vmax.f32 %v2772, 0.0
      %v2889 = vmax.f32 %v2774, 0.0
      %v2890 = vmax.f32 %v2776, 0.0
      %v2891 = vmax.f32 %v2778, 0.0
      %v2892 = vmax.f32 %v2782, 0.0
      %v2893 = vmax.f32 %v2784, 0.0
      %v2894 = vmax.f32 %v2786, 0.0
      %v2895 = vmax.f32 %v2788, 0.0
      %v2896 = vmax.f32 %v2792, 0.0
      %v2897 = vmax.f32 %v2794, 0.0
      %v2898 = vmax.f32 %v2796, 0.0
      %v2899 = vmax.f32 %v2798, 0.0
      %v2900 = vmax.f32 %v2802, 0.0
      %v2901 = vmax.f32 %v2804, 0.0
      %v2902 = vmax.f32 %v2806, 0.0
      %v2903 = vmax.f32 %v2808, 0.0
      %v2904 = vmax.f32 %v2812, 0.0
      %v2905 = vmax.f32 %v2814, 0.0
      %v2906 = vmax.f32 %v2816, 0.0
      %v2907 = vmax.f32 %v2818, 0.0
      %v2908 = vmax.f32 %v2822, 0.0
      %v2909 = vmax.f32 %v2824, 0.0
      %v2910 = vmax.f32 %v2826, 0.0
      %v2911 = vmax.f32 %v2828, 0.0
      %v2912 = vmax.f32 %v2832, 0.0
      %v2913 = vmax.f32 %v2834, 0.0
      %v2914 = vmax.f32 %v2836, 0.0
      %v2915 = vmax.f32 %v2838, 0.0
      %v2916 = vmax.f32 %v2842, 0.0
      %v2917 = vmax.f32 %v2844, 0.0
      %v2918 = vmax.f32 %v2846, 0.0
      %v2919 = vmax.f32 %v2848, 0.0
      %v2920 = vmax.f32 %v2852, 0.0
      %v2921 = vmax.f32 %v2854, 0.0
      %v2922 = vmax.f32 %v2856, 0.0
      %v2923 = vmax.f32 %v2858, 0.0
      %v2924 = vpack.c.bf16 %v2862, %v2860
      %v2925 = vpack.c.bf16 %v2863, %v2861
      %v2926 = vpack.c.bf16 %v2866, %v2864
      %v2927 = vpack.c.bf16 %v2867, %v2865
      %v2928 = vpack.c.bf16 %v2870, %v2868
      %v2929 = vpack.c.bf16 %v2871, %v2869
      %v2930 = vpack.c.bf16 %v2874, %v2872
      %v2931 = vpack.c.bf16 %v2875, %v2873
      %v2932 = vpack.c.bf16 %v2878, %v2876
      %v2933 = vpack.c.bf16 %v2879, %v2877
      %v2934 = vpack.c.bf16 %v2882, %v2880
      %v2935 = vpack.c.bf16 %v2883, %v2881
      %v2936 = vpack.c.bf16 %v2886, %v2884
      %v2937 = vpack.c.bf16 %v2887, %v2885
      %v2938 = vpack.c.bf16 %v2890, %v2888
      %v2939 = vpack.c.bf16 %v2891, %v2889
      %v2940 = vpack.c.bf16 %v2894, %v2892
      %v2941 = vpack.c.bf16 %v2895, %v2893
      %v2942 = vpack.c.bf16 %v2898, %v2896
      %v2943 = vpack.c.bf16 %v2899, %v2897
      %v2944 = vpack.c.bf16 %v2902, %v2900
      %v2945 = vpack.c.bf16 %v2903, %v2901
      %v2946 = vpack.c.bf16 %v2906, %v2904
      %v2947 = vpack.c.bf16 %v2907, %v2905
      %v2948 = vpack.c.bf16 %v2910, %v2908
      %v2949 = vpack.c.bf16 %v2911, %v2909
      %v2950 = vpack.c.bf16 %v2914, %v2912
      %v2951 = vpack.c.bf16 %v2915, %v2913
      %v2952 = vpack.c.bf16 %v2918, %v2916
      %v2953 = vpack.c.bf16 %v2919, %v2917
      %v2954 = vpack.c.bf16 %v2922, %v2920
      %v2955 = vpack.c.bf16 %v2923, %v2921
      %v2956 = vld [vmem:[%s7] sm:$0xf]
      %v2957 = vld [vmem:[%s7 + $0x4] sm:$0xf]
      %v2958 = vld [vmem:[%s7 + $0x8] sm:$0xf]
      %v2959 = vld [vmem:[%s7 + $0xc] sm:$0xf]
      %v2960 = vld [vmem:[%s7 + $0x10] sm:$0xf]
      %v2961 = vld [vmem:[%s7 + $0x14] sm:$0xf]
      %v2962 = vld [vmem:[%s7 + $0x18] sm:$0xf]
      %v2963 = vld [vmem:[%s7 + $0x1c] sm:$0xf]
      %v2964 = vld [vmem:[%s7 + $0x20] sm:$0xf]
      %v2965 = vld [vmem:[%s7 + $0x24] sm:$0xf]
      %v2966 = vld [vmem:[%s7 + $0x28] sm:$0xf]
      %v2967 = vld [vmem:[%s7 + $0x2c] sm:$0xf]
      %v2968 = vld [vmem:[%s7 + $0x30] sm:$0xf]
      %v2969 = vld [vmem:[%s7 + $0x34] sm:$0xf]
      %v2970 = vld [vmem:[%s7 + $0x38] sm:$0xf]
      %v2971 = vld [vmem:[%s7 + $0x3c] sm:$0xf]
      %v2972 = vld [vmem:[%s7 + $0x40] sm:$0xf]
      %v2973 = vld [vmem:[%s7 + $0x44] sm:$0xf]
      %v2974 = vld [vmem:[%s7 + $0x48] sm:$0xf]
      %v2975 = vld [vmem:[%s7 + $0x4c] sm:$0xf]
      %v2976 = vld [vmem:[%s7 + $0x50] sm:$0xf]
      %v2977 = vld [vmem:[%s7 + $0x54] sm:$0xf]
      %v2978 = vld [vmem:[%s7 + $0x58] sm:$0xf]
      %v2979 = vld [vmem:[%s7 + $0x5c] sm:$0xf]
      %v2980 = vld [vmem:[%s7 + $0x60] sm:$0xf]
      %v2981 = vld [vmem:[%s7 + $0x64] sm:$0xf]
      %v2982 = vld [vmem:[%s7 + $0x68] sm:$0xf]
      %v2983 = vld [vmem:[%s7 + $0x6c] sm:$0xf]
      %v2984 = vld [vmem:[%s7 + $0x70] sm:$0xf]
      %v2985 = vld [vmem:[%s7 + $0x74] sm:$0xf]
      %v2986 = vld [vmem:[%s7 + $0x78] sm:$0xf]
      %v2987 = vld [vmem:[%s7 + $0x7c] sm:$0xf]
      %v2988 = vld [vmem:[%s8] sm:$0x1]
      %v2990 = vlaneseq
      %v2991 = vshrl.u32 %v2990, 7
      %v2992 = vsub.s32 0, %v2991
      %v2993 = vrot.slane %v2988, %v2992
      %v3027 = vunpack.c.l.b16 %v2956
      %v3028 = vunpack.c.l.b16 %v2957
      %v3029 = vunpack.c.l.b16 %v2958
      %v3030 = vunpack.c.l.b16 %v2959
      %v3031 = vunpack.c.l.b16 %v2960
      %v3032 = vunpack.c.l.b16 %v2961
      %v3033 = vunpack.c.l.b16 %v2962
      %v3034 = vunpack.c.l.b16 %v2963
      %v3035 = vunpack.c.l.b16 %v2964
      %v3036 = vunpack.c.l.b16 %v2965
      %v3037 = vunpack.c.l.b16 %v2966
      %v3038 = vunpack.c.l.b16 %v2967
      %v3039 = vunpack.c.l.b16 %v2968
      %v3040 = vunpack.c.l.b16 %v2969
      %v3041 = vunpack.c.l.b16 %v2970
      %v3042 = vunpack.c.l.b16 %v2971
      %v3043 = vunpack.c.l.b16 %v2972
      %v3044 = vunpack.c.l.b16 %v2973
      %v3045 = vunpack.c.l.b16 %v2974
      %v3046 = vunpack.c.l.b16 %v2975
      %v3047 = vunpack.c.l.b16 %v2976
      %v3048 = vunpack.c.l.b16 %v2977
      %v3049 = vunpack.c.l.b16 %v2978
      %v3050 = vunpack.c.l.b16 %v2979
      %v3051 = vunpack.c.l.b16 %v2980
      %v3052 = vunpack.c.l.b16 %v2981
      %v3053 = vunpack.c.l.b16 %v2982
      %v3054 = vunpack.c.l.b16 %v2983
      %v3055 = vunpack.c.l.b16 %v2984
      %v3056 = vunpack.c.l.b16 %v2985
      %v3057 = vunpack.c.l.b16 %v2986
      %v3058 = vunpack.c.l.b16 %v2987
      %v3059 = vpack.c.b16 %v3028, %v3027
      %v3060 = vpack.c.b16 %v3030, %v3029
      %v3061 = vpack.c.b16 %v3032, %v3031
      %v3062 = vpack.c.b16 %v3034, %v3033
      %v3063 = vpack.c.b16 %v3036, %v3035
      %v3064 = vpack.c.b16 %v3038, %v3037
      %v3065 = vpack.c.b16 %v3040, %v3039
      %v3066 = vpack.c.b16 %v3042, %v3041
      %v3067 = vpack.c.b16 %v3044, %v3043
      %v3068 = vpack.c.b16 %v3046, %v3045
      %v3069 = vpack.c.b16 %v3048, %v3047
      %v3070 = vpack.c.b16 %v3050, %v3049
      %v3071 = vpack.c.b16 %v3052, %v3051
      %v3072 = vpack.c.b16 %v3054, %v3053
      %v3073 = vpack.c.b16 %v3056, %v3055
      %v3074 = vpack.c.b16 %v3058, %v3057
      %3091 = vmatprep.subr.bf16.mxu0 0
      %3092 = vmatpush1.bf16.msra.mxu0 %v3066
      %3093 = vmatprep.subr.bf16.mxu0 0
      %3094 = vmatpush1.bf16.msra.mxu0 %v3065
      %3095 = vmatprep.subr.bf16.mxu0 0
      %3096 = vmatpush1.bf16.msra.mxu0 %v3064
      %3097 = vmatprep.subr.bf16.mxu0 0
      %3098 = vmatpush1.bf16.msra.mxu0 %v3063
      %3099 = vmatprep.subr.bf16.mxu0 0
      %3100 = vmatpush1.bf16.msra.mxu0 %v3062
      %3101 = vmatprep.subr.bf16.mxu0 0
      %3102 = vmatpush1.bf16.msra.mxu0 %v3061
      %3103 = vmatprep.subr.bf16.mxu0 0
      %3104 = vmatpush1.bf16.msra.mxu0 %v3060
      %3105 = vmatprep.subr.bf16.mxu0 0
      %3106 = vmatpush1.bf16.msra.mxu0 %v3059
      %3107 = vmatprep.subr.bf16.mxu0 0
      %3108 = vmatpush2.bf16.msra.mxu0 %v3074
      %3109 = vmatprep.subr.bf16.mxu0 0
      %3110 = vmatpush2.bf16.msra.mxu0 %v3073
      %3111 = vmatprep.subr.bf16.mxu0 0
      %3112 = vmatpush2.bf16.msra.mxu0 %v3072
      %3113 = vmatprep.subr.bf16.mxu0 0
      %3114 = vmatpush2.bf16.msra.mxu0 %v3071
      %3115 = vmatprep.subr.bf16.mxu0 0
      %3116 = vmatpush2.bf16.msra.mxu0 %v3070
      %3117 = vmatprep.subr.bf16.mxu0 0
      %3118 = vmatpush2.bf16.msra.mxu0 %v3069
      %3119 = vmatprep.subr.bf16.mxu0 0
      %3120 = vmatpush2.bf16.msra.mxu0 %v3068
      %3121 = vmatprep.subr.bf16.mxu0 0
      %3122 = vmatpush2.bf16.msra.mxu0 %v3067
      %3123 = vmatprep.mubr.bf16.mxu0 %v2925
      %3124 = vmatmul.mubr.bf16.gmra.mxu0 %v2924
      %v3125 = vpop.f32.mrf.mxu0
      %v3126 = vadd.f32 %v2993, %v3125
      %v3127 = vpop.f32.mrf.mxu0
      %v3128 = vpop.f32.mrf.mxu0
      %v3129 = vadd.f32 %v2993, %v3128
      %v3130 = vpop.f32.mrf.mxu0
      %3131 = vmatprep.mubr.bf16.mxu0 %v2927
      %3132 = vmatmul.mubr.bf16.gmra.mxu0 %v2926
      %v3133 = vpop.f32.mrf.mxu0
      %v3134 = vadd.f32 %v2993, %v3133
      %v3135 = vpop.f32.mrf.mxu0
      %v3136 = vpop.f32.mrf.mxu0
      %v3137 = vadd.f32 %v2993, %v3136
      %v3138 = vpop.f32.mrf.mxu0
      %3139 = vmatprep.mubr.bf16.mxu0 %v2929
      %3140 = vmatmul.mubr.bf16.gmra.mxu0 %v2928
      %v3141 = vpop.f32.mrf.mxu0
      %v3142 = vadd.f32 %v2993, %v3141
      %v3143 = vpop.f32.mrf.mxu0
      %v3144 = vpop.f32.mrf.mxu0
      %v3145 = vadd.f32 %v2993, %v3144
      %v3146 = vpop.f32.mrf.mxu0
      %3147 = vmatprep.mubr.bf16.mxu0 %v2931
      %3148 = vmatmul.mubr.bf16.gmra.mxu0 %v2930
      %v3149 = vpop.f32.mrf.mxu0
      %v3150 = vadd.f32 %v2993, %v3149
      %v3151 = vpop.f32.mrf.mxu0
      %v3152 = vpop.f32.mrf.mxu0
      %v3153 = vadd.f32 %v2993, %v3152
      %v3154 = vpop.f32.mrf.mxu0
      %3155 = vmatprep.mubr.bf16.mxu0 %v2933
      %3156 = vmatmul.mubr.bf16.gmra.mxu0 %v2932
      %v3157 = vpop.f32.mrf.mxu0
      %v3158 = vadd.f32 %v2993, %v3157
      %v3159 = vpop.f32.mrf.mxu0
      %v3160 = vpop.f32.mrf.mxu0
      %v3161 = vadd.f32 %v2993, %v3160
      %v3162 = vpop.f32.mrf.mxu0
      %3163 = vmatprep.mubr.bf16.mxu0 %v2935
      %3164 = vmatmul.mubr.bf16.gmra.mxu0 %v2934
      %v3165 = vpop.f32.mrf.mxu0
      %v3166 = vadd.f32 %v2993, %v3165
      %v3167 = vpop.f32.mrf.mxu0
      %v3168 = vpop.f32.mrf.mxu0
      %v3169 = vadd.f32 %v2993, %v3168
      %v3170 = vpop.f32.mrf.mxu0
      %3171 = vmatprep.mubr.bf16.mxu0 %v2937
      %3172 = vmatmul.mubr.bf16.gmra.mxu0 %v2936
      %v3173 = vpop.f32.mrf.mxu0
      %v3174 = vadd.f32 %v2993, %v3173
      %v3175 = vpop.f32.mrf.mxu0
      %v3176 = vpop.f32.mrf.mxu0
      %v3177 = vadd.f32 %v2993, %v3176
      %v3178 = vpop.f32.mrf.mxu0
      %3179 = vmatprep.mubr.bf16.mxu0 %v2939
      %3180 = vmatmul.mubr.bf16.gmra.mxu0 %v2938
      %v3181 = vpop.f32.mrf.mxu0
      %v3182 = vadd.f32 %v2993, %v3181
      %v3183 = vpop.f32.mrf.mxu0
      %v3184 = vpop.f32.mrf.mxu0
      %v3185 = vadd.f32 %v2993, %v3184
      %v3186 = vpop.f32.mrf.mxu0
      %3187 = vmatprep.mubr.bf16.mxu0 %v2941
      %3188 = vmatmul.mubr.bf16.gmra.mxu0 %v2940
      %v3189 = vpop.f32.mrf.mxu0
      %v3190 = vadd.f32 %v2993, %v3189
      %v3191 = vpop.f32.mrf.mxu0
      %v3192 = vpop.f32.mrf.mxu0
      %v3193 = vadd.f32 %v2993, %v3192
      %v3194 = vpop.f32.mrf.mxu0
      %3195 = vmatprep.mubr.bf16.mxu0 %v2943
      %3196 = vmatmul.mubr.bf16.gmra.mxu0 %v2942
      %v3197 = vpop.f32.mrf.mxu0
      %v3198 = vadd.f32 %v2993, %v3197
      %v3199 = vpop.f32.mrf.mxu0
      %v3200 = vpop.f32.mrf.mxu0
      %v3201 = vadd.f32 %v2993, %v3200
      %v3202 = vpop.f32.mrf.mxu0
      %3203 = vmatprep.mubr.bf16.mxu0 %v2945
      %3204 = vmatmul.mubr.bf16.gmra.mxu0 %v2944
      %v3205 = vpop.f32.mrf.mxu0
      %v3206 = vadd.f32 %v2993, %v3205
      %v3207 = vpop.f32.mrf.mxu0
      %v3208 = vpop.f32.mrf.mxu0
      %v3209 = vadd.f32 %v2993, %v3208
      %v3210 = vpop.f32.mrf.mxu0
      %3211 = vmatprep.mubr.bf16.mxu0 %v2947
      %3212 = vmatmul.mubr.bf16.gmra.mxu0 %v2946
      %v3213 = vpop.f32.mrf.mxu0
      %v3214 = vadd.f32 %v2993, %v3213
      %v3215 = vpop.f32.mrf.mxu0
      %v3216 = vpop.f32.mrf.mxu0
      %v3217 = vadd.f32 %v2993, %v3216
      %v3218 = vpop.f32.mrf.mxu0
      %3219 = vmatprep.mubr.bf16.mxu0 %v2949
      %3220 = vmatmul.mubr.bf16.gmra.mxu0 %v2948
      %v3221 = vpop.f32.mrf.mxu0
      %v3222 = vadd.f32 %v2993, %v3221
      %v3223 = vpop.f32.mrf.mxu0
      %v3224 = vpop.f32.mrf.mxu0
      %v3225 = vadd.f32 %v2993, %v3224
      %v3226 = vpop.f32.mrf.mxu0
      %3227 = vmatprep.mubr.bf16.mxu0 %v2951
      %3228 = vmatmul.mubr.bf16.gmra.mxu0 %v2950
      %v3229 = vpop.f32.mrf.mxu0
      %v3230 = vadd.f32 %v2993, %v3229
      %v3231 = vpop.f32.mrf.mxu0
      %v3232 = vpop.f32.mrf.mxu0
      %v3233 = vadd.f32 %v2993, %v3232
      %v3234 = vpop.f32.mrf.mxu0
      %3235 = vmatprep.mubr.bf16.mxu0 %v2953
      %3236 = vmatmul.mubr.bf16.gmra.mxu0 %v2952
      %v3237 = vpop.f32.mrf.mxu0
      %v3238 = vadd.f32 %v2993, %v3237
      %v3239 = vpop.f32.mrf.mxu0
      %v3240 = vpop.f32.mrf.mxu0
      %v3241 = vadd.f32 %v2993, %v3240
      %v3242 = vpop.f32.mrf.mxu0
      %3243 = vmatprep.mubr.bf16.mxu0 %v2955
      %3244 = vmatmul.mubr.bf16.gmra.mxu0 %v2954
      %v3245 = vpop.f32.mrf.mxu0
      %v3246 = vadd.f32 %v2993, %v3245
      %v3247 = vpop.f32.mrf.mxu0
      %v3248 = vpop.f32.mrf.mxu0
      %v3249 = vadd.f32 %v2993, %v3248
      %v3250 = vpop.f32.mrf.mxu0
      %3251 = vdwg.mxu0
      %v3252 = vmax.f32 %v3126, 0.0
      %v3253 = vmax.f32 %v3129, 0.0
      %v3254 = vmax.f32 %v3134, 0.0
      %v3255 = vmax.f32 %v3137, 0.0
      %v3256 = vmax.f32 %v3142, 0.0
      %v3257 = vmax.f32 %v3145, 0.0
      %v3258 = vmax.f32 %v3150, 0.0
      %v3259 = vmax.f32 %v3153, 0.0
      %v3260 = vmax.f32 %v3158, 0.0
      %v3261 = vmax.f32 %v3161, 0.0
      %v3262 = vmax.f32 %v3166, 0.0
      %v3263 = vmax.f32 %v3169, 0.0
      %v3264 = vmax.f32 %v3174, 0.0
      %v3265 = vmax.f32 %v3177, 0.0
      %v3266 = vmax.f32 %v3182, 0.0
      %v3267 = vmax.f32 %v3185, 0.0
      %v3268 = vmax.f32 %v3190, 0.0
      %v3269 = vmax.f32 %v3193, 0.0
      %v3270 = vmax.f32 %v3198, 0.0
      %v3271 = vmax.f32 %v3201, 0.0
      %v3272 = vmax.f32 %v3206, 0.0
      %v3273 = vmax.f32 %v3209, 0.0
      %v3274 = vmax.f32 %v3214, 0.0
      %v3275 = vmax.f32 %v3217, 0.0
      %v3276 = vmax.f32 %v3222, 0.0
      %v3277 = vmax.f32 %v3225, 0.0
      %v3278 = vmax.f32 %v3230, 0.0
      %v3279 = vmax.f32 %v3233, 0.0
      %v3280 = vmax.f32 %v3238, 0.0
      %v3281 = vmax.f32 %v3241, 0.0
      %v3282 = vmax.f32 %v3246, 0.0
      %v3283 = vmax.f32 %v3249, 0.0
      %v3284 = vpack.c.bf16 %v3253, %v3252
      %v3285 = vpack.c.bf16 %v3255, %v3254
      %v3286 = vpack.c.bf16 %v3257, %v3256
      %v3287 = vpack.c.bf16 %v3259, %v3258
      %v3288 = vpack.c.bf16 %v3261, %v3260
      %v3289 = vpack.c.bf16 %v3263, %v3262
      %v3290 = vpack.c.bf16 %v3265, %v3264
      %v3291 = vpack.c.bf16 %v3267, %v3266
      %v3292 = vpack.c.bf16 %v3269, %v3268
      %v3293 = vpack.c.bf16 %v3271, %v3270
      %v3294 = vpack.c.bf16 %v3273, %v3272
      %v3295 = vpack.c.bf16 %v3275, %v3274
      %v3296 = vpack.c.bf16 %v3277, %v3276
      %v3297 = vpack.c.bf16 %v3279, %v3278
      %v3298 = vpack.c.bf16 %v3281, %v3280
      %v3299 = vpack.c.bf16 %v3283, %v3282
      %v3316 = vunpack.c.l.b16 %v3284
      %v3317 = vunpack.c.h.b16 %v3284
      %v3318 = vunpack.c.l.b16 %v3285
      %v3319 = vunpack.c.h.b16 %v3285
      %v3320 = vunpack.c.l.b16 %v3286
      %v3321 = vunpack.c.h.b16 %v3286
      %v3322 = vunpack.c.l.b16 %v3287
      %v3323 = vunpack.c.h.b16 %v3287
      %v3324 = vunpack.c.l.b16 %v3288
      %v3325 = vunpack.c.h.b16 %v3288
      %v3326 = vunpack.c.l.b16 %v3289
      %v3327 = vunpack.c.h.b16 %v3289
      %v3328 = vunpack.c.l.b16 %v3290
      %v3329 = vunpack.c.h.b16 %v3290
      %v3330 = vunpack.c.l.b16 %v3291
      %v3331 = vunpack.c.h.b16 %v3291
      %v3332 = vunpack.c.l.b16 %v3292
      %v3333 = vunpack.c.h.b16 %v3292
      %v3334 = vunpack.c.l.b16 %v3293
      %v3335 = vunpack.c.h.b16 %v3293
      %v3336 = vunpack.c.l.b16 %v3294
      %v3337 = vunpack.c.h.b16 %v3294
      %v3338 = vunpack.c.l.b16 %v3295
      %v3339 = vunpack.c.h.b16 %v3295
      %v3340 = vunpack.c.l.b16 %v3296
      %v3341 = vunpack.c.h.b16 %v3296
      %v3342 = vunpack.c.l.b16 %v3297
      %v3343 = vunpack.c.h.b16 %v3297
      %v3344 = vunpack.c.l.b16 %v3298
      %v3345 = vunpack.c.h.b16 %v3298
      %v3346 = vunpack.c.l.b16 %v3299
      %v3347 = vunpack.c.h.b16 %v3299
      %v3348 = vpack.c.b16 %v3316, %v3316
      %v3349 = vpack.c.b16 %v3317, %v3317
      %v3350 = vpack.c.b16 %v3318, %v3318
      %v3351 = vpack.c.b16 %v3319, %v3319
      %v3352 = vpack.c.b16 %v3320, %v3320
      %v3353 = vpack.c.b16 %v3321, %v3321
      %v3354 = vpack.c.b16 %v3322, %v3322
      %v3355 = vpack.c.b16 %v3323, %v3323
      %v3356 = vpack.c.b16 %v3324, %v3324
      %v3357 = vpack.c.b16 %v3325, %v3325
      %v3358 = vpack.c.b16 %v3326, %v3326
      %v3359 = vpack.c.b16 %v3327, %v3327
      %v3360 = vpack.c.b16 %v3328, %v3328
      %v3361 = vpack.c.b16 %v3329, %v3329
      %v3362 = vpack.c.b16 %v3330, %v3330
      %v3363 = vpack.c.b16 %v3331, %v3331
      %v3364 = vpack.c.b16 %v3332, %v3332
      %v3365 = vpack.c.b16 %v3333, %v3333
      %v3366 = vpack.c.b16 %v3334, %v3334
      %v3367 = vpack.c.b16 %v3335, %v3335
      %v3368 = vpack.c.b16 %v3336, %v3336
      %v3369 = vpack.c.b16 %v3337, %v3337
      %v3370 = vpack.c.b16 %v3338, %v3338
      %v3371 = vpack.c.b16 %v3339, %v3339
      %v3372 = vpack.c.b16 %v3340, %v3340
      %v3373 = vpack.c.b16 %v3341, %v3341
      %v3374 = vpack.c.b16 %v3342, %v3342
      %v3375 = vpack.c.b16 %v3343, %v3343
      %v3376 = vpack.c.b16 %v3344, %v3344
      %v3377 = vpack.c.b16 %v3345, %v3345
      %v3378 = vpack.c.b16 %v3346, %v3346
      %v3379 = vpack.c.b16 %v3347, %v3347
      %3412 = vst [vmem:[%s514] sm:$0xf] %v3348
      %3413 = vst [vmem:[%s514 + $0x4] sm:$0xf] %v3349
      %3414 = vst [vmem:[%s514 + $0x8] sm:$0xf] %v3350
      %3415 = vst [vmem:[%s514 + $0xc] sm:$0xf] %v3351
      %3416 = vst [vmem:[%s514 + $0x10] sm:$0xf] %v3352
      %3417 = vst [vmem:[%s514 + $0x14] sm:$0xf] %v3353
      %3418 = vst [vmem:[%s514 + $0x18] sm:$0xf] %v3354
      %3419 = vst [vmem:[%s514 + $0x1c] sm:$0xf] %v3355
      %3420 = vst [vmem:[%s514 + $0x20] sm:$0xf] %v3356
      %3421 = vst [vmem:[%s514 + $0x24] sm:$0xf] %v3357
      %3422 = vst [vmem:[%s514 + $0x28] sm:$0xf] %v3358
      %3423 = vst [vmem:[%s514 + $0x2c] sm:$0xf] %v3359
      %3424 = vst [vmem:[%s514 + $0x30] sm:$0xf] %v3360
      %3425 = vst [vmem:[%s514 + $0x34] sm:$0xf] %v3361
      %3426 = vst [vmem:[%s514 + $0x38] sm:$0xf] %v3362
      %3427 = vst [vmem:[%s514 + $0x3c] sm:$0xf] %v3363
      %3428 = vst [vmem:[%s514 + $0x40] sm:$0xf] %v3364
      %3429 = vst [vmem:[%s514 + $0x44] sm:$0xf] %v3365
      %3430 = vst [vmem:[%s514 + $0x48] sm:$0xf] %v3366
      %3431 = vst [vmem:[%s514 + $0x4c] sm:$0xf] %v3367
      %3432 = vst [vmem:[%s514 + $0x50] sm:$0xf] %v3368
      %3433 = vst [vmem:[%s514 + $0x54] sm:$0xf] %v3369
      %3434 = vst [vmem:[%s514 + $0x58] sm:$0xf] %v3370
      %3435 = vst [vmem:[%s514 + $0x5c] sm:$0xf] %v3371
      %3436 = vst [vmem:[%s514 + $0x60] sm:$0xf] %v3372
      %3437 = vst [vmem:[%s514 + $0x64] sm:$0xf] %v3373
      %3438 = vst [vmem:[%s514 + $0x68] sm:$0xf] %v3374
      %3439 = vst [vmem:[%s514 + $0x6c] sm:$0xf] %v3375
      %3440 = vst [vmem:[%s514 + $0x70] sm:$0xf] %v3376
      %3441 = vst [vmem:[%s514 + $0x74] sm:$0xf] %v3377
      %3442 = vst [vmem:[%s514 + $0x78] sm:$0xf] %v3378
      %3443 = vst [vmem:[%s514 + $0x7c] sm:$0xf] %v3379
      %v3444 = vld [vmem:[#allocation2] sm:$0xf]
      %v3445 = vld [vmem:[%s508] sm:$0xf]
      %v3448 = vunpack.c.l.s4 1983009808
      %v3449 = vunpack.c.0.s8 %v3448
      %v3450 = vlaneseq
      %v3451 = vshrl.u32 %v3450, 7
      %v3452 = vsub.s32 %v3449, %v3451
      %v3453 = vrot.slane %v3445, %v3452
      %v3454 = vcombine.high %v3453, %v3453
      %v3489 = vunpack.c.l.b16 %v523
      %v3490 = vunpack.c.l.b16 %v524
      %v3491 = vunpack.c.l.b16 %v525
      %v3492 = vunpack.c.l.b16 %v526
      %v3493 = vunpack.c.l.b16 %v527
      %v3494 = vunpack.c.l.b16 %v528
      %v3495 = vunpack.c.l.b16 %v529
      %v3496 = vunpack.c.l.b16 %v530
      %v3497 = vunpack.c.l.b16 %v531
      %v3498 = vunpack.c.l.b16 %v532
      %v3499 = vunpack.c.l.b16 %v533
      %v3500 = vunpack.c.l.b16 %v534
      %v3501 = vunpack.c.l.b16 %v535
      %v3502 = vunpack.c.l.b16 %v536
      %v3503 = vunpack.c.l.b16 %v537
      %v3504 = vunpack.c.l.b16 %v538
      %v3505 = vunpack.c.l.b16 %v539
      %v3506 = vunpack.c.l.b16 %v540
      %v3507 = vunpack.c.l.b16 %v541
      %v3508 = vunpack.c.l.b16 %v542
      %v3509 = vunpack.c.l.b16 %v543
      %v3510 = vunpack.c.l.b16 %v544
      %v3511 = vunpack.c.l.b16 %v545
      %v3512 = vunpack.c.l.b16 %v546
      %v3513 = vunpack.c.l.b16 %v547
      %v3514 = vunpack.c.l.b16 %v548
      %v3515 = vunpack.c.l.b16 %v549
      %v3516 = vunpack.c.l.b16 %v550
      %v3517 = vunpack.c.l.b16 %v551
      %v3518 = vunpack.c.l.b16 %v552
      %v3519 = vunpack.c.l.b16 %v553
      %v3520 = vunpack.c.l.b16 %v554
      %v3521 = vpack.c.b16 %v3490, %v3489
      %v3522 = vpack.c.b16 %v3492, %v3491
      %v3523 = vpack.c.b16 %v3494, %v3493
      %v3524 = vpack.c.b16 %v3496, %v3495
      %v3525 = vpack.c.b16 %v3498, %v3497
      %v3526 = vpack.c.b16 %v3500, %v3499
      %v3527 = vpack.c.b16 %v3502, %v3501
      %v3528 = vpack.c.b16 %v3504, %v3503
      %v3529 = vpack.c.b16 %v3506, %v3505
      %v3530 = vpack.c.b16 %v3508, %v3507
      %v3531 = vpack.c.b16 %v3510, %v3509
      %v3532 = vpack.c.b16 %v3512, %v3511
      %v3533 = vpack.c.b16 %v3514, %v3513
      %v3534 = vpack.c.b16 %v3516, %v3515
      %v3535 = vpack.c.b16 %v3518, %v3517
      %v3536 = vpack.c.b16 %v3520, %v3519
      %3553 = vmatprep.subr.bf16.mxu0 0
      %3554 = vmatpush1.bf16.msra.mxu0 %v3528
      %3555 = vmatprep.subr.bf16.mxu0 0
      %3556 = vmatpush1.bf16.msra.mxu0 %v3527
      %3557 = vmatprep.subr.bf16.mxu0 0
      %3558 = vmatpush1.bf16.msra.mxu0 %v3526
      %3559 = vmatprep.subr.bf16.mxu0 0
      %3560 = vmatpush1.bf16.msra.mxu0 %v3525
      %3561 = vmatprep.subr.bf16.mxu0 0
      %3562 = vmatpush1.bf16.msra.mxu0 %v3524
      %3563 = vmatprep.subr.bf16.mxu0 0
      %3564 = vmatpush1.bf16.msra.mxu0 %v3523
      %3565 = vmatprep.subr.bf16.mxu0 0
      %3566 = vmatpush1.bf16.msra.mxu0 %v3522
      %3567 = vmatprep.subr.bf16.mxu0 0
      %3568 = vmatpush1.bf16.msra.mxu0 %v3521
      %3569 = vmatprep.subr.bf16.mxu0 0
      %3570 = vmatpush2.bf16.msra.mxu0 %v3536
      %3571 = vmatprep.subr.bf16.mxu0 0
      %3572 = vmatpush2.bf16.msra.mxu0 %v3535
      %3573 = vmatprep.subr.bf16.mxu0 0
      %3574 = vmatpush2.bf16.msra.mxu0 %v3534
      %3575 = vmatprep.subr.bf16.mxu0 0
      %3576 = vmatpush2.bf16.msra.mxu0 %v3533
      %3577 = vmatprep.subr.bf16.mxu0 0
      %3578 = vmatpush2.bf16.msra.mxu0 %v3532
      %3579 = vmatprep.subr.bf16.mxu0 0
      %3580 = vmatpush2.bf16.msra.mxu0 %v3531
      %3581 = vmatprep.subr.bf16.mxu0 0
      %3582 = vmatpush2.bf16.msra.mxu0 %v3530
      %3583 = vmatprep.subr.bf16.mxu0 0
      %3584 = vmatpush2.bf16.msra.mxu0 %v3529
      %3585 = vmatprep.mubr.bf16.mxu0 %v3454
      %3586 = vmatmul.mubr.bf16.gmra.mxu0 %v3453
      %v3587 = vpop.f32.mrf.mxu0
      %v3588 = vadd.f32 0.0, %v3587
      %v3589 = vpop.f32.mrf.mxu0
      %v3590 = vpop.f32.mrf.mxu0
      %v3591 = vpop.f32.mrf.mxu0
      %3592 = vdwg.mxu0
      %v3593 = vadd.f32 %v3444, %v3588
      %3594 = vst [vmem:[#allocation2] sm:$0xf] %v3593
      %p3595 = scmp.eq.s32.totalorder %s26, 1
      // Predicated region
      $region77: #{gnn_forward.5} parent=71 // pred_check
        %p3596 = pneg %p3595
      $region78: #{gnn_forward.5} parent=71 // pred_check_branch
        %3598 = sbr.rel (%p3596) target = $region80
      $region79: #{gnn_forward.5} parent=71 // pred_region
        %v3599 = vld [vmem:[#allocation2] sm:$0xf]
        %v3600 = vld [vmem:[%s4] sm:$0xf]
        %v3601 = vadd.f32 %v3599, %v3600
        %v3602 = vpack.c.bf16 %v3601, %v3601
        %v3603 = vld [vmem:[%s9] sm:$0xff]
        %v3604 = vld [vmem:[%s9 + $0x8] sm:$0xff]
        %v3605 = vld [vmem:[%s9 + $0x10] sm:$0xff]
        %v3606 = vld [vmem:[%s9 + $0x18] sm:$0xff]
        %v3607 = vld [vmem:[%s9 + $0x20] sm:$0xff]
        %v3608 = vld [vmem:[%s9 + $0x28] sm:$0xff]
        %v3609 = vld [vmem:[%s9 + $0x30] sm:$0xff]
        %v3610 = vld [vmem:[%s9 + $0x38] sm:$0xff]
        %v3611 = vld [vmem:[%s9 + $0x40] sm:$0xff]
        %v3612 = vld [vmem:[%s9 + $0x48] sm:$0xff]
        %v3613 = vld [vmem:[%s9 + $0x50] sm:$0xff]
        %v3614 = vld [vmem:[%s9 + $0x58] sm:$0xff]
        %v3615 = vld [vmem:[%s9 + $0x60] sm:$0xff]
        %v3616 = vld [vmem:[%s9 + $0x68] sm:$0xff]
        %v3617 = vld [vmem:[%s9 + $0x70] sm:$0xff]
        %v3618 = vld [vmem:[%s9 + $0x78] sm:$0xff]
        %v3619 = vld [vmem:[%s10] sm:$0x3]
        %v3621 = vlaneseq
        %v3622 = vshrl.u32 %v3621, 7
        %v3623 = vsub.s32 0, %v3622
        %v3624 = vrot.slane %v3619, %v3623
        %v3625 = vlaneseq
        %v3626 = vshrl.u32 %v3625, 7
        %v3627 = vsub.s32 1, %v3626
        %v3628 = vrot.slane %v3619, %v3627
        %v3647 = vunpack.c.l.b16 %v3603
        %v3648 = vunpack.c.h.b16 %v3603
        %v3649 = vunpack.c.l.b16 %v3604
        %v3650 = vunpack.c.h.b16 %v3604
        %v3651 = vunpack.c.l.b16 %v3605
        %v3652 = vunpack.c.h.b16 %v3605
        %v3653 = vunpack.c.l.b16 %v3606
        %v3654 = vunpack.c.h.b16 %v3606
        %v3655 = vunpack.c.l.b16 %v3607
        %v3656 = vunpack.c.h.b16 %v3607
        %v3657 = vunpack.c.l.b16 %v3608
        %v3658 = vunpack.c.h.b16 %v3608
        %v3659 = vunpack.c.l.b16 %v3609
        %v3660 = vunpack.c.h.b16 %v3609
        %v3661 = vunpack.c.l.b16 %v3610
        %v3662 = vunpack.c.h.b16 %v3610
        %v3663 = vunpack.c.l.b16 %v3611
        %v3664 = vunpack.c.h.b16 %v3611
        %v3665 = vunpack.c.l.b16 %v3612
        %v3666 = vunpack.c.h.b16 %v3612
        %v3667 = vunpack.c.l.b16 %v3613
        %v3668 = vunpack.c.h.b16 %v3613
        %v3669 = vunpack.c.l.b16 %v3614
        %v3670 = vunpack.c.h.b16 %v3614
        %v3671 = vunpack.c.l.b16 %v3615
        %v3672 = vunpack.c.h.b16 %v3615
        %v3673 = vunpack.c.l.b16 %v3616
        %v3674 = vunpack.c.h.b16 %v3616
        %v3675 = vunpack.c.l.b16 %v3617
        %v3676 = vunpack.c.h.b16 %v3617
        %v3677 = vunpack.c.l.b16 %v3618
        %v3678 = vunpack.c.h.b16 %v3618
        %v3679 = vpack.c.b16 %v3649, %v3647
        %v3680 = vpack.c.b16 %v3650, %v3648
        %v3681 = vpack.c.b16 %v3653, %v3651
        %v3682 = vpack.c.b16 %v3654, %v3652
        %v3683 = vpack.c.b16 %v3657, %v3655
        %v3684 = vpack.c.b16 %v3658, %v3656
        %v3685 = vpack.c.b16 %v3661, %v3659
        %v3686 = vpack.c.b16 %v3662, %v3660
        %v3687 = vpack.c.b16 %v3665, %v3663
        %v3688 = vpack.c.b16 %v3666, %v3664
        %v3689 = vpack.c.b16 %v3669, %v3667
        %v3690 = vpack.c.b16 %v3670, %v3668
        %v3691 = vpack.c.b16 %v3673, %v3671
        %v3692 = vpack.c.b16 %v3674, %v3672
        %v3693 = vpack.c.b16 %v3677, %v3675
        %v3694 = vpack.c.b16 %v3678, %v3676
        %3711 = vmatprep.subr.bf16.mxu0 %v3694
        %3712 = vmatpush1.bf16.msra.mxu0 %v3693
        %3713 = vmatprep.subr.bf16.mxu0 %v3692
        %3714 = vmatpush1.bf16.msra.mxu0 %v3691
        %3715 = vmatprep.subr.bf16.mxu0 %v3690
        %3716 = vmatpush1.bf16.msra.mxu0 %v3689
        %3717 = vmatprep.subr.bf16.mxu0 %v3688
        %3718 = vmatpush1.bf16.msra.mxu0 %v3687
        %3719 = vmatprep.subr.bf16.mxu0 %v3686
        %3720 = vmatpush1.bf16.msra.mxu0 %v3685
        %3721 = vmatprep.subr.bf16.mxu0 %v3684
        %3722 = vmatpush1.bf16.msra.mxu0 %v3683
        %3723 = vmatprep.subr.bf16.mxu0 %v3682
        %3724 = vmatpush1.bf16.msra.mxu0 %v3681
        %3725 = vmatprep.subr.bf16.mxu0 %v3680
        %3726 = vmatpush1.bf16.msra.mxu0 %v3679
        %3727 = vmatprep.subr.bf16.mxu0 0
        %3728 = vmatpush2.bf16.msra.mxu0 0
        %3729 = vmatprep.subr.bf16.mxu0 0
        %3730 = vmatpush2.bf16.msra.mxu0 0
        %3731 = vmatprep.subr.bf16.mxu0 0
        %3732 = vmatpush2.bf16.msra.mxu0 0
        %3733 = vmatprep.subr.bf16.mxu0 0
        %3734 = vmatpush2.bf16.msra.mxu0 0
        %3735 = vmatprep.subr.bf16.mxu0 0
        %3736 = vmatpush2.bf16.msra.mxu0 0
        %3737 = vmatprep.subr.bf16.mxu0 0
        %3738 = vmatpush2.bf16.msra.mxu0 0
        %3739 = vmatprep.subr.bf16.mxu0 0
        %3740 = vmatpush2.bf16.msra.mxu0 0
        %3741 = vmatprep.subr.bf16.mxu0 0
        %3742 = vmatpush2.bf16.msra.mxu0 0
        %3743 = vmatprep.mubr.bf16.mxu0 0
        %3744 = vmatmul.mubr.bf16.gmra.mxu0 %v3602
        %v3745 = vpop.f32.mrf.mxu0
        %v3746 = vadd.f32 %v3624, %v3745
        %v3747 = vpop.f32.mrf.mxu0
        %v3748 = vadd.f32 %v3628, %v3747
        %v3749 = vpop.f32.mrf.mxu0
        %v3750 = vpop.f32.mrf.mxu0
        %3751 = vdwg.mxu0
        %v3752 = vmax.f32 %v3746, 0.0
        %v3753 = vmax.f32 %v3748, 0.0
        %v3754 = vpack.c.bf16 %v3752, %v3752
        %v3755 = vpack.c.bf16 %v3753, %v3753
        %v3756 = vld [vmem:[%s11] sm:$0xf]
        %v3757 = vld [vmem:[%s11 + $0x4] sm:$0xf]
        %v3758 = vld [vmem:[%s11 + $0x8] sm:$0xf]
        %v3759 = vld [vmem:[%s11 + $0xc] sm:$0xf]
        %v3760 = vld [vmem:[%s11 + $0x10] sm:$0xf]
        %v3761 = vld [vmem:[%s11 + $0x14] sm:$0xf]
        %v3762 = vld [vmem:[%s11 + $0x18] sm:$0xf]
        %v3763 = vld [vmem:[%s11 + $0x1c] sm:$0xf]
        %v3764 = vld [vmem:[%s11 + $0x20] sm:$0xf]
        %v3765 = vld [vmem:[%s11 + $0x24] sm:$0xf]
        %v3766 = vld [vmem:[%s11 + $0x28] sm:$0xf]
        %v3767 = vld [vmem:[%s11 + $0x2c] sm:$0xf]
        %v3768 = vld [vmem:[%s11 + $0x30] sm:$0xf]
        %v3769 = vld [vmem:[%s11 + $0x34] sm:$0xf]
        %v3770 = vld [vmem:[%s11 + $0x38] sm:$0xf]
        %v3771 = vld [vmem:[%s11 + $0x3c] sm:$0xf]
        %v3772 = vld [vmem:[%s11 + $0x40] sm:$0xf]
        %v3773 = vld [vmem:[%s11 + $0x44] sm:$0xf]
        %v3774 = vld [vmem:[%s11 + $0x48] sm:$0xf]
        %v3775 = vld [vmem:[%s11 + $0x4c] sm:$0xf]
        %v3776 = vld [vmem:[%s11 + $0x50] sm:$0xf]
        %v3777 = vld [vmem:[%s11 + $0x54] sm:$0xf]
        %v3778 = vld [vmem:[%s11 + $0x58] sm:$0xf]
        %v3779 = vld [vmem:[%s11 + $0x5c] sm:$0xf]
        %v3780 = vld [vmem:[%s11 + $0x60] sm:$0xf]
        %v3781 = vld [vmem:[%s11 + $0x64] sm:$0xf]
        %v3782 = vld [vmem:[%s11 + $0x68] sm:$0xf]
        %v3783 = vld [vmem:[%s11 + $0x6c] sm:$0xf]
        %v3784 = vld [vmem:[%s11 + $0x70] sm:$0xf]
        %v3785 = vld [vmem:[%s11 + $0x74] sm:$0xf]
        %v3786 = vld [vmem:[%s11 + $0x78] sm:$0xf]
        %v3787 = vld [vmem:[%s11 + $0x7c] sm:$0xf]
        %v3788 = vld [vmem:[%s12] sm:$0x1]
        %v3790 = vlaneseq
        %v3791 = vshrl.u32 %v3790, 7
        %v3792 = vsub.s32 0, %v3791
        %v3793 = vrot.slane %v3788, %v3792
        %v3827 = vunpack.c.l.b16 %v3756
        %v3828 = vunpack.c.l.b16 %v3757
        %v3829 = vunpack.c.l.b16 %v3758
        %v3830 = vunpack.c.l.b16 %v3759
        %v3831 = vunpack.c.l.b16 %v3760
        %v3832 = vunpack.c.l.b16 %v3761
        %v3833 = vunpack.c.l.b16 %v3762
        %v3834 = vunpack.c.l.b16 %v3763
        %v3835 = vunpack.c.l.b16 %v3764
        %v3836 = vunpack.c.l.b16 %v3765
        %v3837 = vunpack.c.l.b16 %v3766
        %v3838 = vunpack.c.l.b16 %v3767
        %v3839 = vunpack.c.l.b16 %v3768
        %v3840 = vunpack.c.l.b16 %v3769
        %v3841 = vunpack.c.l.b16 %v3770
        %v3842 = vunpack.c.l.b16 %v3771
        %v3843 = vunpack.c.l.b16 %v3772
        %v3844 = vunpack.c.l.b16 %v3773
        %v3845 = vunpack.c.l.b16 %v3774
        %v3846 = vunpack.c.l.b16 %v3775
        %v3847 = vunpack.c.l.b16 %v3776
        %v3848 = vunpack.c.l.b16 %v3777
        %v3849 = vunpack.c.l.b16 %v3778
        %v3850 = vunpack.c.l.b16 %v3779
        %v3851 = vunpack.c.l.b16 %v3780
        %v3852 = vunpack.c.l.b16 %v3781
        %v3853 = vunpack.c.l.b16 %v3782
        %v3854 = vunpack.c.l.b16 %v3783
        %v3855 = vunpack.c.l.b16 %v3784
        %v3856 = vunpack.c.l.b16 %v3785
        %v3857 = vunpack.c.l.b16 %v3786
        %v3858 = vunpack.c.l.b16 %v3787
        %v3859 = vpack.c.b16 %v3828, %v3827
        %v3860 = vpack.c.b16 %v3830, %v3829
        %v3861 = vpack.c.b16 %v3832, %v3831
        %v3862 = vpack.c.b16 %v3834, %v3833
        %v3863 = vpack.c.b16 %v3836, %v3835
        %v3864 = vpack.c.b16 %v3838, %v3837
        %v3865 = vpack.c.b16 %v3840, %v3839
        %v3866 = vpack.c.b16 %v3842, %v3841
        %v3867 = vpack.c.b16 %v3844, %v3843
        %v3868 = vpack.c.b16 %v3846, %v3845
        %v3869 = vpack.c.b16 %v3848, %v3847
        %v3870 = vpack.c.b16 %v3850, %v3849
        %v3871 = vpack.c.b16 %v3852, %v3851
        %v3872 = vpack.c.b16 %v3854, %v3853
        %v3873 = vpack.c.b16 %v3856, %v3855
        %v3874 = vpack.c.b16 %v3858, %v3857
        %3891 = vmatprep.subr.bf16.mxu0 0
        %3892 = vmatpush1.bf16.msra.mxu0 %v3866
        %3893 = vmatprep.subr.bf16.mxu0 0
        %3894 = vmatpush1.bf16.msra.mxu0 %v3865
        %3895 = vmatprep.subr.bf16.mxu0 0
        %3896 = vmatpush1.bf16.msra.mxu0 %v3864
        %3897 = vmatprep.subr.bf16.mxu0 0
        %3898 = vmatpush1.bf16.msra.mxu0 %v3863
        %3899 = vmatprep.subr.bf16.mxu0 0
        %3900 = vmatpush1.bf16.msra.mxu0 %v3862
        %3901 = vmatprep.subr.bf16.mxu0 0
        %3902 = vmatpush1.bf16.msra.mxu0 %v3861
        %3903 = vmatprep.subr.bf16.mxu0 0
        %3904 = vmatpush1.bf16.msra.mxu0 %v3860
        %3905 = vmatprep.subr.bf16.mxu0 0
        %3906 = vmatpush1.bf16.msra.mxu0 %v3859
        %3907 = vmatprep.subr.bf16.mxu0 0
        %3908 = vmatpush2.bf16.msra.mxu0 %v3874
        %3909 = vmatprep.subr.bf16.mxu0 0
        %3910 = vmatpush2.bf16.msra.mxu0 %v3873
        %3911 = vmatprep.subr.bf16.mxu0 0
        %3912 = vmatpush2.bf16.msra.mxu0 %v3872
        %3913 = vmatprep.subr.bf16.mxu0 0
        %3914 = vmatpush2.bf16.msra.mxu0 %v3871
        %3915 = vmatprep.subr.bf16.mxu0 0
        %3916 = vmatpush2.bf16.msra.mxu0 %v3870
        %3917 = vmatprep.subr.bf16.mxu0 0
        %3918 = vmatpush2.bf16.msra.mxu0 %v3869
        %3919 = vmatprep.subr.bf16.mxu0 0
        %3920 = vmatpush2.bf16.msra.mxu0 %v3868
        %3921 = vmatprep.subr.bf16.mxu0 0
        %3922 = vmatpush2.bf16.msra.mxu0 %v3867
        %3923 = vmatprep.mubr.bf16.mxu0 %v3755
        %3924 = vmatmul.mubr.bf16.gmra.mxu0 %v3754
        %v3925 = vpop.f32.mrf.mxu0
        %v3926 = vadd.f32 %v3793, %v3925
        %v3927 = vpop.f32.mrf.mxu0
        %v3928 = vpop.f32.mrf.mxu0
        %v3929 = vpop.f32.mrf.mxu0
        %3930 = vdwg.mxu0
        %v3931 = vmax.f32 %v3926, 0.0
        %3932 = vst [vmem:[%s14] sm:$0xf] %v3931
      $region80: #{gnn_forward.5} parent=71 // pred_fallthru
        _
      %s3933 = smul.u32 32, %s26
      %p3934 = scmp.lt.s32.totalorder %s3933, 63
      %s3935 = scalar_select %p3934, %s3933, 63
      %s3936 = smul.addr %s3935, 4
      %s3937 = scalar_lea.vmem %s13, %s3936
      // Predicated region
      $region81: #{gnn_forward.5} parent=71 // pred_check
        %p3938 = pneg %p332
      $region82: #{gnn_forward.5} parent=71 // pred_check_branch
        %3940 = sbr.rel (%p3938) target = $region84
      $region83: #{gnn_forward.5} parent=71 // pred_region
        %s3941 = smul.u32 32, %s26
      $region84: #{gnn_forward.5} parent=71 // pred_fallthru
        _
      // Predicated region
      $region85: #{gnn_forward.5} parent=71 // pred_check
        %p3942 = pneg %p353
      $region86: #{gnn_forward.5} parent=71 // pred_check_branch
        %3944 = sbr.rel (%p3942) target = $region88
      $region87: #{gnn_forward.5} parent=71 // pred_region
        _
      $region88: #{gnn_forward.5} parent=71 // pred_fallthru
        _
      // Predicated region
      $region89: #{gnn_forward.5} parent=71 // pred_check
        %p3945 = pneg %p353
      $region90: #{gnn_forward.5} parent=71 // pred_check_branch
        %3947 = sbr.rel (%p3945) target = $region92
      $region91: #{gnn_forward.5} parent=71 // pred_region
        _
      $region92: #{gnn_forward.5} parent=71 // pred_fallthru
        _
    $region72: #{gnn_forward.5} parent=5 // pred_fallthru
      _
    %p3948 = scmp.le.s32.totalorder 2, %s21
    // Predicated region
    $region93: #{gnn_forward.5} parent=5 // pred_check
      %p3949 = pneg %p3948
    $region94: #{gnn_forward.5} parent=5 // pred_check_branch
      %3951 = sbr.rel (%p3949) target = $region96
    $region95: #{gnn_forward.5} parent=5 // pred_region
      %s3952 = ssub.s32 %s21, 2
      // Predicated region
      $region97: #{gnn_forward.5} parent=95 // pred_check
        %p3953 = pneg %p338
      $region98: #{gnn_forward.5} parent=95 // pred_check_branch
        %3955 = sbr.rel (%p3953) target = $region100
      $region99: #{gnn_forward.5} parent=95 // pred_region
        %s3956 = smul.u32 32, %s27
        %p3957 = scmp.lt.s32.totalorder %s3956, 63
        %s3958 = scalar_select %p3957, %s3956, 63
        %s3959 = smul.addr %s3958, 4
        %s3960 = scalar_lea.vmem %s13, %s3959
      $region100: #{gnn_forward.5} parent=95 // pred_fallthru
        _
    $region96: #{gnn_forward.5} parent=5 // pred_fallthru
      _
  $region6: #{gnn_forward.5} parent=0 // loop_footer
    %s25 = sadd.s32 1, %s21
  $region7: #{gnn_forward.5} parent=0 // loop_footer_branch
    %20 = sbr.rel target = $region3
  $region8: #{gnn_forward.5} parent=0 // loop_exit
    _

// kernel: gnn_forward.9
$region0: #{gnn_forward.9}
  #allocation0 [shape = 'u32[]', space=smem, size = 0x4, offset = 0x4, fixed_abs, tag = 'smem constant byte address 0x4 - core index']
  #allocation1 [shape = 'u32[144,128]{1,0:T(1,128)}', space=vmem, size = 0x12000, scoped, tag = 'internal scratch']
  #allocation2 [shape = 'f32[4,128]{1,0:T(4,128)}', space=vmem, size = 0x800, scoped, tag = 'scratch operand']
  %s0 = inlined_call_operand.vmem [shape: bf16[512,128], index: 0, kind: input, shape index: {}]
  %s1 = inlined_call_operand.vmem [shape: bf16[1024,128], index: 1, kind: input, shape index: {}]
  %s2 = inlined_call_operand.vmem [shape: bf16[512,1024], index: 2, kind: input, shape index: {}]
  %s3 = inlined_call_operand.vmem [shape: bf16[4,512], index: 3, kind: input, shape index: {}]
  %s4 = inlined_call_operand.vmem [shape: f32[4,1], index: 4, kind: input, shape index: {}]
  %s5 = inlined_call_operand.vmem [shape: bf16[128,256], index: 5, kind: input, shape index: {}]
  %s6 = inlined_call_operand.vmem [shape: f32[1,256], index: 6, kind: input, shape index: {}]
  %s7 = inlined_call_operand.vmem [shape: bf16[256,128], index: 7, kind: input, shape index: {}]
  %s8 = inlined_call_operand.vmem [shape: f32[1,128], index: 8, kind: input, shape index: {}]
  %s9 = inlined_call_operand.vmem [shape: bf16[128,128], index: 9, kind: input, shape index: {}]
  %s10 = inlined_call_operand.vmem [shape: f32[1,128], index: 10, kind: input, shape index: {}]
  %s11 = inlined_call_operand.hbm [shape: f32[4,128], index: 11, kind: output, shape index: {}]
  %s12 = sld [smem:[#allocation0]]
  $region85: #{gnn_forward.9} parent=0
    _
  %s14 = ssub.s32 1, %s12
  %s15 = scalar_select 0, %s14, %s12
  $region1: #{gnn_forward.9} parent=0
    #allocation3 [shape = 'u8[2048]{0}', space=vmem, size = 0x800, scoped, tag = 'output window, operand 0, single buffered']
    #allocation4 [shape = 's32[2]{0}', space=sflag, size = 0x8, scoped, tag = 'scoped memory for gnn_forward.9']
    %16 = vsyncpa [#allocation4], 0
    loop: start=0, step=1, limit=4
    $region2: #{gnn_forward.9} parent=1 // loop_pre_header
      _
    $region3: #{gnn_forward.9} parent=1 // loop_header
      %s18 = sphi 0, %s22
      %p19 = scmp.ge.s32.totalorder %s18, 4
      %s28 = sphi 0, %s30
      %s31 = sphi 0, %s28
      %s32 = sphi 0, %s31
      %s48 = sphi 0, %s32
      %s52 = sphi 0, %s52
      %s54 = sphi 0, %s52
      %s55 = sphi 0, %s54
      %s69 = sphi 0, %s55
      %s75 = sphi 0, %s77
      %s78 = sphi 0, %s75
      %s79 = sphi 0, %s78
      %s95 = sphi 0, %s79
      %s101 = sphi 0, %s103
      %s104 = sphi 0, %s101
      %s105 = sphi 0, %s104
      %s121 = sphi 0, %s105
      %s125 = sphi 0, %s125
      %s127 = sphi 0, %s125
      %s128 = sphi 0, %s127
      %s142 = sphi 0, %s128
      %s146 = sphi 0, %s146
      %s148 = sphi 0, %s146
      %s149 = sphi 0, %s148
      %s163 = sphi 0, %s149
      %s167 = sphi 0, %s167
      %s169 = sphi 0, %s167
      %s170 = sphi 0, %s169
      %s184 = sphi 0, %s170
      %s188 = sphi 0, %s188
      %s190 = sphi 0, %s188
      %s191 = sphi 0, %s190
      %s205 = sphi 0, %s191
      %s209 = sphi 0, %s209
      %s211 = sphi 0, %s209
      %s212 = sphi 0, %s211
      %s226 = sphi 0, %s212
      %s230 = sphi 0, %s230
      %s232 = sphi 0, %s230
      %s233 = sphi 0, %s232
      %s247 = sphi 0, %s233
      %s251 = sphi 0, %s251
      %s253 = sphi 0, %s251
      %s254 = sphi 0, %s253
      %s268 = sphi 0, %s254
      %s272 = sphi 0, %s272
      %s274 = sphi 0, %s272
      %s275 = sphi 0, %s274
      %s289 = sphi 0, %s275
    $region4: #{gnn_forward.9} parent=1 // loop_header_branch
      %21 = sbr.rel (%p19) target = $region8
    $region5: #{gnn_forward.9} parent=1 // loop_body
      %s23 = ssub.s32 %s18, 1
      %s24 = ssub.s32 %s18, 2
      %s25 = sadd.s32 %s18, 1
      %s26 = ssub.s32 %s18, %s25
      %p27 = scmp.eq.s32.totalorder %s26, 0
      %s29 = sadd.s32 %s28, 1
      %s30 = scalar_select %p27, %s28, %s29
      %p33 = pneg %p27
      %p34 = scmp.eq.s32.totalorder %s18, 1
      %p35 = por %p33, %p34
      %p36 = scmp.ne.s32.totalorder %s28, %s31
      %p37 = scmp.eq.s32.totalorder %s18, 0
      %p38 = por %p36, %p37
      %p39 = scmp.ne.s32.totalorder %s28, %s31
      %p40 = scmp.eq.s32.totalorder %s23, 1
      %p41 = por %p39, %p40
      %p42 = scmp.ne.s32.totalorder %s31, %s32
      %p43 = scmp.eq.s32.totalorder %s23, 0
      %p44 = por %p42, %p43
      %p45 = scmp.ne.s32.totalorder %s31, %s32
      %p46 = scmp.eq.s32.totalorder %s24, 1
      %p47 = por %p45, %p46
      %p49 = scmp.ne.s32.totalorder %s32, %s48
      %p50 = scmp.eq.s32.totalorder %s24, 0
      %p51 = por %p49, %p50
      %s53 = sadd.s32 %s52, 1
      %p56 = scmp.eq.s32.totalorder %s18, 1
      %p57 = scmp.ne.s32.totalorder %s52, %s54
      %p58 = scmp.eq.s32.totalorder %s18, 0
      %p59 = por %p57, %p58
      %p60 = scmp.ne.s32.totalorder %s52, %s54
      %p61 = scmp.eq.s32.totalorder %s23, 1
      %p62 = por %p60, %p61
      %p63 = scmp.ne.s32.totalorder %s54, %s55
      %p64 = scmp.eq.s32.totalorder %s23, 0
      %p65 = por %p63, %p64
      %p66 = scmp.ne.s32.totalorder %s54, %s55
      %p67 = scmp.eq.s32.totalorder %s24, 1
      %p68 = por %p66, %p67
      %p70 = scmp.ne.s32.totalorder %s55, %s69
      %p71 = scmp.eq.s32.totalorder %s24, 0
      %p72 = por %p70, %p71
      %s73 = ssub.s32 %s18, %s25
      %p74 = scmp.eq.s32.totalorder %s73, 0
      %s76 = sadd.s32 %s75, 1
      %s77 = scalar_select %p74, %s75, %s76
      %p80 = pneg %p74
      %p81 = scmp.eq.s32.totalorder %s18, 1
      %p82 = por %p80, %p81
      %p83 = scmp.ne.s32.totalorder %s75, %s78
      %p84 = scmp.eq.s32.totalorder %s18, 0
      %p85 = por %p83, %p84
      %p86 = scmp.ne.s32.totalorder %s75, %s78
      %p87 = scmp.eq.s32.totalorder %s23, 1
      %p88 = por %p86, %p87
      %p89 = scmp.ne.s32.totalorder %s78, %s79
      %p90 = scmp.eq.s32.totalorder %s23, 0
      %p91 = por %p89, %p90
      %p92 = scmp.ne.s32.totalorder %s78, %s79
      %p93 = scmp.eq.s32.totalorder %s24, 1
      %p94 = por %p92, %p93
      %p96 = scmp.ne.s32.totalorder %s79, %s95
      %p97 = scmp.eq.s32.totalorder %s24, 0
      %p98 = por %p96, %p97
      %s99 = ssub.s32 %s18, %s25
      %p100 = scmp.eq.s32.totalorder %s99, 0
      %s102 = sadd.s32 %s101, 1
      %s103 = scalar_select %p100, %s101, %s102
      %p106 = pneg %p100
      %p107 = scmp.eq.s32.totalorder %s18, 1
      %p108 = por %p106, %p107
      %p109 = scmp.ne.s32.totalorder %s101, %s104
      %p110 = scmp.eq.s32.totalorder %s18, 0
      %p111 = por %p109, %p110
      %p112 = scmp.ne.s32.totalorder %s101, %s104
      %p113 = scmp.eq.s32.totalorder %s23, 1
      %p114 = por %p112, %p113
      %p115 = scmp.ne.s32.totalorder %s104, %s105
      %p116 = scmp.eq.s32.totalorder %s23, 0
      %p117 = por %p115, %p116
      %p118 = scmp.ne.s32.totalorder %s104, %s105
      %p119 = scmp.eq.s32.totalorder %s24, 1
      %p120 = por %p118, %p119
      %p122 = scmp.ne.s32.totalorder %s105, %s121
      %p123 = scmp.eq.s32.totalorder %s24, 0
      %p124 = por %p122, %p123
      %s126 = sadd.s32 %s125, 1
      %p129 = scmp.eq.s32.totalorder %s18, 1
      %p130 = scmp.ne.s32.totalorder %s125, %s127
      %p131 = scmp.eq.s32.totalorder %s18, 0
      %p132 = por %p130, %p131
      %p133 = scmp.ne.s32.totalorder %s125, %s127
      %p134 = scmp.eq.s32.totalorder %s23, 1
      %p135 = por %p133, %p134
      %p136 = scmp.ne.s32.totalorder %s127, %s128
      %p137 = scmp.eq.s32.totalorder %s23, 0
      %p138 = por %p136, %p137
      %p139 = scmp.ne.s32.totalorder %s127, %s128
      %p140 = scmp.eq.s32.totalorder %s24, 1
      %p141 = por %p139, %p140
      %p143 = scmp.ne.s32.totalorder %s128, %s142
      %p144 = scmp.eq.s32.totalorder %s24, 0
      %p145 = por %p143, %p144
      %s147 = sadd.s32 %s146, 1
      %p150 = scmp.eq.s32.totalorder %s18, 1
      %p151 = scmp.ne.s32.totalorder %s146, %s148
      %p152 = scmp.eq.s32.totalorder %s18, 0
      %p153 = por %p151, %p152
      %p154 = scmp.ne.s32.totalorder %s146, %s148
      %p155 = scmp.eq.s32.totalorder %s23, 1
      %p156 = por %p154, %p155
      %p157 = scmp.ne.s32.totalorder %s148, %s149
      %p158 = scmp.eq.s32.totalorder %s23, 0
      %p159 = por %p157, %p158
      %p160 = scmp.ne.s32.totalorder %s148, %s149
      %p161 = scmp.eq.s32.totalorder %s24, 1
      %p162 = por %p160, %p161
      %p164 = scmp.ne.s32.totalorder %s149, %s163
      %p165 = scmp.eq.s32.totalorder %s24, 0
      %p166 = por %p164, %p165
      %s168 = sadd.s32 %s167, 1
      %p171 = scmp.eq.s32.totalorder %s18, 1
      %p172 = scmp.ne.s32.totalorder %s167, %s169
      %p173 = scmp.eq.s32.totalorder %s18, 0
      %p174 = por %p172, %p173
      %p175 = scmp.ne.s32.totalorder %s167, %s169
      %p176 = scmp.eq.s32.totalorder %s23, 1
      %p177 = por %p175, %p176
      %p178 = scmp.ne.s32.totalorder %s169, %s170
      %p179 = scmp.eq.s32.totalorder %s23, 0
      %p180 = por %p178, %p179
      %p181 = scmp.ne.s32.totalorder %s169, %s170
      %p182 = scmp.eq.s32.totalorder %s24, 1
      %p183 = por %p181, %p182
      %p185 = scmp.ne.s32.totalorder %s170, %s184
      %p186 = scmp.eq.s32.totalorder %s24, 0
      %p187 = por %p185, %p186
      %s189 = sadd.s32 %s188, 1
      %p192 = scmp.eq.s32.totalorder %s18, 1
      %p193 = scmp.ne.s32.totalorder %s188, %s190
      %p194 = scmp.eq.s32.totalorder %s18, 0
      %p195 = por %p193, %p194
      %p196 = scmp.ne.s32.totalorder %s188, %s190
      %p197 = scmp.eq.s32.totalorder %s23, 1
      %p198 = por %p196, %p197
      %p199 = scmp.ne.s32.totalorder %s190, %s191
      %p200 = scmp.eq.s32.totalorder %s23, 0
      %p201 = por %p199, %p200
      %p202 = scmp.ne.s32.totalorder %s190, %s191
      %p203 = scmp.eq.s32.totalorder %s24, 1
      %p204 = por %p202, %p203
      %p206 = scmp.ne.s32.totalorder %s191, %s205
      %p207 = scmp.eq.s32.totalorder %s24, 0
      %p208 = por %p206, %p207
      %s210 = sadd.s32 %s209, 1
      %p213 = scmp.eq.s32.totalorder %s18, 1
      %p214 = scmp.ne.s32.totalorder %s209, %s211
      %p215 = scmp.eq.s32.totalorder %s18, 0
      %p216 = por %p214, %p215
      %p217 = scmp.ne.s32.totalorder %s209, %s211
      %p218 = scmp.eq.s32.totalorder %s23, 1
      %p219 = por %p217, %p218
      %p220 = scmp.ne.s32.totalorder %s211, %s212
      %p221 = scmp.eq.s32.totalorder %s23, 0
      %p222 = por %p220, %p221
      %p223 = scmp.ne.s32.totalorder %s211, %s212
      %p224 = scmp.eq.s32.totalorder %s24, 1
      %p225 = por %p223, %p224
      %p227 = scmp.ne.s32.totalorder %s212, %s226
      %p228 = scmp.eq.s32.totalorder %s24, 0
      %p229 = por %p227, %p228
      %s231 = sadd.s32 %s230, 1
      %p234 = scmp.eq.s32.totalorder %s18, 1
      %p235 = scmp.ne.s32.totalorder %s230, %s232
      %p236 = scmp.eq.s32.totalorder %s18, 0
      %p237 = por %p235, %p236
      %p238 = scmp.ne.s32.totalorder %s230, %s232
      %p239 = scmp.eq.s32.totalorder %s23, 1
      %p240 = por %p238, %p239
      %p241 = scmp.ne.s32.totalorder %s232, %s233
      %p242 = scmp.eq.s32.totalorder %s23, 0
      %p243 = por %p241, %p242
      %p244 = scmp.ne.s32.totalorder %s232, %s233
      %p245 = scmp.eq.s32.totalorder %s24, 1
      %p246 = por %p244, %p245
      %p248 = scmp.ne.s32.totalorder %s233, %s247
      %p249 = scmp.eq.s32.totalorder %s24, 0
      %p250 = por %p248, %p249
      %s252 = sadd.s32 %s251, 1
      %p255 = scmp.eq.s32.totalorder %s18, 1
      %p256 = scmp.ne.s32.totalorder %s251, %s253
      %p257 = scmp.eq.s32.totalorder %s18, 0
      %p258 = por %p256, %p257
      %p259 = scmp.ne.s32.totalorder %s251, %s253
      %p260 = scmp.eq.s32.totalorder %s23, 1
      %p261 = por %p259, %p260
      %p262 = scmp.ne.s32.totalorder %s253, %s254
      %p263 = scmp.eq.s32.totalorder %s23, 0
      %p264 = por %p262, %p263
      %p265 = scmp.ne.s32.totalorder %s253, %s254
      %p266 = scmp.eq.s32.totalorder %s24, 1
      %p267 = por %p265, %p266
      %p269 = scmp.ne.s32.totalorder %s254, %s268
      %p270 = scmp.eq.s32.totalorder %s24, 0
      %p271 = por %p269, %p270
      %s273 = sadd.s32 %s272, 1
      %p276 = scmp.eq.s32.totalorder %s18, 1
      %p277 = scmp.ne.s32.totalorder %s272, %s274
      %p278 = scmp.eq.s32.totalorder %s18, 0
      %p279 = por %p277, %p278
      %p280 = scmp.ne.s32.totalorder %s272, %s274
      %p281 = scmp.eq.s32.totalorder %s23, 1
      %p282 = por %p280, %p281
      %p283 = scmp.ne.s32.totalorder %s274, %s275
      %p284 = scmp.eq.s32.totalorder %s23, 0
      %p285 = por %p283, %p284
      %p286 = scmp.ne.s32.totalorder %s274, %s275
      %p287 = scmp.eq.s32.totalorder %s24, 1
      %p288 = por %p286, %p287
      %p290 = scmp.ne.s32.totalorder %s275, %s289
      %p291 = scmp.eq.s32.totalorder %s24, 0
      %p292 = por %p290, %p291
      %p293 = scmp.le.s32.totalorder 1, %s18
      %p294 = scmp.lt.s32.totalorder %s18, 3
      %p295 = pnand %p293, %p294
      %p296 = pneg %p295
      // Predicated region
      $region9: #{gnn_forward.9} parent=5 // pred_check
        _
      $region10: #{gnn_forward.9} parent=5 // pred_check_branch
        %298 = sbr.rel (%p295) target = $region12
      $region11: #{gnn_forward.9} parent=5 // pred_region
        %s299 = ssub.s32 %s18, 1
        // Predicated region
        $region13: #{gnn_forward.9} parent=11 // pred_check
          %p300 = pneg %p65
        $region14: #{gnn_forward.9} parent=11 // pred_check_branch
          %302 = sbr.rel (%p300) target = $region16
        $region15: #{gnn_forward.9} parent=11 // pred_region
          _
        $region16: #{gnn_forward.9} parent=11 // pred_fallthru
          _
        // Predicated region
        $region17: #{gnn_forward.9} parent=11 // pred_check
          %p303 = pneg %p138
        $region18: #{gnn_forward.9} parent=11 // pred_check_branch
          %305 = sbr.rel (%p303) target = $region20
        $region19: #{gnn_forward.9} parent=11 // pred_region
          _
        $region20: #{gnn_forward.9} parent=11 // pred_fallthru
          _
        // Predicated region
        $region21: #{gnn_forward.9} parent=11 // pred_check
          %p306 = pneg %p159
        $region22: #{gnn_forward.9} parent=11 // pred_check_branch
          %308 = sbr.rel (%p306) target = $region24
        $region23: #{gnn_forward.9} parent=11 // pred_region
          _
        $region24: #{gnn_forward.9} parent=11 // pred_fallthru
          _
        // Predicated region
        $region25: #{gnn_forward.9} parent=11 // pred_check
          %p309 = pneg %p180
        $region26: #{gnn_forward.9} parent=11 // pred_check_branch
          %311 = sbr.rel (%p309) target = $region28
        $region27: #{gnn_forward.9} parent=11 // pred_region
          _
        $region28: #{gnn_forward.9} parent=11 // pred_fallthru
          _
        // Predicated region
        $region29: #{gnn_forward.9} parent=11 // pred_check
          %p312 = pneg %p201
        $region30: #{gnn_forward.9} parent=11 // pred_check_branch
          %314 = sbr.rel (%p312) target = $region32
        $region31: #{gnn_forward.9} parent=11 // pred_region
          _
        $region32: #{gnn_forward.9} parent=11 // pred_fallthru
          _
        // Predicated region
        $region33: #{gnn_forward.9} parent=11 // pred_check
          %p315 = pneg %p222
        $region34: #{gnn_forward.9} parent=11 // pred_check_branch
          %317 = sbr.rel (%p315) target = $region36
        $region35: #{gnn_forward.9} parent=11 // pred_region
          _
        $region36: #{gnn_forward.9} parent=11 // pred_fallthru
          _
        // Predicated region
        $region37: #{gnn_forward.9} parent=11 // pred_check
          %p318 = pneg %p243
        $region38: #{gnn_forward.9} parent=11 // pred_check_branch
          %320 = sbr.rel (%p318) target = $region40
        $region39: #{gnn_forward.9} parent=11 // pred_region
          _
        $region40: #{gnn_forward.9} parent=11 // pred_fallthru
          _
        // Predicated region
        $region41: #{gnn_forward.9} parent=11 // pred_check
          %p321 = pneg %p264
        $region42: #{gnn_forward.9} parent=11 // pred_check_branch
          %323 = sbr.rel (%p321) target = $region44
        $region43: #{gnn_forward.9} parent=11 // pred_region
          _
        $region44: #{gnn_forward.9} parent=11 // pred_fallthru
          _
      $region12: #{gnn_forward.9} parent=5 // pred_fallthru
        _
      %p324 = scmp.lt.s32.totalorder %s18, 2
      // Predicated region
      $region45: #{gnn_forward.9} parent=5 // pred_check
        %p325 = pneg %p324
      $region46: #{gnn_forward.9} parent=5 // pred_check_branch
        %327 = sbr.rel (%p325) target = $region48
      $region47: #{gnn_forward.9} parent=5 // pred_region
        // Predicated region
        $region49: #{gnn_forward.9} parent=47 // pred_check
          %p328 = pneg %p38
        $region50: #{gnn_forward.9} parent=47 // pred_check_branch
          %330 = sbr.rel (%p328) target = $region52
        $region51: #{gnn_forward.9} parent=47 // pred_region
          %s331 = smul.u32 32, %s18
          %p332 = scmp.lt.s32.totalorder %s331, 63
          %s333 = scalar_select %p332, %s331, 63
          %s334 = smul.addr %s333, 4
          %s335 = scalar_lea.vmem %s0, %s334
          %s336 = smul.u32 32, %s18
        $region52: #{gnn_forward.9} parent=47 // pred_fallthru
          _
        // Predicated region
        $region53: #{gnn_forward.9} parent=47 // pred_check
          %p337 = pneg %p85
        $region54: #{gnn_forward.9} parent=47 // pred_check_branch
          %339 = sbr.rel (%p337) target = $region56
        $region55: #{gnn_forward.9} parent=47 // pred_region
          %s340 = smul.u32 32, %s18
          %p341 = scmp.lt.s32.totalorder %s340, 63
          %s342 = scalar_select %p341, %s340, 63
          %s343 = smul.addr %s342, 8
          %s344 = smul.addr %s343, 4
          %s345 = scalar_lea.vmem %s2, %s344
          %s346 = smul.u32 32, %s18
        $region56: #{gnn_forward.9} parent=47 // pred_fallthru
          _
        // Predicated region
        $region57: #{gnn_forward.9} parent=47 // pred_check
          %p347 = pneg %p111
        $region58: #{gnn_forward.9} parent=47 // pred_check_branch
          %349 = sbr.rel (%p347) target = $region60
        $region59: #{gnn_forward.9} parent=47 // pred_region
          %s350 = smul.u32 2, %s18
          %p351 = scmp.lt.s32.totalorder %s350, 3
          %s352 = scalar_select %p351, %s350, 3
          %s353 = smul.addr %s352, 2
          %s354 = scalar_lea.vmem %s3, %s353
          %s355 = smul.u32 2, %s18
        $region60: #{gnn_forward.9} parent=47 // pred_fallthru
          _
      $region48: #{gnn_forward.9} parent=5 // pred_fallthru
        _
      %p356 = scmp.le.s32.totalorder 1, %s18
      %p357 = scmp.lt.s32.totalorder %s18, 3
      %p358 = pnand %p356, %p357
      %p359 = pneg %p358
      // Predicated region
      $region61: #{gnn_forward.9} parent=5 // pred_check
        _
      $region62: #{gnn_forward.9} parent=5 // pred_check_branch
        %361 = sbr.rel (%p358) target = $region64
      $region63: #{gnn_forward.9} parent=5 // pred_region
        %s362 = ssub.s32 %s18, 1
        %s363 = smul.u32 32, %s23
        %p364 = scmp.lt.s32.totalorder %s363, 63
        %s365 = scalar_select %p364, %s363, 63
        %s366 = smul.addr %s365, 4
        %s367 = scalar_lea.vmem %s0, %s366
        %p368 = pneg %p44
        %p369 = pneg %p41
        %p370 = pneg %p65
        %p371 = pneg %p62
        %s372 = smul.u32 32, %s23
        %p373 = scmp.lt.s32.totalorder %s372, 63
        %s374 = scalar_select %p373, %s372, 63
        %s375 = smul.addr %s374, 8
        %s376 = smul.addr %s375, 4
        %s377 = scalar_lea.vmem %s2, %s376
        %p378 = pneg %p91
        %p379 = pneg %p88
        %s380 = smul.u32 2, %s23
        %p381 = scmp.lt.s32.totalorder %s380, 3
        %s382 = scalar_select %p381, %s380, 3
        %s383 = smul.addr %s382, 2
        %s384 = scalar_lea.vmem %s3, %s383
        %p385 = pneg %p117
        %p386 = pneg %p114
        %p387 = pneg %p138
        %p388 = pneg %p135
        %p389 = pneg %p159
        %p390 = pneg %p156
        %p391 = pneg %p180
        %p392 = pneg %p177
        %p393 = pneg %p201
        %p394 = pneg %p198
        %p395 = pneg %p222
        %p396 = pneg %p219
        %p397 = pneg %p243
        %p398 = pneg %p240
        %p399 = pneg %p264
        %p400 = pneg %p261
        %p401 = pneg %p285
        %p402 = pneg %p282
        %s403 = smul.u32 32, %s23
        %p404 = scmp.lt.s32.totalorder %s403, 63
        %s405 = scalar_select %p404, %s403, 63
        %s406 = smul.addr %s405, 4
        %s407 = scalar_lea.vmem %s0, %s406
        %s408 = smul.u32 32, %s23
        %s409 = smul.u32 32, %s23
        %p410 = scmp.lt.s32.totalorder %s409, 63
        %s411 = scalar_select %p410, %s409, 63
        %s412 = smul.addr %s411, 8
        %s413 = smul.addr %s412, 4
        %s414 = scalar_lea.vmem %s2, %s413
        %s415 = smul.u32 32, %s23
        %s416 = smul.u32 2, %s23
        %p417 = scmp.lt.s32.totalorder %s416, 3
        %s418 = scalar_select %p417, %s416, 3
        %s419 = smul.addr %s418, 2
        %s420 = scalar_lea.vmem %s3, %s419
        %s421 = smul.u32 2, %s23
        %p423 = scmp.eq.s32.totalorder %s23, 0
        // Predicated region
        $region65: #{gnn_forward.9} parent=63 // pred_check
          %p424 = pneg %p423
        $region66: #{gnn_forward.9} parent=63 // pred_check_branch
          %426 = sbr.rel (%p424) target = $region68
        $region67: #{gnn_forward.9} parent=63 // pred_region
          %427 = vst [vmem:[#allocation2] sm:$0xf] 0.0
          %428 = vst [vmem:[#allocation3] sm:$0xf] 0.0
        $region68: #{gnn_forward.9} parent=63 // pred_fallthru
          _
        %v429 = vld [vmem:[%s407] sm:$0xf]
        %v430 = vld [vmem:[%s407 + $0x4] sm:$0xf]
        %v431 = vld [vmem:[%s407 + $0x8] sm:$0xf]
        %v432 = vld [vmem:[%s407 + $0xc] sm:$0xf]
        %v433 = vld [vmem:[%s407 + $0x10] sm:$0xf]
        %v434 = vld [vmem:[%s407 + $0x14] sm:$0xf]
        %v435 = vld [vmem:[%s407 + $0x18] sm:$0xf]
        %v436 = vld [vmem:[%s407 + $0x1c] sm:$0xf]
        %v437 = vld [vmem:[%s407 + $0x20] sm:$0xf]
        %v438 = vld [vmem:[%s407 + $0x24] sm:$0xf]
        %v439 = vld [vmem:[%s407 + $0x28] sm:$0xf]
        %v440 = vld [vmem:[%s407 + $0x2c] sm:$0xf]
        %v441 = vld [vmem:[%s407 + $0x30] sm:$0xf]
        %v442 = vld [vmem:[%s407 + $0x34] sm:$0xf]
        %v443 = vld [vmem:[%s407 + $0x38] sm:$0xf]
        %v444 = vld [vmem:[%s407 + $0x3c] sm:$0xf]
        %v445 = vld [vmem:[%s407 + $0x40] sm:$0xf]
        %v446 = vld [vmem:[%s407 + $0x44] sm:$0xf]
        %v447 = vld [vmem:[%s407 + $0x48] sm:$0xf]
        %v448 = vld [vmem:[%s407 + $0x4c] sm:$0xf]
        %v449 = vld [vmem:[%s407 + $0x50] sm:$0xf]
        %v450 = vld [vmem:[%s407 + $0x54] sm:$0xf]
        %v451 = vld [vmem:[%s407 + $0x58] sm:$0xf]
        %v452 = vld [vmem:[%s407 + $0x5c] sm:$0xf]
        %v453 = vld [vmem:[%s407 + $0x60] sm:$0xf]
        %v454 = vld [vmem:[%s407 + $0x64] sm:$0xf]
        %v455 = vld [vmem:[%s407 + $0x68] sm:$0xf]
        %v456 = vld [vmem:[%s407 + $0x6c] sm:$0xf]
        %v457 = vld [vmem:[%s407 + $0x70] sm:$0xf]
        %v458 = vld [vmem:[%s407 + $0x74] sm:$0xf]
        %v459 = vld [vmem:[%s407 + $0x78] sm:$0xf]
        %v460 = vld [vmem:[%s407 + $0x7c] sm:$0xf]
        %v461 = vunpack.c.l.bf16 %v429
        %v462 = vunpack.c.l.bf16 %v430
        %v463 = vunpack.c.l.bf16 %v431
        %v464 = vunpack.c.l.bf16 %v432
        %v465 = vunpack.c.l.bf16 %v433
        %v466 = vunpack.c.l.bf16 %v434
        %v467 = vunpack.c.l.bf16 %v435
        %v468 = vunpack.c.l.bf16 %v436
        %v469 = vunpack.c.l.bf16 %v437
        %v470 = vunpack.c.l.bf16 %v438
        %v471 = vunpack.c.l.bf16 %v439
        %v472 = vunpack.c.l.bf16 %v440
        %v473 = vunpack.c.l.bf16 %v441
        %v474 = vunpack.c.l.bf16 %v442
        %v475 = vunpack.c.l.bf16 %v443
        %v476 = vunpack.c.l.bf16 %v444
        %v477 = vunpack.c.l.bf16 %v445
        %v478 = vunpack.c.l.bf16 %v446
        %v479 = vunpack.c.l.bf16 %v447
        %v480 = vunpack.c.l.bf16 %v448
        %v481 = vunpack.c.l.bf16 %v449
        %v482 = vunpack.c.l.bf16 %v450
        %v483 = vunpack.c.l.bf16 %v451
        %v484 = vunpack.c.l.bf16 %v452
        %v485 = vunpack.c.l.bf16 %v453
        %v486 = vunpack.c.l.bf16 %v454
        %v487 = vunpack.c.l.bf16 %v455
        %v488 = vunpack.c.l.bf16 %v456
        %v489 = vunpack.c.l.bf16 %v457
        %v490 = vunpack.c.l.bf16 %v458
        %v491 = vunpack.c.l.bf16 %v459
        %v492 = vunpack.c.l.bf16 %v460
        %v493 = vld [vmem:[%s414] sm:$0xff]
        %v494 = vld [vmem:[%s414 + $0x8] sm:$0xff]
        %v495 = vld [vmem:[%s414 + $0x10] sm:$0xff]
        %v496 = vld [vmem:[%s414 + $0x18] sm:$0xff]
        %v497 = vld [vmem:[%s414 + $0x20] sm:$0xff]
        %v498 = vld [vmem:[%s414 + $0x28] sm:$0xff]
        %v499 = vld [vmem:[%s414 + $0x30] sm:$0xff]
        %v500 = vld [vmem:[%s414 + $0x38] sm:$0xff]
        %v501 = vld [vmem:[%s414 + $0x40] sm:$0xff]
        %v502 = vld [vmem:[%s414 + $0x48] sm:$0xff]
        %v503 = vld [vmem:[%s414 + $0x50] sm:$0xff]
        %v504 = vld [vmem:[%s414 + $0x58] sm:$0xff]
        %v505 = vld [vmem:[%s414 + $0x60] sm:$0xff]
        %v506 = vld [vmem:[%s414 + $0x68] sm:$0xff]
        %v507 = vld [vmem:[%s414 + $0x70] sm:$0xff]
        %v508 = vld [vmem:[%s414 + $0x78] sm:$0xff]
        %v509 = vld [vmem:[%s414 + $0x80] sm:$0xff]
        %v510 = vld [vmem:[%s414 + $0x88] sm:$0xff]
        %v511 = vld [vmem:[%s414 + $0x90] sm:$0xff]
        %v512 = vld [vmem:[%s414 + $0x98] sm:$0xff]
        %v513 = vld [vmem:[%s414 + $0xa0] sm:$0xff]
        %v514 = vld [vmem:[%s414 + $0xa8] sm:$0xff]
        %v515 = vld [vmem:[%s414 + $0xb0] sm:$0xff]
        %v516 = vld [vmem:[%s414 + $0xb8] sm:$0xff]
        %v517 = vld [vmem:[%s414 + $0xc0] sm:$0xff]
        %v518 = vld [vmem:[%s414 + $0xc8] sm:$0xff]
        %v519 = vld [vmem:[%s414 + $0xd0] sm:$0xff]
        %v520 = vld [vmem:[%s414 + $0xd8] sm:$0xff]
        %v521 = vld [vmem:[%s414 + $0xe0] sm:$0xff]
        %v522 = vld [vmem:[%s414 + $0xe8] sm:$0xff]
        %v523 = vld [vmem:[%s414 + $0xf0] sm:$0xff]
        %v524 = vld [vmem:[%s414 + $0xf8] sm:$0xff]
        %v525 = vld [vmem:[%s414 + $0x100] sm:$0xff]
        %v526 = vld [vmem:[%s414 + $0x108] sm:$0xff]
        %v527 = vld [vmem:[%s414 + $0x110] sm:$0xff]
        %v528 = vld [vmem:[%s414 + $0x118] sm:$0xff]
        %v529 = vld [vmem:[%s414 + $0x120] sm:$0xff]
        %v530 = vld [vmem:[%s414 + $0x128] sm:$0xff]
        %v531 = vld [vmem:[%s414 + $0x130] sm:$0xff]
        %v532 = vld [vmem:[%s414 + $0x138] sm:$0xff]
        %v533 = vld [vmem:[%s414 + $0x140] sm:$0xff]
        %v534 = vld [vmem:[%s414 + $0x148] sm:$0xff]
        %v535 = vld [vmem:[%s414 + $0x150] sm:$0xff]
        %v536 = vld [vmem:[%s414 + $0x158] sm:$0xff]
        %v537 = vld [vmem:[%s414 + $0x160] sm:$0xff]
        %v538 = vld [vmem:[%s414 + $0x168] sm:$0xff]
        %v539 = vld [vmem:[%s414 + $0x170] sm:$0xff]
        %v540 = vld [vmem:[%s414 + $0x178] sm:$0xff]
        %v541 = vld [vmem:[%s414 + $0x180] sm:$0xff]
        %v542 = vld [vmem:[%s414 + $0x188] sm:$0xff]
        %v543 = vld [vmem:[%s414 + $0x190] sm:$0xff]
        %v544 = vld [vmem:[%s414 + $0x198] sm:$0xff]
        %v545 = vld [vmem:[%s414 + $0x1a0] sm:$0xff]
        %v546 = vld [vmem:[%s414 + $0x1a8] sm:$0xff]
        %v547 = vld [vmem:[%s414 + $0x1b0] sm:$0xff]
        %v548 = vld [vmem:[%s414 + $0x1b8] sm:$0xff]
        %v549 = vld [vmem:[%s414 + $0x1c0] sm:$0xff]
        %v550 = vld [vmem:[%s414 + $0x1c8] sm:$0xff]
        %v551 = vld [vmem:[%s414 + $0x1d0] sm:$0xff]
        %v552 = vld [vmem:[%s414 + $0x1d8] sm:$0xff]
        %v553 = vld [vmem:[%s414 + $0x1e0] sm:$0xff]
        %v554 = vld [vmem:[%s414 + $0x1e8] sm:$0xff]
        %v555 = vld [vmem:[%s414 + $0x1f0] sm:$0xff]
        %v556 = vld [vmem:[%s414 + $0x1f8] sm:$0xff]
        %v557 = vld [vmem:[%s414 + $0x200] sm:$0xff]
        %v558 = vld [vmem:[%s414 + $0x208] sm:$0xff]
        %v559 = vld [vmem:[%s414 + $0x210] sm:$0xff]
        %v560 = vld [vmem:[%s414 + $0x218] sm:$0xff]
        %v561 = vld [vmem:[%s414 + $0x220] sm:$0xff]
        %v562 = vld [vmem:[%s414 + $0x228] sm:$0xff]
        %v563 = vld [vmem:[%s414 + $0x230] sm:$0xff]
        %v564 = vld [vmem:[%s414 + $0x238] sm:$0xff]
        %v565 = vld [vmem:[%s414 + $0x240] sm:$0xff]
        %v566 = vld [vmem:[%s414 + $0x248] sm:$0xff]
        %v567 = vld [vmem:[%s414 + $0x250] sm:$0xff]
        %v568 = vld [vmem:[%s414 + $0x258] sm:$0xff]
        %v569 = vld [vmem:[%s414 + $0x260] sm:$0xff]
        %v570 = vld [vmem:[%s414 + $0x268] sm:$0xff]
        %v571 = vld [vmem:[%s414 + $0x270] sm:$0xff]
        %v572 = vld [vmem:[%s414 + $0x278] sm:$0xff]
        %v573 = vld [vmem:[%s414 + $0x280] sm:$0xff]
        %v574 = vld [vmem:[%s414 + $0x288] sm:$0xff]
        %v575 = vld [vmem:[%s414 + $0x290] sm:$0xff]
        %v576 = vld [vmem:[%s414 + $0x298] sm:$0xff]
        %v577 = vld [vmem:[%s414 + $0x2a0] sm:$0xff]
        %v578 = vld [vmem:[%s414 + $0x2a8] sm:$0xff]
        %v579 = vld [vmem:[%s414 + $0x2b0] sm:$0xff]
        %v580 = vld [vmem:[%s414 + $0x2b8] sm:$0xff]
        %v581 = vld [vmem:[%s414 + $0x2c0] sm:$0xff]
        %v582 = vld [vmem:[%s414 + $0x2c8] sm:$0xff]
        %v583 = vld [vmem:[%s414 + $0x2d0] sm:$0xff]
        %v584 = vld [vmem:[%s414 + $0x2d8] sm:$0xff]
        %v585 = vld [vmem:[%s414 + $0x2e0] sm:$0xff]
        %v586 = vld [vmem:[%s414 + $0x2e8] sm:$0xff]
        %v587 = vld [vmem:[%s414 + $0x2f0] sm:$0xff]
        %v588 = vld [vmem:[%s414 + $0x2f8] sm:$0xff]
        %v589 = vld [vmem:[%s414 + $0x300] sm:$0xff]
        %v590 = vld [vmem:[%s414 + $0x308] sm:$0xff]
        %v591 = vld [vmem:[%s414 + $0x310] sm:$0xff]
        %v592 = vld [vmem:[%s414 + $0x318] sm:$0xff]
        %v593 = vld [vmem:[%s414 + $0x320] sm:$0xff]
        %v594 = vld [vmem:[%s414 + $0x328] sm:$0xff]
        %v595 = vld [vmem:[%s414 + $0x330] sm:$0xff]
        %v596 = vld [vmem:[%s414 + $0x338] sm:$0xff]
        %v597 = vld [vmem:[%s414 + $0x340] sm:$0xff]
        %v598 = vld [vmem:[%s414 + $0x348] sm:$0xff]
        %v599 = vld [vmem:[%s414 + $0x350] sm:$0xff]
        %v600 = vld [vmem:[%s414 + $0x358] sm:$0xff]
        %v601 = vld [vmem:[%s414 + $0x360] sm:$0xff]
        %v602 = vld [vmem:[%s414 + $0x368] sm:$0xff]
        %v603 = vld [vmem:[%s414 + $0x370] sm:$0xff]
        %v604 = vld [vmem:[%s414 + $0x378] sm:$0xff]
        %v605 = vld [vmem:[%s414 + $0x380] sm:$0xff]
        %v606 = vld [vmem:[%s414 + $0x388] sm:$0xff]
        %v607 = vld [vmem:[%s414 + $0x390] sm:$0xff]
        %v608 = vld [vmem:[%s414 + $0x398] sm:$0xff]
        %v609 = vld [vmem:[%s414 + $0x3a0] sm:$0xff]
        %v610 = vld [vmem:[%s414 + $0x3a8] sm:$0xff]
        %v611 = vld [vmem:[%s414 + $0x3b0] sm:$0xff]
        %v612 = vld [vmem:[%s414 + $0x3b8] sm:$0xff]
        %v613 = vld [vmem:[%s414 + $0x3c0] sm:$0xff]
        %v614 = vld [vmem:[%s414 + $0x3c8] sm:$0xff]
        %v615 = vld [vmem:[%s414 + $0x3d0] sm:$0xff]
        %v616 = vld [vmem:[%s414 + $0x3d8] sm:$0xff]
        %v617 = vld [vmem:[%s414 + $0x3e0] sm:$0xff]
        %v618 = vld [vmem:[%s414 + $0x3e8] sm:$0xff]
        %v619 = vld [vmem:[%s414 + $0x3f0] sm:$0xff]
        %v620 = vld [vmem:[%s414 + $0x3f8] sm:$0xff]
        %v621 = vld [vmem:[%s1] sm:$0xf]
        %v622 = vld [vmem:[%s1 + $0x4] sm:$0xf]
        %v623 = vld [vmem:[%s1 + $0x8] sm:$0xf]
        %v624 = vld [vmem:[%s1 + $0xc] sm:$0xf]
        %v625 = vld [vmem:[%s1 + $0x10] sm:$0xf]
        %v626 = vld [vmem:[%s1 + $0x14] sm:$0xf]
        %v627 = vld [vmem:[%s1 + $0x18] sm:$0xf]
        %v628 = vld [vmem:[%s1 + $0x1c] sm:$0xf]
        %v629 = vld [vmem:[%s1 + $0x20] sm:$0xf]
        %v630 = vld [vmem:[%s1 + $0x24] sm:$0xf]
        %v631 = vld [vmem:[%s1 + $0x28] sm:$0xf]
        %v632 = vld [vmem:[%s1 + $0x2c] sm:$0xf]
        %v633 = vld [vmem:[%s1 + $0x30] sm:$0xf]
        %v634 = vld [vmem:[%s1 + $0x34] sm:$0xf]
        %v635 = vld [vmem:[%s1 + $0x38] sm:$0xf]
        %v636 = vld [vmem:[%s1 + $0x3c] sm:$0xf]
        %v637 = vld [vmem:[%s1 + $0x40] sm:$0xf]
        %v638 = vld [vmem:[%s1 + $0x44] sm:$0xf]
        %v639 = vld [vmem:[%s1 + $0x48] sm:$0xf]
        %v640 = vld [vmem:[%s1 + $0x4c] sm:$0xf]
        %v641 = vld [vmem:[%s1 + $0x50] sm:$0xf]
        %v642 = vld [vmem:[%s1 + $0x54] sm:$0xf]
        %v643 = vld [vmem:[%s1 + $0x58] sm:$0xf]
        %v644 = vld [vmem:[%s1 + $0x5c] sm:$0xf]
        %v645 = vld [vmem:[%s1 + $0x60] sm:$0xf]
        %v646 = vld [vmem:[%s1 + $0x64] sm:$0xf]
        %v647 = vld [vmem:[%s1 + $0x68] sm:$0xf]
        %v648 = vld [vmem:[%s1 + $0x6c] sm:$0xf]
        %v649 = vld [vmem:[%s1 + $0x70] sm:$0xf]
        %v650 = vld [vmem:[%s1 + $0x74] sm:$0xf]
        %v651 = vld [vmem:[%s1 + $0x78] sm:$0xf]
        %v652 = vld [vmem:[%s1 + $0x7c] sm:$0xf]
        %v653 = vld [vmem:[%s1 + $0x80] sm:$0xf]
        %v654 = vld [vmem:[%s1 + $0x84] sm:$0xf]
        %v655 = vld [vmem:[%s1 + $0x88] sm:$0xf]
        %v656 = vld [vmem:[%s1 + $0x8c] sm:$0xf]
        %v657 = vld [vmem:[%s1 + $0x90] sm:$0xf]
        %v658 = vld [vmem:[%s1 + $0x94] sm:$0xf]
        %v659 = vld [vmem:[%s1 + $0x98] sm:$0xf]
        %v660 = vld [vmem:[%s1 + $0x9c] sm:$0xf]
        %v661 = vld [vmem:[%s1 + $0xa0] sm:$0xf]
        %v662 = vld [vmem:[%s1 + $0xa4] sm:$0xf]
        %v663 = vld [vmem:[%s1 + $0xa8] sm:$0xf]
        %v664 = vld [vmem:[%s1 + $0xac] sm:$0xf]
        %v665 = vld [vmem:[%s1 + $0xb0] sm:$0xf]
        %v666 = vld [vmem:[%s1 + $0xb4] sm:$0xf]
        %v667 = vld [vmem:[%s1 + $0xb8] sm:$0xf]
        %v668 = vld [vmem:[%s1 + $0xbc] sm:$0xf]
        %v669 = vld [vmem:[%s1 + $0xc0] sm:$0xf]
        %v670 = vld [vmem:[%s1 + $0xc4] sm:$0xf]
        %v671 = vld [vmem:[%s1 + $0xc8] sm:$0xf]
        %v672 = vld [vmem:[%s1 + $0xcc] sm:$0xf]
        %v673 = vld [vmem:[%s1 + $0xd0] sm:$0xf]
        %v674 = vld [vmem:[%s1 + $0xd4] sm:$0xf]
        %v675 = vld [vmem:[%s1 + $0xd8] sm:$0xf]
        %v676 = vld [vmem:[%s1 + $0xdc] sm:$0xf]
        %v677 = vld [vmem:[%s1 + $0xe0] sm:$0xf]
        %v678 = vld [vmem:[%s1 + $0xe4] sm:$0xf]
        %v679 = vld [vmem:[%s1 + $0xe8] sm:$0xf]
        %v680 = vld [vmem:[%s1 + $0xec] sm:$0xf]
        %v681 = vld [vmem:[%s1 + $0xf0] sm:$0xf]
        %v682 = vld [vmem:[%s1 + $0xf4] sm:$0xf]
        %v683 = vld [vmem:[%s1 + $0xf8] sm:$0xf]
        %v684 = vld [vmem:[%s1 + $0xfc] sm:$0xf]
        %v685 = vld [vmem:[%s1 + $0x100] sm:$0xf]
        %v686 = vld [vmem:[%s1 + $0x104] sm:$0xf]
        %v687 = vld [vmem:[%s1 + $0x108] sm:$0xf]
        %v688 = vld [vmem:[%s1 + $0x10c] sm:$0xf]
        %v689 = vld [vmem:[%s1 + $0x110] sm:$0xf]
        %v690 = vld [vmem:[%s1 + $0x114] sm:$0xf]
        %v691 = vld [vmem:[%s1 + $0x118] sm:$0xf]
        %v692 = vld [vmem:[%s1 + $0x11c] sm:$0xf]
        %v693 = vld [vmem:[%s1 + $0x120] sm:$0xf]
        %v694 = vld [vmem:[%s1 + $0x124] sm:$0xf]
        %v695 = vld [vmem:[%s1 + $0x128] sm:$0xf]
        %v696 = vld [vmem:[%s1 + $0x12c] sm:$0xf]
        %v697 = vld [vmem:[%s1 + $0x130] sm:$0xf]
        %v698 = vld [vmem:[%s1 + $0x134] sm:$0xf]
        %v699 = vld [vmem:[%s1 + $0x138] sm:$0xf]
        %v700 = vld [vmem:[%s1 + $0x13c] sm:$0xf]
        %v701 = vld [vmem:[%s1 + $0x140] sm:$0xf]
        %v702 = vld [vmem:[%s1 + $0x144] sm:$0xf]
        %v703 = vld [vmem:[%s1 + $0x148] sm:$0xf]
        %v704 = vld [vmem:[%s1 + $0x14c] sm:$0xf]
        %v705 = vld [vmem:[%s1 + $0x150] sm:$0xf]
        %v706 = vld [vmem:[%s1 + $0x154] sm:$0xf]
        %v707 = vld [vmem:[%s1 + $0x158] sm:$0xf]
        %v708 = vld [vmem:[%s1 + $0x15c] sm:$0xf]
        %v709 = vld [vmem:[%s1 + $0x160] sm:$0xf]
        %v710 = vld [vmem:[%s1 + $0x164] sm:$0xf]
        %v711 = vld [vmem:[%s1 + $0x168] sm:$0xf]
        %v712 = vld [vmem:[%s1 + $0x16c] sm:$0xf]
        %v713 = vld [vmem:[%s1 + $0x170] sm:$0xf]
        %v714 = vld [vmem:[%s1 + $0x174] sm:$0xf]
        %v715 = vld [vmem:[%s1 + $0x178] sm:$0xf]
        %v716 = vld [vmem:[%s1 + $0x17c] sm:$0xf]
        %v717 = vld [vmem:[%s1 + $0x180] sm:$0xf]
        %v718 = vld [vmem:[%s1 + $0x184] sm:$0xf]
        %v719 = vld [vmem:[%s1 + $0x188] sm:$0xf]
        %v720 = vld [vmem:[%s1 + $0x18c] sm:$0xf]
        %v721 = vld [vmem:[%s1 + $0x190] sm:$0xf]
        %v722 = vld [vmem:[%s1 + $0x194] sm:$0xf]
        %v723 = vld [vmem:[%s1 + $0x198] sm:$0xf]
        %v724 = vld [vmem:[%s1 + $0x19c] sm:$0xf]
        %v725 = vld [vmem:[%s1 + $0x1a0] sm:$0xf]
        %v726 = vld [vmem:[%s1 + $0x1a4] sm:$0xf]
        %v727 = vld [vmem:[%s1 + $0x1a8] sm:$0xf]
        %v728 = vld [vmem:[%s1 + $0x1ac] sm:$0xf]
        %v729 = vld [vmem:[%s1 + $0x1b0] sm:$0xf]
        %v730 = vld [vmem:[%s1 + $0x1b4] sm:$0xf]
        %v731 = vld [vmem:[%s1 + $0x1b8] sm:$0xf]
        %v732 = vld [vmem:[%s1 + $0x1bc] sm:$0xf]
        %v733 = vld [vmem:[%s1 + $0x1c0] sm:$0xf]
        %v734 = vld [vmem:[%s1 + $0x1c4] sm:$0xf]
        %v735 = vld [vmem:[%s1 + $0x1c8] sm:$0xf]
        %v736 = vld [vmem:[%s1 + $0x1cc] sm:$0xf]
        %v737 = vld [vmem:[%s1 + $0x1d0] sm:$0xf]
        %v738 = vld [vmem:[%s1 + $0x1d4] sm:$0xf]
        %v739 = vld [vmem:[%s1 + $0x1d8] sm:$0xf]
        %v740 = vld [vmem:[%s1 + $0x1dc] sm:$0xf]
        %v741 = vld [vmem:[%s1 + $0x1e0] sm:$0xf]
        %v742 = vld [vmem:[%s1 + $0x1e4] sm:$0xf]
        %v743 = vld [vmem:[%s1 + $0x1e8] sm:$0xf]
        %v744 = vld [vmem:[%s1 + $0x1ec] sm:$0xf]
        %v745 = vld [vmem:[%s1 + $0x1f0] sm:$0xf]
        %v746 = vld [vmem:[%s1 + $0x1f4] sm:$0xf]
        %v747 = vld [vmem:[%s1 + $0x1f8] sm:$0xf]
        %v748 = vld [vmem:[%s1 + $0x1fc] sm:$0xf]
        %v877 = vunpack.c.l.b16 %v493
        %v878 = vunpack.c.h.b16 %v493
        %v879 = vunpack.c.l.b16 %v494
        %v880 = vunpack.c.h.b16 %v494
        %v881 = vunpack.c.l.b16 %v495
        %v882 = vunpack.c.h.b16 %v495
        %v883 = vunpack.c.l.b16 %v496
        %v884 = vunpack.c.h.b16 %v496
        %v885 = vunpack.c.l.b16 %v497
        %v886 = vunpack.c.h.b16 %v497
        %v887 = vunpack.c.l.b16 %v498
        %v888 = vunpack.c.h.b16 %v498
        %v889 = vunpack.c.l.b16 %v499
        %v890 = vunpack.c.h.b16 %v499
        %v891 = vunpack.c.l.b16 %v500
        %v892 = vunpack.c.h.b16 %v500
        %v893 = vunpack.c.l.b16 %v501
        %v894 = vunpack.c.h.b16 %v501
        %v895 = vunpack.c.l.b16 %v502
        %v896 = vunpack.c.h.b16 %v502
        %v897 = vunpack.c.l.b16 %v503
        %v898 = vunpack.c.h.b16 %v503
        %v899 = vunpack.c.l.b16 %v504
        %v900 = vunpack.c.h.b16 %v504
        %v901 = vunpack.c.l.b16 %v505
        %v902 = vunpack.c.h.b16 %v505
        %v903 = vunpack.c.l.b16 %v506
        %v904 = vunpack.c.h.b16 %v506
        %v905 = vunpack.c.l.b16 %v507
        %v906 = vunpack.c.h.b16 %v507
        %v907 = vunpack.c.l.b16 %v508
        %v908 = vunpack.c.h.b16 %v508
        %v909 = vunpack.c.l.b16 %v509
        %v910 = vunpack.c.h.b16 %v509
        %v911 = vunpack.c.l.b16 %v510
        %v912 = vunpack.c.h.b16 %v510
        %v913 = vunpack.c.l.b16 %v511
        %v914 = vunpack.c.h.b16 %v511
        %v915 = vunpack.c.l.b16 %v512
        %v916 = vunpack.c.h.b16 %v512
        %v917 = vunpack.c.l.b16 %v513
        %v918 = vunpack.c.h.b16 %v513
        %v919 = vunpack.c.l.b16 %v514
        %v920 = vunpack.c.h.b16 %v514
        %v921 = vunpack.c.l.b16 %v515
        %v922 = vunpack.c.h.b16 %v515
        %v923 = vunpack.c.l.b16 %v516
        %v924 = vunpack.c.h.b16 %v516
        %v925 = vunpack.c.l.b16 %v517
        %v926 = vunpack.c.h.b16 %v517
        %v927 = vunpack.c.l.b16 %v518
        %v928 = vunpack.c.h.b16 %v518
        %v929 = vunpack.c.l.b16 %v519
        %v930 = vunpack.c.h.b16 %v519
        %v931 = vunpack.c.l.b16 %v520
        %v932 = vunpack.c.h.b16 %v520
        %v933 = vunpack.c.l.b16 %v521
        %v934 = vunpack.c.h.b16 %v521
        %v935 = vunpack.c.l.b16 %v522
        %v936 = vunpack.c.h.b16 %v522
        %v937 = vunpack.c.l.b16 %v523
        %v938 = vunpack.c.h.b16 %v523
        %v939 = vunpack.c.l.b16 %v524
        %v940 = vunpack.c.h.b16 %v524
        %v941 = vunpack.c.l.b16 %v525
        %v942 = vunpack.c.h.b16 %v525
        %v943 = vunpack.c.l.b16 %v526
        %v944 = vunpack.c.h.b16 %v526
        %v945 = vunpack.c.l.b16 %v527
        %v946 = vunpack.c.h.b16 %v527
        %v947 = vunpack.c.l.b16 %v528
        %v948 = vunpack.c.h.b16 %v528
        %v949 = vunpack.c.l.b16 %v529
        %v950 = vunpack.c.h.b16 %v529
        %v951 = vunpack.c.l.b16 %v530
        %v952 = vunpack.c.h.b16 %v530
        %v953 = vunpack.c.l.b16 %v531
        %v954 = vunpack.c.h.b16 %v531
        %v955 = vunpack.c.l.b16 %v532
        %v956 = vunpack.c.h.b16 %v532
        %v957 = vunpack.c.l.b16 %v533
        %v958 = vunpack.c.h.b16 %v533
        %v959 = vunpack.c.l.b16 %v534
        %v960 = vunpack.c.h.b16 %v534
        %v961 = vunpack.c.l.b16 %v535
        %v962 = vunpack.c.h.b16 %v535
        %v963 = vunpack.c.l.b16 %v536
        %v964 = vunpack.c.h.b16 %v536
        %v965 = vunpack.c.l.b16 %v537
        %v966 = vunpack.c.h.b16 %v537
        %v967 = vunpack.c.l.b16 %v538
        %v968 = vunpack.c.h.b16 %v538
        %v969 = vunpack.c.l.b16 %v539
        %v970 = vunpack.c.h.b16 %v539
        %v971 = vunpack.c.l.b16 %v540
        %v972 = vunpack.c.h.b16 %v540
        %v973 = vunpack.c.l.b16 %v541
        %v974 = vunpack.c.h.b16 %v541
        %v975 = vunpack.c.l.b16 %v542
        %v976 = vunpack.c.h.b16 %v542
        %v977 = vunpack.c.l.b16 %v543
        %v978 = vunpack.c.h.b16 %v543
        %v979 = vunpack.c.l.b16 %v544
        %v980 = vunpack.c.h.b16 %v544
        %v981 = vunpack.c.l.b16 %v545
        %v982 = vunpack.c.h.b16 %v545
        %v983 = vunpack.c.l.b16 %v546
        %v984 = vunpack.c.h.b16 %v546
        %v985 = vunpack.c.l.b16 %v547
        %v986 = vunpack.c.h.b16 %v547
        %v987 = vunpack.c.l.b16 %v548
        %v988 = vunpack.c.h.b16 %v548
        %v989 = vunpack.c.l.b16 %v549
        %v990 = vunpack.c.h.b16 %v549
        %v991 = vunpack.c.l.b16 %v550
        %v992 = vunpack.c.h.b16 %v550
        %v993 = vunpack.c.l.b16 %v551
        %v994 = vunpack.c.h.b16 %v551
        %v995 = vunpack.c.l.b16 %v552
        %v996 = vunpack.c.h.b16 %v552
        %v997 = vunpack.c.l.b16 %v553
        %v998 = vunpack.c.h.b16 %v553
        %v999 = vunpack.c.l.b16 %v554
        %v1000 = vunpack.c.h.b16 %v554
        %v1001 = vunpack.c.l.b16 %v555
        %v1002 = vunpack.c.h.b16 %v555
        %v1003 = vunpack.c.l.b16 %v556
        %v1004 = vunpack.c.h.b16 %v556
        %v1005 = vunpack.c.l.b16 %v557
        %v1006 = vunpack.c.h.b16 %v557
        %v1007 = vunpack.c.l.b16 %v558
        %v1008 = vunpack.c.h.b16 %v558
        %v1009 = vunpack.c.l.b16 %v559
        %v1010 = vunpack.c.h.b16 %v559
        %v1011 = vunpack.c.l.b16 %v560
        %v1012 = vunpack.c.h.b16 %v560
        %v1013 = vunpack.c.l.b16 %v561
        %v1014 = vunpack.c.h.b16 %v561
        %v1015 = vunpack.c.l.b16 %v562
        %v1016 = vunpack.c.h.b16 %v562
        %v1017 = vunpack.c.l.b16 %v563
        %v1018 = vunpack.c.h.b16 %v563
        %v1019 = vunpack.c.l.b16 %v564
        %v1020 = vunpack.c.h.b16 %v564
        %v1021 = vunpack.c.l.b16 %v565
        %v1022 = vunpack.c.h.b16 %v565
        %v1023 = vunpack.c.l.b16 %v566
        %v1024 = vunpack.c.h.b16 %v566
        %v1025 = vunpack.c.l.b16 %v567
        %v1026 = vunpack.c.h.b16 %v567
        %v1027 = vunpack.c.l.b16 %v568
        %v1028 = vunpack.c.h.b16 %v568
        %v1029 = vunpack.c.l.b16 %v569
        %v1030 = vunpack.c.h.b16 %v569
        %v1031 = vunpack.c.l.b16 %v570
        %v1032 = vunpack.c.h.b16 %v570
        %v1033 = vunpack.c.l.b16 %v571
        %v1034 = vunpack.c.h.b16 %v571
        %v1035 = vunpack.c.l.b16 %v572
        %v1036 = vunpack.c.h.b16 %v572
        %v1037 = vunpack.c.l.b16 %v573
        %v1038 = vunpack.c.h.b16 %v573
        %v1039 = vunpack.c.l.b16 %v574
        %v1040 = vunpack.c.h.b16 %v574
        %v1041 = vunpack.c.l.b16 %v575
        %v1042 = vunpack.c.h.b16 %v575
        %v1043 = vunpack.c.l.b16 %v576
        %v1044 = vunpack.c.h.b16 %v576
        %v1045 = vunpack.c.l.b16 %v577
        %v1046 = vunpack.c.h.b16 %v577
        %v1047 = vunpack.c.l.b16 %v578
        %v1048 = vunpack.c.h.b16 %v578
        %v1049 = vunpack.c.l.b16 %v579
        %v1050 = vunpack.c.h.b16 %v579
        %v1051 = vunpack.c.l.b16 %v580
        %v1052 = vunpack.c.h.b16 %v580
        %v1053 = vunpack.c.l.b16 %v581
        %v1054 = vunpack.c.h.b16 %v581
        %v1055 = vunpack.c.l.b16 %v582
        %v1056 = vunpack.c.h.b16 %v582
        %v1057 = vunpack.c.l.b16 %v583
        %v1058 = vunpack.c.h.b16 %v583
        %v1059 = vunpack.c.l.b16 %v584
        %v1060 = vunpack.c.h.b16 %v584
        %v1061 = vunpack.c.l.b16 %v585
        %v1062 = vunpack.c.h.b16 %v585
        %v1063 = vunpack.c.l.b16 %v586
        %v1064 = vunpack.c.h.b16 %v586
        %v1065 = vunpack.c.l.b16 %v587
        %v1066 = vunpack.c.h.b16 %v587
        %v1067 = vunpack.c.l.b16 %v588
        %v1068 = vunpack.c.h.b16 %v588
        %v1069 = vunpack.c.l.b16 %v589
        %v1070 = vunpack.c.h.b16 %v589
        %v1071 = vunpack.c.l.b16 %v590
        %v1072 = vunpack.c.h.b16 %v590
        %v1073 = vunpack.c.l.b16 %v591
        %v1074 = vunpack.c.h.b16 %v591
        %v1075 = vunpack.c.l.b16 %v592
        %v1076 = vunpack.c.h.b16 %v592
        %v1077 = vunpack.c.l.b16 %v593
        %v1078 = vunpack.c.h.b16 %v593
        %v1079 = vunpack.c.l.b16 %v594
        %v1080 = vunpack.c.h.b16 %v594
        %v1081 = vunpack.c.l.b16 %v595
        %v1082 = vunpack.c.h.b16 %v595
        %v1083 = vunpack.c.l.b16 %v596
        %v1084 = vunpack.c.h.b16 %v596
        %v1085 = vunpack.c.l.b16 %v597
        %v1086 = vunpack.c.h.b16 %v597
        %v1087 = vunpack.c.l.b16 %v598
        %v1088 = vunpack.c.h.b16 %v598
        %v1089 = vunpack.c.l.b16 %v599
        %v1090 = vunpack.c.h.b16 %v599
        %v1091 = vunpack.c.l.b16 %v600
        %v1092 = vunpack.c.h.b16 %v600
        %v1093 = vunpack.c.l.b16 %v601
        %v1094 = vunpack.c.h.b16 %v601
        %v1095 = vunpack.c.l.b16 %v602
        %v1096 = vunpack.c.h.b16 %v602
        %v1097 = vunpack.c.l.b16 %v603
        %v1098 = vunpack.c.h.b16 %v603
        %v1099 = vunpack.c.l.b16 %v604
        %v1100 = vunpack.c.h.b16 %v604
        %v1101 = vunpack.c.l.b16 %v605
        %v1102 = vunpack.c.h.b16 %v605
        %v1103 = vunpack.c.l.b16 %v606
        %v1104 = vunpack.c.h.b16 %v606
        %v1105 = vunpack.c.l.b16 %v607
        %v1106 = vunpack.c.h.b16 %v607
        %v1107 = vunpack.c.l.b16 %v608
        %v1108 = vunpack.c.h.b16 %v608
        %v1109 = vunpack.c.l.b16 %v609
        %v1110 = vunpack.c.h.b16 %v609
        %v1111 = vunpack.c.l.b16 %v610
        %v1112 = vunpack.c.h.b16 %v610
        %v1113 = vunpack.c.l.b16 %v611
        %v1114 = vunpack.c.h.b16 %v611
        %v1115 = vunpack.c.l.b16 %v612
        %v1116 = vunpack.c.h.b16 %v612
        %v1117 = vunpack.c.l.b16 %v613
        %v1118 = vunpack.c.h.b16 %v613
        %v1119 = vunpack.c.l.b16 %v614
        %v1120 = vunpack.c.h.b16 %v614
        %v1121 = vunpack.c.l.b16 %v615
        %v1122 = vunpack.c.h.b16 %v615
        %v1123 = vunpack.c.l.b16 %v616
        %v1124 = vunpack.c.h.b16 %v616
        %v1125 = vunpack.c.l.b16 %v617
        %v1126 = vunpack.c.h.b16 %v617
        %v1127 = vunpack.c.l.b16 %v618
        %v1128 = vunpack.c.h.b16 %v618
        %v1129 = vunpack.c.l.b16 %v619
        %v1130 = vunpack.c.h.b16 %v619
        %v1131 = vunpack.c.l.b16 %v620
        %v1132 = vunpack.c.h.b16 %v620
        %v1133 = vpack.c.b16 %v885, %v877
        %v1134 = vpack.c.b16 %v886, %v878
        %v1135 = vpack.c.b16 %v887, %v879
        %v1136 = vpack.c.b16 %v888, %v880
        %v1137 = vpack.c.b16 %v889, %v881
        %v1138 = vpack.c.b16 %v890, %v882
        %v1139 = vpack.c.b16 %v891, %v883
        %v1140 = vpack.c.b16 %v892, %v884
        %v1141 = vpack.c.b16 %v901, %v893
        %v1142 = vpack.c.b16 %v902, %v894
        %v1143 = vpack.c.b16 %v903, %v895
        %v1144 = vpack.c.b16 %v904, %v896
        %v1145 = vpack.c.b16 %v905, %v897
        %v1146 = vpack.c.b16 %v906, %v898
        %v1147 = vpack.c.b16 %v907, %v899
        %v1148 = vpack.c.b16 %v908, %v900
        %v1149 = vpack.c.b16 %v917, %v909
        %v1150 = vpack.c.b16 %v918, %v910
        %v1151 = vpack.c.b16 %v919, %v911
        %v1152 = vpack.c.b16 %v920, %v912
        %v1153 = vpack.c.b16 %v921, %v913
        %v1154 = vpack.c.b16 %v922, %v914
        %v1155 = vpack.c.b16 %v923, %v915
        %v1156 = vpack.c.b16 %v924, %v916
        %v1157 = vpack.c.b16 %v933, %v925
        %v1158 = vpack.c.b16 %v934, %v926
        %v1159 = vpack.c.b16 %v935, %v927
        %v1160 = vpack.c.b16 %v936, %v928
        %v1161 = vpack.c.b16 %v937, %v929
        %v1162 = vpack.c.b16 %v938, %v930
        %v1163 = vpack.c.b16 %v939, %v931
        %v1164 = vpack.c.b16 %v940, %v932
        %v1165 = vpack.c.b16 %v949, %v941
        %v1166 = vpack.c.b16 %v950, %v942
        %v1167 = vpack.c.b16 %v951, %v943
        %v1168 = vpack.c.b16 %v952, %v944
        %v1169 = vpack.c.b16 %v953, %v945
        %v1170 = vpack.c.b16 %v954, %v946
        %v1171 = vpack.c.b16 %v955, %v947
        %v1172 = vpack.c.b16 %v956, %v948
        %v1173 = vpack.c.b16 %v965, %v957
        %v1174 = vpack.c.b16 %v966, %v958
        %v1175 = vpack.c.b16 %v967, %v959
        %v1176 = vpack.c.b16 %v968, %v960
        %v1177 = vpack.c.b16 %v969, %v961
        %v1178 = vpack.c.b16 %v970, %v962
        %v1179 = vpack.c.b16 %v971, %v963
        %v1180 = vpack.c.b16 %v972, %v964
        %v1181 = vpack.c.b16 %v981, %v973
        %v1182 = vpack.c.b16 %v982, %v974
        %v1183 = vpack.c.b16 %v983, %v975
        %v1184 = vpack.c.b16 %v984, %v976
        %v1185 = vpack.c.b16 %v985, %v977
        %v1186 = vpack.c.b16 %v986, %v978
        %v1187 = vpack.c.b16 %v987, %v979
        %v1188 = vpack.c.b16 %v988, %v980
        %v1189 = vpack.c.b16 %v997, %v989
        %v1190 = vpack.c.b16 %v998, %v990
        %v1191 = vpack.c.b16 %v999, %v991
        %v1192 = vpack.c.b16 %v1000, %v992
        %v1193 = vpack.c.b16 %v1001, %v993
        %v1194 = vpack.c.b16 %v1002, %v994
        %v1195 = vpack.c.b16 %v1003, %v995
        %v1196 = vpack.c.b16 %v1004, %v996
        %v1197 = vpack.c.b16 %v1013, %v1005
        %v1198 = vpack.c.b16 %v1014, %v1006
        %v1199 = vpack.c.b16 %v1015, %v1007
        %v1200 = vpack.c.b16 %v1016, %v1008
        %v1201 = vpack.c.b16 %v1017, %v1009
        %v1202 = vpack.c.b16 %v1018, %v1010
        %v1203 = vpack.c.b16 %v1019, %v1011
        %v1204 = vpack.c.b16 %v1020, %v1012
        %v1205 = vpack.c.b16 %v1029, %v1021
        %v1206 = vpack.c.b16 %v1030, %v1022
        %v1207 = vpack.c.b16 %v1031, %v1023
        %v1208 = vpack.c.b16 %v1032, %v1024
        %v1209 = vpack.c.b16 %v1033, %v1025
        %v1210 = vpack.c.b16 %v1034, %v1026
        %v1211 = vpack.c.b16 %v1035, %v1027
        %v1212 = vpack.c.b16 %v1036, %v1028
        %v1213 = vpack.c.b16 %v1045, %v1037
        %v1214 = vpack.c.b16 %v1046, %v1038
        %v1215 = vpack.c.b16 %v1047, %v1039
        %v1216 = vpack.c.b16 %v1048, %v1040
        %v1217 = vpack.c.b16 %v1049, %v1041
        %v1218 = vpack.c.b16 %v1050, %v1042
        %v1219 = vpack.c.b16 %v1051, %v1043
        %v1220 = vpack.c.b16 %v1052, %v1044
        %v1221 = vpack.c.b16 %v1061, %v1053
        %v1222 = vpack.c.b16 %v1062, %v1054
        %v1223 = vpack.c.b16 %v1063, %v1055
        %v1224 = vpack.c.b16 %v1064, %v1056
        %v1225 = vpack.c.b16 %v1065, %v1057
        %v1226 = vpack.c.b16 %v1066, %v1058
        %v1227 = vpack.c.b16 %v1067, %v1059
        %v1228 = vpack.c.b16 %v1068, %v1060
        %v1229 = vpack.c.b16 %v1077, %v1069
        %v1230 = vpack.c.b16 %v1078, %v1070
        %v1231 = vpack.c.b16 %v1079, %v1071
        %v1232 = vpack.c.b16 %v1080, %v1072
        %v1233 = vpack.c.b16 %v1081, %v1073
        %v1234 = vpack.c.b16 %v1082, %v1074
        %v1235 = vpack.c.b16 %v1083, %v1075
        %v1236 = vpack.c.b16 %v1084, %v1076
        %v1237 = vpack.c.b16 %v1093, %v1085
        %v1238 = vpack.c.b16 %v1094, %v1086
        %v1239 = vpack.c.b16 %v1095, %v1087
        %v1240 = vpack.c.b16 %v1096, %v1088
        %v1241 = vpack.c.b16 %v1097, %v1089
        %v1242 = vpack.c.b16 %v1098, %v1090
        %v1243 = vpack.c.b16 %v1099, %v1091
        %v1244 = vpack.c.b16 %v1100, %v1092
        %v1245 = vpack.c.b16 %v1109, %v1101
        %v1246 = vpack.c.b16 %v1110, %v1102
        %v1247 = vpack.c.b16 %v1111, %v1103
        %v1248 = vpack.c.b16 %v1112, %v1104
        %v1249 = vpack.c.b16 %v1113, %v1105
        %v1250 = vpack.c.b16 %v1114, %v1106
        %v1251 = vpack.c.b16 %v1115, %v1107
        %v1252 = vpack.c.b16 %v1116, %v1108
        %v1253 = vpack.c.b16 %v1125, %v1117
        %v1254 = vpack.c.b16 %v1126, %v1118
        %v1255 = vpack.c.b16 %v1127, %v1119
        %v1256 = vpack.c.b16 %v1128, %v1120
        %v1257 = vpack.c.b16 %v1129, %v1121
        %v1258 = vpack.c.b16 %v1130, %v1122
        %v1259 = vpack.c.b16 %v1131, %v1123
        %v1260 = vpack.c.b16 %v1132, %v1124
        %v1517 = vunpack.c.l.b16 %v621
        %v1518 = vunpack.c.l.b16 %v622
        %v1519 = vunpack.c.l.b16 %v623
        %v1520 = vunpack.c.l.b16 %v624
        %v1521 = vunpack.c.l.b16 %v625
        %v1522 = vunpack.c.l.b16 %v626
        %v1523 = vunpack.c.l.b16 %v627
        %v1524 = vunpack.c.l.b16 %v628
        %v1525 = vunpack.c.l.b16 %v629
        %v1526 = vunpack.c.l.b16 %v630
        %v1527 = vunpack.c.l.b16 %v631
        %v1528 = vunpack.c.l.b16 %v632
        %v1529 = vunpack.c.l.b16 %v633
        %v1530 = vunpack.c.l.b16 %v634
        %v1531 = vunpack.c.l.b16 %v635
        %v1532 = vunpack.c.l.b16 %v636
        %v1533 = vunpack.c.l.b16 %v637
        %v1534 = vunpack.c.l.b16 %v638
        %v1535 = vunpack.c.l.b16 %v639
        %v1536 = vunpack.c.l.b16 %v640
        %v1537 = vunpack.c.l.b16 %v641
        %v1538 = vunpack.c.l.b16 %v642
        %v1539 = vunpack.c.l.b16 %v643
        %v1540 = vunpack.c.l.b16 %v644
        %v1541 = vunpack.c.l.b16 %v645
        %v1542 = vunpack.c.l.b16 %v646
        %v1543 = vunpack.c.l.b16 %v647
        %v1544 = vunpack.c.l.b16 %v648
        %v1545 = vunpack.c.l.b16 %v649
        %v1546 = vunpack.c.l.b16 %v650
        %v1547 = vunpack.c.l.b16 %v651
        %v1548 = vunpack.c.l.b16 %v652
        %v1549 = vunpack.c.l.b16 %v653
        %v1550 = vunpack.c.l.b16 %v654
        %v1551 = vunpack.c.l.b16 %v655
        %v1552 = vunpack.c.l.b16 %v656
        %v1553 = vunpack.c.l.b16 %v657
        %v1554 = vunpack.c.l.b16 %v658
        %v1555 = vunpack.c.l.b16 %v659
        %v1556 = vunpack.c.l.b16 %v660
        %v1557 = vunpack.c.l.b16 %v661
        %v1558 = vunpack.c.l.b16 %v662
        %v1559 = vunpack.c.l.b16 %v663
        %v1560 = vunpack.c.l.b16 %v664
        %v1561 = vunpack.c.l.b16 %v665
        %v1562 = vunpack.c.l.b16 %v666
        %v1563 = vunpack.c.l.b16 %v667
        %v1564 = vunpack.c.l.b16 %v668
        %v1565 = vunpack.c.l.b16 %v669
        %v1566 = vunpack.c.l.b16 %v670
        %v1567 = vunpack.c.l.b16 %v671
        %v1568 = vunpack.c.l.b16 %v672
        %v1569 = vunpack.c.l.b16 %v673
        %v1570 = vunpack.c.l.b16 %v674
        %v1571 = vunpack.c.l.b16 %v675
        %v1572 = vunpack.c.l.b16 %v676
        %v1573 = vunpack.c.l.b16 %v677
        %v1574 = vunpack.c.l.b16 %v678
        %v1575 = vunpack.c.l.b16 %v679
        %v1576 = vunpack.c.l.b16 %v680
        %v1577 = vunpack.c.l.b16 %v681
        %v1578 = vunpack.c.l.b16 %v682
        %v1579 = vunpack.c.l.b16 %v683
        %v1580 = vunpack.c.l.b16 %v684
        %v1581 = vunpack.c.l.b16 %v685
        %v1582 = vunpack.c.l.b16 %v686
        %v1583 = vunpack.c.l.b16 %v687
        %v1584 = vunpack.c.l.b16 %v688
        %v1585 = vunpack.c.l.b16 %v689
        %v1586 = vunpack.c.l.b16 %v690
        %v1587 = vunpack.c.l.b16 %v691
        %v1588 = vunpack.c.l.b16 %v692
        %v1589 = vunpack.c.l.b16 %v693
        %v1590 = vunpack.c.l.b16 %v694
        %v1591 = vunpack.c.l.b16 %v695
        %v1592 = vunpack.c.l.b16 %v696
        %v1593 = vunpack.c.l.b16 %v697
        %v1594 = vunpack.c.l.b16 %v698
        %v1595 = vunpack.c.l.b16 %v699
        %v1596 = vunpack.c.l.b16 %v700
        %v1597 = vunpack.c.l.b16 %v701
        %v1598 = vunpack.c.l.b16 %v702
        %v1599 = vunpack.c.l.b16 %v703
        %v1600 = vunpack.c.l.b16 %v704
        %v1601 = vunpack.c.l.b16 %v705
        %v1602 = vunpack.c.l.b16 %v706
        %v1603 = vunpack.c.l.b16 %v707
        %v1604 = vunpack.c.l.b16 %v708
        %v1605 = vunpack.c.l.b16 %v709
        %v1606 = vunpack.c.l.b16 %v710
        %v1607 = vunpack.c.l.b16 %v711
        %v1608 = vunpack.c.l.b16 %v712
        %v1609 = vunpack.c.l.b16 %v713
        %v1610 = vunpack.c.l.b16 %v714
        %v1611 = vunpack.c.l.b16 %v715
        %v1612 = vunpack.c.l.b16 %v716
        %v1613 = vunpack.c.l.b16 %v717
        %v1614 = vunpack.c.l.b16 %v718
        %v1615 = vunpack.c.l.b16 %v719
        %v1616 = vunpack.c.l.b16 %v720
        %v1617 = vunpack.c.l.b16 %v721
        %v1618 = vunpack.c.l.b16 %v722
        %v1619 = vunpack.c.l.b16 %v723
        %v1620 = vunpack.c.l.b16 %v724
        %v1621 = vunpack.c.l.b16 %v725
        %v1622 = vunpack.c.l.b16 %v726
        %v1623 = vunpack.c.l.b16 %v727
        %v1624 = vunpack.c.l.b16 %v728
        %v1625 = vunpack.c.l.b16 %v729
        %v1626 = vunpack.c.l.b16 %v730
        %v1627 = vunpack.c.l.b16 %v731
        %v1628 = vunpack.c.l.b16 %v732
        %v1629 = vunpack.c.l.b16 %v733
        %v1630 = vunpack.c.l.b16 %v734
        %v1631 = vunpack.c.l.b16 %v735
        %v1632 = vunpack.c.l.b16 %v736
        %v1633 = vunpack.c.l.b16 %v737
        %v1634 = vunpack.c.l.b16 %v738
        %v1635 = vunpack.c.l.b16 %v739
        %v1636 = vunpack.c.l.b16 %v740
        %v1637 = vunpack.c.l.b16 %v741
        %v1638 = vunpack.c.l.b16 %v742
        %v1639 = vunpack.c.l.b16 %v743
        %v1640 = vunpack.c.l.b16 %v744
        %v1641 = vunpack.c.l.b16 %v745
        %v1642 = vunpack.c.l.b16 %v746
        %v1643 = vunpack.c.l.b16 %v747
        %v1644 = vunpack.c.l.b16 %v748
        %v1645 = vpack.c.b16 %v1518, %v1517
        %v1646 = vpack.c.b16 %v1520, %v1519
        %v1647 = vpack.c.b16 %v1522, %v1521
        %v1648 = vpack.c.b16 %v1524, %v1523
        %v1649 = vpack.c.b16 %v1526, %v1525
        %v1650 = vpack.c.b16 %v1528, %v1527
        %v1651 = vpack.c.b16 %v1530, %v1529
        %v1652 = vpack.c.b16 %v1532, %v1531
        %v1653 = vpack.c.b16 %v1534, %v1533
        %v1654 = vpack.c.b16 %v1536, %v1535
        %v1655 = vpack.c.b16 %v1538, %v1537
        %v1656 = vpack.c.b16 %v1540, %v1539
        %v1657 = vpack.c.b16 %v1542, %v1541
        %v1658 = vpack.c.b16 %v1544, %v1543
        %v1659 = vpack.c.b16 %v1546, %v1545
        %v1660 = vpack.c.b16 %v1548, %v1547
        %v1661 = vpack.c.b16 %v1550, %v1549
        %v1662 = vpack.c.b16 %v1552, %v1551
        %v1663 = vpack.c.b16 %v1554, %v1553
        %v1664 = vpack.c.b16 %v1556, %v1555
        %v1665 = vpack.c.b16 %v1558, %v1557
        %v1666 = vpack.c.b16 %v1560, %v1559
        %v1667 = vpack.c.b16 %v1562, %v1561
        %v1668 = vpack.c.b16 %v1564, %v1563
        %v1669 = vpack.c.b16 %v1566, %v1565
        %v1670 = vpack.c.b16 %v1568, %v1567
        %v1671 = vpack.c.b16 %v1570, %v1569
        %v1672 = vpack.c.b16 %v1572, %v1571
        %v1673 = vpack.c.b16 %v1574, %v1573
        %v1674 = vpack.c.b16 %v1576, %v1575
        %v1675 = vpack.c.b16 %v1578, %v1577
        %v1676 = vpack.c.b16 %v1580, %v1579
        %v1677 = vpack.c.b16 %v1582, %v1581
        %v1678 = vpack.c.b16 %v1584, %v1583
        %v1679 = vpack.c.b16 %v1586, %v1585
        %v1680 = vpack.c.b16 %v1588, %v1587
        %v1681 = vpack.c.b16 %v1590, %v1589
        %v1682 = vpack.c.b16 %v1592, %v1591
        %v1683 = vpack.c.b16 %v1594, %v1593
        %v1684 = vpack.c.b16 %v1596, %v1595
        %v1685 = vpack.c.b16 %v1598, %v1597
        %v1686 = vpack.c.b16 %v1600, %v1599
        %v1687 = vpack.c.b16 %v1602, %v1601
        %v1688 = vpack.c.b16 %v1604, %v1603
        %v1689 = vpack.c.b16 %v1606, %v1605
        %v1690 = vpack.c.b16 %v1608, %v1607
        %v1691 = vpack.c.b16 %v1610, %v1609
        %v1692 = vpack.c.b16 %v1612, %v1611
        %v1693 = vpack.c.b16 %v1614, %v1613
        %v1694 = vpack.c.b16 %v1616, %v1615
        %v1695 = vpack.c.b16 %v1618, %v1617
        %v1696 = vpack.c.b16 %v1620, %v1619
        %v1697 = vpack.c.b16 %v1622, %v1621
        %v1698 = vpack.c.b16 %v1624, %v1623
        %v1699 = vpack.c.b16 %v1626, %v1625
        %v1700 = vpack.c.b16 %v1628, %v1627
        %v1701 = vpack.c.b16 %v1630, %v1629
        %v1702 = vpack.c.b16 %v1632, %v1631
        %v1703 = vpack.c.b16 %v1634, %v1633
        %v1704 = vpack.c.b16 %v1636, %v1635
        %v1705 = vpack.c.b16 %v1638, %v1637
        %v1706 = vpack.c.b16 %v1640, %v1639
        %v1707 = vpack.c.b16 %v1642, %v1641
        %v1708 = vpack.c.b16 %v1644, %v1643
        %1773 = vmatprep.subr.bf16.mxu0 0
        %1774 = vmatpush1.bf16.msra.mxu0 %v1652
        %1775 = vmatprep.subr.bf16.mxu0 0
        %1776 = vmatpush1.bf16.msra.mxu0 %v1651
        %1777 = vmatprep.subr.bf16.mxu0 0
        %1778 = vmatpush1.bf16.msra.mxu0 %v1650
        %1779 = vmatprep.subr.bf16.mxu0 0
        %1780 = vmatpush1.bf16.msra.mxu0 %v1649
        %1781 = vmatprep.subr.bf16.mxu0 0
        %1782 = vmatpush1.bf16.msra.mxu0 %v1648
        %1783 = vmatprep.subr.bf16.mxu0 0
        %1784 = vmatpush1.bf16.msra.mxu0 %v1647
        %1785 = vmatprep.subr.bf16.mxu0 0
        %1786 = vmatpush1.bf16.msra.mxu0 %v1646
        %1787 = vmatprep.subr.bf16.mxu0 0
        %1788 = vmatpush1.bf16.msra.mxu0 %v1645
        %1789 = vmatprep.subr.bf16.mxu0 0
        %1790 = vmatpush2.bf16.msra.mxu0 %v1660
        %1791 = vmatprep.subr.bf16.mxu0 0
        %1792 = vmatpush2.bf16.msra.mxu0 %v1659
        %1793 = vmatprep.subr.bf16.mxu0 0
        %1794 = vmatpush2.bf16.msra.mxu0 %v1658
        %1795 = vmatprep.subr.bf16.mxu0 0
        %1796 = vmatpush2.bf16.msra.mxu0 %v1657
        %1797 = vmatprep.subr.bf16.mxu0 0
        %1798 = vmatpush2.bf16.msra.mxu0 %v1656
        %1799 = vmatprep.subr.bf16.mxu0 0
        %1800 = vmatpush2.bf16.msra.mxu0 %v1655
        %1801 = vmatprep.subr.bf16.mxu0 0
        %1802 = vmatpush2.bf16.msra.mxu0 %v1654
        %1803 = vmatprep.subr.bf16.mxu0 0
        %1804 = vmatpush2.bf16.msra.mxu0 %v1653
        %1805 = vmatprep.mubr.bf16.mxu0 %v1134
        %1806 = vmatmul.mubr.bf16.gmra.mxu0 %v1133
        %v1807 = vpop.f32.mrf.mxu0
        %v1808 = vadd.f32 0.0, %v1807
        %v1809 = vpop.f32.mrf.mxu0
        %v1810 = vpop.f32.mrf.mxu0
        %v1811 = vadd.f32 0.0, %v1810
        %v1812 = vpop.f32.mrf.mxu0
        %1813 = vmatprep.mubr.bf16.mxu0 %v1142
        %1814 = vmatmul.mubr.bf16.gmra.mxu0 %v1141
        %v1815 = vpop.f32.mrf.mxu0
        %v1816 = vadd.f32 0.0, %v1815
        %v1817 = vpop.f32.mrf.mxu0
        %v1818 = vpop.f32.mrf.mxu0
        %v1819 = vadd.f32 0.0, %v1818
        %v1820 = vpop.f32.mrf.mxu0
        %1821 = vmatprep.mubr.bf16.mxu0 %v1150
        %1822 = vmatmul.mubr.bf16.gmra.mxu0 %v1149
        %v1823 = vpop.f32.mrf.mxu0
        %v1824 = vadd.f32 0.0, %v1823
        %v1825 = vpop.f32.mrf.mxu0
        %v1826 = vpop.f32.mrf.mxu0
        %v1827 = vadd.f32 0.0, %v1826
        %v1828 = vpop.f32.mrf.mxu0
        %1829 = vmatprep.mubr.bf16.mxu0 %v1158
        %1830 = vmatmul.mubr.bf16.gmra.mxu0 %v1157
        %v1831 = vpop.f32.mrf.mxu0
        %v1832 = vadd.f32 0.0, %v1831
        %v1833 = vpop.f32.mrf.mxu0
        %v1834 = vpop.f32.mrf.mxu0
        %v1835 = vadd.f32 0.0, %v1834
        %v1836 = vpop.f32.mrf.mxu0
        %1837 = vmatprep.mubr.bf16.mxu0 %v1166
        %1838 = vmatmul.mubr.bf16.gmra.mxu0 %v1165
        %v1839 = vpop.f32.mrf.mxu0
        %v1840 = vadd.f32 0.0, %v1839
        %v1841 = vpop.f32.mrf.mxu0
        %v1842 = vpop.f32.mrf.mxu0
        %v1843 = vadd.f32 0.0, %v1842
        %v1844 = vpop.f32.mrf.mxu0
        %1845 = vmatprep.mubr.bf16.mxu0 %v1174
        %1846 = vmatmul.mubr.bf16.gmra.mxu0 %v1173
        %v1847 = vpop.f32.mrf.mxu0
        %v1848 = vadd.f32 0.0, %v1847
        %v1849 = vpop.f32.mrf.mxu0
        %v1850 = vpop.f32.mrf.mxu0
        %v1851 = vadd.f32 0.0, %v1850
        %v1852 = vpop.f32.mrf.mxu0
        %1853 = vmatprep.mubr.bf16.mxu0 %v1182
        %1854 = vmatmul.mubr.bf16.gmra.mxu0 %v1181
        %v1855 = vpop.f32.mrf.mxu0
        %v1856 = vadd.f32 0.0, %v1855
        %v1857 = vpop.f32.mrf.mxu0
        %v1858 = vpop.f32.mrf.mxu0
        %v1859 = vadd.f32 0.0, %v1858
        %v1860 = vpop.f32.mrf.mxu0
        %1861 = vmatprep.mubr.bf16.mxu0 %v1190
        %1862 = vmatmul.mubr.bf16.gmra.mxu0 %v1189
        %v1863 = vpop.f32.mrf.mxu0
        %v1864 = vadd.f32 0.0, %v1863
        %v1865 = vpop.f32.mrf.mxu0
        %v1866 = vpop.f32.mrf.mxu0
        %v1867 = vadd.f32 0.0, %v1866
        %v1868 = vpop.f32.mrf.mxu0
        %1869 = vmatprep.mubr.bf16.mxu0 %v1198
        %1870 = vmatmul.mubr.bf16.gmra.mxu0 %v1197
        %v1871 = vpop.f32.mrf.mxu0
        %v1872 = vadd.f32 0.0, %v1871
        %v1873 = vpop.f32.mrf.mxu0
        %v1874 = vpop.f32.mrf.mxu0
        %v1875 = vadd.f32 0.0, %v1874
        %v1876 = vpop.f32.mrf.mxu0
        %1877 = vmatprep.mubr.bf16.mxu0 %v1206
        %1878 = vmatmul.mubr.bf16.gmra.mxu0 %v1205
        %v1879 = vpop.f32.mrf.mxu0
        %v1880 = vadd.f32 0.0, %v1879
        %v1881 = vpop.f32.mrf.mxu0
        %v1882 = vpop.f32.mrf.mxu0
        %v1883 = vadd.f32 0.0, %v1882
        %v1884 = vpop.f32.mrf.mxu0
        %1885 = vmatprep.mubr.bf16.mxu0 %v1214
        %1886 = vmatmul.mubr.bf16.gmra.mxu0 %v1213
        %v1887 = vpop.f32.mrf.mxu0
        %v1888 = vadd.f32 0.0, %v1887
        %v1889 = vpop.f32.mrf.mxu0
        %v1890 = vpop.f32.mrf.mxu0
        %v1891 = vadd.f32 0.0, %v1890
        %v1892 = vpop.f32.mrf.mxu0
        %1893 = vmatprep.mubr.bf16.mxu0 %v1222
        %1894 = vmatmul.mubr.bf16.gmra.mxu0 %v1221
        %v1895 = vpop.f32.mrf.mxu0
        %v1896 = vadd.f32 0.0, %v1895
        %v1897 = vpop.f32.mrf.mxu0
        %v1898 = vpop.f32.mrf.mxu0
        %v1899 = vadd.f32 0.0, %v1898
        %v1900 = vpop.f32.mrf.mxu0
        %1901 = vmatprep.mubr.bf16.mxu0 %v1230
        %1902 = vmatmul.mubr.bf16.gmra.mxu0 %v1229
        %v1903 = vpop.f32.mrf.mxu0
        %v1904 = vadd.f32 0.0, %v1903
        %v1905 = vpop.f32.mrf.mxu0
        %v1906 = vpop.f32.mrf.mxu0
        %v1907 = vadd.f32 0.0, %v1906
        %v1908 = vpop.f32.mrf.mxu0
        %1909 = vmatprep.mubr.bf16.mxu0 %v1238
        %1910 = vmatmul.mubr.bf16.gmra.mxu0 %v1237
        %v1911 = vpop.f32.mrf.mxu0
        %v1912 = vadd.f32 0.0, %v1911
        %v1913 = vpop.f32.mrf.mxu0
        %v1914 = vpop.f32.mrf.mxu0
        %v1915 = vadd.f32 0.0, %v1914
        %v1916 = vpop.f32.mrf.mxu0
        %1917 = vmatprep.mubr.bf16.mxu0 %v1246
        %1918 = vmatmul.mubr.bf16.gmra.mxu0 %v1245
        %v1919 = vpop.f32.mrf.mxu0
        %v1920 = vadd.f32 0.0, %v1919
        %v1921 = vpop.f32.mrf.mxu0
        %v1922 = vpop.f32.mrf.mxu0
        %v1923 = vadd.f32 0.0, %v1922
        %v1924 = vpop.f32.mrf.mxu0
        %1925 = vmatprep.mubr.bf16.mxu0 %v1254
        %1926 = vmatmul.mubr.bf16.gmra.mxu0 %v1253
        %v1927 = vpop.f32.mrf.mxu0
        %v1928 = vadd.f32 0.0, %v1927
        %v1929 = vpop.f32.mrf.mxu0
        %v1930 = vpop.f32.mrf.mxu0
        %v1931 = vadd.f32 0.0, %v1930
        %v1932 = vpop.f32.mrf.mxu0
        %1933 = vdwg.mxu0
        %1934 = vmatprep.subr.bf16.mxu0 0
        %1935 = vmatpush1.bf16.msra.mxu0 %v1668
        %1936 = vmatprep.subr.bf16.mxu0 0
        %1937 = vmatpush1.bf16.msra.mxu0 %v1667
        %1938 = vmatprep.subr.bf16.mxu0 0
        %1939 = vmatpush1.bf16.msra.mxu0 %v1666
        %1940 = vmatprep.subr.bf16.mxu0 0
        %1941 = vmatpush1.bf16.msra.mxu0 %v1665
        %1942 = vmatprep.subr.bf16.mxu0 0
        %1943 = vmatpush1.bf16.msra.mxu0 %v1664
        %1944 = vmatprep.subr.bf16.mxu0 0
        %1945 = vmatpush1.bf16.msra.mxu0 %v1663
        %1946 = vmatprep.subr.bf16.mxu0 0
        %1947 = vmatpush1.bf16.msra.mxu0 %v1662
        %1948 = vmatprep.subr.bf16.mxu0 0
        %1949 = vmatpush1.bf16.msra.mxu0 %v1661
        %1950 = vmatprep.subr.bf16.mxu0 0
        %1951 = vmatpush2.bf16.msra.mxu0 %v1676
        %1952 = vmatprep.subr.bf16.mxu0 0
        %1953 = vmatpush2.bf16.msra.mxu0 %v1675
        %1954 = vmatprep.subr.bf16.mxu0 0
        %1955 = vmatpush2.bf16.msra.mxu0 %v1674
        %1956 = vmatprep.subr.bf16.mxu0 0
        %1957 = vmatpush2.bf16.msra.mxu0 %v1673
        %1958 = vmatprep.subr.bf16.mxu0 0
        %1959 = vmatpush2.bf16.msra.mxu0 %v1672
        %1960 = vmatprep.subr.bf16.mxu0 0
        %1961 = vmatpush2.bf16.msra.mxu0 %v1671
        %1962 = vmatprep.subr.bf16.mxu0 0
        %1963 = vmatpush2.bf16.msra.mxu0 %v1670
        %1964 = vmatprep.subr.bf16.mxu0 0
        %1965 = vmatpush2.bf16.msra.mxu0 %v1669
        %1966 = vmatprep.mubr.bf16.mxu0 %v1136
        %1967 = vmatmul.mubr.bf16.gmra.mxu0 %v1135
        %v1968 = vpop.f32.mrf.mxu0
        %v1969 = vadd.f32 %v1808, %v1968
        %v1970 = vpop.f32.mrf.mxu0
        %v1971 = vpop.f32.mrf.mxu0
        %v1972 = vadd.f32 %v1811, %v1971
        %v1973 = vpop.f32.mrf.mxu0
        %1974 = vmatprep.mubr.bf16.mxu0 %v1144
        %1975 = vmatmul.mubr.bf16.gmra.mxu0 %v1143
        %v1976 = vpop.f32.mrf.mxu0
        %v1977 = vadd.f32 %v1816, %v1976
        %v1978 = vpop.f32.mrf.mxu0
        %v1979 = vpop.f32.mrf.mxu0
        %v1980 = vadd.f32 %v1819, %v1979
        %v1981 = vpop.f32.mrf.mxu0
        %1982 = vmatprep.mubr.bf16.mxu0 %v1152
        %1983 = vmatmul.mubr.bf16.gmra.mxu0 %v1151
        %v1984 = vpop.f32.mrf.mxu0
        %v1985 = vadd.f32 %v1824, %v1984
        %v1986 = vpop.f32.mrf.mxu0
        %v1987 = vpop.f32.mrf.mxu0
        %v1988 = vadd.f32 %v1827, %v1987
        %v1989 = vpop.f32.mrf.mxu0
        %1990 = vmatprep.mubr.bf16.mxu0 %v1160
        %1991 = vmatmul.mubr.bf16.gmra.mxu0 %v1159
        %v1992 = vpop.f32.mrf.mxu0
        %v1993 = vadd.f32 %v1832, %v1992
        %v1994 = vpop.f32.mrf.mxu0
        %v1995 = vpop.f32.mrf.mxu0
        %v1996 = vadd.f32 %v1835, %v1995
        %v1997 = vpop.f32.mrf.mxu0
        %1998 = vmatprep.mubr.bf16.mxu0 %v1168
        %1999 = vmatmul.mubr.bf16.gmra.mxu0 %v1167
        %v2000 = vpop.f32.mrf.mxu0
        %v2001 = vadd.f32 %v1840, %v2000
        %v2002 = vpop.f32.mrf.mxu0
        %v2003 = vpop.f32.mrf.mxu0
        %v2004 = vadd.f32 %v1843, %v2003
        %v2005 = vpop.f32.mrf.mxu0
        %2006 = vmatprep.mubr.bf16.mxu0 %v1176
        %2007 = vmatmul.mubr.bf16.gmra.mxu0 %v1175
        %v2008 = vpop.f32.mrf.mxu0
        %v2009 = vadd.f32 %v1848, %v2008
        %v2010 = vpop.f32.mrf.mxu0
        %v2011 = vpop.f32.mrf.mxu0
        %v2012 = vadd.f32 %v1851, %v2011
        %v2013 = vpop.f32.mrf.mxu0
        %2014 = vmatprep.mubr.bf16.mxu0 %v1184
        %2015 = vmatmul.mubr.bf16.gmra.mxu0 %v1183
        %v2016 = vpop.f32.mrf.mxu0
        %v2017 = vadd.f32 %v1856, %v2016
        %v2018 = vpop.f32.mrf.mxu0
        %v2019 = vpop.f32.mrf.mxu0
        %v2020 = vadd.f32 %v1859, %v2019
        %v2021 = vpop.f32.mrf.mxu0
        %2022 = vmatprep.mubr.bf16.mxu0 %v1192
        %2023 = vmatmul.mubr.bf16.gmra.mxu0 %v1191
        %v2024 = vpop.f32.mrf.mxu0
        %v2025 = vadd.f32 %v1864, %v2024
        %v2026 = vpop.f32.mrf.mxu0
        %v2027 = vpop.f32.mrf.mxu0
        %v2028 = vadd.f32 %v1867, %v2027
        %v2029 = vpop.f32.mrf.mxu0
        %2030 = vmatprep.mubr.bf16.mxu0 %v1200
        %2031 = vmatmul.mubr.bf16.gmra.mxu0 %v1199
        %v2032 = vpop.f32.mrf.mxu0
        %v2033 = vadd.f32 %v1872, %v2032
        %v2034 = vpop.f32.mrf.mxu0
        %v2035 = vpop.f32.mrf.mxu0
        %v2036 = vadd.f32 %v1875, %v2035
        %v2037 = vpop.f32.mrf.mxu0
        %2038 = vmatprep.mubr.bf16.mxu0 %v1208
        %2039 = vmatmul.mubr.bf16.gmra.mxu0 %v1207
        %v2040 = vpop.f32.mrf.mxu0
        %v2041 = vadd.f32 %v1880, %v2040
        %v2042 = vpop.f32.mrf.mxu0
        %v2043 = vpop.f32.mrf.mxu0
        %v2044 = vadd.f32 %v1883, %v2043
        %v2045 = vpop.f32.mrf.mxu0
        %2046 = vmatprep.mubr.bf16.mxu0 %v1216
        %2047 = vmatmul.mubr.bf16.gmra.mxu0 %v1215
        %v2048 = vpop.f32.mrf.mxu0
        %v2049 = vadd.f32 %v1888, %v2048
        %v2050 = vpop.f32.mrf.mxu0
        %v2051 = vpop.f32.mrf.mxu0
        %v2052 = vadd.f32 %v1891, %v2051
        %v2053 = vpop.f32.mrf.mxu0
        %2054 = vmatprep.mubr.bf16.mxu0 %v1224
        %2055 = vmatmul.mubr.bf16.gmra.mxu0 %v1223
        %v2056 = vpop.f32.mrf.mxu0
        %v2057 = vadd.f32 %v1896, %v2056
        %v2058 = vpop.f32.mrf.mxu0
        %v2059 = vpop.f32.mrf.mxu0
        %v2060 = vadd.f32 %v1899, %v2059
        %v2061 = vpop.f32.mrf.mxu0
        %2062 = vmatprep.mubr.bf16.mxu0 %v1232
        %2063 = vmatmul.mubr.bf16.gmra.mxu0 %v1231
        %v2064 = vpop.f32.mrf.mxu0
        %v2065 = vadd.f32 %v1904, %v2064
        %v2066 = vpop.f32.mrf.mxu0
        %v2067 = vpop.f32.mrf.mxu0
        %v2068 = vadd.f32 %v1907, %v2067
        %v2069 = vpop.f32.mrf.mxu0
        %2070 = vmatprep.mubr.bf16.mxu0 %v1240
        %2071 = vmatmul.mubr.bf16.gmra.mxu0 %v1239
        %v2072 = vpop.f32.mrf.mxu0
        %v2073 = vadd.f32 %v1912, %v2072
        %v2074 = vpop.f32.mrf.mxu0
        %v2075 = vpop.f32.mrf.mxu0
        %v2076 = vadd.f32 %v1915, %v2075
        %v2077 = vpop.f32.mrf.mxu0
        %2078 = vmatprep.mubr.bf16.mxu0 %v1248
        %2079 = vmatmul.mubr.bf16.gmra.mxu0 %v1247
        %v2080 = vpop.f32.mrf.mxu0
        %v2081 = vadd.f32 %v1920, %v2080
        %v2082 = vpop.f32.mrf.mxu0
        %v2083 = vpop.f32.mrf.mxu0
        %v2084 = vadd.f32 %v1923, %v2083
        %v2085 = vpop.f32.mrf.mxu0
        %2086 = vmatprep.mubr.bf16.mxu0 %v1256
        %2087 = vmatmul.mubr.bf16.gmra.mxu0 %v1255
        %v2088 = vpop.f32.mrf.mxu0
        %v2089 = vadd.f32 %v1928, %v2088
        %v2090 = vpop.f32.mrf.mxu0
        %v2091 = vpop.f32.mrf.mxu0
        %v2092 = vadd.f32 %v1931, %v2091
        %v2093 = vpop.f32.mrf.mxu0
        %2094 = vdwg.mxu0
        %2095 = vmatprep.subr.bf16.mxu0 0
        %2096 = vmatpush1.bf16.msra.mxu0 %v1684
        %2097 = vmatprep.subr.bf16.mxu0 0
        %2098 = vmatpush1.bf16.msra.mxu0 %v1683
        %2099 = vmatprep.subr.bf16.mxu0 0
        %2100 = vmatpush1.bf16.msra.mxu0 %v1682
        %2101 = vmatprep.subr.bf16.mxu0 0
        %2102 = vmatpush1.bf16.msra.mxu0 %v1681
        %2103 = vmatprep.subr.bf16.mxu0 0
        %2104 = vmatpush1.bf16.msra.mxu0 %v1680
        %2105 = vmatprep.subr.bf16.mxu0 0
        %2106 = vmatpush1.bf16.msra.mxu0 %v1679
        %2107 = vmatprep.subr.bf16.mxu0 0
        %2108 = vmatpush1.bf16.msra.mxu0 %v1678
        %2109 = vmatprep.subr.bf16.mxu0 0
        %2110 = vmatpush1.bf16.msra.mxu0 %v1677
        %2111 = vmatprep.subr.bf16.mxu0 0
        %2112 = vmatpush2.bf16.msra.mxu0 %v1692
        %2113 = vmatprep.subr.bf16.mxu0 0
        %2114 = vmatpush2.bf16.msra.mxu0 %v1691
        %2115 = vmatprep.subr.bf16.mxu0 0
        %2116 = vmatpush2.bf16.msra.mxu0 %v1690
        %2117 = vmatprep.subr.bf16.mxu0 0
        %2118 = vmatpush2.bf16.msra.mxu0 %v1689
        %2119 = vmatprep.subr.bf16.mxu0 0
        %2120 = vmatpush2.bf16.msra.mxu0 %v1688
        %2121 = vmatprep.subr.bf16.mxu0 0
        %2122 = vmatpush2.bf16.msra.mxu0 %v1687
        %2123 = vmatprep.subr.bf16.mxu0 0
        %2124 = vmatpush2.bf16.msra.mxu0 %v1686
        %2125 = vmatprep.subr.bf16.mxu0 0
        %2126 = vmatpush2.bf16.msra.mxu0 %v1685
        %2127 = vmatprep.mubr.bf16.mxu0 %v1138
        %2128 = vmatmul.mubr.bf16.gmra.mxu0 %v1137
        %v2129 = vpop.f32.mrf.mxu0
        %v2130 = vadd.f32 %v1969, %v2129
        %v2131 = vpop.f32.mrf.mxu0
        %v2132 = vpop.f32.mrf.mxu0
        %v2133 = vadd.f32 %v1972, %v2132
        %v2134 = vpop.f32.mrf.mxu0
        %2135 = vmatprep.mubr.bf16.mxu0 %v1146
        %2136 = vmatmul.mubr.bf16.gmra.mxu0 %v1145
        %v2137 = vpop.f32.mrf.mxu0
        %v2138 = vadd.f32 %v1977, %v2137
        %v2139 = vpop.f32.mrf.mxu0
        %v2140 = vpop.f32.mrf.mxu0
        %v2141 = vadd.f32 %v1980, %v2140
        %v2142 = vpop.f32.mrf.mxu0
        %2143 = vmatprep.mubr.bf16.mxu0 %v1154
        %2144 = vmatmul.mubr.bf16.gmra.mxu0 %v1153
        %v2145 = vpop.f32.mrf.mxu0
        %v2146 = vadd.f32 %v1985, %v2145
        %v2147 = vpop.f32.mrf.mxu0
        %v2148 = vpop.f32.mrf.mxu0
        %v2149 = vadd.f32 %v1988, %v2148
        %v2150 = vpop.f32.mrf.mxu0
        %2151 = vmatprep.mubr.bf16.mxu0 %v1162
        %2152 = vmatmul.mubr.bf16.gmra.mxu0 %v1161
        %v2153 = vpop.f32.mrf.mxu0
        %v2154 = vadd.f32 %v1993, %v2153
        %v2155 = vpop.f32.mrf.mxu0
        %v2156 = vpop.f32.mrf.mxu0
        %v2157 = vadd.f32 %v1996, %v2156
        %v2158 = vpop.f32.mrf.mxu0
        %2159 = vmatprep.mubr.bf16.mxu0 %v1170
        %2160 = vmatmul.mubr.bf16.gmra.mxu0 %v1169
        %v2161 = vpop.f32.mrf.mxu0
        %v2162 = vadd.f32 %v2001, %v2161
        %v2163 = vpop.f32.mrf.mxu0
        %v2164 = vpop.f32.mrf.mxu0
        %v2165 = vadd.f32 %v2004, %v2164
        %v2166 = vpop.f32.mrf.mxu0
        %2167 = vmatprep.mubr.bf16.mxu0 %v1178
        %2168 = vmatmul.mubr.bf16.gmra.mxu0 %v1177
        %v2169 = vpop.f32.mrf.mxu0
        %v2170 = vadd.f32 %v2009, %v2169
        %v2171 = vpop.f32.mrf.mxu0
        %v2172 = vpop.f32.mrf.mxu0
        %v2173 = vadd.f32 %v2012, %v2172
        %v2174 = vpop.f32.mrf.mxu0
        %2175 = vmatprep.mubr.bf16.mxu0 %v1186
        %2176 = vmatmul.mubr.bf16.gmra.mxu0 %v1185
        %v2177 = vpop.f32.mrf.mxu0
        %v2178 = vadd.f32 %v2017, %v2177
        %v2179 = vpop.f32.mrf.mxu0
        %v2180 = vpop.f32.mrf.mxu0
        %v2181 = vadd.f32 %v2020, %v2180
        %v2182 = vpop.f32.mrf.mxu0
        %2183 = vmatprep.mubr.bf16.mxu0 %v1194
        %2184 = vmatmul.mubr.bf16.gmra.mxu0 %v1193
        %v2185 = vpop.f32.mrf.mxu0
        %v2186 = vadd.f32 %v2025, %v2185
        %v2187 = vpop.f32.mrf.mxu0
        %v2188 = vpop.f32.mrf.mxu0
        %v2189 = vadd.f32 %v2028, %v2188
        %v2190 = vpop.f32.mrf.mxu0
        %2191 = vmatprep.mubr.bf16.mxu0 %v1202
        %2192 = vmatmul.mubr.bf16.gmra.mxu0 %v1201
        %v2193 = vpop.f32.mrf.mxu0
        %v2194 = vadd.f32 %v2033, %v2193
        %v2195 = vpop.f32.mrf.mxu0
        %v2196 = vpop.f32.mrf.mxu0
        %v2197 = vadd.f32 %v2036, %v2196
        %v2198 = vpop.f32.mrf.mxu0
        %2199 = vmatprep.mubr.bf16.mxu0 %v1210
        %2200 = vmatmul.mubr.bf16.gmra.mxu0 %v1209
        %v2201 = vpop.f32.mrf.mxu0
        %v2202 = vadd.f32 %v2041, %v2201
        %v2203 = vpop.f32.mrf.mxu0
        %v2204 = vpop.f32.mrf.mxu0
        %v2205 = vadd.f32 %v2044, %v2204
        %v2206 = vpop.f32.mrf.mxu0
        %2207 = vmatprep.mubr.bf16.mxu0 %v1218
        %2208 = vmatmul.mubr.bf16.gmra.mxu0 %v1217
        %v2209 = vpop.f32.mrf.mxu0
        %v2210 = vadd.f32 %v2049, %v2209
        %v2211 = vpop.f32.mrf.mxu0
        %v2212 = vpop.f32.mrf.mxu0
        %v2213 = vadd.f32 %v2052, %v2212
        %v2214 = vpop.f32.mrf.mxu0
        %2215 = vmatprep.mubr.bf16.mxu0 %v1226
        %2216 = vmatmul.mubr.bf16.gmra.mxu0 %v1225
        %v2217 = vpop.f32.mrf.mxu0
        %v2218 = vadd.f32 %v2057, %v2217
        %v2219 = vpop.f32.mrf.mxu0
        %v2220 = vpop.f32.mrf.mxu0
        %v2221 = vadd.f32 %v2060, %v2220
        %v2222 = vpop.f32.mrf.mxu0
        %2223 = vmatprep.mubr.bf16.mxu0 %v1234
        %2224 = vmatmul.mubr.bf16.gmra.mxu0 %v1233
        %v2225 = vpop.f32.mrf.mxu0
        %v2226 = vadd.f32 %v2065, %v2225
        %v2227 = vpop.f32.mrf.mxu0
        %v2228 = vpop.f32.mrf.mxu0
        %v2229 = vadd.f32 %v2068, %v2228
        %v2230 = vpop.f32.mrf.mxu0
        %2231 = vmatprep.mubr.bf16.mxu0 %v1242
        %2232 = vmatmul.mubr.bf16.gmra.mxu0 %v1241
        %v2233 = vpop.f32.mrf.mxu0
        %v2234 = vadd.f32 %v2073, %v2233
        %v2235 = vpop.f32.mrf.mxu0
        %v2236 = vpop.f32.mrf.mxu0
        %v2237 = vadd.f32 %v2076, %v2236
        %v2238 = vpop.f32.mrf.mxu0
        %2239 = vmatprep.mubr.bf16.mxu0 %v1250
        %2240 = vmatmul.mubr.bf16.gmra.mxu0 %v1249
        %v2241 = vpop.f32.mrf.mxu0
        %v2242 = vadd.f32 %v2081, %v2241
        %v2243 = vpop.f32.mrf.mxu0
        %v2244 = vpop.f32.mrf.mxu0
        %v2245 = vadd.f32 %v2084, %v2244
        %v2246 = vpop.f32.mrf.mxu0
        %2247 = vmatprep.mubr.bf16.mxu0 %v1258
        %2248 = vmatmul.mubr.bf16.gmra.mxu0 %v1257
        %v2249 = vpop.f32.mrf.mxu0
        %v2250 = vadd.f32 %v2089, %v2249
        %v2251 = vpop.f32.mrf.mxu0
        %v2252 = vpop.f32.mrf.mxu0
        %v2253 = vadd.f32 %v2092, %v2252
        %v2254 = vpop.f32.mrf.mxu0
        %2255 = vdwg.mxu0
        %2256 = vmatprep.subr.bf16.mxu0 0
        %2257 = vmatpush1.bf16.msra.mxu0 %v1700
        %2258 = vmatprep.subr.bf16.mxu0 0
        %2259 = vmatpush1.bf16.msra.mxu0 %v1699
        %2260 = vmatprep.subr.bf16.mxu0 0
        %2261 = vmatpush1.bf16.msra.mxu0 %v1698
        %2262 = vmatprep.subr.bf16.mxu0 0
        %2263 = vmatpush1.bf16.msra.mxu0 %v1697
        %2264 = vmatprep.subr.bf16.mxu0 0
        %2265 = vmatpush1.bf16.msra.mxu0 %v1696
        %2266 = vmatprep.subr.bf16.mxu0 0
        %2267 = vmatpush1.bf16.msra.mxu0 %v1695
        %2268 = vmatprep.subr.bf16.mxu0 0
        %2269 = vmatpush1.bf16.msra.mxu0 %v1694
        %2270 = vmatprep.subr.bf16.mxu0 0
        %2271 = vmatpush1.bf16.msra.mxu0 %v1693
        %2272 = vmatprep.subr.bf16.mxu0 0
        %2273 = vmatpush2.bf16.msra.mxu0 %v1708
        %2274 = vmatprep.subr.bf16.mxu0 0
        %2275 = vmatpush2.bf16.msra.mxu0 %v1707
        %2276 = vmatprep.subr.bf16.mxu0 0
        %2277 = vmatpush2.bf16.msra.mxu0 %v1706
        %2278 = vmatprep.subr.bf16.mxu0 0
        %2279 = vmatpush2.bf16.msra.mxu0 %v1705
        %2280 = vmatprep.subr.bf16.mxu0 0
        %2281 = vmatpush2.bf16.msra.mxu0 %v1704
        %2282 = vmatprep.subr.bf16.mxu0 0
        %2283 = vmatpush2.bf16.msra.mxu0 %v1703
        %2284 = vmatprep.subr.bf16.mxu0 0
        %2285 = vmatpush2.bf16.msra.mxu0 %v1702
        %2286 = vmatprep.subr.bf16.mxu0 0
        %2287 = vmatpush2.bf16.msra.mxu0 %v1701
        %2288 = vmatprep.mubr.bf16.mxu0 %v1140
        %2289 = vmatmul.mubr.bf16.gmra.mxu0 %v1139
        %v2290 = vpop.f32.mrf.mxu0
        %v2291 = vadd.f32 %v2130, %v2290
        %v2292 = vpop.f32.mrf.mxu0
        %v2293 = vpop.f32.mrf.mxu0
        %v2294 = vadd.f32 %v2133, %v2293
        %v2295 = vpop.f32.mrf.mxu0
        %2296 = vmatprep.mubr.bf16.mxu0 %v1148
        %2297 = vmatmul.mubr.bf16.gmra.mxu0 %v1147
        %v2298 = vpop.f32.mrf.mxu0
        %v2299 = vadd.f32 %v2138, %v2298
        %v2300 = vpop.f32.mrf.mxu0
        %v2301 = vpop.f32.mrf.mxu0
        %v2302 = vadd.f32 %v2141, %v2301
        %v2303 = vpop.f32.mrf.mxu0
        %2304 = vmatprep.mubr.bf16.mxu0 %v1156
        %2305 = vmatmul.mubr.bf16.gmra.mxu0 %v1155
        %v2306 = vpop.f32.mrf.mxu0
        %v2307 = vadd.f32 %v2146, %v2306
        %v2308 = vpop.f32.mrf.mxu0
        %v2309 = vpop.f32.mrf.mxu0
        %v2310 = vadd.f32 %v2149, %v2309
        %v2311 = vpop.f32.mrf.mxu0
        %2312 = vmatprep.mubr.bf16.mxu0 %v1164
        %2313 = vmatmul.mubr.bf16.gmra.mxu0 %v1163
        %v2314 = vpop.f32.mrf.mxu0
        %v2315 = vadd.f32 %v2154, %v2314
        %v2316 = vpop.f32.mrf.mxu0
        %v2317 = vpop.f32.mrf.mxu0
        %v2318 = vadd.f32 %v2157, %v2317
        %v2319 = vpop.f32.mrf.mxu0
        %2320 = vmatprep.mubr.bf16.mxu0 %v1172
        %2321 = vmatmul.mubr.bf16.gmra.mxu0 %v1171
        %v2322 = vpop.f32.mrf.mxu0
        %v2323 = vadd.f32 %v2162, %v2322
        %v2324 = vpop.f32.mrf.mxu0
        %v2325 = vpop.f32.mrf.mxu0
        %v2326 = vadd.f32 %v2165, %v2325
        %v2327 = vpop.f32.mrf.mxu0
        %2328 = vmatprep.mubr.bf16.mxu0 %v1180
        %2329 = vmatmul.mubr.bf16.gmra.mxu0 %v1179
        %v2330 = vpop.f32.mrf.mxu0
        %v2331 = vadd.f32 %v2170, %v2330
        %v2332 = vpop.f32.mrf.mxu0
        %v2333 = vpop.f32.mrf.mxu0
        %v2334 = vadd.f32 %v2173, %v2333
        %v2335 = vpop.f32.mrf.mxu0
        %2336 = vmatprep.mubr.bf16.mxu0 %v1188
        %2337 = vmatmul.mubr.bf16.gmra.mxu0 %v1187
        %v2338 = vpop.f32.mrf.mxu0
        %v2339 = vadd.f32 %v2178, %v2338
        %v2340 = vpop.f32.mrf.mxu0
        %v2341 = vpop.f32.mrf.mxu0
        %v2342 = vadd.f32 %v2181, %v2341
        %v2343 = vpop.f32.mrf.mxu0
        %2344 = vmatprep.mubr.bf16.mxu0 %v1196
        %2345 = vmatmul.mubr.bf16.gmra.mxu0 %v1195
        %v2346 = vpop.f32.mrf.mxu0
        %v2347 = vadd.f32 %v2186, %v2346
        %v2348 = vpop.f32.mrf.mxu0
        %v2349 = vpop.f32.mrf.mxu0
        %v2350 = vadd.f32 %v2189, %v2349
        %v2351 = vpop.f32.mrf.mxu0
        %2352 = vmatprep.mubr.bf16.mxu0 %v1204
        %2353 = vmatmul.mubr.bf16.gmra.mxu0 %v1203
        %v2354 = vpop.f32.mrf.mxu0
        %v2355 = vadd.f32 %v2194, %v2354
        %v2356 = vpop.f32.mrf.mxu0
        %v2357 = vpop.f32.mrf.mxu0
        %v2358 = vadd.f32 %v2197, %v2357
        %v2359 = vpop.f32.mrf.mxu0
        %2360 = vmatprep.mubr.bf16.mxu0 %v1212
        %2361 = vmatmul.mubr.bf16.gmra.mxu0 %v1211
        %v2362 = vpop.f32.mrf.mxu0
        %v2363 = vadd.f32 %v2202, %v2362
        %v2364 = vpop.f32.mrf.mxu0
        %v2365 = vpop.f32.mrf.mxu0
        %v2366 = vadd.f32 %v2205, %v2365
        %v2367 = vpop.f32.mrf.mxu0
        %2368 = vmatprep.mubr.bf16.mxu0 %v1220
        %2369 = vmatmul.mubr.bf16.gmra.mxu0 %v1219
        %v2370 = vpop.f32.mrf.mxu0
        %v2371 = vadd.f32 %v2210, %v2370
        %v2372 = vpop.f32.mrf.mxu0
        %v2373 = vpop.f32.mrf.mxu0
        %v2374 = vadd.f32 %v2213, %v2373
        %v2375 = vpop.f32.mrf.mxu0
        %2376 = vmatprep.mubr.bf16.mxu0 %v1228
        %2377 = vmatmul.mubr.bf16.gmra.mxu0 %v1227
        %v2378 = vpop.f32.mrf.mxu0
        %v2379 = vadd.f32 %v2218, %v2378
        %v2380 = vpop.f32.mrf.mxu0
        %v2381 = vpop.f32.mrf.mxu0
        %v2382 = vadd.f32 %v2221, %v2381
        %v2383 = vpop.f32.mrf.mxu0
        %2384 = vmatprep.mubr.bf16.mxu0 %v1236
        %2385 = vmatmul.mubr.bf16.gmra.mxu0 %v1235
        %v2386 = vpop.f32.mrf.mxu0
        %v2387 = vadd.f32 %v2226, %v2386
        %v2388 = vpop.f32.mrf.mxu0
        %v2389 = vpop.f32.mrf.mxu0
        %v2390 = vadd.f32 %v2229, %v2389
        %v2391 = vpop.f32.mrf.mxu0
        %2392 = vmatprep.mubr.bf16.mxu0 %v1244
        %2393 = vmatmul.mubr.bf16.gmra.mxu0 %v1243
        %v2394 = vpop.f32.mrf.mxu0
        %v2395 = vadd.f32 %v2234, %v2394
        %v2396 = vpop.f32.mrf.mxu0
        %v2397 = vpop.f32.mrf.mxu0
        %v2398 = vadd.f32 %v2237, %v2397
        %v2399 = vpop.f32.mrf.mxu0
        %2400 = vmatprep.mubr.bf16.mxu0 %v1252
        %2401 = vmatmul.mubr.bf16.gmra.mxu0 %v1251
        %v2402 = vpop.f32.mrf.mxu0
        %v2403 = vadd.f32 %v2242, %v2402
        %v2404 = vpop.f32.mrf.mxu0
        %v2405 = vpop.f32.mrf.mxu0
        %v2406 = vadd.f32 %v2245, %v2405
        %v2407 = vpop.f32.mrf.mxu0
        %2408 = vmatprep.mubr.bf16.mxu0 %v1260
        %2409 = vmatmul.mubr.bf16.gmra.mxu0 %v1259
        %v2410 = vpop.f32.mrf.mxu0
        %v2411 = vadd.f32 %v2250, %v2410
        %v2412 = vpop.f32.mrf.mxu0
        %v2413 = vpop.f32.mrf.mxu0
        %v2414 = vadd.f32 %v2253, %v2413
        %v2415 = vpop.f32.mrf.mxu0
        %2416 = vdwg.mxu0
        %v2417 = vadd.f32 %v461, %v2291
        %v2418 = vadd.f32 %v462, %v2294
        %v2419 = vadd.f32 %v463, %v2299
        %v2420 = vadd.f32 %v464, %v2302
        %v2421 = vadd.f32 %v465, %v2307
        %v2422 = vadd.f32 %v466, %v2310
        %v2423 = vadd.f32 %v467, %v2315
        %v2424 = vadd.f32 %v468, %v2318
        %v2425 = vadd.f32 %v469, %v2323
        %v2426 = vadd.f32 %v470, %v2326
        %v2427 = vadd.f32 %v471, %v2331
        %v2428 = vadd.f32 %v472, %v2334
        %v2429 = vadd.f32 %v473, %v2339
        %v2430 = vadd.f32 %v474, %v2342
        %v2431 = vadd.f32 %v475, %v2347
        %v2432 = vadd.f32 %v476, %v2350
        %v2433 = vadd.f32 %v477, %v2355
        %v2434 = vadd.f32 %v478, %v2358
        %v2435 = vadd.f32 %v479, %v2363
        %v2436 = vadd.f32 %v480, %v2366
        %v2437 = vadd.f32 %v481, %v2371
        %v2438 = vadd.f32 %v482, %v2374
        %v2439 = vadd.f32 %v483, %v2379
        %v2440 = vadd.f32 %v484, %v2382
        %v2441 = vadd.f32 %v485, %v2387
        %v2442 = vadd.f32 %v486, %v2390
        %v2443 = vadd.f32 %v487, %v2395
        %v2444 = vadd.f32 %v488, %v2398
        %v2445 = vadd.f32 %v489, %v2403
        %v2446 = vadd.f32 %v490, %v2406
        %v2447 = vadd.f32 %v491, %v2411
        %v2448 = vadd.f32 %v492, %v2414
        %v2449 = vpack.c.bf16 %v2418, %v2417
        %v2450 = vpack.c.bf16 %v2420, %v2419
        %v2451 = vpack.c.bf16 %v2422, %v2421
        %v2452 = vpack.c.bf16 %v2424, %v2423
        %v2453 = vpack.c.bf16 %v2426, %v2425
        %v2454 = vpack.c.bf16 %v2428, %v2427
        %v2455 = vpack.c.bf16 %v2430, %v2429
        %v2456 = vpack.c.bf16 %v2432, %v2431
        %v2457 = vpack.c.bf16 %v2434, %v2433
        %v2458 = vpack.c.bf16 %v2436, %v2435
        %v2459 = vpack.c.bf16 %v2438, %v2437
        %v2460 = vpack.c.bf16 %v2440, %v2439
        %v2461 = vpack.c.bf16 %v2442, %v2441
        %v2462 = vpack.c.bf16 %v2444, %v2443
        %v2463 = vpack.c.bf16 %v2446, %v2445
        %v2464 = vpack.c.bf16 %v2448, %v2447
        %v2465 = vld [vmem:[%s5] sm:$0xff]
        %v2466 = vld [vmem:[%s5 + $0x8] sm:$0xff]
        %v2467 = vld [vmem:[%s5 + $0x10] sm:$0xff]
        %v2468 = vld [vmem:[%s5 + $0x18] sm:$0xff]
        %v2469 = vld [vmem:[%s5 + $0x20] sm:$0xff]
        %v2470 = vld [vmem:[%s5 + $0x28] sm:$0xff]
        %v2471 = vld [vmem:[%s5 + $0x30] sm:$0xff]
        %v2472 = vld [vmem:[%s5 + $0x38] sm:$0xff]
        %v2473 = vld [vmem:[%s5 + $0x40] sm:$0xff]
        %v2474 = vld [vmem:[%s5 + $0x48] sm:$0xff]
        %v2475 = vld [vmem:[%s5 + $0x50] sm:$0xff]
        %v2476 = vld [vmem:[%s5 + $0x58] sm:$0xff]
        %v2477 = vld [vmem:[%s5 + $0x60] sm:$0xff]
        %v2478 = vld [vmem:[%s5 + $0x68] sm:$0xff]
        %v2479 = vld [vmem:[%s5 + $0x70] sm:$0xff]
        %v2480 = vld [vmem:[%s5 + $0x78] sm:$0xff]
        %v2481 = vld [vmem:[%s6] sm:$0x3]
        %v2483 = vlaneseq
        %v2484 = vshrl.u32 %v2483, 7
        %v2485 = vsub.s32 0, %v2484
        %v2486 = vrot.slane %v2481, %v2485
        %v2487 = vlaneseq
        %v2488 = vshrl.u32 %v2487, 7
        %v2489 = vsub.s32 1, %v2488
        %v2490 = vrot.slane %v2481, %v2489
        %v2509 = vunpack.c.l.b16 %v2465
        %v2510 = vunpack.c.h.b16 %v2465
        %v2511 = vunpack.c.l.b16 %v2466
        %v2512 = vunpack.c.h.b16 %v2466
        %v2513 = vunpack.c.l.b16 %v2467
        %v2514 = vunpack.c.h.b16 %v2467
        %v2515 = vunpack.c.l.b16 %v2468
        %v2516 = vunpack.c.h.b16 %v2468
        %v2517 = vunpack.c.l.b16 %v2469
        %v2518 = vunpack.c.h.b16 %v2469
        %v2519 = vunpack.c.l.b16 %v2470
        %v2520 = vunpack.c.h.b16 %v2470
        %v2521 = vunpack.c.l.b16 %v2471
        %v2522 = vunpack.c.h.b16 %v2471
        %v2523 = vunpack.c.l.b16 %v2472
        %v2524 = vunpack.c.h.b16 %v2472
        %v2525 = vunpack.c.l.b16 %v2473
        %v2526 = vunpack.c.h.b16 %v2473
        %v2527 = vunpack.c.l.b16 %v2474
        %v2528 = vunpack.c.h.b16 %v2474
        %v2529 = vunpack.c.l.b16 %v2475
        %v2530 = vunpack.c.h.b16 %v2475
        %v2531 = vunpack.c.l.b16 %v2476
        %v2532 = vunpack.c.h.b16 %v2476
        %v2533 = vunpack.c.l.b16 %v2477
        %v2534 = vunpack.c.h.b16 %v2477
        %v2535 = vunpack.c.l.b16 %v2478
        %v2536 = vunpack.c.h.b16 %v2478
        %v2537 = vunpack.c.l.b16 %v2479
        %v2538 = vunpack.c.h.b16 %v2479
        %v2539 = vunpack.c.l.b16 %v2480
        %v2540 = vunpack.c.h.b16 %v2480
        %v2541 = vpack.c.b16 %v2511, %v2509
        %v2542 = vpack.c.b16 %v2512, %v2510
        %v2543 = vpack.c.b16 %v2515, %v2513
        %v2544 = vpack.c.b16 %v2516, %v2514
        %v2545 = vpack.c.b16 %v2519, %v2517
        %v2546 = vpack.c.b16 %v2520, %v2518
        %v2547 = vpack.c.b16 %v2523, %v2521
        %v2548 = vpack.c.b16 %v2524, %v2522
        %v2549 = vpack.c.b16 %v2527, %v2525
        %v2550 = vpack.c.b16 %v2528, %v2526
        %v2551 = vpack.c.b16 %v2531, %v2529
        %v2552 = vpack.c.b16 %v2532, %v2530
        %v2553 = vpack.c.b16 %v2535, %v2533
        %v2554 = vpack.c.b16 %v2536, %v2534
        %v2555 = vpack.c.b16 %v2539, %v2537
        %v2556 = vpack.c.b16 %v2540, %v2538
        %2573 = vmatprep.subr.bf16.mxu0 %v2556
        %2574 = vmatpush1.bf16.msra.mxu0 %v2555
        %2575 = vmatprep.subr.bf16.mxu0 %v2554
        %2576 = vmatpush1.bf16.msra.mxu0 %v2553
        %2577 = vmatprep.subr.bf16.mxu0 %v2552
        %2578 = vmatpush1.bf16.msra.mxu0 %v2551
        %2579 = vmatprep.subr.bf16.mxu0 %v2550
        %2580 = vmatpush1.bf16.msra.mxu0 %v2549
        %2581 = vmatprep.subr.bf16.mxu0 %v2548
        %2582 = vmatpush1.bf16.msra.mxu0 %v2547
        %2583 = vmatprep.subr.bf16.mxu0 %v2546
        %2584 = vmatpush1.bf16.msra.mxu0 %v2545
        %2585 = vmatprep.subr.bf16.mxu0 %v2544
        %2586 = vmatpush1.bf16.msra.mxu0 %v2543
        %2587 = vmatprep.subr.bf16.mxu0 %v2542
        %2588 = vmatpush1.bf16.msra.mxu0 %v2541
        %2589 = vmatprep.subr.bf16.mxu0 0
        %2590 = vmatpush2.bf16.msra.mxu0 0
        %2591 = vmatprep.subr.bf16.mxu0 0
        %2592 = vmatpush2.bf16.msra.mxu0 0
        %2593 = vmatprep.subr.bf16.mxu0 0
        %2594 = vmatpush2.bf16.msra.mxu0 0
        %2595 = vmatprep.subr.bf16.mxu0 0
        %2596 = vmatpush2.bf16.msra.mxu0 0
        %2597 = vmatprep.subr.bf16.mxu0 0
        %2598 = vmatpush2.bf16.msra.mxu0 0
        %2599 = vmatprep.subr.bf16.mxu0 0
        %2600 = vmatpush2.bf16.msra.mxu0 0
        %2601 = vmatprep.subr.bf16.mxu0 0
        %2602 = vmatpush2.bf16.msra.mxu0 0
        %2603 = vmatprep.subr.bf16.mxu0 0
        %2604 = vmatpush2.bf16.msra.mxu0 0
        %2605 = vmatprep.mubr.bf16.mxu0 0
        %2606 = vmatmul.mubr.bf16.gmra.mxu0 %v2449
        %v2607 = vpop.f32.mrf.mxu0
        %v2608 = vadd.f32 %v2486, %v2607
        %v2609 = vpop.f32.mrf.mxu0
        %v2610 = vadd.f32 %v2490, %v2609
        %v2611 = vpop.f32.mrf.mxu0
        %v2612 = vadd.f32 %v2486, %v2611
        %v2613 = vpop.f32.mrf.mxu0
        %v2614 = vadd.f32 %v2490, %v2613
        %2615 = vmatprep.mubr.bf16.mxu0 0
        %2616 = vmatmul.mubr.bf16.gmra.mxu0 %v2450
        %v2617 = vpop.f32.mrf.mxu0
        %v2618 = vadd.f32 %v2486, %v2617
        %v2619 = vpop.f32.mrf.mxu0
        %v2620 = vadd.f32 %v2490, %v2619
        %v2621 = vpop.f32.mrf.mxu0
        %v2622 = vadd.f32 %v2486, %v2621
        %v2623 = vpop.f32.mrf.mxu0
        %v2624 = vadd.f32 %v2490, %v2623
        %2625 = vmatprep.mubr.bf16.mxu0 0
        %2626 = vmatmul.mubr.bf16.gmra.mxu0 %v2451
        %v2627 = vpop.f32.mrf.mxu0
        %v2628 = vadd.f32 %v2486, %v2627
        %v2629 = vpop.f32.mrf.mxu0
        %v2630 = vadd.f32 %v2490, %v2629
        %v2631 = vpop.f32.mrf.mxu0
        %v2632 = vadd.f32 %v2486, %v2631
        %v2633 = vpop.f32.mrf.mxu0
        %v2634 = vadd.f32 %v2490, %v2633
        %2635 = vmatprep.mubr.bf16.mxu0 0
        %2636 = vmatmul.mubr.bf16.gmra.mxu0 %v2452
        %v2637 = vpop.f32.mrf.mxu0
        %v2638 = vadd.f32 %v2486, %v2637
        %v2639 = vpop.f32.mrf.mxu0
        %v2640 = vadd.f32 %v2490, %v2639
        %v2641 = vpop.f32.mrf.mxu0
        %v2642 = vadd.f32 %v2486, %v2641
        %v2643 = vpop.f32.mrf.mxu0
        %v2644 = vadd.f32 %v2490, %v2643
        %2645 = vmatprep.mubr.bf16.mxu0 0
        %2646 = vmatmul.mubr.bf16.gmra.mxu0 %v2453
        %v2647 = vpop.f32.mrf.mxu0
        %v2648 = vadd.f32 %v2486, %v2647
        %v2649 = vpop.f32.mrf.mxu0
        %v2650 = vadd.f32 %v2490, %v2649
        %v2651 = vpop.f32.mrf.mxu0
        %v2652 = vadd.f32 %v2486, %v2651
        %v2653 = vpop.f32.mrf.mxu0
        %v2654 = vadd.f32 %v2490, %v2653
        %2655 = vmatprep.mubr.bf16.mxu0 0
        %2656 = vmatmul.mubr.bf16.gmra.mxu0 %v2454
        %v2657 = vpop.f32.mrf.mxu0
        %v2658 = vadd.f32 %v2486, %v2657
        %v2659 = vpop.f32.mrf.mxu0
        %v2660 = vadd.f32 %v2490, %v2659
        %v2661 = vpop.f32.mrf.mxu0
        %v2662 = vadd.f32 %v2486, %v2661
        %v2663 = vpop.f32.mrf.mxu0
        %v2664 = vadd.f32 %v2490, %v2663
        %2665 = vmatprep.mubr.bf16.mxu0 0
        %2666 = vmatmul.mubr.bf16.gmra.mxu0 %v2455
        %v2667 = vpop.f32.mrf.mxu0
        %v2668 = vadd.f32 %v2486, %v2667
        %v2669 = vpop.f32.mrf.mxu0
        %v2670 = vadd.f32 %v2490, %v2669
        %v2671 = vpop.f32.mrf.mxu0
        %v2672 = vadd.f32 %v2486, %v2671
        %v2673 = vpop.f32.mrf.mxu0
        %v2674 = vadd.f32 %v2490, %v2673
        %2675 = vmatprep.mubr.bf16.mxu0 0
        %2676 = vmatmul.mubr.bf16.gmra.mxu0 %v2456
        %v2677 = vpop.f32.mrf.mxu0
        %v2678 = vadd.f32 %v2486, %v2677
        %v2679 = vpop.f32.mrf.mxu0
        %v2680 = vadd.f32 %v2490, %v2679
        %v2681 = vpop.f32.mrf.mxu0
        %v2682 = vadd.f32 %v2486, %v2681
        %v2683 = vpop.f32.mrf.mxu0
        %v2684 = vadd.f32 %v2490, %v2683
        %2685 = vmatprep.mubr.bf16.mxu0 0
        %2686 = vmatmul.mubr.bf16.gmra.mxu0 %v2457
        %v2687 = vpop.f32.mrf.mxu0
        %v2688 = vadd.f32 %v2486, %v2687
        %v2689 = vpop.f32.mrf.mxu0
        %v2690 = vadd.f32 %v2490, %v2689
        %v2691 = vpop.f32.mrf.mxu0
        %v2692 = vadd.f32 %v2486, %v2691
        %v2693 = vpop.f32.mrf.mxu0
        %v2694 = vadd.f32 %v2490, %v2693
        %2695 = vmatprep.mubr.bf16.mxu0 0
        %2696 = vmatmul.mubr.bf16.gmra.mxu0 %v2458
        %v2697 = vpop.f32.mrf.mxu0
        %v2698 = vadd.f32 %v2486, %v2697
        %v2699 = vpop.f32.mrf.mxu0
        %v2700 = vadd.f32 %v2490, %v2699
        %v2701 = vpop.f32.mrf.mxu0
        %v2702 = vadd.f32 %v2486, %v2701
        %v2703 = vpop.f32.mrf.mxu0
        %v2704 = vadd.f32 %v2490, %v2703
        %2705 = vmatprep.mubr.bf16.mxu0 0
        %2706 = vmatmul.mubr.bf16.gmra.mxu0 %v2459
        %v2707 = vpop.f32.mrf.mxu0
        %v2708 = vadd.f32 %v2486, %v2707
        %v2709 = vpop.f32.mrf.mxu0
        %v2710 = vadd.f32 %v2490, %v2709
        %v2711 = vpop.f32.mrf.mxu0
        %v2712 = vadd.f32 %v2486, %v2711
        %v2713 = vpop.f32.mrf.mxu0
        %v2714 = vadd.f32 %v2490, %v2713
        %2715 = vmatprep.mubr.bf16.mxu0 0
        %2716 = vmatmul.mubr.bf16.gmra.mxu0 %v2460
        %v2717 = vpop.f32.mrf.mxu0
        %v2718 = vadd.f32 %v2486, %v2717
        %v2719 = vpop.f32.mrf.mxu0
        %v2720 = vadd.f32 %v2490, %v2719
        %v2721 = vpop.f32.mrf.mxu0
        %v2722 = vadd.f32 %v2486, %v2721
        %v2723 = vpop.f32.mrf.mxu0
        %v2724 = vadd.f32 %v2490, %v2723
        %2725 = vmatprep.mubr.bf16.mxu0 0
        %2726 = vmatmul.mubr.bf16.gmra.mxu0 %v2461
        %v2727 = vpop.f32.mrf.mxu0
        %v2728 = vadd.f32 %v2486, %v2727
        %v2729 = vpop.f32.mrf.mxu0
        %v2730 = vadd.f32 %v2490, %v2729
        %v2731 = vpop.f32.mrf.mxu0
        %v2732 = vadd.f32 %v2486, %v2731
        %v2733 = vpop.f32.mrf.mxu0
        %v2734 = vadd.f32 %v2490, %v2733
        %2735 = vmatprep.mubr.bf16.mxu0 0
        %2736 = vmatmul.mubr.bf16.gmra.mxu0 %v2462
        %v2737 = vpop.f32.mrf.mxu0
        %v2738 = vadd.f32 %v2486, %v2737
        %v2739 = vpop.f32.mrf.mxu0
        %v2740 = vadd.f32 %v2490, %v2739
        %v2741 = vpop.f32.mrf.mxu0
        %v2742 = vadd.f32 %v2486, %v2741
        %v2743 = vpop.f32.mrf.mxu0
        %v2744 = vadd.f32 %v2490, %v2743
        %2745 = vmatprep.mubr.bf16.mxu0 0
        %2746 = vmatmul.mubr.bf16.gmra.mxu0 %v2463
        %v2747 = vpop.f32.mrf.mxu0
        %v2748 = vadd.f32 %v2486, %v2747
        %v2749 = vpop.f32.mrf.mxu0
        %v2750 = vadd.f32 %v2490, %v2749
        %v2751 = vpop.f32.mrf.mxu0
        %v2752 = vadd.f32 %v2486, %v2751
        %v2753 = vpop.f32.mrf.mxu0
        %v2754 = vadd.f32 %v2490, %v2753
        %2755 = vmatprep.mubr.bf16.mxu0 0
        %2756 = vmatmul.mubr.bf16.gmra.mxu0 %v2464
        %v2757 = vpop.f32.mrf.mxu0
        %v2758 = vadd.f32 %v2486, %v2757
        %v2759 = vpop.f32.mrf.mxu0
        %v2760 = vadd.f32 %v2490, %v2759
        %v2761 = vpop.f32.mrf.mxu0
        %v2762 = vadd.f32 %v2486, %v2761
        %v2763 = vpop.f32.mrf.mxu0
        %v2764 = vadd.f32 %v2490, %v2763
        %2765 = vdwg.mxu0
        %v2766 = vmax.f32 %v2608, 0.0
        %v2767 = vmax.f32 %v2610, 0.0
        %v2768 = vmax.f32 %v2612, 0.0
        %v2769 = vmax.f32 %v2614, 0.0
        %v2770 = vmax.f32 %v2618, 0.0
        %v2771 = vmax.f32 %v2620, 0.0
        %v2772 = vmax.f32 %v2622, 0.0
        %v2773 = vmax.f32 %v2624, 0.0
        %v2774 = vmax.f32 %v2628, 0.0
        %v2775 = vmax.f32 %v2630, 0.0
        %v2776 = vmax.f32 %v2632, 0.0
        %v2777 = vmax.f32 %v2634, 0.0
        %v2778 = vmax.f32 %v2638, 0.0
        %v2779 = vmax.f32 %v2640, 0.0
        %v2780 = vmax.f32 %v2642, 0.0
        %v2781 = vmax.f32 %v2644, 0.0
        %v2782 = vmax.f32 %v2648, 0.0
        %v2783 = vmax.f32 %v2650, 0.0
        %v2784 = vmax.f32 %v2652, 0.0
        %v2785 = vmax.f32 %v2654, 0.0
        %v2786 = vmax.f32 %v2658, 0.0
        %v2787 = vmax.f32 %v2660, 0.0
        %v2788 = vmax.f32 %v2662, 0.0
        %v2789 = vmax.f32 %v2664, 0.0
        %v2790 = vmax.f32 %v2668, 0.0
        %v2791 = vmax.f32 %v2670, 0.0
        %v2792 = vmax.f32 %v2672, 0.0
        %v2793 = vmax.f32 %v2674, 0.0
        %v2794 = vmax.f32 %v2678, 0.0
        %v2795 = vmax.f32 %v2680, 0.0
        %v2796 = vmax.f32 %v2682, 0.0
        %v2797 = vmax.f32 %v2684, 0.0
        %v2798 = vmax.f32 %v2688, 0.0
        %v2799 = vmax.f32 %v2690, 0.0
        %v2800 = vmax.f32 %v2692, 0.0
        %v2801 = vmax.f32 %v2694, 0.0
        %v2802 = vmax.f32 %v2698, 0.0
        %v2803 = vmax.f32 %v2700, 0.0
        %v2804 = vmax.f32 %v2702, 0.0
        %v2805 = vmax.f32 %v2704, 0.0
        %v2806 = vmax.f32 %v2708, 0.0
        %v2807 = vmax.f32 %v2710, 0.0
        %v2808 = vmax.f32 %v2712, 0.0
        %v2809 = vmax.f32 %v2714, 0.0
        %v2810 = vmax.f32 %v2718, 0.0
        %v2811 = vmax.f32 %v2720, 0.0
        %v2812 = vmax.f32 %v2722, 0.0
        %v2813 = vmax.f32 %v2724, 0.0
        %v2814 = vmax.f32 %v2728, 0.0
        %v2815 = vmax.f32 %v2730, 0.0
        %v2816 = vmax.f32 %v2732, 0.0
        %v2817 = vmax.f32 %v2734, 0.0
        %v2818 = vmax.f32 %v2738, 0.0
        %v2819 = vmax.f32 %v2740, 0.0
        %v2820 = vmax.f32 %v2742, 0.0
        %v2821 = vmax.f32 %v2744, 0.0
        %v2822 = vmax.f32 %v2748, 0.0
        %v2823 = vmax.f32 %v2750, 0.0
        %v2824 = vmax.f32 %v2752, 0.0
        %v2825 = vmax.f32 %v2754, 0.0
        %v2826 = vmax.f32 %v2758, 0.0
        %v2827 = vmax.f32 %v2760, 0.0
        %v2828 = vmax.f32 %v2762, 0.0
        %v2829 = vmax.f32 %v2764, 0.0
        %v2830 = vpack.c.bf16 %v2768, %v2766
        %v2831 = vpack.c.bf16 %v2769, %v2767
        %v2832 = vpack.c.bf16 %v2772, %v2770
        %v2833 = vpack.c.bf16 %v2773, %v2771
        %v2834 = vpack.c.bf16 %v2776, %v2774
        %v2835 = vpack.c.bf16 %v2777, %v2775
        %v2836 = vpack.c.bf16 %v2780, %v2778
        %v2837 = vpack.c.bf16 %v2781, %v2779
        %v2838 = vpack.c.bf16 %v2784, %v2782
        %v2839 = vpack.c.bf16 %v2785, %v2783
        %v2840 = vpack.c.bf16 %v2788, %v2786
        %v2841 = vpack.c.bf16 %v2789, %v2787
        %v2842 = vpack.c.bf16 %v2792, %v2790
        %v2843 = vpack.c.bf16 %v2793, %v2791
        %v2844 = vpack.c.bf16 %v2796, %v2794
        %v2845 = vpack.c.bf16 %v2797, %v2795
        %v2846 = vpack.c.bf16 %v2800, %v2798
        %v2847 = vpack.c.bf16 %v2801, %v2799
        %v2848 = vpack.c.bf16 %v2804, %v2802
        %v2849 = vpack.c.bf16 %v2805, %v2803
        %v2850 = vpack.c.bf16 %v2808, %v2806
        %v2851 = vpack.c.bf16 %v2809, %v2807
        %v2852 = vpack.c.bf16 %v2812, %v2810
        %v2853 = vpack.c.bf16 %v2813, %v2811
        %v2854 = vpack.c.bf16 %v2816, %v2814
        %v2855 = vpack.c.bf16 %v2817, %v2815
        %v2856 = vpack.c.bf16 %v2820, %v2818
        %v2857 = vpack.c.bf16 %v2821, %v2819
        %v2858 = vpack.c.bf16 %v2824, %v2822
        %v2859 = vpack.c.bf16 %v2825, %v2823
        %v2860 = vpack.c.bf16 %v2828, %v2826
        %v2861 = vpack.c.bf16 %v2829, %v2827
        %v2862 = vld [vmem:[%s7] sm:$0xf]
        %v2863 = vld [vmem:[%s7 + $0x4] sm:$0xf]
        %v2864 = vld [vmem:[%s7 + $0x8] sm:$0xf]
        %v2865 = vld [vmem:[%s7 + $0xc] sm:$0xf]
        %v2866 = vld [vmem:[%s7 + $0x10] sm:$0xf]
        %v2867 = vld [vmem:[%s7 + $0x14] sm:$0xf]
        %v2868 = vld [vmem:[%s7 + $0x18] sm:$0xf]
        %v2869 = vld [vmem:[%s7 + $0x1c] sm:$0xf]
        %v2870 = vld [vmem:[%s7 + $0x20] sm:$0xf]
        %v2871 = vld [vmem:[%s7 + $0x24] sm:$0xf]
        %v2872 = vld [vmem:[%s7 + $0x28] sm:$0xf]
        %v2873 = vld [vmem:[%s7 + $0x2c] sm:$0xf]
        %v2874 = vld [vmem:[%s7 + $0x30] sm:$0xf]
        %v2875 = vld [vmem:[%s7 + $0x34] sm:$0xf]
        %v2876 = vld [vmem:[%s7 + $0x38] sm:$0xf]
        %v2877 = vld [vmem:[%s7 + $0x3c] sm:$0xf]
        %v2878 = vld [vmem:[%s7 + $0x40] sm:$0xf]
        %v2879 = vld [vmem:[%s7 + $0x44] sm:$0xf]
        %v2880 = vld [vmem:[%s7 + $0x48] sm:$0xf]
        %v2881 = vld [vmem:[%s7 + $0x4c] sm:$0xf]
        %v2882 = vld [vmem:[%s7 + $0x50] sm:$0xf]
        %v2883 = vld [vmem:[%s7 + $0x54] sm:$0xf]
        %v2884 = vld [vmem:[%s7 + $0x58] sm:$0xf]
        %v2885 = vld [vmem:[%s7 + $0x5c] sm:$0xf]
        %v2886 = vld [vmem:[%s7 + $0x60] sm:$0xf]
        %v2887 = vld [vmem:[%s7 + $0x64] sm:$0xf]
        %v2888 = vld [vmem:[%s7 + $0x68] sm:$0xf]
        %v2889 = vld [vmem:[%s7 + $0x6c] sm:$0xf]
        %v2890 = vld [vmem:[%s7 + $0x70] sm:$0xf]
        %v2891 = vld [vmem:[%s7 + $0x74] sm:$0xf]
        %v2892 = vld [vmem:[%s7 + $0x78] sm:$0xf]
        %v2893 = vld [vmem:[%s7 + $0x7c] sm:$0xf]
        %v2894 = vld [vmem:[%s8] sm:$0x1]
        %v2896 = vlaneseq
        %v2897 = vshrl.u32 %v2896, 7
        %v2898 = vsub.s32 0, %v2897
        %v2899 = vrot.slane %v2894, %v2898
        %v2933 = vunpack.c.l.b16 %v2862
        %v2934 = vunpack.c.l.b16 %v2863
        %v2935 = vunpack.c.l.b16 %v2864
        %v2936 = vunpack.c.l.b16 %v2865
        %v2937 = vunpack.c.l.b16 %v2866
        %v2938 = vunpack.c.l.b16 %v2867
        %v2939 = vunpack.c.l.b16 %v2868
        %v2940 = vunpack.c.l.b16 %v2869
        %v2941 = vunpack.c.l.b16 %v2870
        %v2942 = vunpack.c.l.b16 %v2871
        %v2943 = vunpack.c.l.b16 %v2872
        %v2944 = vunpack.c.l.b16 %v2873
        %v2945 = vunpack.c.l.b16 %v2874
        %v2946 = vunpack.c.l.b16 %v2875
        %v2947 = vunpack.c.l.b16 %v2876
        %v2948 = vunpack.c.l.b16 %v2877
        %v2949 = vunpack.c.l.b16 %v2878
        %v2950 = vunpack.c.l.b16 %v2879
        %v2951 = vunpack.c.l.b16 %v2880
        %v2952 = vunpack.c.l.b16 %v2881
        %v2953 = vunpack.c.l.b16 %v2882
        %v2954 = vunpack.c.l.b16 %v2883
        %v2955 = vunpack.c.l.b16 %v2884
        %v2956 = vunpack.c.l.b16 %v2885
        %v2957 = vunpack.c.l.b16 %v2886
        %v2958 = vunpack.c.l.b16 %v2887
        %v2959 = vunpack.c.l.b16 %v2888
        %v2960 = vunpack.c.l.b16 %v2889
        %v2961 = vunpack.c.l.b16 %v2890
        %v2962 = vunpack.c.l.b16 %v2891
        %v2963 = vunpack.c.l.b16 %v2892
        %v2964 = vunpack.c.l.b16 %v2893
        %v2965 = vpack.c.b16 %v2934, %v2933
        %v2966 = vpack.c.b16 %v2936, %v2935
        %v2967 = vpack.c.b16 %v2938, %v2937
        %v2968 = vpack.c.b16 %v2940, %v2939
        %v2969 = vpack.c.b16 %v2942, %v2941
        %v2970 = vpack.c.b16 %v2944, %v2943
        %v2971 = vpack.c.b16 %v2946, %v2945
        %v2972 = vpack.c.b16 %v2948, %v2947
        %v2973 = vpack.c.b16 %v2950, %v2949
        %v2974 = vpack.c.b16 %v2952, %v2951
        %v2975 = vpack.c.b16 %v2954, %v2953
        %v2976 = vpack.c.b16 %v2956, %v2955
        %v2977 = vpack.c.b16 %v2958, %v2957
        %v2978 = vpack.c.b16 %v2960, %v2959
        %v2979 = vpack.c.b16 %v2962, %v2961
        %v2980 = vpack.c.b16 %v2964, %v2963
        %2997 = vmatprep.subr.bf16.mxu0 0
        %2998 = vmatpush1.bf16.msra.mxu0 %v2972
        %2999 = vmatprep.subr.bf16.mxu0 0
        %3000 = vmatpush1.bf16.msra.mxu0 %v2971
        %3001 = vmatprep.subr.bf16.mxu0 0
        %3002 = vmatpush1.bf16.msra.mxu0 %v2970
        %3003 = vmatprep.subr.bf16.mxu0 0
        %3004 = vmatpush1.bf16.msra.mxu0 %v2969
        %3005 = vmatprep.subr.bf16.mxu0 0
        %3006 = vmatpush1.bf16.msra.mxu0 %v2968
        %3007 = vmatprep.subr.bf16.mxu0 0
        %3008 = vmatpush1.bf16.msra.mxu0 %v2967
        %3009 = vmatprep.subr.bf16.mxu0 0
        %3010 = vmatpush1.bf16.msra.mxu0 %v2966
        %3011 = vmatprep.subr.bf16.mxu0 0
        %3012 = vmatpush1.bf16.msra.mxu0 %v2965
        %3013 = vmatprep.subr.bf16.mxu0 0
        %3014 = vmatpush2.bf16.msra.mxu0 %v2980
        %3015 = vmatprep.subr.bf16.mxu0 0
        %3016 = vmatpush2.bf16.msra.mxu0 %v2979
        %3017 = vmatprep.subr.bf16.mxu0 0
        %3018 = vmatpush2.bf16.msra.mxu0 %v2978
        %3019 = vmatprep.subr.bf16.mxu0 0
        %3020 = vmatpush2.bf16.msra.mxu0 %v2977
        %3021 = vmatprep.subr.bf16.mxu0 0
        %3022 = vmatpush2.bf16.msra.mxu0 %v2976
        %3023 = vmatprep.subr.bf16.mxu0 0
        %3024 = vmatpush2.bf16.msra.mxu0 %v2975
        %3025 = vmatprep.subr.bf16.mxu0 0
        %3026 = vmatpush2.bf16.msra.mxu0 %v2974
        %3027 = vmatprep.subr.bf16.mxu0 0
        %3028 = vmatpush2.bf16.msra.mxu0 %v2973
        %3029 = vmatprep.mubr.bf16.mxu0 %v2831
        %3030 = vmatmul.mubr.bf16.gmra.mxu0 %v2830
        %v3031 = vpop.f32.mrf.mxu0
        %v3032 = vadd.f32 %v2899, %v3031
        %v3033 = vpop.f32.mrf.mxu0
        %v3034 = vpop.f32.mrf.mxu0
        %v3035 = vadd.f32 %v2899, %v3034
        %v3036 = vpop.f32.mrf.mxu0
        %3037 = vmatprep.mubr.bf16.mxu0 %v2833
        %3038 = vmatmul.mubr.bf16.gmra.mxu0 %v2832
        %v3039 = vpop.f32.mrf.mxu0
        %v3040 = vadd.f32 %v2899, %v3039
        %v3041 = vpop.f32.mrf.mxu0
        %v3042 = vpop.f32.mrf.mxu0
        %v3043 = vadd.f32 %v2899, %v3042
        %v3044 = vpop.f32.mrf.mxu0
        %3045 = vmatprep.mubr.bf16.mxu0 %v2835
        %3046 = vmatmul.mubr.bf16.gmra.mxu0 %v2834
        %v3047 = vpop.f32.mrf.mxu0
        %v3048 = vadd.f32 %v2899, %v3047
        %v3049 = vpop.f32.mrf.mxu0
        %v3050 = vpop.f32.mrf.mxu0
        %v3051 = vadd.f32 %v2899, %v3050
        %v3052 = vpop.f32.mrf.mxu0
        %3053 = vmatprep.mubr.bf16.mxu0 %v2837
        %3054 = vmatmul.mubr.bf16.gmra.mxu0 %v2836
        %v3055 = vpop.f32.mrf.mxu0
        %v3056 = vadd.f32 %v2899, %v3055
        %v3057 = vpop.f32.mrf.mxu0
        %v3058 = vpop.f32.mrf.mxu0
        %v3059 = vadd.f32 %v2899, %v3058
        %v3060 = vpop.f32.mrf.mxu0
        %3061 = vmatprep.mubr.bf16.mxu0 %v2839
        %3062 = vmatmul.mubr.bf16.gmra.mxu0 %v2838
        %v3063 = vpop.f32.mrf.mxu0
        %v3064 = vadd.f32 %v2899, %v3063
        %v3065 = vpop.f32.mrf.mxu0
        %v3066 = vpop.f32.mrf.mxu0
        %v3067 = vadd.f32 %v2899, %v3066
        %v3068 = vpop.f32.mrf.mxu0
        %3069 = vmatprep.mubr.bf16.mxu0 %v2841
        %3070 = vmatmul.mubr.bf16.gmra.mxu0 %v2840
        %v3071 = vpop.f32.mrf.mxu0
        %v3072 = vadd.f32 %v2899, %v3071
        %v3073 = vpop.f32.mrf.mxu0
        %v3074 = vpop.f32.mrf.mxu0
        %v3075 = vadd.f32 %v2899, %v3074
        %v3076 = vpop.f32.mrf.mxu0
        %3077 = vmatprep.mubr.bf16.mxu0 %v2843
        %3078 = vmatmul.mubr.bf16.gmra.mxu0 %v2842
        %v3079 = vpop.f32.mrf.mxu0
        %v3080 = vadd.f32 %v2899, %v3079
        %v3081 = vpop.f32.mrf.mxu0
        %v3082 = vpop.f32.mrf.mxu0
        %v3083 = vadd.f32 %v2899, %v3082
        %v3084 = vpop.f32.mrf.mxu0
        %3085 = vmatprep.mubr.bf16.mxu0 %v2845
        %3086 = vmatmul.mubr.bf16.gmra.mxu0 %v2844
        %v3087 = vpop.f32.mrf.mxu0
        %v3088 = vadd.f32 %v2899, %v3087
        %v3089 = vpop.f32.mrf.mxu0
        %v3090 = vpop.f32.mrf.mxu0
        %v3091 = vadd.f32 %v2899, %v3090
        %v3092 = vpop.f32.mrf.mxu0
        %3093 = vmatprep.mubr.bf16.mxu0 %v2847
        %3094 = vmatmul.mubr.bf16.gmra.mxu0 %v2846
        %v3095 = vpop.f32.mrf.mxu0
        %v3096 = vadd.f32 %v2899, %v3095
        %v3097 = vpop.f32.mrf.mxu0
        %v3098 = vpop.f32.mrf.mxu0
        %v3099 = vadd.f32 %v2899, %v3098
        %v3100 = vpop.f32.mrf.mxu0
        %3101 = vmatprep.mubr.bf16.mxu0 %v2849
        %3102 = vmatmul.mubr.bf16.gmra.mxu0 %v2848
        %v3103 = vpop.f32.mrf.mxu0
        %v3104 = vadd.f32 %v2899, %v3103
        %v3105 = vpop.f32.mrf.mxu0
        %v3106 = vpop.f32.mrf.mxu0
        %v3107 = vadd.f32 %v2899, %v3106
        %v3108 = vpop.f32.mrf.mxu0
        %3109 = vmatprep.mubr.bf16.mxu0 %v2851
        %3110 = vmatmul.mubr.bf16.gmra.mxu0 %v2850
        %v3111 = vpop.f32.mrf.mxu0
        %v3112 = vadd.f32 %v2899, %v3111
        %v3113 = vpop.f32.mrf.mxu0
        %v3114 = vpop.f32.mrf.mxu0
        %v3115 = vadd.f32 %v2899, %v3114
        %v3116 = vpop.f32.mrf.mxu0
        %3117 = vmatprep.mubr.bf16.mxu0 %v2853
        %3118 = vmatmul.mubr.bf16.gmra.mxu0 %v2852
        %v3119 = vpop.f32.mrf.mxu0
        %v3120 = vadd.f32 %v2899, %v3119
        %v3121 = vpop.f32.mrf.mxu0
        %v3122 = vpop.f32.mrf.mxu0
        %v3123 = vadd.f32 %v2899, %v3122
        %v3124 = vpop.f32.mrf.mxu0
        %3125 = vmatprep.mubr.bf16.mxu0 %v2855
        %3126 = vmatmul.mubr.bf16.gmra.mxu0 %v2854
        %v3127 = vpop.f32.mrf.mxu0
        %v3128 = vadd.f32 %v2899, %v3127
        %v3129 = vpop.f32.mrf.mxu0
        %v3130 = vpop.f32.mrf.mxu0
        %v3131 = vadd.f32 %v2899, %v3130
        %v3132 = vpop.f32.mrf.mxu0
        %3133 = vmatprep.mubr.bf16.mxu0 %v2857
        %3134 = vmatmul.mubr.bf16.gmra.mxu0 %v2856
        %v3135 = vpop.f32.mrf.mxu0
        %v3136 = vadd.f32 %v2899, %v3135
        %v3137 = vpop.f32.mrf.mxu0
        %v3138 = vpop.f32.mrf.mxu0
        %v3139 = vadd.f32 %v2899, %v3138
        %v3140 = vpop.f32.mrf.mxu0
        %3141 = vmatprep.mubr.bf16.mxu0 %v2859
        %3142 = vmatmul.mubr.bf16.gmra.mxu0 %v2858
        %v3143 = vpop.f32.mrf.mxu0
        %v3144 = vadd.f32 %v2899, %v3143
        %v3145 = vpop.f32.mrf.mxu0
        %v3146 = vpop.f32.mrf.mxu0
        %v3147 = vadd.f32 %v2899, %v3146
        %v3148 = vpop.f32.mrf.mxu0
        %3149 = vmatprep.mubr.bf16.mxu0 %v2861
        %3150 = vmatmul.mubr.bf16.gmra.mxu0 %v2860
        %v3151 = vpop.f32.mrf.mxu0
        %v3152 = vadd.f32 %v2899, %v3151
        %v3153 = vpop.f32.mrf.mxu0
        %v3154 = vpop.f32.mrf.mxu0
        %v3155 = vadd.f32 %v2899, %v3154
        %v3156 = vpop.f32.mrf.mxu0
        %3157 = vdwg.mxu0
        %v3158 = vld [vmem:[#allocation2] sm:$0xf]
        %v3159 = vld [vmem:[%s420] sm:$0xf]
        %v3160 = vpack.c.bf16 %v3035, %v3032
        %v3161 = vpack.c.bf16 %v3043, %v3040
        %v3162 = vpack.c.bf16 %v3051, %v3048
        %v3163 = vpack.c.bf16 %v3059, %v3056
        %v3164 = vpack.c.bf16 %v3067, %v3064
        %v3165 = vpack.c.bf16 %v3075, %v3072
        %v3166 = vpack.c.bf16 %v3083, %v3080
        %v3167 = vpack.c.bf16 %v3091, %v3088
        %v3168 = vpack.c.bf16 %v3099, %v3096
        %v3169 = vpack.c.bf16 %v3107, %v3104
        %v3170 = vpack.c.bf16 %v3115, %v3112
        %v3171 = vpack.c.bf16 %v3123, %v3120
        %v3172 = vpack.c.bf16 %v3131, %v3128
        %v3173 = vpack.c.bf16 %v3139, %v3136
        %v3174 = vpack.c.bf16 %v3147, %v3144
        %v3175 = vpack.c.bf16 %v3155, %v3152
        %v3178 = vunpack.c.l.s4 1983009808
        %v3179 = vunpack.c.0.s8 %v3178
        %v3180 = vlaneseq
        %v3181 = vshrl.u32 %v3180, 7
        %v3182 = vsub.s32 %v3179, %v3181
        %v3183 = vrot.slane %v3159, %v3182
        %v3184 = vcombine.high %v3183, %v3183
        %3187 = vmatprep.subr.bf16.mxu0 0
        %3188 = vmatpush1.bf16.msra.mxu0 %v3167
        %3189 = vmatprep.subr.bf16.mxu0 0
        %3190 = vmatpush1.bf16.msra.mxu0 %v3166
        %3191 = vmatprep.subr.bf16.mxu0 0
        %3192 = vmatpush1.bf16.msra.mxu0 %v3165
        %3193 = vmatprep.subr.bf16.mxu0 0
        %3194 = vmatpush1.bf16.msra.mxu0 %v3164
        %3195 = vmatprep.subr.bf16.mxu0 0
        %3196 = vmatpush1.bf16.msra.mxu0 %v3163
        %3197 = vmatprep.subr.bf16.mxu0 0
        %3198 = vmatpush1.bf16.msra.mxu0 %v3162
        %3199 = vmatprep.subr.bf16.mxu0 0
        %3200 = vmatpush1.bf16.msra.mxu0 %v3161
        %3201 = vmatprep.subr.bf16.mxu0 0
        %3202 = vmatpush1.bf16.msra.mxu0 %v3160
        %3203 = vmatprep.subr.bf16.mxu0 0
        %3204 = vmatpush2.bf16.msra.mxu0 %v3175
        %3205 = vmatprep.subr.bf16.mxu0 0
        %3206 = vmatpush2.bf16.msra.mxu0 %v3174
        %3207 = vmatprep.subr.bf16.mxu0 0
        %3208 = vmatpush2.bf16.msra.mxu0 %v3173
        %3209 = vmatprep.subr.bf16.mxu0 0
        %3210 = vmatpush2.bf16.msra.mxu0 %v3172
        %3211 = vmatprep.subr.bf16.mxu0 0
        %3212 = vmatpush2.bf16.msra.mxu0 %v3171
        %3213 = vmatprep.subr.bf16.mxu0 0
        %3214 = vmatpush2.bf16.msra.mxu0 %v3170
        %3215 = vmatprep.subr.bf16.mxu0 0
        %3216 = vmatpush2.bf16.msra.mxu0 %v3169
        %3217 = vmatprep.subr.bf16.mxu0 0
        %3218 = vmatpush2.bf16.msra.mxu0 %v3168
        %3219 = vmatprep.mubr.bf16.mxu0 %v3184
        %3220 = vmatmul.mubr.bf16.gmra.mxu0 %v3183
        %v3221 = vpop.f32.mrf.mxu0
        %v3222 = vadd.f32 0.0, %v3221
        %v3223 = vpop.f32.mrf.mxu0
        %v3224 = vpop.f32.mrf.mxu0
        %v3225 = vpop.f32.mrf.mxu0
        %3226 = vdwg.mxu0
        %v3227 = vadd.f32 %v3158, %v3222
        %3228 = vst [vmem:[#allocation2] sm:$0xf] %v3227
        %p3229 = scmp.eq.s32.totalorder %s23, 1
        // Predicated region
        $region69: #{gnn_forward.9} parent=63 // pred_check
          %p3230 = pneg %p3229
        $region70: #{gnn_forward.9} parent=63 // pred_check_branch
          %3232 = sbr.rel (%p3230) target = $region72
        $region71: #{gnn_forward.9} parent=63 // pred_region
          %v3233 = vld [vmem:[#allocation2] sm:$0xf]
          %v3234 = vld [vmem:[%s4] sm:$0xf]
          %3236 = vset.pattern.permute.xlu0 0
          %3237 = vperm.xlu0 %3236, %v3234
          %v3238 = vpop.permute.xlu0 %3237
          %v3240 = vmul.f32 %v3233, %v3238
          %v3241 = vpack.c.bf16 %v3240, %v3240
          %v3242 = vld [vmem:[%s9] sm:$0xf]
          %v3243 = vld [vmem:[%s9 + $0x4] sm:$0xf]
          %v3244 = vld [vmem:[%s9 + $0x8] sm:$0xf]
          %v3245 = vld [vmem:[%s9 + $0xc] sm:$0xf]
          %v3246 = vld [vmem:[%s9 + $0x10] sm:$0xf]
          %v3247 = vld [vmem:[%s9 + $0x14] sm:$0xf]
          %v3248 = vld [vmem:[%s9 + $0x18] sm:$0xf]
          %v3249 = vld [vmem:[%s9 + $0x1c] sm:$0xf]
          %v3250 = vld [vmem:[%s9 + $0x20] sm:$0xf]
          %v3251 = vld [vmem:[%s9 + $0x24] sm:$0xf]
          %v3252 = vld [vmem:[%s9 + $0x28] sm:$0xf]
          %v3253 = vld [vmem:[%s9 + $0x2c] sm:$0xf]
          %v3254 = vld [vmem:[%s9 + $0x30] sm:$0xf]
          %v3255 = vld [vmem:[%s9 + $0x34] sm:$0xf]
          %v3256 = vld [vmem:[%s9 + $0x38] sm:$0xf]
          %v3257 = vld [vmem:[%s9 + $0x3c] sm:$0xf]
          %v3258 = vld [vmem:[%s10] sm:$0x1]
          %v3260 = vlaneseq
          %v3261 = vshrl.u32 %v3260, 7
          %v3262 = vsub.s32 0, %v3261
          %v3263 = vrot.slane %v3258, %v3262
          %v3281 = vunpack.c.l.b16 %v3242
          %v3282 = vunpack.c.l.b16 %v3243
          %v3283 = vunpack.c.l.b16 %v3244
          %v3284 = vunpack.c.l.b16 %v3245
          %v3285 = vunpack.c.l.b16 %v3246
          %v3286 = vunpack.c.l.b16 %v3247
          %v3287 = vunpack.c.l.b16 %v3248
          %v3288 = vunpack.c.l.b16 %v3249
          %v3289 = vunpack.c.l.b16 %v3250
          %v3290 = vunpack.c.l.b16 %v3251
          %v3291 = vunpack.c.l.b16 %v3252
          %v3292 = vunpack.c.l.b16 %v3253
          %v3293 = vunpack.c.l.b16 %v3254
          %v3294 = vunpack.c.l.b16 %v3255
          %v3295 = vunpack.c.l.b16 %v3256
          %v3296 = vunpack.c.l.b16 %v3257
          %v3297 = vpack.c.b16 %v3282, %v3281
          %v3298 = vpack.c.b16 %v3284, %v3283
          %v3299 = vpack.c.b16 %v3286, %v3285
          %v3300 = vpack.c.b16 %v3288, %v3287
          %v3301 = vpack.c.b16 %v3290, %v3289
          %v3302 = vpack.c.b16 %v3292, %v3291
          %v3303 = vpack.c.b16 %v3294, %v3293
          %v3304 = vpack.c.b16 %v3296, %v3295
          %3313 = vmatprep.subr.bf16.mxu0 0
          %3314 = vmatpush1.bf16.msra.mxu0 %v3304
          %3315 = vmatprep.subr.bf16.mxu0 0
          %3316 = vmatpush1.bf16.msra.mxu0 %v3303
          %3317 = vmatprep.subr.bf16.mxu0 0
          %3318 = vmatpush1.bf16.msra.mxu0 %v3302
          %3319 = vmatprep.subr.bf16.mxu0 0
          %3320 = vmatpush1.bf16.msra.mxu0 %v3301
          %3321 = vmatprep.subr.bf16.mxu0 0
          %3322 = vmatpush1.bf16.msra.mxu0 %v3300
          %3323 = vmatprep.subr.bf16.mxu0 0
          %3324 = vmatpush1.bf16.msra.mxu0 %v3299
          %3325 = vmatprep.subr.bf16.mxu0 0
          %3326 = vmatpush1.bf16.msra.mxu0 %v3298
          %3327 = vmatprep.subr.bf16.mxu0 0
          %3328 = vmatpush1.bf16.msra.mxu0 %v3297
          %3329 = vmatprep.subr.bf16.mxu0 0
          %3330 = vmatpush2.bf16.msra.mxu0 0
          %3331 = vmatprep.subr.bf16.mxu0 0
          %3332 = vmatpush2.bf16.msra.mxu0 0
          %3333 = vmatprep.subr.bf16.mxu0 0
          %3334 = vmatpush2.bf16.msra.mxu0 0
          %3335 = vmatprep.subr.bf16.mxu0 0
          %3336 = vmatpush2.bf16.msra.mxu0 0
          %3337 = vmatprep.subr.bf16.mxu0 0
          %3338 = vmatpush2.bf16.msra.mxu0 0
          %3339 = vmatprep.subr.bf16.mxu0 0
          %3340 = vmatpush2.bf16.msra.mxu0 0
          %3341 = vmatprep.subr.bf16.mxu0 0
          %3342 = vmatpush2.bf16.msra.mxu0 0
          %3343 = vmatprep.subr.bf16.mxu0 0
          %3344 = vmatpush2.bf16.msra.mxu0 0
          %3345 = vmatprep.mubr.bf16.mxu0 0
          %3346 = vmatmul.mubr.bf16.gmra.mxu0 %v3241
          %v3347 = vpop.f32.mrf.mxu0
          %v3348 = vadd.f32 %v3263, %v3347
          %v3349 = vpop.f32.mrf.mxu0
          %v3350 = vpop.f32.mrf.mxu0
          %v3351 = vpop.f32.mrf.mxu0
          %3352 = vdwg.mxu0
          %3353 = vst [vmem:[#allocation3] sm:$0xf] %v3348
        $region72: #{gnn_forward.9} parent=63 // pred_fallthru
          _
        // Predicated region
        $region73: #{gnn_forward.9} parent=63 // pred_check
          %p3354 = pneg %p282
        $region74: #{gnn_forward.9} parent=63 // pred_check_branch
          %3356 = sbr.rel (%p3354) target = $region76
        $region75: #{gnn_forward.9} parent=63 // pred_region
          %s3358 = ssub.s32 64, 64
          %3359 = vsyncadd [#allocation4], %s3358
          %s3361 = sshll.u32 [#allocation3], 4
          %s3362 = int_to_ptr.vmem [resolvable:$true] %s3361
          %3364 = dma.vmem_to_hbm [thread:$0]  %s3362, 64, %s11, [#allocation4]
        $region76: #{gnn_forward.9} parent=63 // pred_fallthru
          _
        // Predicated region
        $region77: #{gnn_forward.9} parent=63 // pred_check
          %p3365 = pneg %p282
        $region78: #{gnn_forward.9} parent=63 // pred_check_branch
          %3367 = sbr.rel (%p3365) target = $region80
        $region79: #{gnn_forward.9} parent=63 // pred_region
          %3368 = dma.done [#allocation4], 64
        $region80: #{gnn_forward.9} parent=63 // pred_fallthru
          _
      $region64: #{gnn_forward.9} parent=5 // pred_fallthru
        _
      %p3369 = scmp.le.s32.totalorder 2, %s18
      // Predicated region
      $region81: #{gnn_forward.9} parent=5 // pred_check
        %p3370 = pneg %p3369
      $region82: #{gnn_forward.9} parent=5 // pred_check_branch
        %3372 = sbr.rel (%p3370) target = $region84
      $region83: #{gnn_forward.9} parent=5 // pred_region
        %s3373 = ssub.s32 %s18, 2
      $region84: #{gnn_forward.9} parent=5 // pred_fallthru
        _
    $region6: #{gnn_forward.9} parent=1 // loop_footer
      %s22 = sadd.s32 1, %s18
    $region7: #{gnn_forward.9} parent=1 // loop_footer_branch
      %17 = sbr.rel target = $region3
    $region8: #{gnn_forward.9} parent=1 // loop_exit
      _
    %3374 = vsyncpa [#allocation4], 1
    %s3375 = scalar_lea.sflag [#allocation4], 1
    %3376 = vsyncpa %s3375, 1

</llo_original>
